<compile_context>
chip_gen: v7x
topology: tpu7x:2x2x1
jax: 0.10.0
libtpu: 0.0.40
codegen_flags: <defaults>
</compile_context>

<pallas_src>
import functools

import jax
import jax.numpy as jnp
from jax.experimental import pallas as pl
from jax.experimental.pallas import tpu as pltpu

EPS = 1e-5            # nn.BatchNorm2d default
LANE = 128            # TPU lane width

# Scoped VMEM limit: safe on v5e / v6e / v7x (v7x has only 64 MiB physical).
# TODO(synk): on v5e/v6e this can be raised toward 96-112 MiB (and the tile
# budget with it) for larger row tiles at realistic UNet shapes.
VMEM_LIMIT = 48 * 1024 * 1024
TILE_VMEM_BUDGET = 28 * 1024 * 1024


def _round_up(x, m):
    return ((x + m - 1) // m) * m


def _pad_axis_to(a, axis, size):
    pads = [(0, 0)] * a.ndim
    pads[axis] = (0, size - a.shape[axis])
    return jnp.pad(a, pads)


def _pick_tile_rows(H, W, Cin, Cout):
    """Largest row tile whose per-step working set fits the VMEM budget."""
    cands = [t for t in (128, 64, 32, 16, 8) if t <= H and H % t == 0]
    for th in cands:
        need = (2 * (th + 4) * W * Cin * 2        # double-buffered bf16 xbuf
                + (th + 2) * W * 3 * Cin * 2      # fused bf16 tap operand
                + th * W * Cout * 4               # f32 accumulator
                + 2 * th * W * Cout * 2           # double-buffered y block
                + 2 * 9 * Cin * Cout * 2)         # double-buffered weights
        if need <= TILE_VMEM_BUDGET:
            return th
    return cands[-1] if cands else H


# ----------------------------------------------------------------------------
# Kernel 1: row-tiled 3x3 SAME conv with manually double-buffered input DMAs,
# optionally fused with the previous unit's BatchNorm affine + ReLU applied to
# its input tile.  Emits per-tile per-channel sum / sum-of-squares of the
# (exact f32) conv output for the following BatchNorm.
# ----------------------------------------------------------------------------
def _make_conv_kernel(*, TH, W, Cin, Cout, nh, apply_act):
    """Kernel refs:
      scale_ref, shift_ref : (1, Cin) f32   folded BN affine of previous unit
      x_hbm                : (N, H, W, Cin) bf16, left in HBM (pl.ANY)
      w_ref                : (3, 3*Cin, Cout) bf16 (dx taps fused into K)
      y_ref                : (1, TH, W, Cout) bf16   pre-BN conv output tile
      stats_ref            : (1, 1, 8, Cout) f32     row0 = sum, row1 = sum sq
      xbuf                 : (2, TH+4, W, Cin) bf16 double-buffered scratch
                             (per slot: row 0 / TH+3 guard, row 1 top halo,
                              rows 2..TH+1 body, row TH+2 bottom halo)
      sem                  : DMA semaphores (2, 3)  [slot, body/top/bottom]
    """
    span = (TH + 2) * W

    def kernel(scale_ref, shift_ref, x_hbm, w_ref, y_ref, stats_ref,
               xbuf, sem):
        n = pl.program_id(0)
        h = pl.program_id(1)
        slot = h % 2
        nslot = 1 - slot

        def issue(hh, sl):
            r0 = hh * TH
            pltpu.make_async_copy(
                x_hbm.at[n, pl.ds(r0, TH)],
                xbuf.at[sl, pl.ds(2, TH)], sem.at[sl, 0]).start()

            @pl.when(hh > 0)
            def _():
                pltpu.make_async_copy(
                    x_hbm.at[n, pl.ds(r0 - 1, 1)],
                    xbuf.at[sl, pl.ds(1, 1)], sem.at[sl, 1]).start()

            @pl.when(hh < nh - 1)
            def _():
                pltpu.make_async_copy(
                    x_hbm.at[n, pl.ds(r0 + TH, 1)],
                    xbuf.at[sl, pl.ds(TH + 2, 1)], sem.at[sl, 2]).start()

        # Prime the pipeline at the start of each image's row sweep.
        @pl.when(h == 0)
        def _():
            issue(h, slot)

        # Prefetch the next row tile of the same image; it completes under
        # this tile's MXU work and is consumed at the next grid step.
        # (Requires the row axis to be sequential -> "arbitrary" semantics.)
        @pl.when(h + 1 < nh)
        def _():
            issue(h + 1, nslot)

        # Wait for this tile's DMAs (issued at the previous step, or above
        # when h == 0).  Wait descriptors only need matching shapes.
        pltpu.make_async_copy(
            x_hbm.at[n, pl.ds(h * TH, TH)],
            xbuf.at[slot, pl.ds(2, TH)], sem.at[slot, 0]).wait()

        @pl.when(h > 0)
        def _():
            pltpu.make_async_copy(
                x_hbm.at[n, pl.ds(0, 1)],
                xbuf.at[slot, pl.ds(1, 1)], sem.at[slot, 1]).wait()

        @pl.when(h < nh - 1)
        def _():
            pltpu.make_async_copy(
                x_hbm.at[n, pl.ds(0, 1)],
                xbuf.at[slot, pl.ds(TH + 2, 1)], sem.at[slot, 2]).wait()

        zrow = jnp.zeros((1, W, Cin), jnp.bfloat16)

        if apply_act:
            # Fused BatchNorm affine + ReLU of the previous unit (f32 math),
            # written back to xbuf so the activation-space SAME zero padding
            # can be restored with narrow row stores below.
            sc = scale_ref[...].reshape(1, 1, Cin)
            sh = shift_ref[...].reshape(1, 1, Cin)
            act = jnp.maximum(xbuf[slot].astype(jnp.float32) * sc + sh, 0.0)
            xbuf[slot] = act.astype(jnp.bfloat16)

        # Out-of-image halo rows are zero (SAME padding).  Guard rows 0 and
        # TH+3 never need zeroing: the only elements of them the taps touch
        # are removed by the width-boundary mask.
        @pl.when(h == 0)
        def _():
            xbuf[slot, 1:2] = zrow

        @pl.when(h == nh - 1)
        def _():
            xbuf[slot, TH + 2:TH + 3] = zrow

        xb = xbuf[slot]                              # (TH+4, W, Cin) bf16
        g = xb.reshape((TH + 4) * W, Cin)

        # dx = -1 / 0 / +1 column shifts as flattened slices; SAME padding on
        # the width boundary via a plain column iota (no integer mod).
        col = jax.lax.broadcasted_iota(
            jnp.int32, (TH + 2, W, Cin), 1).reshape(span, Cin)
        zero = jnp.zeros((), jnp.bfloat16)
        g_l = jnp.where(col == 0, zero, g[W - 1:W - 1 + span])      # col j-1
        g_c = g[W:W + span]                                         # col j
        g_r = jnp.where(col == W - 1, zero, g[W + 1:W + 1 + span])  # col j+1

        # Fuse the three dx taps into the contraction dim: 3 MXU matmuls with
        # K = 3*Cin instead of 9 with K = Cin.
        lhs = jnp.concatenate([g_l, g_c, g_r], axis=1)   # (span, 3*Cin)

        acc = jnp.dot(lhs[0:TH * W], w_ref[0],
                      preferred_element_type=jnp.float32)
        acc = acc + jnp.dot(lhs[W:W + TH * W], w_ref[1],
                            preferred_element_type=jnp.float32)
        acc = acc + jnp.dot(lhs[2 * W:2 * W + TH * W], w_ref[2],
                            preferred_element_type=jnp.float32)
        # Conv bias intentionally dropped: a per-channel constant is exactly
        # cancelled by the following training-mode BatchNorm, so the block's
        # forward output is unchanged.

        y_ref[0] = acc.reshape(TH, W, Cout).astype(y_ref.dtype)

        # Per-tile BatchNorm partial statistics on the exact f32 accumulator.
        # TODO(synk): E[x^2]-E[x]^2 can lose precision for very large means;
        # acceptable for post-conv magnitudes here.
        stats_ref[0, 0, 0:1] = jnp.sum(acc, axis=0, keepdims=True)
        stats_ref[0, 0, 1:2] = jnp.sum(acc * acc, axis=0, keepdims=True)

    return kernel


def _conv_unit(x, w, scale_in, shift_in, *, apply_act, TH):
    """One 3x3 SAME conv (+ optional fused input BN-affine+ReLU)."""
    N, H, W, Cin = x.shape
    Cout = w.shape[-1]
    assert H % TH == 0 and w.shape == (3, 3 * Cin, Cout)
    nh = H // TH

    kernel = _make_conv_kernel(TH=TH, W=W, Cin=Cin, Cout=Cout, nh=nh,
                               apply_act=apply_act)
    grid_spec = pltpu.PrefetchScalarGridSpec(
        num_scalar_prefetch=0,
        grid=(N, nh),
        in_specs=[
            pl.BlockSpec((1, Cin), lambda n, h: (0, 0)),      # scale
            pl.BlockSpec((1, Cin), lambda n, h: (0, 0)),      # shift
            pl.BlockSpec(memory_space=pl.ANY),                # x stays in HBM
            pl.BlockSpec((3, 3 * Cin, Cout), lambda n, h: (0, 0, 0)),
        ],
        out_specs=[
            pl.BlockSpec((1, TH, W, Cout), lambda n, h: (n, h, 0, 0)),
            pl.BlockSpec((1, 1, 8, Cout), lambda n, h: (n, h, 0, 0)),
        ],
        scratch_shapes=[
            pltpu.VMEM((2, TH + 4, W, Cin), jnp.bfloat16),
            pltpu.SemaphoreType.DMA((2, 3)),
        ],
    )
    y, stats = pl.pallas_call(
        kernel,
        out_shape=(
            jax.ShapeDtypeStruct((N, H, W, Cout), jnp.bfloat16),
            jax.ShapeDtypeStruct((N, nh, 8, Cout), jnp.float32),
        ),
        grid_spec=grid_spec,
        # Row axis must stay sequential per image for the manual prefetch;
        # the batch axis is free to be megacore-sharded.
        compiler_params=pltpu.CompilerParams(
            dimension_semantics=("parallel", "arbitrary"),
            vmem_limit_bytes=VMEM_LIMIT),
    )(scale_in, shift_in, x, w)
    return y, stats


def _bn_scale_shift(stats, gamma, beta, count):
    """Fold training-mode BatchNorm stats into per-channel (scale, shift)."""
    s = jnp.sum(stats[:, :, 0, :], axis=(0, 1))
    q = jnp.sum(stats[:, :, 1, :], axis=(0, 1))
    mean = s / count
    var = jnp.maximum(q / count - mean * mean, 0.0)      # biased (training)
    inv_std = jax.lax.rsqrt(var + EPS)
    scale = gamma * inv_std
    shift = beta - mean * scale
    return scale.reshape(1, -1), shift.reshape(1, -1)


# ----------------------------------------------------------------------------
# Kernel 2: final BatchNorm affine + ReLU fused with the NHWC -> NCHW output
# transpose (only the real channels are transposed / written).
# ----------------------------------------------------------------------------
def _make_bn_relu_nchw_kernel(*, TH, W, Cpad, Cout, Cs):
    def kernel(y_ref, scale_ref, shift_ref, o_ref):
        a = y_ref[0].astype(jnp.float32).reshape(TH * W, Cpad)
        a = jnp.maximum(a * scale_ref[...] + shift_ref[...], 0.0)
        # Transpose only the sublane-rounded real channels, not the padding.
        o_ref[0] = a[:, :Cs].T[:Cout, :]           # (Cout, TH*W) NCHW slab
    return kernel


def _bn_relu_to_nchw(y, scale, shift, Cout, TH):
    N, H, W, Cpad = y.shape
    assert H % TH == 0
    nh = H // TH
    Cs = min(Cpad, _round_up(Cout, 8))
    kernel = _make_bn_relu_nchw_kernel(TH=TH, W=W, Cpad=Cpad, Cout=Cout, Cs=Cs)
    grid_spec = pltpu.PrefetchScalarGridSpec(
        num_scalar_prefetch=0,
        grid=(N, nh),
        in_specs=[
            pl.BlockSpec((1, TH, W, Cpad), lambda n, h: (n, h, 0, 0)),
            pl.BlockSpec((1, Cpad), lambda n, h: (0, 0)),
            pl.BlockSpec((1, Cpad), lambda n, h: (0, 0)),
        ],
        out_specs=pl.BlockSpec((1, Cout, TH * W), lambda n, h: (n, 0, h)),
    )
    out = pl.pallas_call(
        kernel,
        out_shape=jax.ShapeDtypeStruct((N, Cout, H * W), jnp.float32),
        grid_spec=grid_spec,
        compiler_params=pltpu.CompilerParams(
            dimension_semantics=("parallel", "parallel"),
            vmem_limit_bytes=VMEM_LIMIT),
    )(y, scale, shift)
    return out.reshape(N, Cout, H, W)            # free (contiguous) reshape


# ----------------------------------------------------------------------------
# Full block: Conv -> BN -> ReLU -> Conv -> BN -> ReLU.
# ----------------------------------------------------------------------------
@functools.partial(jax.jit, static_argnames=("tile_rows",))
def unet_conv_block_2d(x_nchw, params, tile_rows=None):
    """UNetConvBlock2D forward (BatchNorm variant). x is NCHW f32."""
    (w1, b1, g1, be1, w2, b2, g2, be2) = params
    del b1, b2  # cancelled by the following BatchNorm (forward unchanged)
    N, Cin, H, W = x_nchw.shape
    Cout = w1.shape[0]
    Cinp = _round_up(Cin, LANE)
    Cpad = _round_up(Cout, LANE)

    TH = tile_rows if tile_rows is not None else _pick_tile_rows(
        H, W, max(Cinp, Cpad), Cpad)
    assert H % TH == 0
    # Fused NCHW-output kernel wants lane-dense (multiple-of-128) stores.
    TH_out = TH if (TH * W) % LANE == 0 else H

    # NCHW -> NHWC, channels zero-padded to a lane multiple, stored in bf16.
    # TODO(synk): for tiny first-layer Cin (3-4) this still inflates the input
    # array ~16x; an im2col first layer would keep the lane padding in VMEM.
    x = _pad_axis_to(jnp.transpose(x_nchw, (0, 2, 3, 1)).astype(jnp.bfloat16),
                     3, Cinp)

    def prep_w(w, cin_p):
        wk = jnp.transpose(w, (2, 3, 1, 0))                 # OIHW -> HWIO
        wk = _pad_axis_to(_pad_axis_to(wk, 2, cin_p), 3, Cpad)
        # Fuse the 3 dx taps into the contraction dim: (3, 3*Cin, Cout).
        return wk.reshape(3, 3 * cin_p, Cpad).astype(jnp.bfloat16)

    w1k, w2k = prep_w(w1, Cinp), prep_w(w2, Cpad)
    g1p, g2p = _pad_axis_to(g1, 0, Cpad), _pad_axis_to(g2, 0, Cpad)
    be1p, be2p = _pad_axis_to(be1, 0, Cpad), _pad_axis_to(be2, 0, Cpad)

    count = float(N * H * W)
    dummy = jnp.zeros((1, Cinp), jnp.float32)

    y1, st1 = _conv_unit(x, w1k, dummy, dummy, apply_act=False, TH=TH)
    sc1, sh1 = _bn_scale_shift(st1, g1p, be1p, count)
    y2, st2 = _conv_unit(y1, w2k, sc1, sh1, apply_act=True, TH=TH)
    sc2, sh2 = _bn_scale_shift(st2, g2p, be2p, count)
    return _bn_relu_to_nchw(y2, sc2, sh2, Cout, TH_out)


# ----------------------------------------------------------------------------
# Pure-JAX reference (matches PyTorch NCHW semantics) for self-check.
# ----------------------------------------------------------------------------
def _ref_unit(x_nchw, w, b, gamma, beta):
    y = jax.lax.conv_general_dilated(
        x_nchw, w, window_strides=(1, 1), padding="SAME",
        dimension_numbers=("NCHW", "OIHW", "NCHW"))
    y = y + b[None, :, None, None]
    mean = jnp.mean(y, axis=(0, 2, 3))
    var = jnp.mean((y - mean[None, :, None, None]) ** 2, axis=(0, 2, 3))
    yn = (y - mean[None, :, None, None]) / jnp.sqrt(var + EPS)[None, :, None, None]
    yn = yn * gamma[None, :, None, None] + beta[None, :, None, None]
    return jnp.maximum(yn, 0.0)


def _ref_block(x_nchw, params):
    (w1, b1, g1, be1, w2, b2, g2, be2) = params
    h = _ref_unit(x_nchw, w1, b1, g1, be1)
    return _ref_unit(h, w2, b2, g2, be2)


if __name__ == "__main__":
    N, Cin, Cout, H, W, K = 2, 4, 8, 16, 16, 3

    key = jax.random.PRNGKey(0)
    ks = jax.random.split(key, 9)
    x = jax.random.normal(ks[0], (N, Cin, H, W), jnp.float32)

    # Deterministic parameter init (shapes per nn.Conv2d / nn.BatchNorm2d).
    w1 = 0.2 * jax.random.normal(ks[1], (Cout, Cin, K, K), jnp.float32)
    b1 = 0.1 * jax.random.normal(ks[2], (Cout,), jnp.float32)
    g1 = 1.0 + 0.1 * jax.random.normal(ks[3], (Cout,), jnp.float32)
    be1 = 0.1 * jax.random.normal(ks[4], (Cout,), jnp.float32)
    w2 = 0.2 * jax.random.normal(ks[5], (Cout, Cout, K, K), jnp.float32)
    b2 = 0.1 * jax.random.normal(ks[6], (Cout,), jnp.float32)
    g2 = 1.0 + 0.1 * jax.random.normal(ks[7], (Cout,), jnp.float32)
    be2 = 0.1 * jax.random.normal(ks[8], (Cout,), jnp.float32)

    params = (w1, b1, g1, be1, w2, b2, g2, be2)

    # tile_rows=8 -> two row tiles per image: exercises the halo DMAs, the
    # cross-tile prefetch and both boundary-zeroing paths.
    out = jax.block_until_ready(unet_conv_block_2d(x, params, tile_rows=8))
    ref = _ref_block(x, params)

    assert out.shape == (N, Cout, H, W)
    max_err = float(jnp.max(jnp.abs(out - ref)))
    # bf16 matmul operands + bf16 activation storage (f32 accumulation and
    # statistics) => relaxed tolerance vs the all-f32 reference.
    assert jnp.allclose(out, ref, atol=3e-2, rtol=3e-2), max_err

    print("KERNEL_OK")
</pallas_src>

<mosaic_0001>
module attributes {stable_mosaic.version = 11 : i64} {
  func.func @kernel(%arg0: i32, %arg1: i32, %arg2: memref<1x128xf32, #tpu.memory_space<vmem>>, %arg3: memref<1x128xf32, #tpu.memory_space<vmem>>, %arg4: memref<2x16x16x128xbf16, #tpu.memory_space<any>>, %arg5: memref<3x384x128xbf16, #tpu.memory_space<vmem>>, %arg6: memref<1x8x16x128xbf16, #tpu.memory_space<vmem>>, %arg7: memref<1x1x8x128xf32, #tpu.memory_space<vmem>>, %arg8: memref<2x12x16x128xbf16, #tpu.memory_space<vmem>>, %arg9: memref<2x3x!tpu.dma_semaphore, #tpu.memory_space<semaphore_mem>>) attributes {dimension_semantics = [#tpu.dimension_semantics<parallel>, #tpu.dimension_semantics<arbitrary>], iteration_bounds = array<i64: 2, 2>, scalar_prefetch = 0 : i64, scratch_operands = 2 : i64, tpu.core_type = #tpu.core_type<tc>, window_params = [{pipeline_mode = #tpu.pipeline_mode<synchronous>, transform_indices = @transform_0, window_bounds = array<i64: 1, 128>}, {pipeline_mode = #tpu.pipeline_mode<synchronous>, transform_indices = @transform_1, window_bounds = array<i64: 1, 128>}, {}, {pipeline_mode = #tpu.pipeline_mode<synchronous>, transform_indices = @transform_3, window_bounds = array<i64: 3, 384, 128>}, {transform_indices = @transform_4, window_bounds = array<i64: 1, 8, 16, 128>}, {transform_indices = @transform_5, window_bounds = array<i64: 1, 1, 8, 128>}]} {
    %c2_i32 = arith.constant 2 : i32
    %c0_i32 = arith.constant 0 : i32
    %0 = arith.cmpi eq, %c2_i32, %c0_i32 : i32
    %c1_i32 = arith.constant 1 : i32
    %1 = arith.select %0, %c1_i32, %c2_i32 : i32
    %2 = arith.remsi %arg1, %1 : i32
    %c0_i32_0 = arith.constant 0 : i32
    %3 = arith.cmpi ne, %2, %c0_i32_0 : i32
    %c0_i32_1 = arith.constant 0 : i32
    %4 = arith.cmpi slt, %2, %c0_i32_1 : i32
    %c0_i32_2 = arith.constant 0 : i32
    %5 = arith.cmpi slt, %1, %c0_i32_2 : i32
    %6 = arith.xori %4, %5 : i1
    %7 = arith.andi %6, %3 : i1
    %8 = arith.addi %2, %1 : i32
    %9 = arith.select %7, %8, %2 : i32
    %c1_i32_3 = arith.constant 1 : i32
    %10 = arith.subi %c1_i32_3, %9 : i32
    %c0_i32_4 = arith.constant 0 : i32
    %11 = arith.cmpi eq, %arg1, %c0_i32_4 : i32
    %12 = arith.extui %11 : i1 to i32
    %c0_i32_5 = arith.constant 0 : i32
    %13 = arith.cmpi ne, %12, %c0_i32_5 : i32
    scf.if %13 {
      %c8_i32_52 = arith.constant 8 : i32
      %86 = arith.muli %arg1, %c8_i32_52 : i32
      %c0_i32_53 = arith.constant 0 : i32
      %c0_i32_54 = arith.constant 0 : i32
      %c0_i32_55 = arith.constant 0 : i32
      %87 = tpu.memref_slice %arg4[%arg0, %86, %c0_i32_54, %c0_i32_55] : memref<2x16x16x128xbf16, #tpu.memory_space<any>> -> memref<1x8x16x128xbf16, #tpu.memory_space<any>>
      %88 = tpu.memref_squeeze %87 : memref<1x8x16x128xbf16, #tpu.memory_space<any>> -> memref<8x16x128xbf16, #tpu.memory_space<any>>
      %c2_i32_56 = arith.constant 2 : i32
      %c0_i32_57 = arith.constant 0 : i32
      %c0_i32_58 = arith.constant 0 : i32
      %89 = tpu.memref_slice %arg8[%9, %c2_i32_56, %c0_i32_57, %c0_i32_58] : memref<2x12x16x128xbf16, #tpu.memory_space<vmem>> -> memref<1x8x16x128xbf16, #tpu.memory_space<vmem>>
      %90 = tpu.memref_squeeze %89 : memref<1x8x16x128xbf16, #tpu.memory_space<vmem>> -> memref<8x16x128xbf16, #tpu.memory_space<vmem>>
      %91 = tpu.memref_slice %arg9[%9, %c0_i32_53] : memref<2x3x!tpu.dma_semaphore, #tpu.memory_space<semaphore_mem>> -> memref<1x1x!tpu.dma_semaphore, #tpu.memory_space<semaphore_mem>>
      %92 = tpu.memref_squeeze %91 : memref<1x1x!tpu.dma_semaphore, #tpu.memory_space<semaphore_mem>> -> memref<!tpu.dma_semaphore, #tpu.memory_space<semaphore_mem>>
      tpu.enqueue_dma source(%88 : memref<8x16x128xbf16, #tpu.memory_space<any>>) target(%90 : memref<8x16x128xbf16, #tpu.memory_space<vmem>>) target_semaphore(%92 : memref<!tpu.dma_semaphore, #tpu.memory_space<semaphore_mem>>)
      %c0_i32_59 = arith.constant 0 : i32
      %93 = arith.cmpi sgt, %arg1, %c0_i32_59 : i32
      %94 = arith.extui %93 : i1 to i32
      %c0_i32_60 = arith.constant 0 : i32
      %95 = arith.cmpi ne, %94, %c0_i32_60 : i32
      scf.if %95 {
        %c1_i32_63 = arith.constant 1 : i32
        %99 = arith.subi %86, %c1_i32_63 : i32
        %c1_i32_64 = arith.constant 1 : i32
        %c0_i32_65 = arith.constant 0 : i32
        %c0_i32_66 = arith.constant 0 : i32
        %100 = tpu.memref_slice %arg4[%arg0, %99, %c0_i32_65, %c0_i32_66] : memref<2x16x16x128xbf16, #tpu.memory_space<any>> -> memref<1x1x16x128xbf16, #tpu.memory_space<any>>
        %101 = tpu.memref_squeeze %100 : memref<1x1x16x128xbf16, #tpu.memory_space<any>> -> memref<1x16x128xbf16, #tpu.memory_space<any>>
        %c1_i32_67 = arith.constant 1 : i32
        %c0_i32_68 = arith.constant 0 : i32
        %c0_i32_69 = arith.constant 0 : i32
        %102 = tpu.memref_slice %arg8[%9, %c1_i32_67, %c0_i32_68, %c0_i32_69] : memref<2x12x16x128xbf16, #tpu.memory_space<vmem>> -> memref<1x1x16x128xbf16, #tpu.memory_space<vmem>>
        %103 = tpu.memref_squeeze %102 : memref<1x1x16x128xbf16, #tpu.memory_space<vmem>> -> memref<1x16x128xbf16, #tpu.memory_space<vmem>>
        %104 = tpu.memref_slice %arg9[%9, %c1_i32_64] : memref<2x3x!tpu.dma_semaphore, #tpu.memory_space<semaphore_mem>> -> memref<1x1x!tpu.dma_semaphore, #tpu.memory_space<semaphore_mem>>
        %105 = tpu.memref_squeeze %104 : memref<1x1x!tpu.dma_semaphore, #tpu.memory_space<semaphore_mem>> -> memref<!tpu.dma_semaphore, #tpu.memory_space<semaphore_mem>>
        tpu.enqueue_dma source(%101 : memref<1x16x128xbf16, #tpu.memory_space<any>>) target(%103 : memref<1x16x128xbf16, #tpu.memory_space<vmem>>) target_semaphore(%105 : memref<!tpu.dma_semaphore, #tpu.memory_space<semaphore_mem>>)
      } else {
      }
      %c1_i32_61 = arith.constant 1 : i32
      %96 = arith.cmpi slt, %arg1, %c1_i32_61 : i32
      %97 = arith.extui %96 : i1 to i32
      %c0_i32_62 = arith.constant 0 : i32
      %98 = arith.cmpi ne, %97, %c0_i32_62 : i32
      scf.if %98 {
        %c8_i32_63 = arith.constant 8 : i32
        %99 = arith.addi %86, %c8_i32_63 : i32
        %c2_i32_64 = arith.constant 2 : i32
        %c0_i32_65 = arith.constant 0 : i32
        %c0_i32_66 = arith.constant 0 : i32
        %100 = tpu.memref_slice %arg4[%arg0, %99, %c0_i32_65, %c0_i32_66] : memref<2x16x16x128xbf16, #tpu.memory_space<any>> -> memref<1x1x16x128xbf16, #tpu.memory_space<any>>
        %101 = tpu.memref_squeeze %100 : memref<1x1x16x128xbf16, #tpu.memory_space<any>> -> memref<1x16x128xbf16, #tpu.memory_space<any>>
        %c10_i32 = arith.constant 10 : i32
        %c0_i32_67 = arith.constant 0 : i32
        %c0_i32_68 = arith.constant 0 : i32
        %102 = tpu.memref_slice %arg8[%9, %c10_i32, %c0_i32_67, %c0_i32_68] : memref<2x12x16x128xbf16, #tpu.memory_space<vmem>> -> memref<1x1x16x128xbf16, #tpu.memory_space<vmem>>
        %103 = tpu.memref_squeeze %102 : memref<1x1x16x128xbf16, #tpu.memory_space<vmem>> -> memref<1x16x128xbf16, #tpu.memory_space<vmem>>
        %104 = tpu.memref_slice %arg9[%9, %c2_i32_64] : memref<2x3x!tpu.dma_semaphore, #tpu.memory_space<semaphore_mem>> -> memref<1x1x!tpu.dma_semaphore, #tpu.memory_space<semaphore_mem>>
        %105 = tpu.memref_squeeze %104 : memref<1x1x!tpu.dma_semaphore, #tpu.memory_space<semaphore_mem>> -> memref<!tpu.dma_semaphore, #tpu.memory_space<semaphore_mem>>
        tpu.enqueue_dma source(%101 : memref<1x16x128xbf16, #tpu.memory_space<any>>) target(%103 : memref<1x16x128xbf16, #tpu.memory_space<vmem>>) target_semaphore(%105 : memref<!tpu.dma_semaphore, #tpu.memory_space<semaphore_mem>>)
      } else {
      }
    } else {
    }
    %c1_i32_6 = arith.constant 1 : i32
    %14 = arith.addi %arg1, %c1_i32_6 : i32
    %c2_i32_7 = arith.constant 2 : i32
    %15 = arith.cmpi slt, %14, %c2_i32_7 : i32
    %16 = arith.extui %15 : i1 to i32
    %c0_i32_8 = arith.constant 0 : i32
    %17 = arith.cmpi ne, %16, %c0_i32_8 : i32
    scf.if %17 {
      %c1_i32_52 = arith.constant 1 : i32
      %86 = arith.addi %arg1, %c1_i32_52 : i32
      %c8_i32_53 = arith.constant 8 : i32
      %87 = arith.muli %86, %c8_i32_53 : i32
      %c0_i32_54 = arith.constant 0 : i32
      %c0_i32_55 = arith.constant 0 : i32
      %c0_i32_56 = arith.constant 0 : i32
      %88 = tpu.memref_slice %arg4[%arg0, %87, %c0_i32_55, %c0_i32_56] : memref<2x16x16x128xbf16, #tpu.memory_space<any>> -> memref<1x8x16x128xbf16, #tpu.memory_space<any>>
      %89 = tpu.memref_squeeze %88 : memref<1x8x16x128xbf16, #tpu.memory_space<any>> -> memref<8x16x128xbf16, #tpu.memory_space<any>>
      %c2_i32_57 = arith.constant 2 : i32
      %c0_i32_58 = arith.constant 0 : i32
      %c0_i32_59 = arith.constant 0 : i32
      %90 = tpu.memref_slice %arg8[%10, %c2_i32_57, %c0_i32_58, %c0_i32_59] : memref<2x12x16x128xbf16, #tpu.memory_space<vmem>> -> memref<1x8x16x128xbf16, #tpu.memory_space<vmem>>
      %91 = tpu.memref_squeeze %90 : memref<1x8x16x128xbf16, #tpu.memory_space<vmem>> -> memref<8x16x128xbf16, #tpu.memory_space<vmem>>
      %92 = tpu.memref_slice %arg9[%10, %c0_i32_54] : memref<2x3x!tpu.dma_semaphore, #tpu.memory_space<semaphore_mem>> -> memref<1x1x!tpu.dma_semaphore, #tpu.memory_space<semaphore_mem>>
      %93 = tpu.memref_squeeze %92 : memref<1x1x!tpu.dma_semaphore, #tpu.memory_space<semaphore_mem>> -> memref<!tpu.dma_semaphore, #tpu.memory_space<semaphore_mem>>
      tpu.enqueue_dma source(%89 : memref<8x16x128xbf16, #tpu.memory_space<any>>) target(%91 : memref<8x16x128xbf16, #tpu.memory_space<vmem>>) target_semaphore(%93 : memref<!tpu.dma_semaphore, #tpu.memory_space<semaphore_mem>>)
      %c0_i32_60 = arith.constant 0 : i32
      %94 = arith.cmpi sgt, %86, %c0_i32_60 : i32
      %95 = arith.extui %94 : i1 to i32
      %c0_i32_61 = arith.constant 0 : i32
      %96 = arith.cmpi ne, %95, %c0_i32_61 : i32
      scf.if %96 {
        %c1_i32_64 = arith.constant 1 : i32
        %100 = arith.subi %87, %c1_i32_64 : i32
        %c1_i32_65 = arith.constant 1 : i32
        %c0_i32_66 = arith.constant 0 : i32
        %c0_i32_67 = arith.constant 0 : i32
        %101 = tpu.memref_slice %arg4[%arg0, %100, %c0_i32_66, %c0_i32_67] : memref<2x16x16x128xbf16, #tpu.memory_space<any>> -> memref<1x1x16x128xbf16, #tpu.memory_space<any>>
        %102 = tpu.memref_squeeze %101 : memref<1x1x16x128xbf16, #tpu.memory_space<any>> -> memref<1x16x128xbf16, #tpu.memory_space<any>>
        %c1_i32_68 = arith.constant 1 : i32
        %c0_i32_69 = arith.constant 0 : i32
        %c0_i32_70 = arith.constant 0 : i32
        %103 = tpu.memref_slice %arg8[%10, %c1_i32_68, %c0_i32_69, %c0_i32_70] : memref<2x12x16x128xbf16, #tpu.memory_space<vmem>> -> memref<1x1x16x128xbf16, #tpu.memory_space<vmem>>
        %104 = tpu.memref_squeeze %103 : memref<1x1x16x128xbf16, #tpu.memory_space<vmem>> -> memref<1x16x128xbf16, #tpu.memory_space<vmem>>
        %105 = tpu.memref_slice %arg9[%10, %c1_i32_65] : memref<2x3x!tpu.dma_semaphore, #tpu.memory_space<semaphore_mem>> -> memref<1x1x!tpu.dma_semaphore, #tpu.memory_space<semaphore_mem>>
        %106 = tpu.memref_squeeze %105 : memref<1x1x!tpu.dma_semaphore, #tpu.memory_space<semaphore_mem>> -> memref<!tpu.dma_semaphore, #tpu.memory_space<semaphore_mem>>
        tpu.enqueue_dma source(%102 : memref<1x16x128xbf16, #tpu.memory_space<any>>) target(%104 : memref<1x16x128xbf16, #tpu.memory_space<vmem>>) target_semaphore(%106 : memref<!tpu.dma_semaphore, #tpu.memory_space<semaphore_mem>>)
      } else {
      }
      %c1_i32_62 = arith.constant 1 : i32
      %97 = arith.cmpi slt, %86, %c1_i32_62 : i32
      %98 = arith.extui %97 : i1 to i32
      %c0_i32_63 = arith.constant 0 : i32
      %99 = arith.cmpi ne, %98, %c0_i32_63 : i32
      scf.if %99 {
        %c8_i32_64 = arith.constant 8 : i32
        %100 = arith.addi %87, %c8_i32_64 : i32
        %c2_i32_65 = arith.constant 2 : i32
        %c0_i32_66 = arith.constant 0 : i32
        %c0_i32_67 = arith.constant 0 : i32
        %101 = tpu.memref_slice %arg4[%arg0, %100, %c0_i32_66, %c0_i32_67] : memref<2x16x16x128xbf16, #tpu.memory_space<any>> -> memref<1x1x16x128xbf16, #tpu.memory_space<any>>
        %102 = tpu.memref_squeeze %101 : memref<1x1x16x128xbf16, #tpu.memory_space<any>> -> memref<1x16x128xbf16, #tpu.memory_space<any>>
        %c10_i32 = arith.constant 10 : i32
        %c0_i32_68 = arith.constant 0 : i32
        %c0_i32_69 = arith.constant 0 : i32
        %103 = tpu.memref_slice %arg8[%10, %c10_i32, %c0_i32_68, %c0_i32_69] : memref<2x12x16x128xbf16, #tpu.memory_space<vmem>> -> memref<1x1x16x128xbf16, #tpu.memory_space<vmem>>
        %104 = tpu.memref_squeeze %103 : memref<1x1x16x128xbf16, #tpu.memory_space<vmem>> -> memref<1x16x128xbf16, #tpu.memory_space<vmem>>
        %105 = tpu.memref_slice %arg9[%10, %c2_i32_65] : memref<2x3x!tpu.dma_semaphore, #tpu.memory_space<semaphore_mem>> -> memref<1x1x!tpu.dma_semaphore, #tpu.memory_space<semaphore_mem>>
        %106 = tpu.memref_squeeze %105 : memref<1x1x!tpu.dma_semaphore, #tpu.memory_space<semaphore_mem>> -> memref<!tpu.dma_semaphore, #tpu.memory_space<semaphore_mem>>
        tpu.enqueue_dma source(%102 : memref<1x16x128xbf16, #tpu.memory_space<any>>) target(%104 : memref<1x16x128xbf16, #tpu.memory_space<vmem>>) target_semaphore(%106 : memref<!tpu.dma_semaphore, #tpu.memory_space<semaphore_mem>>)
      } else {
      }
    } else {
    }
    %c8_i32 = arith.constant 8 : i32
    %18 = arith.muli %arg1, %c8_i32 : i32
    %c0_i32_9 = arith.constant 0 : i32
    %c0_i32_10 = arith.constant 0 : i32
    %c0_i32_11 = arith.constant 0 : i32
    %19 = tpu.memref_slice %arg4[%arg0, %18, %c0_i32_10, %c0_i32_11] : memref<2x16x16x128xbf16, #tpu.memory_space<any>> -> memref<1x8x16x128xbf16, #tpu.memory_space<any>>
    %20 = tpu.memref_squeeze %19 : memref<1x8x16x128xbf16, #tpu.memory_space<any>> -> memref<8x16x128xbf16, #tpu.memory_space<any>>
    %c2_i32_12 = arith.constant 2 : i32
    %c0_i32_13 = arith.constant 0 : i32
    %c0_i32_14 = arith.constant 0 : i32
    %21 = tpu.memref_slice %arg8[%9, %c2_i32_12, %c0_i32_13, %c0_i32_14] : memref<2x12x16x128xbf16, #tpu.memory_space<vmem>> -> memref<1x8x16x128xbf16, #tpu.memory_space<vmem>>
    %22 = tpu.memref_squeeze %21 : memref<1x8x16x128xbf16, #tpu.memory_space<vmem>> -> memref<8x16x128xbf16, #tpu.memory_space<vmem>>
    %23 = tpu.memref_slice %arg9[%9, %c0_i32_9] : memref<2x3x!tpu.dma_semaphore, #tpu.memory_space<semaphore_mem>> -> memref<1x1x!tpu.dma_semaphore, #tpu.memory_space<semaphore_mem>>
    %24 = tpu.memref_squeeze %23 : memref<1x1x!tpu.dma_semaphore, #tpu.memory_space<semaphore_mem>> -> memref<!tpu.dma_semaphore, #tpu.memory_space<semaphore_mem>>
    tpu.wait_dma2 semaphore(%24 : memref<!tpu.dma_semaphore, #tpu.memory_space<semaphore_mem>>) src(%20 : memref<8x16x128xbf16, #tpu.memory_space<any>>) dst(%22 : memref<8x16x128xbf16, #tpu.memory_space<vmem>>)
    %c0_i32_15 = arith.constant 0 : i32
    %25 = arith.cmpi sgt, %arg1, %c0_i32_15 : i32
    %26 = arith.extui %25 : i1 to i32
    %c0_i32_16 = arith.constant 0 : i32
    %27 = arith.cmpi ne, %26, %c0_i32_16 : i32
    scf.if %27 {
      %c1_i32_52 = arith.constant 1 : i32
      %c0_i32_53 = arith.constant 0 : i32
      %c0_i32_54 = arith.constant 0 : i32
      %c0_i32_55 = arith.constant 0 : i32
      %86 = tpu.memref_slice %arg4[%arg0, %c0_i32_53, %c0_i32_54, %c0_i32_55] : memref<2x16x16x128xbf16, #tpu.memory_space<any>> -> memref<1x1x16x128xbf16, #tpu.memory_space<any>>
      %87 = tpu.memref_squeeze %86 : memref<1x1x16x128xbf16, #tpu.memory_space<any>> -> memref<1x16x128xbf16, #tpu.memory_space<any>>
      %c1_i32_56 = arith.constant 1 : i32
      %c0_i32_57 = arith.constant 0 : i32
      %c0_i32_58 = arith.constant 0 : i32
      %88 = tpu.memref_slice %arg8[%9, %c1_i32_56, %c0_i32_57, %c0_i32_58] : memref<2x12x16x128xbf16, #tpu.memory_space<vmem>> -> memref<1x1x16x128xbf16, #tpu.memory_space<vmem>>
      %89 = tpu.memref_squeeze %88 : memref<1x1x16x128xbf16, #tpu.memory_space<vmem>> -> memref<1x16x128xbf16, #tpu.memory_space<vmem>>
      %90 = tpu.memref_slice %arg9[%9, %c1_i32_52] : memref<2x3x!tpu.dma_semaphore, #tpu.memory_space<semaphore_mem>> -> memref<1x1x!tpu.dma_semaphore, #tpu.memory_space<semaphore_mem>>
      %91 = tpu.memref_squeeze %90 : memref<1x1x!tpu.dma_semaphore, #tpu.memory_space<semaphore_mem>> -> memref<!tpu.dma_semaphore, #tpu.memory_space<semaphore_mem>>
      tpu.wait_dma2 semaphore(%91 : memref<!tpu.dma_semaphore, #tpu.memory_space<semaphore_mem>>) src(%87 : memref<1x16x128xbf16, #tpu.memory_space<any>>) dst(%89 : memref<1x16x128xbf16, #tpu.memory_space<vmem>>)
    } else {
    }
    %c1_i32_17 = arith.constant 1 : i32
    %28 = arith.cmpi slt, %arg1, %c1_i32_17 : i32
    %29 = arith.extui %28 : i1 to i32
    %c0_i32_18 = arith.constant 0 : i32
    %30 = arith.cmpi ne, %29, %c0_i32_18 : i32
    scf.if %30 {
      %c2_i32_52 = arith.constant 2 : i32
      %c0_i32_53 = arith.constant 0 : i32
      %c0_i32_54 = arith.constant 0 : i32
      %c0_i32_55 = arith.constant 0 : i32
      %86 = tpu.memref_slice %arg4[%arg0, %c0_i32_53, %c0_i32_54, %c0_i32_55] : memref<2x16x16x128xbf16, #tpu.memory_space<any>> -> memref<1x1x16x128xbf16, #tpu.memory_space<any>>
      %87 = tpu.memref_squeeze %86 : memref<1x1x16x128xbf16, #tpu.memory_space<any>> -> memref<1x16x128xbf16, #tpu.memory_space<any>>
      %c10_i32 = arith.constant 10 : i32
      %c0_i32_56 = arith.constant 0 : i32
      %c0_i32_57 = arith.constant 0 : i32
      %88 = tpu.memref_slice %arg8[%9, %c10_i32, %c0_i32_56, %c0_i32_57] : memref<2x12x16x128xbf16, #tpu.memory_space<vmem>> -> memref<1x1x16x128xbf16, #tpu.memory_space<vmem>>
      %89 = tpu.memref_squeeze %88 : memref<1x1x16x128xbf16, #tpu.memory_space<vmem>> -> memref<1x16x128xbf16, #tpu.memory_space<vmem>>
      %90 = tpu.memref_slice %arg9[%9, %c2_i32_52] : memref<2x3x!tpu.dma_semaphore, #tpu.memory_space<semaphore_mem>> -> memref<1x1x!tpu.dma_semaphore, #tpu.memory_space<semaphore_mem>>
      %91 = tpu.memref_squeeze %90 : memref<1x1x!tpu.dma_semaphore, #tpu.memory_space<semaphore_mem>> -> memref<!tpu.dma_semaphore, #tpu.memory_space<semaphore_mem>>
      tpu.wait_dma2 semaphore(%91 : memref<!tpu.dma_semaphore, #tpu.memory_space<semaphore_mem>>) src(%87 : memref<1x16x128xbf16, #tpu.memory_space<any>>) dst(%89 : memref<1x16x128xbf16, #tpu.memory_space<vmem>>)
    } else {
    }
    %cst = arith.constant 0.000000e+00 : bf16
    %31 = vector.broadcast %cst : bf16 to vector<1x16x128xbf16>
    %c0_i32_19 = arith.constant 0 : i32
    %32 = arith.cmpi eq, %arg1, %c0_i32_19 : i32
    %33 = arith.extui %32 : i1 to i32
    %c0_i32_20 = arith.constant 0 : i32
    %34 = arith.cmpi ne, %33, %c0_i32_20 : i32
    scf.if %34 {
      %86 = arith.index_cast %9 : i32 to index
      %c1_52 = arith.constant 1 : index
      %c0_53 = arith.constant 0 : index
      %c0_54 = arith.constant 0 : index
      %87 = vector.load %arg8[%86, %c1_52, %c0_53, %c0_54] : memref<2x12x16x128xbf16, #tpu.memory_space<vmem>>, vector<1x1x16x128xbf16>
      %88 = vector.shape_cast %87 : vector<1x1x16x128xbf16> to vector<1x16x128xbf16>
      %89 = vector.shape_cast %31 : vector<1x16x128xbf16> to vector<1x1x16x128xbf16>
      tpu.vector_store %arg8[%86, %c1_52, %c0_53, %c0_54], %89 {strides = array<i32>} : memref<2x12x16x128xbf16, #tpu.memory_space<vmem>>, vector<1x1x16x128xbf16>,
    } else {
    }
    %c1_i32_21 = arith.constant 1 : i32
    %35 = arith.cmpi eq, %arg1, %c1_i32_21 : i32
    %36 = arith.extui %35 : i1 to i32
    %c0_i32_22 = arith.constant 0 : i32
    %37 = arith.cmpi ne, %36, %c0_i32_22 : i32
    scf.if %37 {
      %86 = arith.index_cast %9 : i32 to index
      %c10 = arith.constant 10 : index
      %c0_52 = arith.constant 0 : index
      %c0_53 = arith.constant 0 : index
      %87 = vector.load %arg8[%86, %c10, %c0_52, %c0_53] : memref<2x12x16x128xbf16, #tpu.memory_space<vmem>>, vector<1x1x16x128xbf16>
      %88 = vector.shape_cast %87 : vector<1x1x16x128xbf16> to vector<1x16x128xbf16>
      %89 = vector.shape_cast %31 : vector<1x16x128xbf16> to vector<1x1x16x128xbf16>
      tpu.vector_store %arg8[%86, %c10, %c0_52, %c0_53], %89 {strides = array<i32>} : memref<2x12x16x128xbf16, #tpu.memory_space<vmem>>, vector<1x1x16x128xbf16>,
    } else {
    }
    %38 = arith.index_cast %9 : i32 to index
    %c0 = arith.constant 0 : index
    %c0_23 = arith.constant 0 : index
    %c0_24 = arith.constant 0 : index
    %39 = vector.load %arg8[%38, %c0, %c0_23, %c0_24] : memref<2x12x16x128xbf16, #tpu.memory_space<vmem>>, vector<1x12x16x128xbf16>
    %40 = vector.shape_cast %39 : vector<1x12x16x128xbf16> to vector<12x16x128xbf16>
    %41 = vector.shape_cast %40 : vector<12x16x128xbf16> to vector<192x128xbf16>
    %42 = tpu.iota {dimensions = array<i32: 1>} : vector<10x16x128xi32>
    %43 = vector.shape_cast %42 : vector<10x16x128xi32> to vector<160x128xi32>
    %c0_i32_25 = arith.constant 0 : i32
    %44 = vector.broadcast %c0_i32_25 : i32 to vector<160x128xi32>
    %45 = arith.cmpi eq, %43, %44 : vector<160x128xi32>
    %46 = vector.extract_strided_slice %41 {offsets = [15, 0], sizes = [160, 128], strides = [1, 1]} : vector<192x128xbf16> to vector<160x128xbf16>
    %cst_26 = arith.constant 0.000000e+00 : bf16
    %47 = vector.broadcast %cst_26 : bf16 to vector<160x128xbf16>
    %48 = arith.select %45, %47, %46 : vector<160x128xi1>, vector<160x128xbf16>
    %49 = vector.extract_strided_slice %41 {offsets = [16, 0], sizes = [160, 128], strides = [1, 1]} : vector<192x128xbf16> to vector<160x128xbf16>
    %c15_i32 = arith.constant 15 : i32
    %50 = vector.broadcast %c15_i32 : i32 to vector<160x128xi32>
    %51 = arith.cmpi eq, %43, %50 : vector<160x128xi32>
    %52 = vector.extract_strided_slice %41 {offsets = [17, 0], sizes = [160, 128], strides = [1, 1]} : vector<192x128xbf16> to vector<160x128xbf16>
    %cst_27 = arith.constant 0.000000e+00 : bf16
    %53 = vector.broadcast %cst_27 : bf16 to vector<160x128xbf16>
    %54 = arith.select %51, %53, %52 : vector<160x128xi1>, vector<160x128xbf16>
    %55 = tpu.concatenate %48, %49, %54 in 1 : vector<160x128xbf16>, vector<160x128xbf16>, vector<160x128xbf16> -> vector<160x384xbf16>
    %56 = vector.extract_strided_slice %55 {offsets = [0, 0], sizes = [128, 384], strides = [1, 1]} : vector<160x384xbf16> to vector<128x384xbf16>
    %c0_28 = arith.constant 0 : index
    %c0_29 = arith.constant 0 : index
    %c0_30 = arith.constant 0 : index
    %57 = vector.load %arg5[%c0_28, %c0_29, %c0_30] : memref<3x384x128xbf16, #tpu.memory_space<vmem>>, vector<1x384x128xbf16>
    %58 = vector.shape_cast %57 : vector<1x384x128xbf16> to vector<384x128xbf16>
    %cst_31 = arith.constant dense<0.000000e+00> : vector<128x128xf32>
    %59 = tpu.matmul %56, %58, %cst_31 {dimension_numbers = #tpu.dot_dimension_numbers<[1], [0], [0], [1], [0, 0, 1, 1], [], []>} : vector<128x384xbf16>, vector<384x128xbf16>, vector<128x128xf32> -> vector<128x128xf32>
    %60 = vector.extract_strided_slice %55 {offsets = [16, 0], sizes = [128, 384], strides = [1, 1]} : vector<160x384xbf16> to vector<128x384xbf16>
    %c1 = arith.constant 1 : index
    %c0_32 = arith.constant 0 : index
    %c0_33 = arith.constant 0 : index
    %61 = vector.load %arg5[%c1, %c0_32, %c0_33] : memref<3x384x128xbf16, #tpu.memory_space<vmem>>, vector<1x384x128xbf16>
    %62 = vector.shape_cast %61 : vector<1x384x128xbf16> to vector<384x128xbf16>
    %cst_34 = arith.constant dense<0.000000e+00> : vector<128x128xf32>
    %63 = tpu.matmul %60, %62, %cst_34 {dimension_numbers = #tpu.dot_dimension_numbers<[1], [0], [0], [1], [0, 0, 1, 1], [], []>} : vector<128x384xbf16>, vector<384x128xbf16>, vector<128x128xf32> -> vector<128x128xf32>
    %64 = arith.addf %59, %63 : vector<128x128xf32>
    %65 = vector.extract_strided_slice %55 {offsets = [32, 0], sizes = [128, 384], strides = [1, 1]} : vector<160x384xbf16> to vector<128x384xbf16>
    %c2 = arith.constant 2 : index
    %c0_35 = arith.constant 0 : index
    %c0_36 = arith.constant 0 : index
    %66 = vector.load %arg5[%c2, %c0_35, %c0_36] : memref<3x384x128xbf16, #tpu.memory_space<vmem>>, vector<1x384x128xbf16>
    %67 = vector.shape_cast %66 : vector<1x384x128xbf16> to vector<384x128xbf16>
    %cst_37 = arith.constant dense<0.000000e+00> : vector<128x128xf32>
    %68 = tpu.matmul %65, %67, %cst_37 {dimension_numbers = #tpu.dot_dimension_numbers<[1], [0], [0], [1], [0, 0, 1, 1], [], []>} : vector<128x384xbf16>, vector<384x128xbf16>, vector<128x128xf32> -> vector<128x128xf32>
    %69 = arith.addf %64, %68 : vector<128x128xf32>
    %70 = vector.shape_cast %69 : vector<128x128xf32> to vector<8x16x128xf32>
    %71 = arith.truncf %70 : vector<8x16x128xf32> to vector<8x16x128xbf16>
    %c0_38 = arith.constant 0 : index
    %c0_39 = arith.constant 0 : index
    %c0_40 = arith.constant 0 : index
    %c0_41 = arith.constant 0 : index
    %72 = vector.load %arg6[%c0_38, %c0_39, %c0_40, %c0_41] : memref<1x8x16x128xbf16, #tpu.memory_space<vmem>>, vector<1x8x16x128xbf16>
    %73 = vector.shape_cast %72 : vector<1x8x16x128xbf16> to vector<8x16x128xbf16>
    %74 = vector.shape_cast %71 : vector<8x16x128xbf16> to vector<1x8x16x128xbf16>
    tpu.vector_store %arg6[%c0_38, %c0_39, %c0_40, %c0_41], %74 {strides = array<i32>} : memref<1x8x16x128xbf16, #tpu.memory_space<vmem>>, vector<1x8x16x128xbf16>,
    %cst_42 = arith.constant dense<0.000000e+00> : vector<128xf32>
    %75 = vector.multi_reduction <add>, %69, %cst_42 [0] : vector<128x128xf32> to vector<128xf32>
    %76 = vector.shape_cast %75 : vector<128xf32> to vector<1x128xf32>
    %c0_43 = arith.constant 0 : index
    %c0_44 = arith.constant 0 : index
    %c0_45 = arith.constant 0 : index
    %c0_46 = arith.constant 0 : index
    %77 = vector.load %arg7[%c0_43, %c0_44, %c0_45, %c0_46] : memref<1x1x8x128xf32, #tpu.memory_space<vmem>>, vector<1x1x1x128xf32>
    %78 = vector.shape_cast %77 : vector<1x1x1x128xf32> to vector<1x128xf32>
    %79 = vector.shape_cast %76 : vector<1x128xf32> to vector<1x1x1x128xf32>
    tpu.vector_store %arg7[%c0_43, %c0_44, %c0_45, %c0_46], %79 {strides = array<i32>} : memref<1x1x8x128xf32, #tpu.memory_space<vmem>>, vector<1x1x1x128xf32>,
    %80 = arith.mulf %69, %69 : vector<128x128xf32>
    %cst_47 = arith.constant dense<0.000000e+00> : vector<128xf32>
    %81 = vector.multi_reduction <add>, %80, %cst_47 [0] : vector<128x128xf32> to vector<128xf32>
    %82 = vector.shape_cast %81 : vector<128xf32> to vector<1x128xf32>
    %c0_48 = arith.constant 0 : index
    %c0_49 = arith.constant 0 : index
    %c1_50 = arith.constant 1 : index
    %c0_51 = arith.constant 0 : index
    %83 = vector.load %arg7[%c0_48, %c0_49, %c1_50, %c0_51] : memref<1x1x8x128xf32, #tpu.memory_space<vmem>>, vector<1x1x1x128xf32>
    %84 = vector.shape_cast %83 : vector<1x1x1x128xf32> to vector<1x128xf32>
    %85 = vector.shape_cast %82 : vector<1x128xf32> to vector<1x1x1x128xf32>
    tpu.vector_store %arg7[%c0_48, %c0_49, %c1_50, %c0_51], %85 {strides = array<i32>} : memref<1x1x8x128xf32, #tpu.memory_space<vmem>>, vector<1x1x1x128xf32>,
    return
  }
  func.func @transform_0(%arg0: i32, %arg1: i32) -> (i32, i32) {
    %c0_i32 = arith.constant 0 : i32
    %c0_i32_0 = arith.constant 0 : i32
    %c0_i32_1 = arith.constant 0 : i32
    return %c0_i32, %c0_i32_0 : i32, i32
  }
  func.func @transform_1(%arg0: i32, %arg1: i32) -> (i32, i32) {
    %c0_i32 = arith.constant 0 : i32
    %c0_i32_0 = arith.constant 0 : i32
    %c0_i32_1 = arith.constant 0 : i32
    return %c0_i32, %c0_i32_0 : i32, i32
  }
  func.func @transform_3(%arg0: i32, %arg1: i32) -> (i32, i32, i32) {
    %c0_i32 = arith.constant 0 : i32
    %c0_i32_0 = arith.constant 0 : i32
    %c0_i32_1 = arith.constant 0 : i32
    %c0_i32_2 = arith.constant 0 : i32
    return %c0_i32, %c0_i32_0, %c0_i32_1 : i32, i32, i32
  }
  func.func @transform_4(%arg0: i32, %arg1: i32) -> (i32, i32, i32, i32) {
    %c0_i32 = arith.constant 0 : i32
    %c0_i32_0 = arith.constant 0 : i32
    %c0_i32_1 = arith.constant 0 : i32
    return %arg0, %arg1, %c0_i32, %c0_i32_0 : i32, i32, i32, i32
  }
  func.func @transform_5(%arg0: i32, %arg1: i32) -> (i32, i32, i32, i32) {
    %c0_i32 = arith.constant 0 : i32
    %c0_i32_0 = arith.constant 0 : i32
    %c0_i32_1 = arith.constant 0 : i32
    return %arg0, %arg1, %c0_i32, %c0_i32_0 : i32, i32, i32, i32
  }
}

module attributes {stable_mosaic.version = 11 : i64} {
  func.func @kernel(%arg0: i32, %arg1: i32, %arg2: memref<1x8x16x128xbf16, #tpu.memory_space<vmem>>, %arg3: memref<1x128xf32, #tpu.memory_space<vmem>>, %arg4: memref<1x128xf32, #tpu.memory_space<vmem>>, %arg5: memref<1x8x128xf32, #tpu.memory_space<vmem>>) attributes {dimension_semantics = [#tpu.dimension_semantics<parallel>, #tpu.dimension_semantics<parallel>], iteration_bounds = array<i64: 2, 2>, scalar_prefetch = 0 : i64, scratch_operands = 0 : i64, tpu.core_type = #tpu.core_type<tc>, window_params = [{transform_indices = @transform_0, window_bounds = array<i64: 1, 8, 16, 128>}, {pipeline_mode = #tpu.pipeline_mode<synchronous>, transform_indices = @transform_1, window_bounds = array<i64: 1, 128>}, {pipeline_mode = #tpu.pipeline_mode<synchronous>, transform_indices = @transform_2, window_bounds = array<i64: 1, 128>}, {transform_indices = @transform_3, window_bounds = array<i64: 1, 8, 128>}]} {
    %c0 = arith.constant 0 : index
    %c0_0 = arith.constant 0 : index
    %c0_1 = arith.constant 0 : index
    %c0_2 = arith.constant 0 : index
    %0 = vector.load %arg2[%c0, %c0_0, %c0_1, %c0_2] : memref<1x8x16x128xbf16, #tpu.memory_space<vmem>>, vector<1x8x16x128xbf16>
    %1 = vector.shape_cast %0 : vector<1x8x16x128xbf16> to vector<8x16x128xbf16>
    %2 = arith.extf %1 : vector<8x16x128xbf16> to vector<8x16x128xf32>
    %3 = vector.shape_cast %2 : vector<8x16x128xf32> to vector<128x128xf32>
    %c0_3 = arith.constant 0 : index
    %c0_4 = arith.constant 0 : index
    %4 = vector.load %arg3[%c0_3, %c0_4] : memref<1x128xf32, #tpu.memory_space<vmem>>, vector<1x128xf32>
    %5 = vector.broadcast %4 : vector<1x128xf32> to vector<128x128xf32>
    %6 = arith.mulf %3, %5 : vector<128x128xf32>
    %c0_5 = arith.constant 0 : index
    %c0_6 = arith.constant 0 : index
    %7 = vector.load %arg4[%c0_5, %c0_6] : memref<1x128xf32, #tpu.memory_space<vmem>>, vector<1x128xf32>
    %8 = vector.broadcast %7 : vector<1x128xf32> to vector<128x128xf32>
    %9 = arith.addf %6, %8 : vector<128x128xf32>
    %cst = arith.constant 0.000000e+00 : f32
    %10 = vector.broadcast %cst : f32 to vector<128x128xf32>
    %11 = arith.maximumf %9, %10 : vector<128x128xf32>
    %12 = vector.extract_strided_slice %11 {offsets = [0, 0], sizes = [128, 8], strides = [1, 1]} : vector<128x128xf32> to vector<128x8xf32>
    %13 = tpu.transpose %12, [1, 0] : vector<128x8xf32> -> vector<8x128xf32>
    %c0_7 = arith.constant 0 : index
    %c0_8 = arith.constant 0 : index
    %c0_9 = arith.constant 0 : index
    %14 = vector.load %arg5[%c0_7, %c0_8, %c0_9] : memref<1x8x128xf32, #tpu.memory_space<vmem>>, vector<1x8x128xf32>
    %15 = vector.shape_cast %14 : vector<1x8x128xf32> to vector<8x128xf32>
    %16 = vector.shape_cast %13 : vector<8x128xf32> to vector<1x8x128xf32>
    tpu.vector_store %arg5[%c0_7, %c0_8, %c0_9], %16 {strides = array<i32>} : memref<1x8x128xf32, #tpu.memory_space<vmem>>, vector<1x8x128xf32>,
    return
  }
  func.func @transform_0(%arg0: i32, %arg1: i32) -> (i32, i32, i32, i32) {
    %c0_i32 = arith.constant 0 : i32
    %c0_i32_0 = arith.constant 0 : i32
    %c0_i32_1 = arith.constant 0 : i32
    return %arg0, %arg1, %c0_i32, %c0_i32_0 : i32, i32, i32, i32
  }
  func.func @transform_1(%arg0: i32, %arg1: i32) -> (i32, i32) {
    %c0_i32 = arith.constant 0 : i32
    %c0_i32_0 = arith.constant 0 : i32
    %c0_i32_1 = arith.constant 0 : i32
    return %c0_i32, %c0_i32_0 : i32, i32
  }
  func.func @transform_2(%arg0: i32, %arg1: i32) -> (i32, i32) {
    %c0_i32 = arith.constant 0 : i32
    %c0_i32_0 = arith.constant 0 : i32
    %c0_i32_1 = arith.constant 0 : i32
    return %c0_i32, %c0_i32_0 : i32, i32
  }
  func.func @transform_3(%arg0: i32, %arg1: i32) -> (i32, i32, i32) {
    %c0_i32 = arith.constant 0 : i32
    %c0_i32_0 = arith.constant 0 : i32
    return %arg0, %c0_i32, %arg1 : i32, i32, i32
  }
}

module attributes {stable_mosaic.version = 11 : i64} {
  func.func @kernel(%arg0: i32, %arg1: i32, %arg2: memref<1x128xf32, #tpu.memory_space<vmem>>, %arg3: memref<1x128xf32, #tpu.memory_space<vmem>>, %arg4: memref<2x16x16x128xbf16, #tpu.memory_space<any>>, %arg5: memref<3x384x128xbf16, #tpu.memory_space<vmem>>, %arg6: memref<1x8x16x128xbf16, #tpu.memory_space<vmem>>, %arg7: memref<1x1x8x128xf32, #tpu.memory_space<vmem>>, %arg8: memref<2x12x16x128xbf16, #tpu.memory_space<vmem>>, %arg9: memref<2x3x!tpu.dma_semaphore, #tpu.memory_space<semaphore_mem>>) attributes {dimension_semantics = [#tpu.dimension_semantics<parallel>, #tpu.dimension_semantics<arbitrary>], iteration_bounds = array<i64: 2, 2>, scalar_prefetch = 0 : i64, scratch_operands = 2 : i64, tpu.core_type = #tpu.core_type<tc>, window_params = [{pipeline_mode = #tpu.pipeline_mode<synchronous>, transform_indices = @transform_0, window_bounds = array<i64: 1, 128>}, {pipeline_mode = #tpu.pipeline_mode<synchronous>, transform_indices = @transform_1, window_bounds = array<i64: 1, 128>}, {}, {pipeline_mode = #tpu.pipeline_mode<synchronous>, transform_indices = @transform_3, window_bounds = array<i64: 3, 384, 128>}, {transform_indices = @transform_4, window_bounds = array<i64: 1, 8, 16, 128>}, {transform_indices = @transform_5, window_bounds = array<i64: 1, 1, 8, 128>}]} {
    %c2_i32 = arith.constant 2 : i32
    %c0_i32 = arith.constant 0 : i32
    %0 = arith.cmpi eq, %c2_i32, %c0_i32 : i32
    %c1_i32 = arith.constant 1 : i32
    %1 = arith.select %0, %c1_i32, %c2_i32 : i32
    %2 = arith.remsi %arg1, %1 : i32
    %c0_i32_0 = arith.constant 0 : i32
    %3 = arith.cmpi ne, %2, %c0_i32_0 : i32
    %c0_i32_1 = arith.constant 0 : i32
    %4 = arith.cmpi slt, %2, %c0_i32_1 : i32
    %c0_i32_2 = arith.constant 0 : i32
    %5 = arith.cmpi slt, %1, %c0_i32_2 : i32
    %6 = arith.xori %4, %5 : i1
    %7 = arith.andi %6, %3 : i1
    %8 = arith.addi %2, %1 : i32
    %9 = arith.select %7, %8, %2 : i32
    %c1_i32_3 = arith.constant 1 : i32
    %10 = arith.subi %c1_i32_3, %9 : i32
    %c0_i32_4 = arith.constant 0 : i32
    %11 = arith.cmpi eq, %arg1, %c0_i32_4 : i32
    %12 = arith.extui %11 : i1 to i32
    %c0_i32_5 = arith.constant 0 : i32
    %13 = arith.cmpi ne, %12, %c0_i32_5 : i32
    scf.if %13 {
      %c8_i32_63 = arith.constant 8 : i32
      %105 = arith.muli %arg1, %c8_i32_63 : i32
      %c0_i32_64 = arith.constant 0 : i32
      %c0_i32_65 = arith.constant 0 : i32
      %c0_i32_66 = arith.constant 0 : i32
      %106 = tpu.memref_slice %arg4[%arg0, %105, %c0_i32_65, %c0_i32_66] : memref<2x16x16x128xbf16, #tpu.memory_space<any>> -> memref<1x8x16x128xbf16, #tpu.memory_space<any>>
      %107 = tpu.memref_squeeze %106 : memref<1x8x16x128xbf16, #tpu.memory_space<any>> -> memref<8x16x128xbf16, #tpu.memory_space<any>>
      %c2_i32_67 = arith.constant 2 : i32
      %c0_i32_68 = arith.constant 0 : i32
      %c0_i32_69 = arith.constant 0 : i32
      %108 = tpu.memref_slice %arg8[%9, %c2_i32_67, %c0_i32_68, %c0_i32_69] : memref<2x12x16x128xbf16, #tpu.memory_space<vmem>> -> memref<1x8x16x128xbf16, #tpu.memory_space<vmem>>
      %109 = tpu.memref_squeeze %108 : memref<1x8x16x128xbf16, #tpu.memory_space<vmem>> -> memref<8x16x128xbf16, #tpu.memory_space<vmem>>
      %110 = tpu.memref_slice %arg9[%9, %c0_i32_64] : memref<2x3x!tpu.dma_semaphore, #tpu.memory_space<semaphore_mem>> -> memref<1x1x!tpu.dma_semaphore, #tpu.memory_space<semaphore_mem>>
      %111 = tpu.memref_squeeze %110 : memref<1x1x!tpu.dma_semaphore, #tpu.memory_space<semaphore_mem>> -> memref<!tpu.dma_semaphore, #tpu.memory_space<semaphore_mem>>
      tpu.enqueue_dma source(%107 : memref<8x16x128xbf16, #tpu.memory_space<any>>) target(%109 : memref<8x16x128xbf16, #tpu.memory_space<vmem>>) target_semaphore(%111 : memref<!tpu.dma_semaphore, #tpu.memory_space<semaphore_mem>>)
      %c0_i32_70 = arith.constant 0 : i32
      %112 = arith.cmpi sgt, %arg1, %c0_i32_70 : i32
      %113 = arith.extui %112 : i1 to i32
      %c0_i32_71 = arith.constant 0 : i32
      %114 = arith.cmpi ne, %113, %c0_i32_71 : i32
      scf.if %114 {
        %c1_i32_74 = arith.constant 1 : i32
        %118 = arith.subi %105, %c1_i32_74 : i32
        %c1_i32_75 = arith.constant 1 : i32
        %c0_i32_76 = arith.constant 0 : i32
        %c0_i32_77 = arith.constant 0 : i32
        %119 = tpu.memref_slice %arg4[%arg0, %118, %c0_i32_76, %c0_i32_77] : memref<2x16x16x128xbf16, #tpu.memory_space<any>> -> memref<1x1x16x128xbf16, #tpu.memory_space<any>>
        %120 = tpu.memref_squeeze %119 : memref<1x1x16x128xbf16, #tpu.memory_space<any>> -> memref<1x16x128xbf16, #tpu.memory_space<any>>
        %c1_i32_78 = arith.constant 1 : i32
        %c0_i32_79 = arith.constant 0 : i32
        %c0_i32_80 = arith.constant 0 : i32
        %121 = tpu.memref_slice %arg8[%9, %c1_i32_78, %c0_i32_79, %c0_i32_80] : memref<2x12x16x128xbf16, #tpu.memory_space<vmem>> -> memref<1x1x16x128xbf16, #tpu.memory_space<vmem>>
        %122 = tpu.memref_squeeze %121 : memref<1x1x16x128xbf16, #tpu.memory_space<vmem>> -> memref<1x16x128xbf16, #tpu.memory_space<vmem>>
        %123 = tpu.memref_slice %arg9[%9, %c1_i32_75] : memref<2x3x!tpu.dma_semaphore, #tpu.memory_space<semaphore_mem>> -> memref<1x1x!tpu.dma_semaphore, #tpu.memory_space<semaphore_mem>>
        %124 = tpu.memref_squeeze %123 : memref<1x1x!tpu.dma_semaphore, #tpu.memory_space<semaphore_mem>> -> memref<!tpu.dma_semaphore, #tpu.memory_space<semaphore_mem>>
        tpu.enqueue_dma source(%120 : memref<1x16x128xbf16, #tpu.memory_space<any>>) target(%122 : memref<1x16x128xbf16, #tpu.memory_space<vmem>>) target_semaphore(%124 : memref<!tpu.dma_semaphore, #tpu.memory_space<semaphore_mem>>)
      } else {
      }
      %c1_i32_72 = arith.constant 1 : i32
      %115 = arith.cmpi slt, %arg1, %c1_i32_72 : i32
      %116 = arith.extui %115 : i1 to i32
      %c0_i32_73 = arith.constant 0 : i32
      %117 = arith.cmpi ne, %116, %c0_i32_73 : i32
      scf.if %117 {
        %c8_i32_74 = arith.constant 8 : i32
        %118 = arith.addi %105, %c8_i32_74 : i32
        %c2_i32_75 = arith.constant 2 : i32
        %c0_i32_76 = arith.constant 0 : i32
        %c0_i32_77 = arith.constant 0 : i32
        %119 = tpu.memref_slice %arg4[%arg0, %118, %c0_i32_76, %c0_i32_77] : memref<2x16x16x128xbf16, #tpu.memory_space<any>> -> memref<1x1x16x128xbf16, #tpu.memory_space<any>>
        %120 = tpu.memref_squeeze %119 : memref<1x1x16x128xbf16, #tpu.memory_space<any>> -> memref<1x16x128xbf16, #tpu.memory_space<any>>
        %c10_i32 = arith.constant 10 : i32
        %c0_i32_78 = arith.constant 0 : i32
        %c0_i32_79 = arith.constant 0 : i32
        %121 = tpu.memref_slice %arg8[%9, %c10_i32, %c0_i32_78, %c0_i32_79] : memref<2x12x16x128xbf16, #tpu.memory_space<vmem>> -> memref<1x1x16x128xbf16, #tpu.memory_space<vmem>>
        %122 = tpu.memref_squeeze %121 : memref<1x1x16x128xbf16, #tpu.memory_space<vmem>> -> memref<1x16x128xbf16, #tpu.memory_space<vmem>>
        %123 = tpu.memref_slice %arg9[%9, %c2_i32_75] : memref<2x3x!tpu.dma_semaphore, #tpu.memory_space<semaphore_mem>> -> memref<1x1x!tpu.dma_semaphore, #tpu.memory_space<semaphore_mem>>
        %124 = tpu.memref_squeeze %123 : memref<1x1x!tpu.dma_semaphore, #tpu.memory_space<semaphore_mem>> -> memref<!tpu.dma_semaphore, #tpu.memory_space<semaphore_mem>>
        tpu.enqueue_dma source(%120 : memref<1x16x128xbf16, #tpu.memory_space<any>>) target(%122 : memref<1x16x128xbf16, #tpu.memory_space<vmem>>) target_semaphore(%124 : memref<!tpu.dma_semaphore, #tpu.memory_space<semaphore_mem>>)
      } else {
      }
    } else {
    }
    %c1_i32_6 = arith.constant 1 : i32
    %14 = arith.addi %arg1, %c1_i32_6 : i32
    %c2_i32_7 = arith.constant 2 : i32
    %15 = arith.cmpi slt, %14, %c2_i32_7 : i32
    %16 = arith.extui %15 : i1 to i32
    %c0_i32_8 = arith.constant 0 : i32
    %17 = arith.cmpi ne, %16, %c0_i32_8 : i32
    scf.if %17 {
      %c1_i32_63 = arith.constant 1 : i32
      %105 = arith.addi %arg1, %c1_i32_63 : i32
      %c8_i32_64 = arith.constant 8 : i32
      %106 = arith.muli %105, %c8_i32_64 : i32
      %c0_i32_65 = arith.constant 0 : i32
      %c0_i32_66 = arith.constant 0 : i32
      %c0_i32_67 = arith.constant 0 : i32
      %107 = tpu.memref_slice %arg4[%arg0, %106, %c0_i32_66, %c0_i32_67] : memref<2x16x16x128xbf16, #tpu.memory_space<any>> -> memref<1x8x16x128xbf16, #tpu.memory_space<any>>
      %108 = tpu.memref_squeeze %107 : memref<1x8x16x128xbf16, #tpu.memory_space<any>> -> memref<8x16x128xbf16, #tpu.memory_space<any>>
      %c2_i32_68 = arith.constant 2 : i32
      %c0_i32_69 = arith.constant 0 : i32
      %c0_i32_70 = arith.constant 0 : i32
      %109 = tpu.memref_slice %arg8[%10, %c2_i32_68, %c0_i32_69, %c0_i32_70] : memref<2x12x16x128xbf16, #tpu.memory_space<vmem>> -> memref<1x8x16x128xbf16, #tpu.memory_space<vmem>>
      %110 = tpu.memref_squeeze %109 : memref<1x8x16x128xbf16, #tpu.memory_space<vmem>> -> memref<8x16x128xbf16, #tpu.memory_space<vmem>>
      %111 = tpu.memref_slice %arg9[%10, %c0_i32_65] : memref<2x3x!tpu.dma_semaphore, #tpu.memory_space<semaphore_mem>> -> memref<1x1x!tpu.dma_semaphore, #tpu.memory_space<semaphore_mem>>
      %112 = tpu.memref_squeeze %111 : memref<1x1x!tpu.dma_semaphore, #tpu.memory_space<semaphore_mem>> -> memref<!tpu.dma_semaphore, #tpu.memory_space<semaphore_mem>>
      tpu.enqueue_dma source(%108 : memref<8x16x128xbf16, #tpu.memory_space<any>>) target(%110 : memref<8x16x128xbf16, #tpu.memory_space<vmem>>) target_semaphore(%112 : memref<!tpu.dma_semaphore, #tpu.memory_space<semaphore_mem>>)
      %c0_i32_71 = arith.constant 0 : i32
      %113 = arith.cmpi sgt, %105, %c0_i32_71 : i32
      %114 = arith.extui %113 : i1 to i32
      %c0_i32_72 = arith.constant 0 : i32
      %115 = arith.cmpi ne, %114, %c0_i32_72 : i32
      scf.if %115 {
        %c1_i32_75 = arith.constant 1 : i32
        %119 = arith.subi %106, %c1_i32_75 : i32
        %c1_i32_76 = arith.constant 1 : i32
        %c0_i32_77 = arith.constant 0 : i32
        %c0_i32_78 = arith.constant 0 : i32
        %120 = tpu.memref_slice %arg4[%arg0, %119, %c0_i32_77, %c0_i32_78] : memref<2x16x16x128xbf16, #tpu.memory_space<any>> -> memref<1x1x16x128xbf16, #tpu.memory_space<any>>
        %121 = tpu.memref_squeeze %120 : memref<1x1x16x128xbf16, #tpu.memory_space<any>> -> memref<1x16x128xbf16, #tpu.memory_space<any>>
        %c1_i32_79 = arith.constant 1 : i32
        %c0_i32_80 = arith.constant 0 : i32
        %c0_i32_81 = arith.constant 0 : i32
        %122 = tpu.memref_slice %arg8[%10, %c1_i32_79, %c0_i32_80, %c0_i32_81] : memref<2x12x16x128xbf16, #tpu.memory_space<vmem>> -> memref<1x1x16x128xbf16, #tpu.memory_space<vmem>>
        %123 = tpu.memref_squeeze %122 : memref<1x1x16x128xbf16, #tpu.memory_space<vmem>> -> memref<1x16x128xbf16, #tpu.memory_space<vmem>>
        %124 = tpu.memref_slice %arg9[%10, %c1_i32_76] : memref<2x3x!tpu.dma_semaphore, #tpu.memory_space<semaphore_mem>> -> memref<1x1x!tpu.dma_semaphore, #tpu.memory_space<semaphore_mem>>
        %125 = tpu.memref_squeeze %124 : memref<1x1x!tpu.dma_semaphore, #tpu.memory_space<semaphore_mem>> -> memref<!tpu.dma_semaphore, #tpu.memory_space<semaphore_mem>>
        tpu.enqueue_dma source(%121 : memref<1x16x128xbf16, #tpu.memory_space<any>>) target(%123 : memref<1x16x128xbf16, #tpu.memory_space<vmem>>) target_semaphore(%125 : memref<!tpu.dma_semaphore, #tpu.memory_space<semaphore_mem>>)
      } else {
      }
      %c1_i32_73 = arith.constant 1 : i32
      %116 = arith.cmpi slt, %105, %c1_i32_73 : i32
      %117 = arith.extui %116 : i1 to i32
      %c0_i32_74 = arith.constant 0 : i32
      %118 = arith.cmpi ne, %117, %c0_i32_74 : i32
      scf.if %118 {
        %c8_i32_75 = arith.constant 8 : i32
        %119 = arith.addi %106, %c8_i32_75 : i32
        %c2_i32_76 = arith.constant 2 : i32
        %c0_i32_77 = arith.constant 0 : i32
        %c0_i32_78 = arith.constant 0 : i32
        %120 = tpu.memref_slice %arg4[%arg0, %119, %c0_i32_77, %c0_i32_78] : memref<2x16x16x128xbf16, #tpu.memory_space<any>> -> memref<1x1x16x128xbf16, #tpu.memory_space<any>>
        %121 = tpu.memref_squeeze %120 : memref<1x1x16x128xbf16, #tpu.memory_space<any>> -> memref<1x16x128xbf16, #tpu.memory_space<any>>
        %c10_i32 = arith.constant 10 : i32
        %c0_i32_79 = arith.constant 0 : i32
        %c0_i32_80 = arith.constant 0 : i32
        %122 = tpu.memref_slice %arg8[%10, %c10_i32, %c0_i32_79, %c0_i32_80] : memref<2x12x16x128xbf16, #tpu.memory_space<vmem>> -> memref<1x1x16x128xbf16, #tpu.memory_space<vmem>>
        %123 = tpu.memref_squeeze %122 : memref<1x1x16x128xbf16, #tpu.memory_space<vmem>> -> memref<1x16x128xbf16, #tpu.memory_space<vmem>>
        %124 = tpu.memref_slice %arg9[%10, %c2_i32_76] : memref<2x3x!tpu.dma_semaphore, #tpu.memory_space<semaphore_mem>> -> memref<1x1x!tpu.dma_semaphore, #tpu.memory_space<semaphore_mem>>
        %125 = tpu.memref_squeeze %124 : memref<1x1x!tpu.dma_semaphore, #tpu.memory_space<semaphore_mem>> -> memref<!tpu.dma_semaphore, #tpu.memory_space<semaphore_mem>>
        tpu.enqueue_dma source(%121 : memref<1x16x128xbf16, #tpu.memory_space<any>>) target(%123 : memref<1x16x128xbf16, #tpu.memory_space<vmem>>) target_semaphore(%125 : memref<!tpu.dma_semaphore, #tpu.memory_space<semaphore_mem>>)
      } else {
      }
    } else {
    }
    %c8_i32 = arith.constant 8 : i32
    %18 = arith.muli %arg1, %c8_i32 : i32
    %c0_i32_9 = arith.constant 0 : i32
    %c0_i32_10 = arith.constant 0 : i32
    %c0_i32_11 = arith.constant 0 : i32
    %19 = tpu.memref_slice %arg4[%arg0, %18, %c0_i32_10, %c0_i32_11] : memref<2x16x16x128xbf16, #tpu.memory_space<any>> -> memref<1x8x16x128xbf16, #tpu.memory_space<any>>
    %20 = tpu.memref_squeeze %19 : memref<1x8x16x128xbf16, #tpu.memory_space<any>> -> memref<8x16x128xbf16, #tpu.memory_space<any>>
    %c2_i32_12 = arith.constant 2 : i32
    %c0_i32_13 = arith.constant 0 : i32
    %c0_i32_14 = arith.constant 0 : i32
    %21 = tpu.memref_slice %arg8[%9, %c2_i32_12, %c0_i32_13, %c0_i32_14] : memref<2x12x16x128xbf16, #tpu.memory_space<vmem>> -> memref<1x8x16x128xbf16, #tpu.memory_space<vmem>>
    %22 = tpu.memref_squeeze %21 : memref<1x8x16x128xbf16, #tpu.memory_space<vmem>> -> memref<8x16x128xbf16, #tpu.memory_space<vmem>>
    %23 = tpu.memref_slice %arg9[%9, %c0_i32_9] : memref<2x3x!tpu.dma_semaphore, #tpu.memory_space<semaphore_mem>> -> memref<1x1x!tpu.dma_semaphore, #tpu.memory_space<semaphore_mem>>
    %24 = tpu.memref_squeeze %23 : memref<1x1x!tpu.dma_semaphore, #tpu.memory_space<semaphore_mem>> -> memref<!tpu.dma_semaphore, #tpu.memory_space<semaphore_mem>>
    tpu.wait_dma2 semaphore(%24 : memref<!tpu.dma_semaphore, #tpu.memory_space<semaphore_mem>>) src(%20 : memref<8x16x128xbf16, #tpu.memory_space<any>>) dst(%22 : memref<8x16x128xbf16, #tpu.memory_space<vmem>>)
    %c0_i32_15 = arith.constant 0 : i32
    %25 = arith.cmpi sgt, %arg1, %c0_i32_15 : i32
    %26 = arith.extui %25 : i1 to i32
    %c0_i32_16 = arith.constant 0 : i32
    %27 = arith.cmpi ne, %26, %c0_i32_16 : i32
    scf.if %27 {
      %c1_i32_63 = arith.constant 1 : i32
      %c0_i32_64 = arith.constant 0 : i32
      %c0_i32_65 = arith.constant 0 : i32
      %c0_i32_66 = arith.constant 0 : i32
      %105 = tpu.memref_slice %arg4[%arg0, %c0_i32_64, %c0_i32_65, %c0_i32_66] : memref<2x16x16x128xbf16, #tpu.memory_space<any>> -> memref<1x1x16x128xbf16, #tpu.memory_space<any>>
      %106 = tpu.memref_squeeze %105 : memref<1x1x16x128xbf16, #tpu.memory_space<any>> -> memref<1x16x128xbf16, #tpu.memory_space<any>>
      %c1_i32_67 = arith.constant 1 : i32
      %c0_i32_68 = arith.constant 0 : i32
      %c0_i32_69 = arith.constant 0 : i32
      %107 = tpu.memref_slice %arg8[%9, %c1_i32_67, %c0_i32_68, %c0_i32_69] : memref<2x12x16x128xbf16, #tpu.memory_space<vmem>> -> memref<1x1x16x128xbf16, #tpu.memory_space<vmem>>
      %108 = tpu.memref_squeeze %107 : memref<1x1x16x128xbf16, #tpu.memory_space<vmem>> -> memref<1x16x128xbf16, #tpu.memory_space<vmem>>
      %109 = tpu.memref_slice %arg9[%9, %c1_i32_63] : memref<2x3x!tpu.dma_semaphore, #tpu.memory_space<semaphore_mem>> -> memref<1x1x!tpu.dma_semaphore, #tpu.memory_space<semaphore_mem>>
      %110 = tpu.memref_squeeze %109 : memref<1x1x!tpu.dma_semaphore, #tpu.memory_space<semaphore_mem>> -> memref<!tpu.dma_semaphore, #tpu.memory_space<semaphore_mem>>
      tpu.wait_dma2 semaphore(%110 : memref<!tpu.dma_semaphore, #tpu.memory_space<semaphore_mem>>) src(%106 : memref<1x16x128xbf16, #tpu.memory_space<any>>) dst(%108 : memref<1x16x128xbf16, #tpu.memory_space<vmem>>)
    } else {
    }
    %c1_i32_17 = arith.constant 1 : i32
    %28 = arith.cmpi slt, %arg1, %c1_i32_17 : i32
    %29 = arith.extui %28 : i1 to i32
    %c0_i32_18 = arith.constant 0 : i32
    %30 = arith.cmpi ne, %29, %c0_i32_18 : i32
    scf.if %30 {
      %c2_i32_63 = arith.constant 2 : i32
      %c0_i32_64 = arith.constant 0 : i32
      %c0_i32_65 = arith.constant 0 : i32
      %c0_i32_66 = arith.constant 0 : i32
      %105 = tpu.memref_slice %arg4[%arg0, %c0_i32_64, %c0_i32_65, %c0_i32_66] : memref<2x16x16x128xbf16, #tpu.memory_space<any>> -> memref<1x1x16x128xbf16, #tpu.memory_space<any>>
      %106 = tpu.memref_squeeze %105 : memref<1x1x16x128xbf16, #tpu.memory_space<any>> -> memref<1x16x128xbf16, #tpu.memory_space<any>>
      %c10_i32 = arith.constant 10 : i32
      %c0_i32_67 = arith.constant 0 : i32
      %c0_i32_68 = arith.constant 0 : i32
      %107 = tpu.memref_slice %arg8[%9, %c10_i32, %c0_i32_67, %c0_i32_68] : memref<2x12x16x128xbf16, #tpu.memory_space<vmem>> -> memref<1x1x16x128xbf16, #tpu.memory_space<vmem>>
      %108 = tpu.memref_squeeze %107 : memref<1x1x16x128xbf16, #tpu.memory_space<vmem>> -> memref<1x16x128xbf16, #tpu.memory_space<vmem>>
      %109 = tpu.memref_slice %arg9[%9, %c2_i32_63] : memref<2x3x!tpu.dma_semaphore, #tpu.memory_space<semaphore_mem>> -> memref<1x1x!tpu.dma_semaphore, #tpu.memory_space<semaphore_mem>>
      %110 = tpu.memref_squeeze %109 : memref<1x1x!tpu.dma_semaphore, #tpu.memory_space<semaphore_mem>> -> memref<!tpu.dma_semaphore, #tpu.memory_space<semaphore_mem>>
      tpu.wait_dma2 semaphore(%110 : memref<!tpu.dma_semaphore, #tpu.memory_space<semaphore_mem>>) src(%106 : memref<1x16x128xbf16, #tpu.memory_space<any>>) dst(%108 : memref<1x16x128xbf16, #tpu.memory_space<vmem>>)
    } else {
    }
    %cst = arith.constant 0.000000e+00 : bf16
    %31 = vector.broadcast %cst : bf16 to vector<1x16x128xbf16>
    %c0 = arith.constant 0 : index
    %c0_19 = arith.constant 0 : index
    %32 = vector.load %arg2[%c0, %c0_19] : memref<1x128xf32, #tpu.memory_space<vmem>>, vector<1x128xf32>
    %33 = vector.shape_cast %32 : vector<1x128xf32> to vector<1x1x128xf32>
    %c0_20 = arith.constant 0 : index
    %c0_21 = arith.constant 0 : index
    %34 = vector.load %arg3[%c0_20, %c0_21] : memref<1x128xf32, #tpu.memory_space<vmem>>, vector<1x128xf32>
    %35 = vector.shape_cast %34 : vector<1x128xf32> to vector<1x1x128xf32>
    %36 = arith.index_cast %9 : i32 to index
    %c0_22 = arith.constant 0 : index
    %c0_23 = arith.constant 0 : index
    %c0_24 = arith.constant 0 : index
    %37 = vector.load %arg8[%36, %c0_22, %c0_23, %c0_24] : memref<2x12x16x128xbf16, #tpu.memory_space<vmem>>, vector<1x12x16x128xbf16>
    %38 = vector.shape_cast %37 : vector<1x12x16x128xbf16> to vector<12x16x128xbf16>
    %39 = arith.extf %38 : vector<12x16x128xbf16> to vector<12x16x128xf32>
    %40 = vector.broadcast %33 : vector<1x1x128xf32> to vector<12x16x128xf32>
    %41 = arith.mulf %39, %40 : vector<12x16x128xf32>
    %42 = vector.broadcast %35 : vector<1x1x128xf32> to vector<12x16x128xf32>
    %43 = arith.addf %41, %42 : vector<12x16x128xf32>
    %cst_25 = arith.constant 0.000000e+00 : f32
    %44 = vector.broadcast %cst_25 : f32 to vector<12x16x128xf32>
    %45 = arith.maximumf %43, %44 : vector<12x16x128xf32>
    %46 = arith.truncf %45 : vector<12x16x128xf32> to vector<12x16x128xbf16>
    %47 = arith.index_cast %9 : i32 to index
    %c0_26 = arith.constant 0 : index
    %c0_27 = arith.constant 0 : index
    %c0_28 = arith.constant 0 : index
    %48 = vector.load %arg8[%47, %c0_26, %c0_27, %c0_28] : memref<2x12x16x128xbf16, #tpu.memory_space<vmem>>, vector<1x12x16x128xbf16>
    %49 = vector.shape_cast %48 : vector<1x12x16x128xbf16> to vector<12x16x128xbf16>
    %50 = vector.shape_cast %46 : vector<12x16x128xbf16> to vector<1x12x16x128xbf16>
    tpu.vector_store %arg8[%47, %c0_26, %c0_27, %c0_28], %50 {strides = array<i32>} : memref<2x12x16x128xbf16, #tpu.memory_space<vmem>>, vector<1x12x16x128xbf16>,
    %c0_i32_29 = arith.constant 0 : i32
    %51 = arith.cmpi eq, %arg1, %c0_i32_29 : i32
    %52 = arith.extui %51 : i1 to i32
    %c0_i32_30 = arith.constant 0 : i32
    %53 = arith.cmpi ne, %52, %c0_i32_30 : i32
    scf.if %53 {
      %105 = arith.index_cast %9 : i32 to index
      %c1_63 = arith.constant 1 : index
      %c0_64 = arith.constant 0 : index
      %c0_65 = arith.constant 0 : index
      %106 = vector.load %arg8[%105, %c1_63, %c0_64, %c0_65] : memref<2x12x16x128xbf16, #tpu.memory_space<vmem>>, vector<1x1x16x128xbf16>
      %107 = vector.shape_cast %106 : vector<1x1x16x128xbf16> to vector<1x16x128xbf16>
      %108 = vector.shape_cast %31 : vector<1x16x128xbf16> to vector<1x1x16x128xbf16>
      tpu.vector_store %arg8[%105, %c1_63, %c0_64, %c0_65], %108 {strides = array<i32>} : memref<2x12x16x128xbf16, #tpu.memory_space<vmem>>, vector<1x1x16x128xbf16>,
    } else {
    }
    %c1_i32_31 = arith.constant 1 : i32
    %54 = arith.cmpi eq, %arg1, %c1_i32_31 : i32
    %55 = arith.extui %54 : i1 to i32
    %c0_i32_32 = arith.constant 0 : i32
    %56 = arith.cmpi ne, %55, %c0_i32_32 : i32
    scf.if %56 {
      %105 = arith.index_cast %9 : i32 to index
      %c10 = arith.constant 10 : index
      %c0_63 = arith.constant 0 : index
      %c0_64 = arith.constant 0 : index
      %106 = vector.load %arg8[%105, %c10, %c0_63, %c0_64] : memref<2x12x16x128xbf16, #tpu.memory_space<vmem>>, vector<1x1x16x128xbf16>
      %107 = vector.shape_cast %106 : vector<1x1x16x128xbf16> to vector<1x16x128xbf16>
      %108 = vector.shape_cast %31 : vector<1x16x128xbf16> to vector<1x1x16x128xbf16>
      tpu.vector_store %arg8[%105, %c10, %c0_63, %c0_64], %108 {strides = array<i32>} : memref<2x12x16x128xbf16, #tpu.memory_space<vmem>>, vector<1x1x16x128xbf16>,
    } else {
    }
    %57 = arith.index_cast %9 : i32 to index
    %c0_33 = arith.constant 0 : index
    %c0_34 = arith.constant 0 : index
    %c0_35 = arith.constant 0 : index
    %58 = vector.load %arg8[%57, %c0_33, %c0_34, %c0_35] : memref<2x12x16x128xbf16, #tpu.memory_space<vmem>>, vector<1x12x16x128xbf16>
    %59 = vector.shape_cast %58 : vector<1x12x16x128xbf16> to vector<12x16x128xbf16>
    %60 = vector.shape_cast %59 : vector<12x16x128xbf16> to vector<192x128xbf16>
    %61 = tpu.iota {dimensions = array<i32: 1>} : vector<10x16x128xi32>
    %62 = vector.shape_cast %61 : vector<10x16x128xi32> to vector<160x128xi32>
    %c0_i32_36 = arith.constant 0 : i32
    %63 = vector.broadcast %c0_i32_36 : i32 to vector<160x128xi32>
    %64 = arith.cmpi eq, %62, %63 : vector<160x128xi32>
    %65 = vector.extract_strided_slice %60 {offsets = [15, 0], sizes = [160, 128], strides = [1, 1]} : vector<192x128xbf16> to vector<160x128xbf16>
    %cst_37 = arith.constant 0.000000e+00 : bf16
    %66 = vector.broadcast %cst_37 : bf16 to vector<160x128xbf16>
    %67 = arith.select %64, %66, %65 : vector<160x128xi1>, vector<160x128xbf16>
    %68 = vector.extract_strided_slice %60 {offsets = [16, 0], sizes = [160, 128], strides = [1, 1]} : vector<192x128xbf16> to vector<160x128xbf16>
    %c15_i32 = arith.constant 15 : i32
    %69 = vector.broadcast %c15_i32 : i32 to vector<160x128xi32>
    %70 = arith.cmpi eq, %62, %69 : vector<160x128xi32>
    %71 = vector.extract_strided_slice %60 {offsets = [17, 0], sizes = [160, 128], strides = [1, 1]} : vector<192x128xbf16> to vector<160x128xbf16>
    %cst_38 = arith.constant 0.000000e+00 : bf16
    %72 = vector.broadcast %cst_38 : bf16 to vector<160x128xbf16>
    %73 = arith.select %70, %72, %71 : vector<160x128xi1>, vector<160x128xbf16>
    %74 = tpu.concatenate %67, %68, %73 in 1 : vector<160x128xbf16>, vector<160x128xbf16>, vector<160x128xbf16> -> vector<160x384xbf16>
    %75 = vector.extract_strided_slice %74 {offsets = [0, 0], sizes = [128, 384], strides = [1, 1]} : vector<160x384xbf16> to vector<128x384xbf16>
    %c0_39 = arith.constant 0 : index
    %c0_40 = arith.constant 0 : index
    %c0_41 = arith.constant 0 : index
    %76 = vector.load %arg5[%c0_39, %c0_40, %c0_41] : memref<3x384x128xbf16, #tpu.memory_space<vmem>>, vector<1x384x128xbf16>
    %77 = vector.shape_cast %76 : vector<1x384x128xbf16> to vector<384x128xbf16>
    %cst_42 = arith.constant dense<0.000000e+00> : vector<128x128xf32>
    %78 = tpu.matmul %75, %77, %cst_42 {dimension_numbers = #tpu.dot_dimension_numbers<[1], [0], [0], [1], [0, 0, 1, 1], [], []>} : vector<128x384xbf16>, vector<384x128xbf16>, vector<128x128xf32> -> vector<128x128xf32>
    %79 = vector.extract_strided_slice %74 {offsets = [16, 0], sizes = [128, 384], strides = [1, 1]} : vector<160x384xbf16> to vector<128x384xbf16>
    %c1 = arith.constant 1 : index
    %c0_43 = arith.constant 0 : index
    %c0_44 = arith.constant 0 : index
    %80 = vector.load %arg5[%c1, %c0_43, %c0_44] : memref<3x384x128xbf16, #tpu.memory_space<vmem>>, vector<1x384x128xbf16>
    %81 = vector.shape_cast %80 : vector<1x384x128xbf16> to vector<384x128xbf16>
    %cst_45 = arith.constant dense<0.000000e+00> : vector<128x128xf32>
    %82 = tpu.matmul %79, %81, %cst_45 {dimension_numbers = #tpu.dot_dimension_numbers<[1], [0], [0], [1], [0, 0, 1, 1], [], []>} : vector<128x384xbf16>, vector<384x128xbf16>, vector<128x128xf32> -> vector<128x128xf32>
    %83 = arith.addf %78, %82 : vector<128x128xf32>
    %84 = vector.extract_strided_slice %74 {offsets = [32, 0], sizes = [128, 384], strides = [1, 1]} : vector<160x384xbf16> to vector<128x384xbf16>
    %c2 = arith.constant 2 : index
    %c0_46 = arith.constant 0 : index
    %c0_47 = arith.constant 0 : index
    %85 = vector.load %arg5[%c2, %c0_46, %c0_47] : memref<3x384x128xbf16, #tpu.memory_space<vmem>>, vector<1x384x128xbf16>
    %86 = vector.shape_cast %85 : vector<1x384x128xbf16> to vector<384x128xbf16>
    %cst_48 = arith.constant dense<0.000000e+00> : vector<128x128xf32>
    %87 = tpu.matmul %84, %86, %cst_48 {dimension_numbers = #tpu.dot_dimension_numbers<[1], [0], [0], [1], [0, 0, 1, 1], [], []>} : vector<128x384xbf16>, vector<384x128xbf16>, vector<128x128xf32> -> vector<128x128xf32>
    %88 = arith.addf %83, %87 : vector<128x128xf32>
    %89 = vector.shape_cast %88 : vector<128x128xf32> to vector<8x16x128xf32>
    %90 = arith.truncf %89 : vector<8x16x128xf32> to vector<8x16x128xbf16>
    %c0_49 = arith.constant 0 : index
    %c0_50 = arith.constant 0 : index
    %c0_51 = arith.constant 0 : index
    %c0_52 = arith.constant 0 : index
    %91 = vector.load %arg6[%c0_49, %c0_50, %c0_51, %c0_52] : memref<1x8x16x128xbf16, #tpu.memory_space<vmem>>, vector<1x8x16x128xbf16>
    %92 = vector.shape_cast %91 : vector<1x8x16x128xbf16> to vector<8x16x128xbf16>
    %93 = vector.shape_cast %90 : vector<8x16x128xbf16> to vector<1x8x16x128xbf16>
    tpu.vector_store %arg6[%c0_49, %c0_50, %c0_51, %c0_52], %93 {strides = array<i32>} : memref<1x8x16x128xbf16, #tpu.memory_space<vmem>>, vector<1x8x16x128xbf16>,
    %cst_53 = arith.constant dense<0.000000e+00> : vector<128xf32>
    %94 = vector.multi_reduction <add>, %88, %cst_53 [0] : vector<128x128xf32> to vector<128xf32>
    %95 = vector.shape_cast %94 : vector<128xf32> to vector<1x128xf32>
    %c0_54 = arith.constant 0 : index
    %c0_55 = arith.constant 0 : index
    %c0_56 = arith.constant 0 : index
    %c0_57 = arith.constant 0 : index
    %96 = vector.load %arg7[%c0_54, %c0_55, %c0_56, %c0_57] : memref<1x1x8x128xf32, #tpu.memory_space<vmem>>, vector<1x1x1x128xf32>
    %97 = vector.shape_cast %96 : vector<1x1x1x128xf32> to vector<1x128xf32>
    %98 = vector.shape_cast %95 : vector<1x128xf32> to vector<1x1x1x128xf32>
    tpu.vector_store %arg7[%c0_54, %c0_55, %c0_56, %c0_57], %98 {strides = array<i32>} : memref<1x1x8x128xf32, #tpu.memory_space<vmem>>, vector<1x1x1x128xf32>,
    %99 = arith.mulf %88, %88 : vector<128x128xf32>
    %cst_58 = arith.constant dense<0.000000e+00> : vector<128xf32>
    %100 = vector.multi_reduction <add>, %99, %cst_58 [0] : vector<128x128xf32> to vector<128xf32>
    %101 = vector.shape_cast %100 : vector<128xf32> to vector<1x128xf32>
    %c0_59 = arith.constant 0 : index
    %c0_60 = arith.constant 0 : index
    %c1_61 = arith.constant 1 : index
    %c0_62 = arith.constant 0 : index
    %102 = vector.load %arg7[%c0_59, %c0_60, %c1_61, %c0_62] : memref<1x1x8x128xf32, #tpu.memory_space<vmem>>, vector<1x1x1x128xf32>
    %103 = vector.shape_cast %102 : vector<1x1x1x128xf32> to vector<1x128xf32>
    %104 = vector.shape_cast %101 : vector<1x128xf32> to vector<1x1x1x128xf32>
    tpu.vector_store %arg7[%c0_59, %c0_60, %c1_61, %c0_62], %104 {strides = array<i32>} : memref<1x1x8x128xf32, #tpu.memory_space<vmem>>, vector<1x1x1x128xf32>,
    return
  }
  func.func @transform_0(%arg0: i32, %arg1: i32) -> (i32, i32) {
    %c0_i32 = arith.constant 0 : i32
    %c0_i32_0 = arith.constant 0 : i32
    %c0_i32_1 = arith.constant 0 : i32
    return %c0_i32, %c0_i32_0 : i32, i32
  }
  func.func @transform_1(%arg0: i32, %arg1: i32) -> (i32, i32) {
    %c0_i32 = arith.constant 0 : i32
    %c0_i32_0 = arith.constant 0 : i32
    %c0_i32_1 = arith.constant 0 : i32
    return %c0_i32, %c0_i32_0 : i32, i32
  }
  func.func @transform_3(%arg0: i32, %arg1: i32) -> (i32, i32, i32) {
    %c0_i32 = arith.constant 0 : i32
    %c0_i32_0 = arith.constant 0 : i32
    %c0_i32_1 = arith.constant 0 : i32
    %c0_i32_2 = arith.constant 0 : i32
    return %c0_i32, %c0_i32_0, %c0_i32_1 : i32, i32, i32
  }
  func.func @transform_4(%arg0: i32, %arg1: i32) -> (i32, i32, i32, i32) {
    %c0_i32 = arith.constant 0 : i32
    %c0_i32_0 = arith.constant 0 : i32
    %c0_i32_1 = arith.constant 0 : i32
    return %arg0, %arg1, %c0_i32, %c0_i32_0 : i32, i32, i32, i32
  }
  func.func @transform_5(%arg0: i32, %arg1: i32) -> (i32, i32, i32, i32) {
    %c0_i32 = arith.constant 0 : i32
    %c0_i32_0 = arith.constant 0 : i32
    %c0_i32_1 = arith.constant 0 : i32
    return %arg0, %arg1, %c0_i32, %c0_i32_0 : i32, i32, i32, i32
  }
}

</mosaic_0001>

<llo_original>
// kernel: unet_conv_block_2d.5
$region0: #{unet_conv_block_2d.5}
  #allocation0 [shape = 'u32[]', space=smem, size = 0x4, offset = 0x4, fixed_abs, tag = 'smem constant byte address 0x4 - core index']
  #allocation1 [shape = 'u32[144,128]{1,0:T(1,128)}', space=vmem, size = 0x12000, scoped, tag = 'internal scratch']
  %s0 = inlined_call_operand.vmem [shape: bf16[2,16,16,128], index: 0, kind: input, shape index: {}]
  %s1 = inlined_call_operand.vmem [shape: f32[1,128], index: 1, kind: input, shape index: {}]
  %s2 = inlined_call_operand.vmem [shape: f32[1,128], index: 2, kind: input, shape index: {}]
  %s3 = inlined_call_operand.vmem [shape: f32[2,8,256], index: 3, kind: output, shape index: {}]
  %s4 = sld [smem:[#allocation0]]
  $region45: #{unet_conv_block_2d.5} parent=0
    _
  %s6 = ssub.s32 1, %s4
  %s7 = scalar_select 0, %s6, %s4
  loop: start=0, step=1, limit=6
  $region2: #{unet_conv_block_2d.5} parent=0 // loop_pre_header
    _
  $region3: #{unet_conv_block_2d.5} parent=0 // loop_header
    %s9 = sphi 0, %s13
    %p10 = scmp.ge.s32.totalorder %s9, 6
    %s16 = sphi 0, %s28
    %s17 = sphi 0, %s24
    %s18 = sphi 0, %s16
    %s19 = sphi 0, %s17
    %s20 = sphi 0, %s18
    %s21 = sphi 0, %s19
    %s33 = sphi 0, %s35
    %s36 = sphi 0, %s33
    %s37 = sphi 0, %s36
    %s53 = sphi 0, %s37
    %s57 = sphi 0, %s57
    %s59 = sphi 0, %s57
    %s60 = sphi 0, %s59
    %s74 = sphi 0, %s60
    %s78 = sphi 0, %s78
    %s80 = sphi 0, %s78
    %s81 = sphi 0, %s80
    %s95 = sphi 0, %s81
    %s103 = sphi 0, %s105
    %s106 = sphi 0, %s103
    %s107 = sphi 0, %s106
    %s123 = sphi 0, %s107
  $region4: #{unet_conv_block_2d.5} parent=0 // loop_header_branch
    %12 = sbr.rel (%p10) target = $region8
  $region5: #{unet_conv_block_2d.5} parent=0 // loop_body
    %s14 = ssub.s32 %s9, 1
    %s15 = ssub.s32 %s9, 2
    %s22 = sadd.s32 1, %s17
    %p23 = scmp.ge.s32.totalorder %s22, 2
    %s24 = scalar_select %p23, 0, %s22
    %s25 = sadd.s32 1, %s16
    %s26 = scalar_select %p23, %s25, %s16
    %p27 = scmp.ge.s32.totalorder %s26, 2
    %s28 = scalar_select %p27, 0, %s26
    %s29 = ssub.s32 %s16, %s28
    %s30 = ssub.s32 %s17, %s24
    %s31 = sor.u32 %s29, %s30
    %p32 = scmp.eq.s32.totalorder %s31, 0
    %s34 = sadd.s32 %s33, 1
    %s35 = scalar_select %p32, %s33, %s34
    %p38 = pneg %p32
    %p39 = scmp.eq.s32.totalorder %s9, 3
    %p40 = por %p38, %p39
    %p41 = scmp.ne.s32.totalorder %s33, %s36
    %p42 = scmp.eq.s32.totalorder %s9, 0
    %p43 = por %p41, %p42
    %p44 = scmp.ne.s32.totalorder %s33, %s36
    %p45 = scmp.eq.s32.totalorder %s14, 3
    %p46 = por %p44, %p45
    %p47 = scmp.ne.s32.totalorder %s36, %s37
    %p48 = scmp.eq.s32.totalorder %s14, 0
    %p49 = por %p47, %p48
    %p50 = scmp.ne.s32.totalorder %s36, %s37
    %p51 = scmp.eq.s32.totalorder %s15, 3
    %p52 = por %p50, %p51
    %p54 = scmp.ne.s32.totalorder %s37, %s53
    %p55 = scmp.eq.s32.totalorder %s15, 0
    %p56 = por %p54, %p55
    %s58 = sadd.s32 %s57, 1
    %p61 = scmp.eq.s32.totalorder %s9, 3
    %p62 = scmp.ne.s32.totalorder %s57, %s59
    %p63 = scmp.eq.s32.totalorder %s9, 0
    %p64 = por %p62, %p63
    %p65 = scmp.ne.s32.totalorder %s57, %s59
    %p66 = scmp.eq.s32.totalorder %s14, 3
    %p67 = por %p65, %p66
    %p68 = scmp.ne.s32.totalorder %s59, %s60
    %p69 = scmp.eq.s32.totalorder %s14, 0
    %p70 = por %p68, %p69
    %p71 = scmp.ne.s32.totalorder %s59, %s60
    %p72 = scmp.eq.s32.totalorder %s15, 3
    %p73 = por %p71, %p72
    %p75 = scmp.ne.s32.totalorder %s60, %s74
    %p76 = scmp.eq.s32.totalorder %s15, 0
    %p77 = por %p75, %p76
    %s79 = sadd.s32 %s78, 1
    %p82 = scmp.eq.s32.totalorder %s9, 3
    %p83 = scmp.ne.s32.totalorder %s78, %s80
    %p84 = scmp.eq.s32.totalorder %s9, 0
    %p85 = por %p83, %p84
    %p86 = scmp.ne.s32.totalorder %s78, %s80
    %p87 = scmp.eq.s32.totalorder %s14, 3
    %p88 = por %p86, %p87
    %p89 = scmp.ne.s32.totalorder %s80, %s81
    %p90 = scmp.eq.s32.totalorder %s14, 0
    %p91 = por %p89, %p90
    %p92 = scmp.ne.s32.totalorder %s80, %s81
    %p93 = scmp.eq.s32.totalorder %s15, 3
    %p94 = por %p92, %p93
    %p96 = scmp.ne.s32.totalorder %s81, %s95
    %p97 = scmp.eq.s32.totalorder %s15, 0
    %p98 = por %p96, %p97
    %s99 = ssub.s32 %s16, %s28
    %s100 = ssub.s32 %s17, %s24
    %s101 = sor.u32 %s99, %s100
    %p102 = scmp.eq.s32.totalorder %s101, 0
    %s104 = sadd.s32 %s103, 1
    %s105 = scalar_select %p102, %s103, %s104
    %p108 = pneg %p102
    %p109 = scmp.eq.s32.totalorder %s9, 3
    %p110 = por %p108, %p109
    %p111 = scmp.ne.s32.totalorder %s103, %s106
    %p112 = scmp.eq.s32.totalorder %s9, 0
    %p113 = por %p111, %p112
    %p114 = scmp.ne.s32.totalorder %s103, %s106
    %p115 = scmp.eq.s32.totalorder %s14, 3
    %p116 = por %p114, %p115
    %p117 = scmp.ne.s32.totalorder %s106, %s107
    %p118 = scmp.eq.s32.totalorder %s14, 0
    %p119 = por %p117, %p118
    %p120 = scmp.ne.s32.totalorder %s106, %s107
    %p121 = scmp.eq.s32.totalorder %s15, 3
    %p122 = por %p120, %p121
    %p124 = scmp.ne.s32.totalorder %s107, %s123
    %p125 = scmp.eq.s32.totalorder %s15, 0
    %p126 = por %p124, %p125
    %p127 = scmp.le.s32.totalorder 1, %s9
    %p128 = scmp.lt.s32.totalorder %s9, 5
    %p129 = pnand %p127, %p128
    %p130 = pneg %p129
    // Predicated region
    $region9: #{unet_conv_block_2d.5} parent=5 // pred_check
      _
    $region10: #{unet_conv_block_2d.5} parent=5 // pred_check_branch
      %132 = sbr.rel (%p129) target = $region12
    $region11: #{unet_conv_block_2d.5} parent=5 // pred_region
      %s133 = ssub.s32 %s9, 1
      // Predicated region
      $region13: #{unet_conv_block_2d.5} parent=11 // pred_check
        %p134 = pneg %p70
      $region14: #{unet_conv_block_2d.5} parent=11 // pred_check_branch
        %136 = sbr.rel (%p134) target = $region16
      $region15: #{unet_conv_block_2d.5} parent=11 // pred_region
        _
      $region16: #{unet_conv_block_2d.5} parent=11 // pred_fallthru
        _
      // Predicated region
      $region17: #{unet_conv_block_2d.5} parent=11 // pred_check
        %p137 = pneg %p91
      $region18: #{unet_conv_block_2d.5} parent=11 // pred_check_branch
        %139 = sbr.rel (%p137) target = $region20
      $region19: #{unet_conv_block_2d.5} parent=11 // pred_region
        _
      $region20: #{unet_conv_block_2d.5} parent=11 // pred_fallthru
        _
    $region12: #{unet_conv_block_2d.5} parent=5 // pred_fallthru
      _
    %p140 = scmp.lt.s32.totalorder %s9, 4
    // Predicated region
    $region21: #{unet_conv_block_2d.5} parent=5 // pred_check
      %p141 = pneg %p140
    $region22: #{unet_conv_block_2d.5} parent=5 // pred_check_branch
      %143 = sbr.rel (%p141) target = $region24
    $region23: #{unet_conv_block_2d.5} parent=5 // pred_region
      // Predicated region
      $region25: #{unet_conv_block_2d.5} parent=23 // pred_check
        %p144 = pneg %p43
      $region26: #{unet_conv_block_2d.5} parent=23 // pred_check_branch
        %146 = sbr.rel (%p144) target = $region28
      $region27: #{unet_conv_block_2d.5} parent=23 // pred_region
        %s147 = smul.u32 8, %s17
        %p148 = scmp.lt.s32.totalorder %s16, 1
        %s149 = scalar_select %p148, %s16, 1
        %p150 = scmp.lt.s32.totalorder %s147, 15
        %s151 = scalar_select %p150, %s147, 15
        %s152 = smul.addr %s151, 2
        %s153 = smul.addr %s149, 32
        %s154 = sadd.s32 %s152, %s153
        %s155 = smul.addr %s154, 4
        %s156 = scalar_lea.vmem %s0, %s155
        %s157 = smul.u32 8, %s17
      $region28: #{unet_conv_block_2d.5} parent=23 // pred_fallthru
        _
    $region24: #{unet_conv_block_2d.5} parent=5 // pred_fallthru
      _
    %p158 = scmp.le.s32.totalorder 1, %s9
    %p159 = scmp.lt.s32.totalorder %s9, 5
    %p160 = pnand %p158, %p159
    %p161 = pneg %p160
    // Predicated region
    $region29: #{unet_conv_block_2d.5} parent=5 // pred_check
      _
    $region30: #{unet_conv_block_2d.5} parent=5 // pred_check_branch
      %163 = sbr.rel (%p160) target = $region32
    $region31: #{unet_conv_block_2d.5} parent=5 // pred_region
      %s164 = ssub.s32 %s9, 1
      %s165 = smul.u32 8, %s19
      %p166 = scmp.lt.s32.totalorder %s18, 1
      %s167 = scalar_select %p166, %s18, 1
      %p168 = scmp.lt.s32.totalorder %s165, 15
      %s169 = scalar_select %p168, %s165, 15
      %s170 = smul.addr %s169, 2
      %s171 = smul.addr %s167, 32
      %s172 = sadd.s32 %s170, %s171
      %s173 = smul.addr %s172, 4
      %s174 = scalar_lea.vmem %s0, %s173
      %p175 = pneg %p49
      %p176 = pneg %p46
      %p177 = pneg %p70
      %p178 = pneg %p67
      %p179 = pneg %p91
      %p180 = pneg %p88
      %p181 = pneg %p119
      %p182 = pneg %p116
      %p183 = scmp.lt.s32.totalorder %s18, 1
      %s184 = scalar_select %p183, %s18, 1
      %p185 = scmp.lt.s32.totalorder %s19, 1
      %s186 = scalar_select %p185, %s19, 1
      %s187 = smul.addr %s184, 2
      %s188 = sadd.s32 %s186, %s187
      %s189 = smul.addr %s188, 8
      %s190 = scalar_lea.vmem %s3, %s189
      %s191 = smul.u32 8, %s19
      %p192 = scmp.lt.s32.totalorder %s18, 1
      %s193 = scalar_select %p192, %s18, 1
      %p194 = scmp.lt.s32.totalorder %s191, 15
      %s195 = scalar_select %p194, %s191, 15
      %s196 = smul.addr %s195, 2
      %s197 = smul.addr %s193, 32
      %s198 = sadd.s32 %s196, %s197
      %s199 = smul.addr %s198, 4
      %s200 = scalar_lea.vmem %s0, %s199
      %s201 = smul.u32 8, %s19
      %p202 = scmp.lt.s32.totalorder %s18, 1
      %s203 = scalar_select %p202, %s18, 1
      %p204 = scmp.lt.s32.totalorder %s19, 1
      %s205 = scalar_select %p204, %s19, 1
      %s206 = smul.addr %s203, 2
      %s207 = sadd.s32 %s205, %s206
      %s208 = smul.addr %s207, 8
      %s209 = scalar_lea.vmem %s3, %s208
      %v210 = vld [vmem:[%s200] sm:$0xf]
      %v211 = vld [vmem:[%s200 + $0x4] sm:$0xf]
      %v212 = vld [vmem:[%s200 + $0x8] sm:$0xf]
      %v213 = vld [vmem:[%s200 + $0xc] sm:$0xf]
      %v214 = vld [vmem:[%s200 + $0x10] sm:$0xf]
      %v215 = vld [vmem:[%s200 + $0x14] sm:$0xf]
      %v216 = vld [vmem:[%s200 + $0x18] sm:$0xf]
      %v217 = vld [vmem:[%s200 + $0x1c] sm:$0xf]
      %v218 = vld [vmem:[%s200 + $0x20] sm:$0xf]
      %v219 = vld [vmem:[%s200 + $0x24] sm:$0xf]
      %v220 = vld [vmem:[%s200 + $0x28] sm:$0xf]
      %v221 = vld [vmem:[%s200 + $0x2c] sm:$0xf]
      %v222 = vld [vmem:[%s200 + $0x30] sm:$0xf]
      %v223 = vld [vmem:[%s200 + $0x34] sm:$0xf]
      %v224 = vld [vmem:[%s200 + $0x38] sm:$0xf]
      %v225 = vld [vmem:[%s200 + $0x3c] sm:$0xf]
      %v226 = vunpack.c.l.bf16 %v210
      %v227 = vunpack.c.l.bf16 %v211
      %v228 = vunpack.c.l.bf16 %v212
      %v229 = vunpack.c.l.bf16 %v213
      %v230 = vunpack.c.l.bf16 %v214
      %v231 = vunpack.c.l.bf16 %v215
      %v232 = vunpack.c.l.bf16 %v216
      %v233 = vunpack.c.l.bf16 %v217
      %v234 = vunpack.c.l.bf16 %v218
      %v235 = vunpack.c.l.bf16 %v219
      %v236 = vunpack.c.l.bf16 %v220
      %v237 = vunpack.c.l.bf16 %v221
      %v238 = vunpack.c.l.bf16 %v222
      %v239 = vunpack.c.l.bf16 %v223
      %v240 = vunpack.c.l.bf16 %v224
      %v241 = vunpack.c.l.bf16 %v225
      %v242 = vld [vmem:[%s1] sm:$0x1]
      %v244 = vlaneseq
      %v245 = vshrl.u32 %v244, 7
      %v246 = vsub.s32 0, %v245
      %v247 = vrot.slane %v242, %v246
      %v249 = vmul.f32 %v226, %v247
      %v250 = vmul.f32 %v227, %v247
      %v251 = vmul.f32 %v228, %v247
      %v252 = vmul.f32 %v229, %v247
      %v253 = vmul.f32 %v230, %v247
      %v254 = vmul.f32 %v231, %v247
      %v255 = vmul.f32 %v232, %v247
      %v256 = vmul.f32 %v233, %v247
      %v257 = vmul.f32 %v234, %v247
      %v258 = vmul.f32 %v235, %v247
      %v259 = vmul.f32 %v236, %v247
      %v260 = vmul.f32 %v237, %v247
      %v261 = vmul.f32 %v238, %v247
      %v262 = vmul.f32 %v239, %v247
      %v263 = vmul.f32 %v240, %v247
      %v264 = vmul.f32 %v241, %v247
      %v265 = vld [vmem:[%s2] sm:$0x1]
      %v267 = vlaneseq
      %v268 = vshrl.u32 %v267, 7
      %v269 = vsub.s32 0, %v268
      %v270 = vrot.slane %v265, %v269
      %v272 = vadd.f32 %v249, %v270
      %v273 = vadd.f32 %v250, %v270
      %v274 = vadd.f32 %v251, %v270
      %v275 = vadd.f32 %v252, %v270
      %v276 = vadd.f32 %v253, %v270
      %v277 = vadd.f32 %v254, %v270
      %v278 = vadd.f32 %v255, %v270
      %v279 = vadd.f32 %v256, %v270
      %v280 = vadd.f32 %v257, %v270
      %v281 = vadd.f32 %v258, %v270
      %v282 = vadd.f32 %v259, %v270
      %v283 = vadd.f32 %v260, %v270
      %v284 = vadd.f32 %v261, %v270
      %v285 = vadd.f32 %v262, %v270
      %v286 = vadd.f32 %v263, %v270
      %v287 = vadd.f32 %v264, %v270
      %v288 = vmax.f32 %v272, 0.0
      %v289 = vmax.f32 %v273, 0.0
      %v290 = vmax.f32 %v274, 0.0
      %v291 = vmax.f32 %v275, 0.0
      %v292 = vmax.f32 %v276, 0.0
      %v293 = vmax.f32 %v277, 0.0
      %v294 = vmax.f32 %v278, 0.0
      %v295 = vmax.f32 %v279, 0.0
      %v296 = vmax.f32 %v280, 0.0
      %v297 = vmax.f32 %v281, 0.0
      %v298 = vmax.f32 %v282, 0.0
      %v299 = vmax.f32 %v283, 0.0
      %v300 = vmax.f32 %v284, 0.0
      %v301 = vmax.f32 %v285, 0.0
      %v302 = vmax.f32 %v286, 0.0
      %v303 = vmax.f32 %v287, 0.0
      %304 = vxpose.xlu0.b32.start [1/16] %v288, 128
      %305 = vxpose.xlu0.b32.cont [2/16] %v289, 128
      %306 = vxpose.xlu0.b32.cont [3/16] %v290, 128
      %307 = vxpose.xlu0.b32.cont [4/16] %v291, 128
      %308 = vxpose.xlu0.b32.cont [5/16] %v292, 128
      %309 = vxpose.xlu0.b32.cont [6/16] %v293, 128
      %310 = vxpose.xlu0.b32.cont [7/16] %v294, 128
      %311 = vxpose.xlu0.b32.cont [8/16] %v295, 128
      %312 = vxpose.xlu0.b32.cont [9/16] %v296, 128
      %313 = vxpose.xlu0.b32.cont [10/16] %v297, 128
      %314 = vxpose.xlu0.b32.cont [11/16] %v298, 128
      %315 = vxpose.xlu0.b32.cont [12/16] %v299, 128
      %316 = vxpose.xlu0.b32.cont [13/16] %v300, 128
      %317 = vxpose.xlu0.b32.cont [14/16] %v301, 128
      %318 = vxpose.xlu0.b32.cont [15/16] %v302, 128
      %319 = vxpose.xlu0.b32.end [16/16] %v303, 128
      %v320 = vpop.trf.xlu0
      %v321 = vpop.trf.xlu0
      %v322 = vpop.trf.xlu0
      %v323 = vpop.trf.xlu0
      %v324 = vpop.trf.xlu0
      %v325 = vpop.trf.xlu0
      %v326 = vpop.trf.xlu0
      %v327 = vpop.trf.xlu0
      %v328 = vpop.trf.xlu0
      %v329 = vpop.trf.xlu0
      %v330 = vpop.trf.xlu0
      %v331 = vpop.trf.xlu0
      %v332 = vpop.trf.xlu0
      %v333 = vpop.trf.xlu0
      %v334 = vpop.trf.xlu0
      %v335 = vpop.trf.xlu0
      %336 = vst [vmem:[%s209] sm:$0xff] %v320
      %p337 = scmp.lt.s32.totalorder %s18, 1
      %s338 = scalar_select %p337, %s18, 1
      %p339 = scmp.lt.s32.totalorder %s19, 1
      %s340 = scalar_select %p339, %s19, 1
      %s341 = smul.addr %s338, 2
      %s342 = sadd.s32 %s340, %s341
      %s343 = smul.addr %s342, 8
      %s344 = scalar_lea.vmem %s3, %s343
      // Predicated region
      $region33: #{unet_conv_block_2d.5} parent=31 // pred_check
        %p345 = pneg %p116
      $region34: #{unet_conv_block_2d.5} parent=31 // pred_check_branch
        %347 = sbr.rel (%p345) target = $region36
      $region35: #{unet_conv_block_2d.5} parent=31 // pred_region
        _
      $region36: #{unet_conv_block_2d.5} parent=31 // pred_fallthru
        _
    $region32: #{unet_conv_block_2d.5} parent=5 // pred_fallthru
      _
    %p348 = scmp.le.s32.totalorder 2, %s9
    // Predicated region
    $region37: #{unet_conv_block_2d.5} parent=5 // pred_check
      %p349 = pneg %p348
    $region38: #{unet_conv_block_2d.5} parent=5 // pred_check_branch
      %351 = sbr.rel (%p349) target = $region40
    $region39: #{unet_conv_block_2d.5} parent=5 // pred_region
      %s352 = ssub.s32 %s9, 2
      // Predicated region
      $region41: #{unet_conv_block_2d.5} parent=39 // pred_check
        %p353 = pneg %p122
      $region42: #{unet_conv_block_2d.5} parent=39 // pred_check_branch
        %355 = sbr.rel (%p353) target = $region44
      $region43: #{unet_conv_block_2d.5} parent=39 // pred_region
        %p356 = scmp.lt.s32.totalorder %s20, 1
        %s357 = scalar_select %p356, %s20, 1
        %p358 = scmp.lt.s32.totalorder %s21, 1
        %s359 = scalar_select %p358, %s21, 1
        %s360 = smul.addr %s357, 2
        %s361 = sadd.s32 %s359, %s360
        %s362 = smul.addr %s361, 8
        %s363 = scalar_lea.vmem %s3, %s362
      $region44: #{unet_conv_block_2d.5} parent=39 // pred_fallthru
        _
    $region40: #{unet_conv_block_2d.5} parent=5 // pred_fallthru
      _
  $region6: #{unet_conv_block_2d.5} parent=0 // loop_footer
    %s13 = sadd.s32 1, %s9
  $region7: #{unet_conv_block_2d.5} parent=0 // loop_footer_branch
    %8 = sbr.rel target = $region3
  $region8: #{unet_conv_block_2d.5} parent=0 // loop_exit
    _

// kernel: unet_conv_block_2d.3
$region0: #{unet_conv_block_2d.3}
  #allocation0 [shape = 'u32[]', space=smem, size = 0x4, offset = 0x4, fixed_abs, tag = 'smem constant byte address 0x4 - core index']
  #allocation1 [shape = 'u32[144,128]{1,0:T(1,128)}', space=vmem, size = 0x12000, scoped, tag = 'internal scratch']
  #allocation2 [shape = 'bf16[2,12,16,128]{3,2,1,0:T(16,128)(2,1)}', space=vmem, size = 0x18000, scoped, tag = 'scratch operand']
  #allocation3 [shape = 's32[6]{0}', space=sflag, size = 0x18, scoped, tag = 'scratch operand']
  #allocation4 [shape = 's32[]', space=sflag, size = 0x4, offset = 0, fixed_abs, tag = 'sflag constant byte address 0x0 - dummy sync flag']
  #allocation5 [shape = 's32[]', space=sflag, size = 0x4, offset = 0, fixed_abs, tag = 'sflag constant byte address 0x0 - dummy sync flag']
  #allocation6 [shape = 's32[]', space=sflag, size = 0x4, offset = 0, fixed_abs, tag = 'sflag constant byte address 0x0 - dummy sync flag']
  #allocation7 [shape = 's32[]', space=sflag, size = 0x4, offset = 0, fixed_abs, tag = 'sflag constant byte address 0x0 - dummy sync flag']
  #allocation8 [shape = 's32[]', space=sflag, size = 0x4, offset = 0, fixed_abs, tag = 'sflag constant byte address 0x0 - dummy sync flag']
  #allocation9 [shape = 's32[]', space=sflag, size = 0x4, offset = 0, fixed_abs, tag = 'sflag constant byte address 0x0 - dummy sync flag']
  %s0 = inlined_call_operand.vmem [shape: f32[1,128], index: 0, kind: input, shape index: {}, may-alias: {0,1}]
  %s1 = inlined_call_operand.vmem [shape: f32[1,128], index: 1, kind: input, shape index: {}, may-alias: {0,1}]
  %s2 = inlined_call_operand.vmem [shape: bf16[2,16,16,128], index: 2, kind: input, shape index: {}]
  %s3 = inlined_call_operand.vmem [shape: bf16[3,384,128], index: 3, kind: input, shape index: {}]
  %s4 = inlined_call_operand.vmem [shape: bf16[2,16,16,128], index: 4, kind: output, shape index: {0}]
  %s5 = inlined_call_operand.vmem [shape: f32[2,2,8,128], index: 5, kind: output, shape index: {1}]
  %6 = xla_tuple %s4, %s5
  %s7 = sld [smem:[#allocation0]]
  $region297: #{unet_conv_block_2d.3} parent=0
    _
  %s9 = ssub.s32 1, %s7
  %s10 = scalar_select 0, %s9, %s7
  loop: start=0, step=1, limit=6
  $region2: #{unet_conv_block_2d.3} parent=0 // loop_pre_header
    _
  $region3: #{unet_conv_block_2d.3} parent=0 // loop_header
    %s12 = sphi 0, %s16
    %p13 = scmp.ge.s32.totalorder %s12, 6
    %s19 = sphi 0, %s31
    %s20 = sphi 0, %s27
    %s21 = sphi 0, %s19
    %s22 = sphi 0, %s20
    %s23 = sphi 0, %s21
    %s24 = sphi 0, %s22
    %s32 = sphi 0, %s32
    %s34 = sphi 0, %s32
    %s35 = sphi 0, %s34
    %s49 = sphi 0, %s35
    %s53 = sphi 0, %s53
    %s55 = sphi 0, %s53
    %s56 = sphi 0, %s55
    %s70 = sphi 0, %s56
    %s74 = sphi 0, %s74
    %s76 = sphi 0, %s74
    %s77 = sphi 0, %s76
    %s91 = sphi 0, %s77
    %s99 = sphi 0, %s101
    %s102 = sphi 0, %s99
    %s103 = sphi 0, %s102
    %s119 = sphi 0, %s103
    %s127 = sphi 0, %s129
    %s130 = sphi 0, %s127
    %s131 = sphi 0, %s130
    %s147 = sphi 0, %s131
  $region4: #{unet_conv_block_2d.3} parent=0 // loop_header_branch
    %15 = sbr.rel (%p13) target = $region8
  $region5: #{unet_conv_block_2d.3} parent=0 // loop_body
    %s17 = ssub.s32 %s12, 1
    %s18 = ssub.s32 %s12, 2
    %s25 = sadd.s32 1, %s20
    %p26 = scmp.ge.s32.totalorder %s25, 2
    %s27 = scalar_select %p26, 0, %s25
    %s28 = sadd.s32 1, %s19
    %s29 = scalar_select %p26, %s28, %s19
    %p30 = scmp.ge.s32.totalorder %s29, 2
    %s31 = scalar_select %p30, 0, %s29
    %s33 = sadd.s32 %s32, 1
    %p36 = scmp.eq.s32.totalorder %s12, 3
    %p37 = scmp.ne.s32.totalorder %s32, %s34
    %p38 = scmp.eq.s32.totalorder %s12, 0
    %p39 = por %p37, %p38
    %p40 = scmp.ne.s32.totalorder %s32, %s34
    %p41 = scmp.eq.s32.totalorder %s17, 3
    %p42 = por %p40, %p41
    %p43 = scmp.ne.s32.totalorder %s34, %s35
    %p44 = scmp.eq.s32.totalorder %s17, 0
    %p45 = por %p43, %p44
    %p46 = scmp.ne.s32.totalorder %s34, %s35
    %p47 = scmp.eq.s32.totalorder %s18, 3
    %p48 = por %p46, %p47
    %p50 = scmp.ne.s32.totalorder %s35, %s49
    %p51 = scmp.eq.s32.totalorder %s18, 0
    %p52 = por %p50, %p51
    %s54 = sadd.s32 %s53, 1
    %p57 = scmp.eq.s32.totalorder %s12, 3
    %p58 = scmp.ne.s32.totalorder %s53, %s55
    %p59 = scmp.eq.s32.totalorder %s12, 0
    %p60 = por %p58, %p59
    %p61 = scmp.ne.s32.totalorder %s53, %s55
    %p62 = scmp.eq.s32.totalorder %s17, 3
    %p63 = por %p61, %p62
    %p64 = scmp.ne.s32.totalorder %s55, %s56
    %p65 = scmp.eq.s32.totalorder %s17, 0
    %p66 = por %p64, %p65
    %p67 = scmp.ne.s32.totalorder %s55, %s56
    %p68 = scmp.eq.s32.totalorder %s18, 3
    %p69 = por %p67, %p68
    %p71 = scmp.ne.s32.totalorder %s56, %s70
    %p72 = scmp.eq.s32.totalorder %s18, 0
    %p73 = por %p71, %p72
    %s75 = sadd.s32 %s74, 1
    %p78 = scmp.eq.s32.totalorder %s12, 3
    %p79 = scmp.ne.s32.totalorder %s74, %s76
    %p80 = scmp.eq.s32.totalorder %s12, 0
    %p81 = por %p79, %p80
    %p82 = scmp.ne.s32.totalorder %s74, %s76
    %p83 = scmp.eq.s32.totalorder %s17, 3
    %p84 = por %p82, %p83
    %p85 = scmp.ne.s32.totalorder %s76, %s77
    %p86 = scmp.eq.s32.totalorder %s17, 0
    %p87 = por %p85, %p86
    %p88 = scmp.ne.s32.totalorder %s76, %s77
    %p89 = scmp.eq.s32.totalorder %s18, 3
    %p90 = por %p88, %p89
    %p92 = scmp.ne.s32.totalorder %s77, %s91
    %p93 = scmp.eq.s32.totalorder %s18, 0
    %p94 = por %p92, %p93
    %s95 = ssub.s32 %s19, %s31
    %s96 = ssub.s32 %s20, %s27
    %s97 = sor.u32 %s95, %s96
    %p98 = scmp.eq.s32.totalorder %s97, 0
    %s100 = sadd.s32 %s99, 1
    %s101 = scalar_select %p98, %s99, %s100
    %p104 = pneg %p98
    %p105 = scmp.eq.s32.totalorder %s12, 3
    %p106 = por %p104, %p105
    %p107 = scmp.ne.s32.totalorder %s99, %s102
    %p108 = scmp.eq.s32.totalorder %s12, 0
    %p109 = por %p107, %p108
    %p110 = scmp.ne.s32.totalorder %s99, %s102
    %p111 = scmp.eq.s32.totalorder %s17, 3
    %p112 = por %p110, %p111
    %p113 = scmp.ne.s32.totalorder %s102, %s103
    %p114 = scmp.eq.s32.totalorder %s17, 0
    %p115 = por %p113, %p114
    %p116 = scmp.ne.s32.totalorder %s102, %s103
    %p117 = scmp.eq.s32.totalorder %s18, 3
    %p118 = por %p116, %p117
    %p120 = scmp.ne.s32.totalorder %s103, %s119
    %p121 = scmp.eq.s32.totalorder %s18, 0
    %p122 = por %p120, %p121
    %s123 = ssub.s32 %s19, %s31
    %s124 = ssub.s32 %s20, %s27
    %s125 = sor.u32 %s123, %s124
    %p126 = scmp.eq.s32.totalorder %s125, 0
    %s128 = sadd.s32 %s127, 1
    %s129 = scalar_select %p126, %s127, %s128
    %p132 = pneg %p126
    %p133 = scmp.eq.s32.totalorder %s12, 3
    %p134 = por %p132, %p133
    %p135 = scmp.ne.s32.totalorder %s127, %s130
    %p136 = scmp.eq.s32.totalorder %s12, 0
    %p137 = por %p135, %p136
    %p138 = scmp.ne.s32.totalorder %s127, %s130
    %p139 = scmp.eq.s32.totalorder %s17, 3
    %p140 = por %p138, %p139
    %p141 = scmp.ne.s32.totalorder %s130, %s131
    %p142 = scmp.eq.s32.totalorder %s17, 0
    %p143 = por %p141, %p142
    %p144 = scmp.ne.s32.totalorder %s130, %s131
    %p145 = scmp.eq.s32.totalorder %s18, 3
    %p146 = por %p144, %p145
    %p148 = scmp.ne.s32.totalorder %s131, %s147
    %p149 = scmp.eq.s32.totalorder %s18, 0
    %p150 = por %p148, %p149
    %p151 = scmp.le.s32.totalorder 1, %s12
    %p152 = scmp.lt.s32.totalorder %s12, 5
    %p153 = pnand %p151, %p152
    %p154 = pneg %p153
    // Predicated region
    $region9: #{unet_conv_block_2d.3} parent=5 // pred_check
      _
    $region10: #{unet_conv_block_2d.3} parent=5 // pred_check_branch
      %156 = sbr.rel (%p153) target = $region12
    $region11: #{unet_conv_block_2d.3} parent=5 // pred_region
      %s157 = ssub.s32 %s12, 1
      // Predicated region
      $region13: #{unet_conv_block_2d.3} parent=11 // pred_check
        %p158 = pneg %p45
      $region14: #{unet_conv_block_2d.3} parent=11 // pred_check_branch
        %160 = sbr.rel (%p158) target = $region16
      $region15: #{unet_conv_block_2d.3} parent=11 // pred_region
        _
      $region16: #{unet_conv_block_2d.3} parent=11 // pred_fallthru
        _
      // Predicated region
      $region17: #{unet_conv_block_2d.3} parent=11 // pred_check
        %p161 = pneg %p66
      $region18: #{unet_conv_block_2d.3} parent=11 // pred_check_branch
        %163 = sbr.rel (%p161) target = $region20
      $region19: #{unet_conv_block_2d.3} parent=11 // pred_region
        _
      $region20: #{unet_conv_block_2d.3} parent=11 // pred_fallthru
        _
      // Predicated region
      $region21: #{unet_conv_block_2d.3} parent=11 // pred_check
        %p164 = pneg %p87
      $region22: #{unet_conv_block_2d.3} parent=11 // pred_check_branch
        %166 = sbr.rel (%p164) target = $region24
      $region23: #{unet_conv_block_2d.3} parent=11 // pred_region
        _
      $region24: #{unet_conv_block_2d.3} parent=11 // pred_fallthru
        _
    $region12: #{unet_conv_block_2d.3} parent=5 // pred_fallthru
      _
    %p167 = scmp.lt.s32.totalorder %s12, 4
    // Predicated region
    $region25: #{unet_conv_block_2d.3} parent=5 // pred_check
      %p168 = pneg %p167
    $region26: #{unet_conv_block_2d.3} parent=5 // pred_check_branch
      %170 = sbr.rel (%p168) target = $region28
    $region27: #{unet_conv_block_2d.3} parent=5 // pred_region
      _
    $region28: #{unet_conv_block_2d.3} parent=5 // pred_fallthru
      _
    %p171 = scmp.le.s32.totalorder 1, %s12
    %p172 = scmp.lt.s32.totalorder %s12, 5
    %p173 = pnand %p171, %p172
    %p174 = pneg %p173
    // Predicated region
    $region29: #{unet_conv_block_2d.3} parent=5 // pred_check
      _
    $region30: #{unet_conv_block_2d.3} parent=5 // pred_check_branch
      %176 = sbr.rel (%p173) target = $region32
    $region31: #{unet_conv_block_2d.3} parent=5 // pred_region
      %s177 = ssub.s32 %s12, 1
      %p178 = pneg %p45
      %p179 = pneg %p42
      %p180 = pneg %p66
      %p181 = pneg %p63
      %p182 = pneg %p87
      %p183 = pneg %p84
      %p184 = pneg %p115
      %p185 = pneg %p112
      %s186 = smul.u32 8, %s22
      %p187 = scmp.lt.s32.totalorder %s21, 1
      %s188 = scalar_select %p187, %s21, 1
      %p189 = scmp.lt.s32.totalorder %s186, 15
      %s190 = scalar_select %p189, %s186, 15
      %s191 = smul.addr %s190, 2
      %s192 = smul.addr %s188, 32
      %s193 = sadd.s32 %s191, %s192
      %s194 = smul.addr %s193, 4
      %s195 = scalar_lea.vmem %s4, %s194
      %p196 = pneg %p143
      %p197 = pneg %p140
      %p198 = scmp.lt.s32.totalorder %s21, 1
      %s199 = scalar_select %p198, %s21, 1
      %p200 = scmp.lt.s32.totalorder %s22, 1
      %s201 = scalar_select %p200, %s22, 1
      %s202 = smul.addr %s199, 2
      %s203 = sadd.s32 %s201, %s202
      %s204 = smul.addr %s203, 8
      %s205 = scalar_lea.vmem %s5, %s204
      %s206 = smul.u32 8, %s22
      %p207 = scmp.lt.s32.totalorder %s21, 1
      %s208 = scalar_select %p207, %s21, 1
      %p209 = scmp.lt.s32.totalorder %s206, 15
      %s210 = scalar_select %p209, %s206, 15
      %s211 = smul.addr %s210, 2
      %s212 = smul.addr %s208, 32
      %s213 = sadd.s32 %s211, %s212
      %s214 = smul.addr %s213, 4
      %s215 = scalar_lea.vmem %s4, %s214
      %s216 = smul.u32 8, %s22
      %p217 = scmp.lt.s32.totalorder %s21, 1
      %s218 = scalar_select %p217, %s21, 1
      %p219 = scmp.lt.s32.totalorder %s22, 1
      %s220 = scalar_select %p219, %s22, 1
      %s221 = smul.addr %s218, 2
      %s222 = sadd.s32 %s220, %s221
      %s223 = smul.addr %s222, 8
      %s224 = scalar_lea.vmem %s5, %s223
      %p228 = scmp.lt.s32.totalorder %s22, 0
      %s229 = ssub.s32 0, %s22
      %s230 = scalar_select %p228, %s229, %s22
      %s231 = sand.u32 %s230, 1
      %s232 = ssub.s32 0, %s231
      %s233 = scalar_select %p228, %s232, %s231
      %p234 = scmp.ne.s32.totalorder %s233, 0
      %p235 = scmp.lt.s32.totalorder %s233, 0
      %p236 = pnand %p235, %p234
      %p237 = pneg %p236
      %s238 = sadd.s32 %s233, 2
      %s239 = scalar_select %p237, %s238, %s233
      %s240 = ssub.s32 1, %s239
      %p241 = scmp.eq.s32.totalorder %s22, 0
      // Predicated region
      $region33: #{unet_conv_block_2d.3} parent=31 // pred_check
        %p242 = pneg %p241
      $region34: #{unet_conv_block_2d.3} parent=31 // pred_check_branch
        %244 = sbr.rel (%p242) target = $region36
      $region35: #{unet_conv_block_2d.3} parent=31 // pred_region
        %s245 = smul.u32 %s22, 8
        %s246 = smul.u32 %s245, 2
        %s247 = smul.u32 %s21, 32
        %s248 = sadd.s32 %s246, %s247
        %s249 = smul.addr %s248, 4
        %s250 = scalar_lea.vmem %s2, %s249
        %s251 = smul.u32 %s239, 12
        %s252 = sadd.s32 2, %s251
        %s253 = smul.addr %s252, 8
        %s254 = scalar_lea.vmem [#allocation2], %s253
        %s255 = smul.u32 %s239, 3
        %s256 = scalar_lea.sflag [#allocation3], %s255
        %p258 = scmp.lt.u32.totalorder 64, 8
        %p259 = pneg %p258
        // Predicated region
        $region37: #{unet_conv_block_2d.3} parent=35 // pred_check
          _
        $region38: #{unet_conv_block_2d.3} parent=35 // pred_check_branch
          %261 = sbr.rel (%p258) target = $region40
        $region39: #{unet_conv_block_2d.3} parent=35 // pred_region
          %s276 = sand.u32 64, 7
          %p277 = scmp.eq.s32.totalorder %s276, 0
          // Predicated region
          $region52: #{unet_conv_block_2d.3} parent=39 // pred_check
            %p278 = pneg %p277
          $region53: #{unet_conv_block_2d.3} parent=39 // pred_check_branch
            %280 = sbr.rel (%p278) target = $region55
          $region54: #{unet_conv_block_2d.3} parent=39 // pred_region
            loop: start=0, step=1, limit=1
            $region56: #{unet_conv_block_2d.3} parent=54 // loop_pre_header
              _
            $region57: #{unet_conv_block_2d.3} parent=54 // loop_header
              %s282 = sphi 0, %s286
              %p283 = scmp.ge.s32.totalorder %s282, 1
              %s287 = sphi %s250, %s250
              %s288 = sphi %s254, %s254
            $region58: #{unet_conv_block_2d.3} parent=54 // loop_header_branch
              %285 = sbr.rel (%p283) target = $region62
            $region59: #{unet_conv_block_2d.3} parent=54 // loop_body
              %v289 = vld [vmem:[%s287] sm:$0xff]
              %290 = vst [vmem:[%s288] sm:$0xff] %v289
              %v291 = vld [vmem:[%s287 + $0x8] sm:$0xff]
              %292 = vst [vmem:[%s288 + $0x8] sm:$0xff] %v291
              %v293 = vld [vmem:[%s287 + $0x10] sm:$0xff]
              %294 = vst [vmem:[%s288 + $0x10] sm:$0xff] %v293
              %v295 = vld [vmem:[%s287 + $0x18] sm:$0xff]
              %296 = vst [vmem:[%s288 + $0x18] sm:$0xff] %v295
              %v297 = vld [vmem:[%s287 + $0x20] sm:$0xff]
              %298 = vst [vmem:[%s288 + $0x20] sm:$0xff] %v297
              %v299 = vld [vmem:[%s287 + $0x28] sm:$0xff]
              %300 = vst [vmem:[%s288 + $0x28] sm:$0xff] %v299
              %v301 = vld [vmem:[%s287 + $0x30] sm:$0xff]
              %302 = vst [vmem:[%s288 + $0x30] sm:$0xff] %v301
              %v303 = vld [vmem:[%s287 + $0x38] sm:$0xff]
              %304 = vst [vmem:[%s288 + $0x38] sm:$0xff] %v303
            $region60: #{unet_conv_block_2d.3} parent=54 // loop_footer
              %s286 = sadd.s32 1, %s282
            $region61: #{unet_conv_block_2d.3} parent=54 // loop_footer_branch
              %281 = sbr.rel target = $region57
            $region62: #{unet_conv_block_2d.3} parent=54 // loop_exit
              _
          $region55: #{unet_conv_block_2d.3} parent=39 // pred_fallthru
            _
          %p305 = pneg %p277
          // Predicated region
          $region63: #{unet_conv_block_2d.3} parent=39 // pred_check
            _
          $region64: #{unet_conv_block_2d.3} parent=39 // pred_check_branch
            %307 = sbr.rel (%p277) target = $region66
          $region65: #{unet_conv_block_2d.3} parent=39 // pred_region
            %s308 = sand.u32 64, 7
          $region66: #{unet_conv_block_2d.3} parent=39 // pred_fallthru
            _
        $region40: #{unet_conv_block_2d.3} parent=35 // pred_fallthru
          _
        // Predicated region
        $region41: #{unet_conv_block_2d.3} parent=35 // pred_check
          %p262 = pneg %p258
        $region42: #{unet_conv_block_2d.3} parent=35 // pred_check_branch
          %264 = sbr.rel (%p262) target = $region44
        $region43: #{unet_conv_block_2d.3} parent=35 // pred_region
          %s265 = sshllo.u32 0, 64
          loop: start=0, step=1, limit=1
          $region45: #{unet_conv_block_2d.3} parent=43 // loop_pre_header
            _
          $region46: #{unet_conv_block_2d.3} parent=43 // loop_header
            %s267 = sphi 0, %s271
            %p268 = scmp.ge.s32.totalorder %s267, 1
            %s272 = sphi %s250, %s250
            %s273 = sphi %s254, %s254
          $region47: #{unet_conv_block_2d.3} parent=43 // loop_header_branch
            %270 = sbr.rel (%p268) target = $region51
          $region48: #{unet_conv_block_2d.3} parent=43 // loop_body
            %v274 = vld [vmem:[%s272] sm:%s265]
            %275 = vst [vmem:[%s273] sm:%s265] %v274
          $region49: #{unet_conv_block_2d.3} parent=43 // loop_footer
            %s271 = sadd.s32 1, %s267
          $region50: #{unet_conv_block_2d.3} parent=43 // loop_footer_branch
            %266 = sbr.rel target = $region46
          $region51: #{unet_conv_block_2d.3} parent=43 // loop_exit
            _
        $region44: #{unet_conv_block_2d.3} parent=35 // pred_fallthru
          _
        // Predicated region
        $region67: #{unet_conv_block_2d.3} parent=35 // pred_check
          _
        $region68: #{unet_conv_block_2d.3} parent=35 // pred_check_branch
          %311 = sbr.rel (0) target = $region70
        $region69: #{unet_conv_block_2d.3} parent=35 // pred_region
          %312 = vsyncadd %s256, 1024
        $region70: #{unet_conv_block_2d.3} parent=35 // pred_fallthru
          _
        %p313 = scmp.gt.s32.totalorder %s22, 0
        // Predicated region
        $region71: #{unet_conv_block_2d.3} parent=35 // pred_check
          %p314 = pneg %p313
        $region72: #{unet_conv_block_2d.3} parent=35 // pred_check_branch
          %316 = sbr.rel (%p314) target = $region74
        $region73: #{unet_conv_block_2d.3} parent=35 // pred_region
          %s317 = ssub.s32 %s245, 1
          %s318 = smul.u32 %s317, 2
          %s319 = sadd.s32 %s318, %s247
          %s320 = smul.addr %s319, 4
          %s321 = scalar_lea.vmem %s2, %s320
          %s322 = sadd.s32 1, %s251
          %s323 = smul.addr %s322, 8
          %s324 = scalar_lea.vmem [#allocation2], %s323
          %s325 = sadd.s32 1, %s255
          %s326 = scalar_lea.sflag [#allocation3], %s325
          %p328 = scmp.lt.u32.totalorder 8, 8
          %p329 = pneg %p328
          // Predicated region
          $region75: #{unet_conv_block_2d.3} parent=73 // pred_check
            _
          $region76: #{unet_conv_block_2d.3} parent=73 // pred_check_branch
            %331 = sbr.rel (%p328) target = $region78
          $region77: #{unet_conv_block_2d.3} parent=73 // pred_region
            %s346 = sand.u32 8, 7
            %p347 = scmp.eq.s32.totalorder %s346, 0
            // Predicated region
            $region90: #{unet_conv_block_2d.3} parent=77 // pred_check
              %p348 = pneg %p347
            $region91: #{unet_conv_block_2d.3} parent=77 // pred_check_branch
              %350 = sbr.rel (%p348) target = $region93
            $region92: #{unet_conv_block_2d.3} parent=77 // pred_region
              loop: start=0, step=1, limit=1
              $region94: #{unet_conv_block_2d.3} parent=92 // loop_pre_header
                _
              $region95: #{unet_conv_block_2d.3} parent=92 // loop_header
                %s352 = sphi 0, %s356
                %p353 = scmp.ge.s32.totalorder %s352, 1
                %s357 = sphi %s321, %s321
                %s358 = sphi %s324, %s324
              $region96: #{unet_conv_block_2d.3} parent=92 // loop_header_branch
                %355 = sbr.rel (%p353) target = $region100
              $region97: #{unet_conv_block_2d.3} parent=92 // loop_body
                %v359 = vld [vmem:[%s357] sm:$0xff]
                %360 = vst [vmem:[%s358] sm:$0xff] %v359
              $region98: #{unet_conv_block_2d.3} parent=92 // loop_footer
                %s356 = sadd.s32 1, %s352
              $region99: #{unet_conv_block_2d.3} parent=92 // loop_footer_branch
                %351 = sbr.rel target = $region95
              $region100: #{unet_conv_block_2d.3} parent=92 // loop_exit
                _
            $region93: #{unet_conv_block_2d.3} parent=77 // pred_fallthru
              _
            %p361 = pneg %p347
            // Predicated region
            $region101: #{unet_conv_block_2d.3} parent=77 // pred_check
              _
            $region102: #{unet_conv_block_2d.3} parent=77 // pred_check_branch
              %363 = sbr.rel (%p347) target = $region104
            $region103: #{unet_conv_block_2d.3} parent=77 // pred_region
              %s364 = sand.u32 8, 7
            $region104: #{unet_conv_block_2d.3} parent=77 // pred_fallthru
              _
          $region78: #{unet_conv_block_2d.3} parent=73 // pred_fallthru
            _
          // Predicated region
          $region79: #{unet_conv_block_2d.3} parent=73 // pred_check
            %p332 = pneg %p328
          $region80: #{unet_conv_block_2d.3} parent=73 // pred_check_branch
            %334 = sbr.rel (%p332) target = $region82
          $region81: #{unet_conv_block_2d.3} parent=73 // pred_region
            %s335 = sshllo.u32 0, 8
            loop: start=0, step=1, limit=1
            $region83: #{unet_conv_block_2d.3} parent=81 // loop_pre_header
              _
            $region84: #{unet_conv_block_2d.3} parent=81 // loop_header
              %s337 = sphi 0, %s341
              %p338 = scmp.ge.s32.totalorder %s337, 1
              %s342 = sphi %s321, %s321
              %s343 = sphi %s324, %s324
            $region85: #{unet_conv_block_2d.3} parent=81 // loop_header_branch
              %340 = sbr.rel (%p338) target = $region89
            $region86: #{unet_conv_block_2d.3} parent=81 // loop_body
              %v344 = vld [vmem:[%s342] sm:%s335]
              %345 = vst [vmem:[%s343] sm:%s335] %v344
            $region87: #{unet_conv_block_2d.3} parent=81 // loop_footer
              %s341 = sadd.s32 1, %s337
            $region88: #{unet_conv_block_2d.3} parent=81 // loop_footer_branch
              %336 = sbr.rel target = $region84
            $region89: #{unet_conv_block_2d.3} parent=81 // loop_exit
              _
          $region82: #{unet_conv_block_2d.3} parent=73 // pred_fallthru
            _
          // Predicated region
          $region105: #{unet_conv_block_2d.3} parent=73 // pred_check
            _
          $region106: #{unet_conv_block_2d.3} parent=73 // pred_check_branch
            %367 = sbr.rel (0) target = $region108
          $region107: #{unet_conv_block_2d.3} parent=73 // pred_region
            %368 = vsyncadd %s326, 128
          $region108: #{unet_conv_block_2d.3} parent=73 // pred_fallthru
            _
        $region74: #{unet_conv_block_2d.3} parent=35 // pred_fallthru
          _
        %p369 = scmp.lt.s32.totalorder %s22, 1
        // Predicated region
        $region109: #{unet_conv_block_2d.3} parent=35 // pred_check
          %p370 = pneg %p369
        $region110: #{unet_conv_block_2d.3} parent=35 // pred_check_branch
          %372 = sbr.rel (%p370) target = $region112
        $region111: #{unet_conv_block_2d.3} parent=35 // pred_region
          %s373 = sadd.s32 %s245, 8
          %s374 = smul.u32 %s373, 2
          %s375 = sadd.s32 %s374, %s247
          %s376 = smul.addr %s375, 4
          %s377 = scalar_lea.vmem %s2, %s376
          %s378 = sadd.s32 10, %s251
          %s379 = smul.addr %s378, 8
          %s380 = scalar_lea.vmem [#allocation2], %s379
          %s381 = sadd.s32 2, %s255
          %s382 = scalar_lea.sflag [#allocation3], %s381
          %p384 = scmp.lt.u32.totalorder 8, 8
          %p385 = pneg %p384
          // Predicated region
          $region113: #{unet_conv_block_2d.3} parent=111 // pred_check
            _
          $region114: #{unet_conv_block_2d.3} parent=111 // pred_check_branch
            %387 = sbr.rel (%p384) target = $region116
          $region115: #{unet_conv_block_2d.3} parent=111 // pred_region
            %s402 = sand.u32 8, 7
            %p403 = scmp.eq.s32.totalorder %s402, 0
            // Predicated region
            $region128: #{unet_conv_block_2d.3} parent=115 // pred_check
              %p404 = pneg %p403
            $region129: #{unet_conv_block_2d.3} parent=115 // pred_check_branch
              %406 = sbr.rel (%p404) target = $region131
            $region130: #{unet_conv_block_2d.3} parent=115 // pred_region
              loop: start=0, step=1, limit=1
              $region132: #{unet_conv_block_2d.3} parent=130 // loop_pre_header
                _
              $region133: #{unet_conv_block_2d.3} parent=130 // loop_header
                %s408 = sphi 0, %s412
                %p409 = scmp.ge.s32.totalorder %s408, 1
                %s413 = sphi %s377, %s377
                %s414 = sphi %s380, %s380
              $region134: #{unet_conv_block_2d.3} parent=130 // loop_header_branch
                %411 = sbr.rel (%p409) target = $region138
              $region135: #{unet_conv_block_2d.3} parent=130 // loop_body
                %v415 = vld [vmem:[%s413] sm:$0xff]
                %416 = vst [vmem:[%s414] sm:$0xff] %v415
              $region136: #{unet_conv_block_2d.3} parent=130 // loop_footer
                %s412 = sadd.s32 1, %s408
              $region137: #{unet_conv_block_2d.3} parent=130 // loop_footer_branch
                %407 = sbr.rel target = $region133
              $region138: #{unet_conv_block_2d.3} parent=130 // loop_exit
                _
            $region131: #{unet_conv_block_2d.3} parent=115 // pred_fallthru
              _
            %p417 = pneg %p403
            // Predicated region
            $region139: #{unet_conv_block_2d.3} parent=115 // pred_check
              _
            $region140: #{unet_conv_block_2d.3} parent=115 // pred_check_branch
              %419 = sbr.rel (%p403) target = $region142
            $region141: #{unet_conv_block_2d.3} parent=115 // pred_region
              %s420 = sand.u32 8, 7
            $region142: #{unet_conv_block_2d.3} parent=115 // pred_fallthru
              _
          $region116: #{unet_conv_block_2d.3} parent=111 // pred_fallthru
            _
          // Predicated region
          $region117: #{unet_conv_block_2d.3} parent=111 // pred_check
            %p388 = pneg %p384
          $region118: #{unet_conv_block_2d.3} parent=111 // pred_check_branch
            %390 = sbr.rel (%p388) target = $region120
          $region119: #{unet_conv_block_2d.3} parent=111 // pred_region
            %s391 = sshllo.u32 0, 8
            loop: start=0, step=1, limit=1
            $region121: #{unet_conv_block_2d.3} parent=119 // loop_pre_header
              _
            $region122: #{unet_conv_block_2d.3} parent=119 // loop_header
              %s393 = sphi 0, %s397
              %p394 = scmp.ge.s32.totalorder %s393, 1
              %s398 = sphi %s377, %s377
              %s399 = sphi %s380, %s380
            $region123: #{unet_conv_block_2d.3} parent=119 // loop_header_branch
              %396 = sbr.rel (%p394) target = $region127
            $region124: #{unet_conv_block_2d.3} parent=119 // loop_body
              %v400 = vld [vmem:[%s398] sm:%s391]
              %401 = vst [vmem:[%s399] sm:%s391] %v400
            $region125: #{unet_conv_block_2d.3} parent=119 // loop_footer
              %s397 = sadd.s32 1, %s393
            $region126: #{unet_conv_block_2d.3} parent=119 // loop_footer_branch
              %392 = sbr.rel target = $region122
            $region127: #{unet_conv_block_2d.3} parent=119 // loop_exit
              _
          $region120: #{unet_conv_block_2d.3} parent=111 // pred_fallthru
            _
          // Predicated region
          $region143: #{unet_conv_block_2d.3} parent=111 // pred_check
            _
          $region144: #{unet_conv_block_2d.3} parent=111 // pred_check_branch
            %423 = sbr.rel (0) target = $region146
          $region145: #{unet_conv_block_2d.3} parent=111 // pred_region
            %424 = vsyncadd %s382, 128
          $region146: #{unet_conv_block_2d.3} parent=111 // pred_fallthru
            _
        $region112: #{unet_conv_block_2d.3} parent=35 // pred_fallthru
          _
      $region36: #{unet_conv_block_2d.3} parent=31 // pred_fallthru
        _
      %s425 = sadd.s32 %s22, 1
      %p426 = scmp.lt.s32.totalorder %s425, 2
      // Predicated region
      $region147: #{unet_conv_block_2d.3} parent=31 // pred_check
        %p427 = pneg %p426
      $region148: #{unet_conv_block_2d.3} parent=31 // pred_check_branch
        %429 = sbr.rel (%p427) target = $region150
      $region149: #{unet_conv_block_2d.3} parent=31 // pred_region
        %s430 = smul.u32 %s425, 8
        %s431 = smul.u32 %s430, 2
        %s432 = smul.u32 %s21, 32
        %s433 = sadd.s32 %s431, %s432
        %s434 = smul.addr %s433, 4
        %s435 = scalar_lea.vmem %s2, %s434
        %s436 = smul.u32 %s240, 12
        %s437 = sadd.s32 2, %s436
        %s438 = smul.addr %s437, 8
        %s439 = scalar_lea.vmem [#allocation2], %s438
        %s440 = smul.u32 %s240, 3
        %s441 = scalar_lea.sflag [#allocation3], %s440
        %p443 = scmp.lt.u32.totalorder 64, 8
        %p444 = pneg %p443
        // Predicated region
        $region151: #{unet_conv_block_2d.3} parent=149 // pred_check
          _
        $region152: #{unet_conv_block_2d.3} parent=149 // pred_check_branch
          %446 = sbr.rel (%p443) target = $region154
        $region153: #{unet_conv_block_2d.3} parent=149 // pred_region
          %s461 = sand.u32 64, 7
          %p462 = scmp.eq.s32.totalorder %s461, 0
          // Predicated region
          $region166: #{unet_conv_block_2d.3} parent=153 // pred_check
            %p463 = pneg %p462
          $region167: #{unet_conv_block_2d.3} parent=153 // pred_check_branch
            %465 = sbr.rel (%p463) target = $region169
          $region168: #{unet_conv_block_2d.3} parent=153 // pred_region
            loop: start=0, step=1, limit=1
            $region170: #{unet_conv_block_2d.3} parent=168 // loop_pre_header
              _
            $region171: #{unet_conv_block_2d.3} parent=168 // loop_header
              %s467 = sphi 0, %s471
              %p468 = scmp.ge.s32.totalorder %s467, 1
              %s472 = sphi %s435, %s435
              %s473 = sphi %s439, %s439
            $region172: #{unet_conv_block_2d.3} parent=168 // loop_header_branch
              %470 = sbr.rel (%p468) target = $region176
            $region173: #{unet_conv_block_2d.3} parent=168 // loop_body
              %v474 = vld [vmem:[%s472] sm:$0xff]
              %475 = vst [vmem:[%s473] sm:$0xff] %v474
              %v476 = vld [vmem:[%s472 + $0x8] sm:$0xff]
              %477 = vst [vmem:[%s473 + $0x8] sm:$0xff] %v476
              %v478 = vld [vmem:[%s472 + $0x10] sm:$0xff]
              %479 = vst [vmem:[%s473 + $0x10] sm:$0xff] %v478
              %v480 = vld [vmem:[%s472 + $0x18] sm:$0xff]
              %481 = vst [vmem:[%s473 + $0x18] sm:$0xff] %v480
              %v482 = vld [vmem:[%s472 + $0x20] sm:$0xff]
              %483 = vst [vmem:[%s473 + $0x20] sm:$0xff] %v482
              %v484 = vld [vmem:[%s472 + $0x28] sm:$0xff]
              %485 = vst [vmem:[%s473 + $0x28] sm:$0xff] %v484
              %v486 = vld [vmem:[%s472 + $0x30] sm:$0xff]
              %487 = vst [vmem:[%s473 + $0x30] sm:$0xff] %v486
              %v488 = vld [vmem:[%s472 + $0x38] sm:$0xff]
              %489 = vst [vmem:[%s473 + $0x38] sm:$0xff] %v488
            $region174: #{unet_conv_block_2d.3} parent=168 // loop_footer
              %s471 = sadd.s32 1, %s467
            $region175: #{unet_conv_block_2d.3} parent=168 // loop_footer_branch
              %466 = sbr.rel target = $region171
            $region176: #{unet_conv_block_2d.3} parent=168 // loop_exit
              _
          $region169: #{unet_conv_block_2d.3} parent=153 // pred_fallthru
            _
          %p490 = pneg %p462
          // Predicated region
          $region177: #{unet_conv_block_2d.3} parent=153 // pred_check
            _
          $region178: #{unet_conv_block_2d.3} parent=153 // pred_check_branch
            %492 = sbr.rel (%p462) target = $region180
          $region179: #{unet_conv_block_2d.3} parent=153 // pred_region
            %s493 = sand.u32 64, 7
          $region180: #{unet_conv_block_2d.3} parent=153 // pred_fallthru
            _
        $region154: #{unet_conv_block_2d.3} parent=149 // pred_fallthru
          _
        // Predicated region
        $region155: #{unet_conv_block_2d.3} parent=149 // pred_check
          %p447 = pneg %p443
        $region156: #{unet_conv_block_2d.3} parent=149 // pred_check_branch
          %449 = sbr.rel (%p447) target = $region158
        $region157: #{unet_conv_block_2d.3} parent=149 // pred_region
          %s450 = sshllo.u32 0, 64
          loop: start=0, step=1, limit=1
          $region159: #{unet_conv_block_2d.3} parent=157 // loop_pre_header
            _
          $region160: #{unet_conv_block_2d.3} parent=157 // loop_header
            %s452 = sphi 0, %s456
            %p453 = scmp.ge.s32.totalorder %s452, 1
            %s457 = sphi %s435, %s435
            %s458 = sphi %s439, %s439
          $region161: #{unet_conv_block_2d.3} parent=157 // loop_header_branch
            %455 = sbr.rel (%p453) target = $region165
          $region162: #{unet_conv_block_2d.3} parent=157 // loop_body
            %v459 = vld [vmem:[%s457] sm:%s450]
            %460 = vst [vmem:[%s458] sm:%s450] %v459
          $region163: #{unet_conv_block_2d.3} parent=157 // loop_footer
            %s456 = sadd.s32 1, %s452
          $region164: #{unet_conv_block_2d.3} parent=157 // loop_footer_branch
            %451 = sbr.rel target = $region160
          $region165: #{unet_conv_block_2d.3} parent=157 // loop_exit
            _
        $region158: #{unet_conv_block_2d.3} parent=149 // pred_fallthru
          _
        // Predicated region
        $region181: #{unet_conv_block_2d.3} parent=149 // pred_check
          _
        $region182: #{unet_conv_block_2d.3} parent=149 // pred_check_branch
          %496 = sbr.rel (0) target = $region184
        $region183: #{unet_conv_block_2d.3} parent=149 // pred_region
          %497 = vsyncadd %s441, 1024
        $region184: #{unet_conv_block_2d.3} parent=149 // pred_fallthru
          _
        %p498 = scmp.gt.s32.totalorder %s425, 0
        // Predicated region
        $region185: #{unet_conv_block_2d.3} parent=149 // pred_check
          %p499 = pneg %p498
        $region186: #{unet_conv_block_2d.3} parent=149 // pred_check_branch
          %501 = sbr.rel (%p499) target = $region188
        $region187: #{unet_conv_block_2d.3} parent=149 // pred_region
          %s502 = ssub.s32 %s430, 1
          %s503 = smul.u32 %s502, 2
          %s504 = sadd.s32 %s503, %s432
          %s505 = smul.addr %s504, 4
          %s506 = scalar_lea.vmem %s2, %s505
          %s507 = sadd.s32 1, %s436
          %s508 = smul.addr %s507, 8
          %s509 = scalar_lea.vmem [#allocation2], %s508
          %s510 = sadd.s32 1, %s440
          %s511 = scalar_lea.sflag [#allocation3], %s510
          %p513 = scmp.lt.u32.totalorder 8, 8
          %p514 = pneg %p513
          // Predicated region
          $region189: #{unet_conv_block_2d.3} parent=187 // pred_check
            _
          $region190: #{unet_conv_block_2d.3} parent=187 // pred_check_branch
            %516 = sbr.rel (%p513) target = $region192
          $region191: #{unet_conv_block_2d.3} parent=187 // pred_region
            %s531 = sand.u32 8, 7
            %p532 = scmp.eq.s32.totalorder %s531, 0
            // Predicated region
            $region204: #{unet_conv_block_2d.3} parent=191 // pred_check
              %p533 = pneg %p532
            $region205: #{unet_conv_block_2d.3} parent=191 // pred_check_branch
              %535 = sbr.rel (%p533) target = $region207
            $region206: #{unet_conv_block_2d.3} parent=191 // pred_region
              loop: start=0, step=1, limit=1
              $region208: #{unet_conv_block_2d.3} parent=206 // loop_pre_header
                _
              $region209: #{unet_conv_block_2d.3} parent=206 // loop_header
                %s537 = sphi 0, %s541
                %p538 = scmp.ge.s32.totalorder %s537, 1
                %s542 = sphi %s506, %s506
                %s543 = sphi %s509, %s509
              $region210: #{unet_conv_block_2d.3} parent=206 // loop_header_branch
                %540 = sbr.rel (%p538) target = $region214
              $region211: #{unet_conv_block_2d.3} parent=206 // loop_body
                %v544 = vld [vmem:[%s542] sm:$0xff]
                %545 = vst [vmem:[%s543] sm:$0xff] %v544
              $region212: #{unet_conv_block_2d.3} parent=206 // loop_footer
                %s541 = sadd.s32 1, %s537
              $region213: #{unet_conv_block_2d.3} parent=206 // loop_footer_branch
                %536 = sbr.rel target = $region209
              $region214: #{unet_conv_block_2d.3} parent=206 // loop_exit
                _
            $region207: #{unet_conv_block_2d.3} parent=191 // pred_fallthru
              _
            %p546 = pneg %p532
            // Predicated region
            $region215: #{unet_conv_block_2d.3} parent=191 // pred_check
              _
            $region216: #{unet_conv_block_2d.3} parent=191 // pred_check_branch
              %548 = sbr.rel (%p532) target = $region218
            $region217: #{unet_conv_block_2d.3} parent=191 // pred_region
              %s549 = sand.u32 8, 7
            $region218: #{unet_conv_block_2d.3} parent=191 // pred_fallthru
              _
          $region192: #{unet_conv_block_2d.3} parent=187 // pred_fallthru
            _
          // Predicated region
          $region193: #{unet_conv_block_2d.3} parent=187 // pred_check
            %p517 = pneg %p513
          $region194: #{unet_conv_block_2d.3} parent=187 // pred_check_branch
            %519 = sbr.rel (%p517) target = $region196
          $region195: #{unet_conv_block_2d.3} parent=187 // pred_region
            %s520 = sshllo.u32 0, 8
            loop: start=0, step=1, limit=1
            $region197: #{unet_conv_block_2d.3} parent=195 // loop_pre_header
              _
            $region198: #{unet_conv_block_2d.3} parent=195 // loop_header
              %s522 = sphi 0, %s526
              %p523 = scmp.ge.s32.totalorder %s522, 1
              %s527 = sphi %s506, %s506
              %s528 = sphi %s509, %s509
            $region199: #{unet_conv_block_2d.3} parent=195 // loop_header_branch
              %525 = sbr.rel (%p523) target = $region203
            $region200: #{unet_conv_block_2d.3} parent=195 // loop_body
              %v529 = vld [vmem:[%s527] sm:%s520]
              %530 = vst [vmem:[%s528] sm:%s520] %v529
            $region201: #{unet_conv_block_2d.3} parent=195 // loop_footer
              %s526 = sadd.s32 1, %s522
            $region202: #{unet_conv_block_2d.3} parent=195 // loop_footer_branch
              %521 = sbr.rel target = $region198
            $region203: #{unet_conv_block_2d.3} parent=195 // loop_exit
              _
          $region196: #{unet_conv_block_2d.3} parent=187 // pred_fallthru
            _
          // Predicated region
          $region219: #{unet_conv_block_2d.3} parent=187 // pred_check
            _
          $region220: #{unet_conv_block_2d.3} parent=187 // pred_check_branch
            %552 = sbr.rel (0) target = $region222
          $region221: #{unet_conv_block_2d.3} parent=187 // pred_region
            %553 = vsyncadd %s511, 128
          $region222: #{unet_conv_block_2d.3} parent=187 // pred_fallthru
            _
        $region188: #{unet_conv_block_2d.3} parent=149 // pred_fallthru
          _
        %p554 = scmp.lt.s32.totalorder %s425, 1
        // Predicated region
        $region223: #{unet_conv_block_2d.3} parent=149 // pred_check
          %p555 = pneg %p554
        $region224: #{unet_conv_block_2d.3} parent=149 // pred_check_branch
          %557 = sbr.rel (%p555) target = $region226
        $region225: #{unet_conv_block_2d.3} parent=149 // pred_region
          %s558 = sadd.s32 %s430, 8
          %s559 = smul.u32 %s558, 2
          %s560 = sadd.s32 %s559, %s432
          %s561 = smul.addr %s560, 4
          %s562 = scalar_lea.vmem %s2, %s561
          %s563 = sadd.s32 10, %s436
          %s564 = smul.addr %s563, 8
          %s565 = scalar_lea.vmem [#allocation2], %s564
          %s566 = sadd.s32 2, %s440
          %s567 = scalar_lea.sflag [#allocation3], %s566
          %p569 = scmp.lt.u32.totalorder 8, 8
          %p570 = pneg %p569
          // Predicated region
          $region227: #{unet_conv_block_2d.3} parent=225 // pred_check
            _
          $region228: #{unet_conv_block_2d.3} parent=225 // pred_check_branch
            %572 = sbr.rel (%p569) target = $region230
          $region229: #{unet_conv_block_2d.3} parent=225 // pred_region
            %s587 = sand.u32 8, 7
            %p588 = scmp.eq.s32.totalorder %s587, 0
            // Predicated region
            $region242: #{unet_conv_block_2d.3} parent=229 // pred_check
              %p589 = pneg %p588
            $region243: #{unet_conv_block_2d.3} parent=229 // pred_check_branch
              %591 = sbr.rel (%p589) target = $region245
            $region244: #{unet_conv_block_2d.3} parent=229 // pred_region
              loop: start=0, step=1, limit=1
              $region246: #{unet_conv_block_2d.3} parent=244 // loop_pre_header
                _
              $region247: #{unet_conv_block_2d.3} parent=244 // loop_header
                %s593 = sphi 0, %s597
                %p594 = scmp.ge.s32.totalorder %s593, 1
                %s598 = sphi %s562, %s562
                %s599 = sphi %s565, %s565
              $region248: #{unet_conv_block_2d.3} parent=244 // loop_header_branch
                %596 = sbr.rel (%p594) target = $region252
              $region249: #{unet_conv_block_2d.3} parent=244 // loop_body
                %v600 = vld [vmem:[%s598] sm:$0xff]
                %601 = vst [vmem:[%s599] sm:$0xff] %v600
              $region250: #{unet_conv_block_2d.3} parent=244 // loop_footer
                %s597 = sadd.s32 1, %s593
              $region251: #{unet_conv_block_2d.3} parent=244 // loop_footer_branch
                %592 = sbr.rel target = $region247
              $region252: #{unet_conv_block_2d.3} parent=244 // loop_exit
                _
            $region245: #{unet_conv_block_2d.3} parent=229 // pred_fallthru
              _
            %p602 = pneg %p588
            // Predicated region
            $region253: #{unet_conv_block_2d.3} parent=229 // pred_check
              _
            $region254: #{unet_conv_block_2d.3} parent=229 // pred_check_branch
              %604 = sbr.rel (%p588) target = $region256
            $region255: #{unet_conv_block_2d.3} parent=229 // pred_region
              %s605 = sand.u32 8, 7
            $region256: #{unet_conv_block_2d.3} parent=229 // pred_fallthru
              _
          $region230: #{unet_conv_block_2d.3} parent=225 // pred_fallthru
            _
          // Predicated region
          $region231: #{unet_conv_block_2d.3} parent=225 // pred_check
            %p573 = pneg %p569
          $region232: #{unet_conv_block_2d.3} parent=225 // pred_check_branch
            %575 = sbr.rel (%p573) target = $region234
          $region233: #{unet_conv_block_2d.3} parent=225 // pred_region
            %s576 = sshllo.u32 0, 8
            loop: start=0, step=1, limit=1
            $region235: #{unet_conv_block_2d.3} parent=233 // loop_pre_header
              _
            $region236: #{unet_conv_block_2d.3} parent=233 // loop_header
              %s578 = sphi 0, %s582
              %p579 = scmp.ge.s32.totalorder %s578, 1
              %s583 = sphi %s562, %s562
              %s584 = sphi %s565, %s565
            $region237: #{unet_conv_block_2d.3} parent=233 // loop_header_branch
              %581 = sbr.rel (%p579) target = $region241
            $region238: #{unet_conv_block_2d.3} parent=233 // loop_body
              %v585 = vld [vmem:[%s583] sm:%s576]
              %586 = vst [vmem:[%s584] sm:%s576] %v585
            $region239: #{unet_conv_block_2d.3} parent=233 // loop_footer
              %s582 = sadd.s32 1, %s578
            $region240: #{unet_conv_block_2d.3} parent=233 // loop_footer_branch
              %577 = sbr.rel target = $region236
            $region241: #{unet_conv_block_2d.3} parent=233 // loop_exit
              _
          $region234: #{unet_conv_block_2d.3} parent=225 // pred_fallthru
            _
          // Predicated region
          $region257: #{unet_conv_block_2d.3} parent=225 // pred_check
            _
          $region258: #{unet_conv_block_2d.3} parent=225 // pred_check_branch
            %608 = sbr.rel (0) target = $region260
          $region259: #{unet_conv_block_2d.3} parent=225 // pred_region
            %609 = vsyncadd %s567, 128
          $region260: #{unet_conv_block_2d.3} parent=225 // pred_fallthru
            _
        $region226: #{unet_conv_block_2d.3} parent=149 // pred_fallthru
          _
      $region150: #{unet_conv_block_2d.3} parent=31 // pred_fallthru
        _
      %s610 = smul.u32 %s239, 3
      %s611 = scalar_lea.sflag [#allocation3], %s610
      %s612 = smul.u32 4, 8
      %s613 = smul.u32 %s612, 2
      %s614 = smul.u32 %s613, 1
      %s615 = sshll.u32 %s614, 4
      %616 = dma.done %s611, %s615
      %p617 = scmp.gt.s32.totalorder %s22, 0
      // Predicated region
      $region261: #{unet_conv_block_2d.3} parent=31 // pred_check
        %p618 = pneg %p617
      $region262: #{unet_conv_block_2d.3} parent=31 // pred_check_branch
        %620 = sbr.rel (%p618) target = $region264
      $region263: #{unet_conv_block_2d.3} parent=31 // pred_region
        %s621 = sadd.s32 1, %s610
        %s622 = scalar_lea.sflag [#allocation3], %s621
        %s623 = smul.u32 4, 1
        %s624 = smul.u32 %s623, 2
        %s625 = smul.u32 %s624, 1
        %s626 = sshll.u32 %s625, 4
        %627 = dma.done %s622, %s626
      $region264: #{unet_conv_block_2d.3} parent=31 // pred_fallthru
        _
      %p628 = scmp.lt.s32.totalorder %s22, 1
      // Predicated region
      $region265: #{unet_conv_block_2d.3} parent=31 // pred_check
        %p629 = pneg %p628
      $region266: #{unet_conv_block_2d.3} parent=31 // pred_check_branch
        %631 = sbr.rel (%p629) target = $region268
      $region267: #{unet_conv_block_2d.3} parent=31 // pred_region
        %s632 = sadd.s32 2, %s610
        %s633 = scalar_lea.sflag [#allocation3], %s632
        %s634 = smul.u32 4, 1
        %s635 = smul.u32 %s634, 2
        %s636 = smul.u32 %s635, 1
        %s637 = sshll.u32 %s636, 4
        %638 = dma.done %s633, %s637
      $region268: #{unet_conv_block_2d.3} parent=31 // pred_fallthru
        _
      // Predicated region
      $region269: #{unet_conv_block_2d.3} parent=31 // pred_check
        %p639 = pneg %p241
      $region270: #{unet_conv_block_2d.3} parent=31 // pred_check_branch
        %641 = sbr.rel (%p639) target = $region272
      $region271: #{unet_conv_block_2d.3} parent=31 // pred_region
        %s642 = smul.u32 %s239, 12
        %s643 = sadd.s32 1, %s642
        %s644 = smul.addr %s643, 8
        %s645 = scalar_lea.vmem [#allocation2], %s644
        %646 = vst [vmem:[%s645] sm:$0xff] 0
      $region272: #{unet_conv_block_2d.3} parent=31 // pred_fallthru
        _
      %p647 = scmp.eq.s32.totalorder %s22, 1
      // Predicated region
      $region273: #{unet_conv_block_2d.3} parent=31 // pred_check
        %p648 = pneg %p647
      $region274: #{unet_conv_block_2d.3} parent=31 // pred_check_branch
        %650 = sbr.rel (%p648) target = $region276
      $region275: #{unet_conv_block_2d.3} parent=31 // pred_region
        %s651 = smul.u32 %s239, 12
        %s652 = sadd.s32 10, %s651
        %s653 = smul.addr %s652, 8
        %s654 = scalar_lea.vmem [#allocation2], %s653
        %655 = vst [vmem:[%s654] sm:$0xff] 0
      $region276: #{unet_conv_block_2d.3} parent=31 // pred_fallthru
        _
      %s656 = smul.u32 %s239, 12
      %s657 = smul.addr %s656, 8
      %s658 = scalar_lea.vmem [#allocation2], %s657
      %v659 = vld [vmem:[%s658] sm:$0xff]
      %v660 = vld [vmem:[%s658 + $0x8] sm:$0xff]
      %v661 = vld [vmem:[%s658 + $0x10] sm:$0xff]
      %v662 = vld [vmem:[%s658 + $0x18] sm:$0xff]
      %v663 = vld [vmem:[%s658 + $0x20] sm:$0xff]
      %v664 = vld [vmem:[%s658 + $0x28] sm:$0xff]
      %v665 = vld [vmem:[%s658 + $0x30] sm:$0xff]
      %v666 = vld [vmem:[%s658 + $0x38] sm:$0xff]
      %v667 = vld [vmem:[%s658 + $0x40] sm:$0xff]
      %v668 = vld [vmem:[%s658 + $0x48] sm:$0xff]
      %v669 = vld [vmem:[%s658 + $0x50] sm:$0xff]
      %v670 = vld [vmem:[%s658 + $0x58] sm:$0xff]
      %v671 = vlaneseq
      %v672 = vshrl.u32 %v671, 7
      %v673 = vadd.s32 %v672, 8
      %vm674 = vcmp.eq.s32.totalorder %v672, 0
      %vm675 = vcmp.eq.s32.totalorder %v673, 0
      %vm676 = vmpackc.low %vm674, %vm674
      %vm677 = vmpackc.low %vm675, %vm675
      %v678 = vsel %vm676, 65537, 0
      %v679 = vsel %vm677, 65537, 0
      %v680 = vunpack.c.l.b16 %v678
      %v681 = vunpack.c.l.b16 %v679
      %v682 = vpack.c.b16 %v681, %v680
      %vm683 = vsmask.f32 7424
      %v685 = vshll.u32 %v682, 16
      %v687 = vrot.slane %v685, 1
      %v688 = vshrl.u32 %v682, 16
      %v690 = vor.u32 %v688, %v687
      %v691 = vsel %vm683, %v690, %v687
      %vm692 = vcmp.ne.s16.totalorder %v687, 0
      %vm693 = vcmp.ne.s16.totalorder %v691, 0
      %vm694 = vcmp.ne.s16.totalorder %v690, 0
      %v695 = vsel %vm692, 0, %v659
      %v696 = vsel %vm693, 0, %v660
      %v697 = vsel %vm693, 0, %v661
      %v698 = vsel %vm693, 0, %v662
      %v699 = vsel %vm693, 0, %v663
      %v700 = vsel %vm693, 0, %v664
      %v701 = vsel %vm693, 0, %v665
      %v702 = vsel %vm693, 0, %v666
      %v703 = vsel %vm693, 0, %v667
      %v704 = vsel %vm693, 0, %v668
      %v705 = vsel %vm694, 0, %v669
      %vm706 = vcmp.eq.s32.totalorder %v672, 15
      %vm707 = vcmp.eq.s32.totalorder %v673, 15
      %vm708 = vmpackc.low %vm706, %vm706
      %vm709 = vmpackc.low %vm707, %vm707
      %v710 = vsel %vm708, 65537, 0
      %v711 = vsel %vm709, 65537, 0
      %v712 = vunpack.c.l.b16 %v710
      %v713 = vunpack.c.l.b16 %v711
      %v714 = vpack.c.b16 %v713, %v712
      %vm715 = vsmask.f32 256
      %v717 = vshrl.u32 %v714, 16
      %v719 = vrot.slane %v717, 7
      %v720 = vshll.u32 %v714, 16
      %v722 = vor.u32 %v719, %v720
      %v723 = vsel %vm715, %v719, %v722
      %vm724 = vcmp.ne.s16.totalorder %v722, 0
      %vm725 = vcmp.ne.s16.totalorder %v723, 0
      %vm726 = vcmp.ne.s16.totalorder %v719, 0
      %v727 = vsel %vm724, 0, %v660
      %v728 = vsel %vm725, 0, %v661
      %v729 = vsel %vm725, 0, %v662
      %v730 = vsel %vm725, 0, %v663
      %v731 = vsel %vm725, 0, %v664
      %v732 = vsel %vm725, 0, %v665
      %v733 = vsel %vm725, 0, %v666
      %v734 = vsel %vm725, 0, %v667
      %v735 = vsel %vm725, 0, %v668
      %v736 = vsel %vm725, 0, %v669
      %v737 = vsel %vm726, 0, %v670
      %v739 = vshll.u32 %v660, 16
      %v741 = vrot.slane %v739, 1
      %v742 = vshrl.u32 %v660, 16
      %v744 = vor.u32 %v742, %v741
      %v746 = vshll.u32 %v661, 16
      %v748 = vrot.slane %v746, 1
      %v749 = vsel %vm683, %v744, %v748
      %v750 = vshrl.u32 %v661, 16
      %v752 = vor.u32 %v750, %v748
      %v754 = vshll.u32 %v662, 16
      %v756 = vrot.slane %v754, 1
      %v757 = vsel %vm683, %v752, %v756
      %v758 = vshrl.u32 %v662, 16
      %v760 = vor.u32 %v758, %v756
      %v762 = vshll.u32 %v663, 16
      %v764 = vrot.slane %v762, 1
      %v765 = vsel %vm683, %v760, %v764
      %v766 = vshrl.u32 %v663, 16
      %v768 = vor.u32 %v766, %v764
      %v770 = vshll.u32 %v664, 16
      %v772 = vrot.slane %v770, 1
      %v773 = vsel %vm683, %v768, %v772
      %v774 = vshrl.u32 %v664, 16
      %v776 = vor.u32 %v774, %v772
      %v778 = vshll.u32 %v665, 16
      %v780 = vrot.slane %v778, 1
      %v781 = vsel %vm683, %v776, %v780
      %v782 = vshrl.u32 %v665, 16
      %v784 = vor.u32 %v782, %v780
      %v786 = vshll.u32 %v666, 16
      %v788 = vrot.slane %v786, 1
      %v789 = vsel %vm683, %v784, %v788
      %v790 = vshrl.u32 %v666, 16
      %v792 = vor.u32 %v790, %v788
      %v794 = vshll.u32 %v667, 16
      %v796 = vrot.slane %v794, 1
      %v797 = vsel %vm683, %v792, %v796
      %v798 = vshrl.u32 %v667, 16
      %v800 = vor.u32 %v798, %v796
      %v802 = vshll.u32 %v668, 16
      %v804 = vrot.slane %v802, 1
      %v805 = vsel %vm683, %v800, %v804
      %v806 = vshrl.u32 %v668, 16
      %v808 = vor.u32 %v806, %v804
      %v810 = vshll.u32 %v669, 16
      %v812 = vrot.slane %v810, 1
      %v813 = vsel %vm683, %v808, %v812
      %v814 = vshrl.u32 %v669, 16
      %v816 = vor.u32 %v814, %v812
      %vm828 = vcmask 1046528
      %v829 = vrot.slane %v727, 1
      %v830 = vrot.slane %v728, 1
      %v831 = vsel %vm828, %v829, %v830
      %v832 = vrot.slane %v729, 1
      %v833 = vsel %vm828, %v830, %v832
      %v834 = vrot.slane %v730, 1
      %v835 = vsel %vm828, %v832, %v834
      %v836 = vrot.slane %v731, 1
      %v837 = vsel %vm828, %v834, %v836
      %v838 = vrot.slane %v732, 1
      %v839 = vsel %vm828, %v836, %v838
      %v840 = vrot.slane %v733, 1
      %v841 = vsel %vm828, %v838, %v840
      %v842 = vrot.slane %v734, 1
      %v843 = vsel %vm828, %v840, %v842
      %v844 = vrot.slane %v735, 1
      %v845 = vsel %vm828, %v842, %v844
      %v846 = vrot.slane %v736, 1
      %v847 = vsel %vm828, %v844, %v846
      %v848 = vrot.slane %v737, 1
      %v849 = vsel %vm828, %v846, %v848
      %v850 = vld [vmem:[%s3] sm:$0xf]
      %v851 = vld [vmem:[%s3 + $0x4] sm:$0xf]
      %v852 = vld [vmem:[%s3 + $0x8] sm:$0xf]
      %v853 = vld [vmem:[%s3 + $0xc] sm:$0xf]
      %v854 = vld [vmem:[%s3 + $0x10] sm:$0xf]
      %v855 = vld [vmem:[%s3 + $0x14] sm:$0xf]
      %v856 = vld [vmem:[%s3 + $0x18] sm:$0xf]
      %v857 = vld [vmem:[%s3 + $0x1c] sm:$0xf]
      %v858 = vld [vmem:[%s3 + $0x20] sm:$0xf]
      %v859 = vld [vmem:[%s3 + $0x24] sm:$0xf]
      %v860 = vld [vmem:[%s3 + $0x28] sm:$0xf]
      %v861 = vld [vmem:[%s3 + $0x2c] sm:$0xf]
      %v862 = vld [vmem:[%s3 + $0x30] sm:$0xf]
      %v863 = vld [vmem:[%s3 + $0x34] sm:$0xf]
      %v864 = vld [vmem:[%s3 + $0x38] sm:$0xf]
      %v865 = vld [vmem:[%s3 + $0x3c] sm:$0xf]
      %v866 = vld [vmem:[%s3 + $0x40] sm:$0xf]
      %v867 = vld [vmem:[%s3 + $0x44] sm:$0xf]
      %v868 = vld [vmem:[%s3 + $0x48] sm:$0xf]
      %v869 = vld [vmem:[%s3 + $0x4c] sm:$0xf]
      %v870 = vld [vmem:[%s3 + $0x50] sm:$0xf]
      %v871 = vld [vmem:[%s3 + $0x54] sm:$0xf]
      %v872 = vld [vmem:[%s3 + $0x58] sm:$0xf]
      %v873 = vld [vmem:[%s3 + $0x5c] sm:$0xf]
      %v874 = vld [vmem:[%s3 + $0x60] sm:$0xf]
      %v875 = vld [vmem:[%s3 + $0x64] sm:$0xf]
      %v876 = vld [vmem:[%s3 + $0x68] sm:$0xf]
      %v877 = vld [vmem:[%s3 + $0x6c] sm:$0xf]
      %v878 = vld [vmem:[%s3 + $0x70] sm:$0xf]
      %v879 = vld [vmem:[%s3 + $0x74] sm:$0xf]
      %v880 = vld [vmem:[%s3 + $0x78] sm:$0xf]
      %v881 = vld [vmem:[%s3 + $0x7c] sm:$0xf]
      %v882 = vld [vmem:[%s3 + $0x80] sm:$0xf]
      %v883 = vld [vmem:[%s3 + $0x84] sm:$0xf]
      %v884 = vld [vmem:[%s3 + $0x88] sm:$0xf]
      %v885 = vld [vmem:[%s3 + $0x8c] sm:$0xf]
      %v886 = vld [vmem:[%s3 + $0x90] sm:$0xf]
      %v887 = vld [vmem:[%s3 + $0x94] sm:$0xf]
      %v888 = vld [vmem:[%s3 + $0x98] sm:$0xf]
      %v889 = vld [vmem:[%s3 + $0x9c] sm:$0xf]
      %v890 = vld [vmem:[%s3 + $0xa0] sm:$0xf]
      %v891 = vld [vmem:[%s3 + $0xa4] sm:$0xf]
      %v892 = vld [vmem:[%s3 + $0xa8] sm:$0xf]
      %v893 = vld [vmem:[%s3 + $0xac] sm:$0xf]
      %v894 = vld [vmem:[%s3 + $0xb0] sm:$0xf]
      %v895 = vld [vmem:[%s3 + $0xb4] sm:$0xf]
      %v896 = vld [vmem:[%s3 + $0xb8] sm:$0xf]
      %v897 = vld [vmem:[%s3 + $0xbc] sm:$0xf]
      %s898 = scalar_lea.vmem %s3, 192
      %v899 = vld [vmem:[%s898] sm:$0xf]
      %v900 = vld [vmem:[%s898 + $0x4] sm:$0xf]
      %v901 = vld [vmem:[%s898 + $0x8] sm:$0xf]
      %v902 = vld [vmem:[%s898 + $0xc] sm:$0xf]
      %v903 = vld [vmem:[%s898 + $0x10] sm:$0xf]
      %v904 = vld [vmem:[%s898 + $0x14] sm:$0xf]
      %v905 = vld [vmem:[%s898 + $0x18] sm:$0xf]
      %v906 = vld [vmem:[%s898 + $0x1c] sm:$0xf]
      %v907 = vld [vmem:[%s898 + $0x20] sm:$0xf]
      %v908 = vld [vmem:[%s898 + $0x24] sm:$0xf]
      %v909 = vld [vmem:[%s898 + $0x28] sm:$0xf]
      %v910 = vld [vmem:[%s898 + $0x2c] sm:$0xf]
      %v911 = vld [vmem:[%s898 + $0x30] sm:$0xf]
      %v912 = vld [vmem:[%s898 + $0x34] sm:$0xf]
      %v913 = vld [vmem:[%s898 + $0x38] sm:$0xf]
      %v914 = vld [vmem:[%s898 + $0x3c] sm:$0xf]
      %v915 = vld [vmem:[%s898 + $0x40] sm:$0xf]
      %v916 = vld [vmem:[%s898 + $0x44] sm:$0xf]
      %v917 = vld [vmem:[%s898 + $0x48] sm:$0xf]
      %v918 = vld [vmem:[%s898 + $0x4c] sm:$0xf]
      %v919 = vld [vmem:[%s898 + $0x50] sm:$0xf]
      %v920 = vld [vmem:[%s898 + $0x54] sm:$0xf]
      %v921 = vld [vmem:[%s898 + $0x58] sm:$0xf]
      %v922 = vld [vmem:[%s898 + $0x5c] sm:$0xf]
      %v923 = vld [vmem:[%s898 + $0x60] sm:$0xf]
      %v924 = vld [vmem:[%s898 + $0x64] sm:$0xf]
      %v925 = vld [vmem:[%s898 + $0x68] sm:$0xf]
      %v926 = vld [vmem:[%s898 + $0x6c] sm:$0xf]
      %v927 = vld [vmem:[%s898 + $0x70] sm:$0xf]
      %v928 = vld [vmem:[%s898 + $0x74] sm:$0xf]
      %v929 = vld [vmem:[%s898 + $0x78] sm:$0xf]
      %v930 = vld [vmem:[%s898 + $0x7c] sm:$0xf]
      %v931 = vld [vmem:[%s898 + $0x80] sm:$0xf]
      %v932 = vld [vmem:[%s898 + $0x84] sm:$0xf]
      %v933 = vld [vmem:[%s898 + $0x88] sm:$0xf]
      %v934 = vld [vmem:[%s898 + $0x8c] sm:$0xf]
      %v935 = vld [vmem:[%s898 + $0x90] sm:$0xf]
      %v936 = vld [vmem:[%s898 + $0x94] sm:$0xf]
      %v937 = vld [vmem:[%s898 + $0x98] sm:$0xf]
      %v938 = vld [vmem:[%s898 + $0x9c] sm:$0xf]
      %v939 = vld [vmem:[%s898 + $0xa0] sm:$0xf]
      %v940 = vld [vmem:[%s898 + $0xa4] sm:$0xf]
      %v941 = vld [vmem:[%s898 + $0xa8] sm:$0xf]
      %v942 = vld [vmem:[%s898 + $0xac] sm:$0xf]
      %v943 = vld [vmem:[%s898 + $0xb0] sm:$0xf]
      %v944 = vld [vmem:[%s898 + $0xb4] sm:$0xf]
      %v945 = vld [vmem:[%s898 + $0xb8] sm:$0xf]
      %v946 = vld [vmem:[%s898 + $0xbc] sm:$0xf]
      %v948 = vshrl.u32 %v696, 16
      %v950 = vrot.slane %v948, 7
      %v952 = vshrl.u32 %v697, 16
      %v954 = vrot.slane %v952, 7
      %v955 = vshll.u32 %v697, 16
      %v957 = vor.u32 %v954, %v955
      %v958 = vsel %vm715, %v950, %v957
      %v960 = vshrl.u32 %v749, 16
      %v962 = vrot.slane %v960, 7
      %v964 = vshrl.u32 %v757, 16
      %v966 = vrot.slane %v964, 7
      %v967 = vshll.u32 %v757, 16
      %v969 = vor.u32 %v966, %v967
      %v970 = vsel %vm715, %v962, %v969
      %v972 = vshrl.u32 %v831, 16
      %v974 = vrot.slane %v972, 7
      %v976 = vshrl.u32 %v833, 16
      %v978 = vrot.slane %v976, 7
      %v979 = vshll.u32 %v833, 16
      %v981 = vor.u32 %v978, %v979
      %v982 = vsel %vm715, %v974, %v981
      %v984 = vshrl.u32 %v698, 16
      %v986 = vrot.slane %v984, 7
      %v987 = vshll.u32 %v698, 16
      %v989 = vor.u32 %v986, %v987
      %v990 = vsel %vm715, %v954, %v989
      %v992 = vshrl.u32 %v765, 16
      %v994 = vrot.slane %v992, 7
      %v995 = vshll.u32 %v765, 16
      %v997 = vor.u32 %v994, %v995
      %v998 = vsel %vm715, %v966, %v997
      %v1000 = vshrl.u32 %v835, 16
      %v1002 = vrot.slane %v1000, 7
      %v1003 = vshll.u32 %v835, 16
      %v1005 = vor.u32 %v1002, %v1003
      %v1006 = vsel %vm715, %v978, %v1005
      %v1008 = vshrl.u32 %v699, 16
      %v1010 = vrot.slane %v1008, 7
      %v1011 = vshll.u32 %v699, 16
      %v1013 = vor.u32 %v1010, %v1011
      %v1014 = vsel %vm715, %v986, %v1013
      %v1016 = vshrl.u32 %v773, 16
      %v1018 = vrot.slane %v1016, 7
      %v1019 = vshll.u32 %v773, 16
      %v1021 = vor.u32 %v1018, %v1019
      %v1022 = vsel %vm715, %v994, %v1021
      %v1024 = vshrl.u32 %v837, 16
      %v1026 = vrot.slane %v1024, 7
      %v1027 = vshll.u32 %v837, 16
      %v1029 = vor.u32 %v1026, %v1027
      %v1030 = vsel %vm715, %v1002, %v1029
      %v1032 = vshrl.u32 %v700, 16
      %v1034 = vrot.slane %v1032, 7
      %v1035 = vshll.u32 %v700, 16
      %v1037 = vor.u32 %v1034, %v1035
      %v1038 = vsel %vm715, %v1010, %v1037
      %v1040 = vshrl.u32 %v781, 16
      %v1042 = vrot.slane %v1040, 7
      %v1043 = vshll.u32 %v781, 16
      %v1045 = vor.u32 %v1042, %v1043
      %v1046 = vsel %vm715, %v1018, %v1045
      %v1048 = vshrl.u32 %v839, 16
      %v1050 = vrot.slane %v1048, 7
      %v1051 = vshll.u32 %v839, 16
      %v1053 = vor.u32 %v1050, %v1051
      %v1054 = vsel %vm715, %v1026, %v1053
      %v1056 = vshrl.u32 %v701, 16
      %v1058 = vrot.slane %v1056, 7
      %v1059 = vshll.u32 %v701, 16
      %v1061 = vor.u32 %v1058, %v1059
      %v1062 = vsel %vm715, %v1034, %v1061
      %v1064 = vshrl.u32 %v789, 16
      %v1066 = vrot.slane %v1064, 7
      %v1067 = vshll.u32 %v789, 16
      %v1069 = vor.u32 %v1066, %v1067
      %v1070 = vsel %vm715, %v1042, %v1069
      %v1072 = vshrl.u32 %v841, 16
      %v1074 = vrot.slane %v1072, 7
      %v1075 = vshll.u32 %v841, 16
      %v1077 = vor.u32 %v1074, %v1075
      %v1078 = vsel %vm715, %v1050, %v1077
      %v1080 = vshrl.u32 %v702, 16
      %v1082 = vrot.slane %v1080, 7
      %v1083 = vshll.u32 %v702, 16
      %v1085 = vor.u32 %v1082, %v1083
      %v1086 = vsel %vm715, %v1058, %v1085
      %v1088 = vshrl.u32 %v797, 16
      %v1090 = vrot.slane %v1088, 7
      %v1091 = vshll.u32 %v797, 16
      %v1093 = vor.u32 %v1090, %v1091
      %v1094 = vsel %vm715, %v1066, %v1093
      %v1096 = vshrl.u32 %v843, 16
      %v1098 = vrot.slane %v1096, 7
      %v1099 = vshll.u32 %v843, 16
      %v1101 = vor.u32 %v1098, %v1099
      %v1102 = vsel %vm715, %v1074, %v1101
      %v1104 = vshrl.u32 %v703, 16
      %v1106 = vrot.slane %v1104, 7
      %v1107 = vshll.u32 %v703, 16
      %v1109 = vor.u32 %v1106, %v1107
      %v1110 = vsel %vm715, %v1082, %v1109
      %v1112 = vshrl.u32 %v805, 16
      %v1114 = vrot.slane %v1112, 7
      %v1115 = vshll.u32 %v805, 16
      %v1117 = vor.u32 %v1114, %v1115
      %v1118 = vsel %vm715, %v1090, %v1117
      %v1120 = vshrl.u32 %v845, 16
      %v1122 = vrot.slane %v1120, 7
      %v1123 = vshll.u32 %v845, 16
      %v1125 = vor.u32 %v1122, %v1123
      %v1126 = vsel %vm715, %v1098, %v1125
      %v1128 = vshrl.u32 %v704, 16
      %v1130 = vrot.slane %v1128, 7
      %v1131 = vshll.u32 %v704, 16
      %v1133 = vor.u32 %v1130, %v1131
      %v1134 = vsel %vm715, %v1106, %v1133
      %v1136 = vshrl.u32 %v813, 16
      %v1138 = vrot.slane %v1136, 7
      %v1139 = vshll.u32 %v813, 16
      %v1141 = vor.u32 %v1138, %v1139
      %v1142 = vsel %vm715, %v1114, %v1141
      %v1144 = vshrl.u32 %v847, 16
      %v1146 = vrot.slane %v1144, 7
      %v1147 = vshll.u32 %v847, 16
      %v1149 = vor.u32 %v1146, %v1147
      %v1150 = vsel %vm715, %v1122, %v1149
      %v1223 = vunpack.c.l.b16 %v899
      %v1224 = vunpack.c.l.b16 %v900
      %v1225 = vunpack.c.l.b16 %v901
      %v1226 = vunpack.c.l.b16 %v902
      %v1227 = vunpack.c.l.b16 %v903
      %v1228 = vunpack.c.l.b16 %v904
      %v1229 = vunpack.c.l.b16 %v905
      %v1230 = vunpack.c.l.b16 %v906
      %v1231 = vunpack.c.l.b16 %v907
      %v1232 = vunpack.c.l.b16 %v908
      %v1233 = vunpack.c.l.b16 %v909
      %v1234 = vunpack.c.l.b16 %v910
      %v1235 = vunpack.c.l.b16 %v911
      %v1236 = vunpack.c.l.b16 %v912
      %v1237 = vunpack.c.l.b16 %v913
      %v1238 = vunpack.c.l.b16 %v914
      %v1239 = vunpack.c.l.b16 %v915
      %v1240 = vunpack.c.l.b16 %v916
      %v1241 = vunpack.c.l.b16 %v917
      %v1242 = vunpack.c.l.b16 %v918
      %v1243 = vunpack.c.l.b16 %v919
      %v1244 = vunpack.c.l.b16 %v920
      %v1245 = vunpack.c.l.b16 %v921
      %v1246 = vunpack.c.l.b16 %v922
      %v1247 = vunpack.c.l.b16 %v923
      %v1248 = vunpack.c.l.b16 %v924
      %v1249 = vunpack.c.l.b16 %v925
      %v1250 = vunpack.c.l.b16 %v926
      %v1251 = vunpack.c.l.b16 %v927
      %v1252 = vunpack.c.l.b16 %v928
      %v1253 = vunpack.c.l.b16 %v929
      %v1254 = vunpack.c.l.b16 %v930
      %v1255 = vunpack.c.l.b16 %v931
      %v1256 = vunpack.c.l.b16 %v932
      %v1257 = vunpack.c.l.b16 %v933
      %v1258 = vunpack.c.l.b16 %v934
      %v1259 = vunpack.c.l.b16 %v935
      %v1260 = vunpack.c.l.b16 %v936
      %v1261 = vunpack.c.l.b16 %v937
      %v1262 = vunpack.c.l.b16 %v938
      %v1263 = vunpack.c.l.b16 %v939
      %v1264 = vunpack.c.l.b16 %v940
      %v1265 = vunpack.c.l.b16 %v941
      %v1266 = vunpack.c.l.b16 %v942
      %v1267 = vunpack.c.l.b16 %v943
      %v1268 = vunpack.c.l.b16 %v944
      %v1269 = vunpack.c.l.b16 %v945
      %v1270 = vunpack.c.l.b16 %v946
      %v1271 = vpack.c.b16 %v1224, %v1223
      %v1272 = vpack.c.b16 %v1226, %v1225
      %v1273 = vpack.c.b16 %v1228, %v1227
      %v1274 = vpack.c.b16 %v1230, %v1229
      %v1275 = vpack.c.b16 %v1232, %v1231
      %v1276 = vpack.c.b16 %v1234, %v1233
      %v1277 = vpack.c.b16 %v1236, %v1235
      %v1278 = vpack.c.b16 %v1238, %v1237
      %v1279 = vpack.c.b16 %v1240, %v1239
      %v1280 = vpack.c.b16 %v1242, %v1241
      %v1281 = vpack.c.b16 %v1244, %v1243
      %v1282 = vpack.c.b16 %v1246, %v1245
      %v1283 = vpack.c.b16 %v1248, %v1247
      %v1284 = vpack.c.b16 %v1250, %v1249
      %v1285 = vpack.c.b16 %v1252, %v1251
      %v1286 = vpack.c.b16 %v1254, %v1253
      %v1287 = vpack.c.b16 %v1256, %v1255
      %v1288 = vpack.c.b16 %v1258, %v1257
      %v1289 = vpack.c.b16 %v1260, %v1259
      %v1290 = vpack.c.b16 %v1262, %v1261
      %v1291 = vpack.c.b16 %v1264, %v1263
      %v1292 = vpack.c.b16 %v1266, %v1265
      %v1293 = vpack.c.b16 %v1268, %v1267
      %v1294 = vpack.c.b16 %v1270, %v1269
      %1319 = vmatprep.subr.bf16.mxu0 0
      %1320 = vmatpush1.bf16.msra.mxu0 %v1271
      %1321 = vmatprep.subr.bf16.mxu0 0
      %1322 = vmatpush1.bf16.msra.mxu0 %v1272
      %1323 = vmatprep.subr.bf16.mxu0 0
      %1324 = vmatpush1.bf16.msra.mxu0 %v1273
      %1325 = vmatprep.subr.bf16.mxu0 0
      %1326 = vmatpush1.bf16.msra.mxu0 %v1274
      %1327 = vmatprep.subr.bf16.mxu0 0
      %1328 = vmatpush1.bf16.msra.mxu0 %v1275
      %1329 = vmatprep.subr.bf16.mxu0 0
      %1330 = vmatpush1.bf16.msra.mxu0 %v1276
      %1331 = vmatprep.subr.bf16.mxu0 0
      %1332 = vmatpush1.bf16.msra.mxu0 %v1277
      %1333 = vmatprep.subr.bf16.mxu0 0
      %1334 = vmatpush1.bf16.msra.mxu0 %v1278
      %1335 = vmatprep.subr.bf16.mxu0 0
      %1336 = vmatpush1.bf16.msra.mxu0 %v1279
      %1337 = vmatprep.subr.bf16.mxu0 0
      %1338 = vmatpush1.bf16.msra.mxu0 %v1280
      %1339 = vmatprep.subr.bf16.mxu0 0
      %1340 = vmatpush1.bf16.msra.mxu0 %v1281
      %1341 = vmatprep.subr.bf16.mxu0 0
      %1342 = vmatpush1.bf16.msra.mxu0 %v1282
      %1343 = vmatprep.subr.bf16.mxu0 0
      %1344 = vmatpush1.bf16.msra.mxu0 %v1283
      %1345 = vmatprep.subr.bf16.mxu0 0
      %1346 = vmatpush1.bf16.msra.mxu0 %v1284
      %1347 = vmatprep.subr.bf16.mxu0 0
      %1348 = vmatpush1.bf16.msra.mxu0 %v1285
      %1349 = vmatprep.subr.bf16.mxu0 0
      %1350 = vmatpush1.bf16.msra.mxu0 %v1286
      %1351 = vmatprep.mubr.bf16.mxu0 %v970
      %1352 = vmatmul.mubr.bf16.gmra.mrb[0].mxu0 %v958
      %v1353 = vpop.f32.mrb[0].mxu0
      %v1354 = vadd.f32 0.0, %v1353
      %v1355 = vpop.f32.mrb[0].mxu0
      %v1356 = vpop.f32.mrb[0].mxu0
      %v1357 = vadd.f32 0.0, %v1356
      %v1358 = vpop.f32.mrb[0].mxu0
      %1359 = vmatprep.mubr.bf16.mxu0 %v998
      %1360 = vmatmul.mubr.bf16.gmra.mrb[0].mxu0 %v990
      %v1361 = vpop.f32.mrb[0].mxu0
      %v1362 = vadd.f32 0.0, %v1361
      %v1363 = vpop.f32.mrb[0].mxu0
      %v1364 = vpop.f32.mrb[0].mxu0
      %v1365 = vadd.f32 0.0, %v1364
      %v1366 = vpop.f32.mrb[0].mxu0
      %1367 = vmatprep.mubr.bf16.mxu0 %v1022
      %1368 = vmatmul.mubr.bf16.gmra.mrb[0].mxu0 %v1014
      %v1369 = vpop.f32.mrb[0].mxu0
      %v1370 = vadd.f32 0.0, %v1369
      %v1371 = vpop.f32.mrb[0].mxu0
      %v1372 = vpop.f32.mrb[0].mxu0
      %v1373 = vadd.f32 0.0, %v1372
      %v1374 = vpop.f32.mrb[0].mxu0
      %1375 = vmatprep.mubr.bf16.mxu0 %v1046
      %1376 = vmatmul.mubr.bf16.gmra.mrb[0].mxu0 %v1038
      %v1377 = vpop.f32.mrb[0].mxu0
      %v1378 = vadd.f32 0.0, %v1377
      %v1379 = vpop.f32.mrb[0].mxu0
      %v1380 = vpop.f32.mrb[0].mxu0
      %v1381 = vadd.f32 0.0, %v1380
      %v1382 = vpop.f32.mrb[0].mxu0
      %1383 = vmatprep.mubr.bf16.mxu0 %v1070
      %1384 = vmatmul.mubr.bf16.gmra.mrb[0].mxu0 %v1062
      %v1385 = vpop.f32.mrb[0].mxu0
      %v1386 = vadd.f32 0.0, %v1385
      %v1387 = vpop.f32.mrb[0].mxu0
      %v1388 = vpop.f32.mrb[0].mxu0
      %v1389 = vadd.f32 0.0, %v1388
      %v1390 = vpop.f32.mrb[0].mxu0
      %1391 = vmatprep.mubr.bf16.mxu0 %v1094
      %1392 = vmatmul.mubr.bf16.gmra.mrb[0].mxu0 %v1086
      %v1393 = vpop.f32.mrb[0].mxu0
      %v1394 = vadd.f32 0.0, %v1393
      %v1395 = vpop.f32.mrb[0].mxu0
      %v1396 = vpop.f32.mrb[0].mxu0
      %v1397 = vadd.f32 0.0, %v1396
      %v1398 = vpop.f32.mrb[0].mxu0
      %1399 = vmatprep.mubr.bf16.mxu0 %v1118
      %1400 = vmatmul.mubr.bf16.gmra.mrb[0].mxu0 %v1110
      %v1401 = vpop.f32.mrb[0].mxu0
      %v1402 = vadd.f32 0.0, %v1401
      %v1403 = vpop.f32.mrb[0].mxu0
      %v1404 = vpop.f32.mrb[0].mxu0
      %v1405 = vadd.f32 0.0, %v1404
      %v1406 = vpop.f32.mrb[0].mxu0
      %1407 = vmatprep.mubr.bf16.mxu0 %v1142
      %1408 = vmatmul.mubr.bf16.gmra.mrb[0].mxu0 %v1134
      %v1409 = vpop.f32.mrb[0].mxu0
      %v1410 = vadd.f32 0.0, %v1409
      %v1411 = vpop.f32.mrb[0].mxu0
      %v1412 = vpop.f32.mrb[0].mxu0
      %v1413 = vadd.f32 0.0, %v1412
      %v1414 = vpop.f32.mrb[0].mxu0
      %1415 = vdwg.mxu0
      %1416 = vmatprep.subr.bf16.mxu0 0
      %1417 = vmatpush1.bf16.msra.mxu0 %v1287
      %1418 = vmatprep.subr.bf16.mxu0 0
      %1419 = vmatpush1.bf16.msra.mxu0 %v1288
      %1420 = vmatprep.subr.bf16.mxu0 0
      %1421 = vmatpush1.bf16.msra.mxu0 %v1289
      %1422 = vmatprep.subr.bf16.mxu0 0
      %1423 = vmatpush1.bf16.msra.mxu0 %v1290
      %1424 = vmatprep.subr.bf16.mxu0 0
      %1425 = vmatpush1.bf16.msra.mxu0 %v1291
      %1426 = vmatprep.subr.bf16.mxu0 0
      %1427 = vmatpush1.bf16.msra.mxu0 %v1292
      %1428 = vmatprep.subr.bf16.mxu0 0
      %1429 = vmatpush1.bf16.msra.mxu0 %v1293
      %1430 = vmatprep.subr.bf16.mxu0 0
      %1431 = vmatpush1.bf16.msra.mxu0 %v1294
      %1432 = vmatprep.subr.bf16.mxu0 0
      %1433 = vmatpush1.bf16.msra.mxu0 0
      %1434 = vmatprep.subr.bf16.mxu0 0
      %1435 = vmatpush1.bf16.msra.mxu0 0
      %1436 = vmatprep.subr.bf16.mxu0 0
      %1437 = vmatpush1.bf16.msra.mxu0 0
      %1438 = vmatprep.subr.bf16.mxu0 0
      %1439 = vmatpush1.bf16.msra.mxu0 0
      %1440 = vmatprep.subr.bf16.mxu0 0
      %1441 = vmatpush1.bf16.msra.mxu0 0
      %1442 = vmatprep.subr.bf16.mxu0 0
      %1443 = vmatpush1.bf16.msra.mxu0 0
      %1444 = vmatprep.subr.bf16.mxu0 0
      %1445 = vmatpush1.bf16.msra.mxu0 0
      %1446 = vmatprep.subr.bf16.mxu0 0
      %1447 = vmatpush1.bf16.msra.mxu0 0
      %1448 = vmatprep.mubr.bf16.mxu0 0
      %1449 = vmatmul.mubr.bf16.gmra.mrb[0].mxu0 %v982
      %v1450 = vpop.f32.mrb[0].mxu0
      %v1451 = vadd.f32 %v1354, %v1450
      %v1452 = vpop.f32.mrb[0].mxu0
      %v1453 = vpop.f32.mrb[0].mxu0
      %v1454 = vadd.f32 %v1357, %v1453
      %v1455 = vpop.f32.mrb[0].mxu0
      %1456 = vmatprep.mubr.bf16.mxu0 0
      %1457 = vmatmul.mubr.bf16.gmra.mrb[0].mxu0 %v1006
      %v1458 = vpop.f32.mrb[0].mxu0
      %v1459 = vadd.f32 %v1362, %v1458
      %v1460 = vpop.f32.mrb[0].mxu0
      %v1461 = vpop.f32.mrb[0].mxu0
      %v1462 = vadd.f32 %v1365, %v1461
      %v1463 = vpop.f32.mrb[0].mxu0
      %1464 = vmatprep.mubr.bf16.mxu0 0
      %1465 = vmatmul.mubr.bf16.gmra.mrb[0].mxu0 %v1030
      %v1466 = vpop.f32.mrb[0].mxu0
      %v1467 = vadd.f32 %v1370, %v1466
      %v1468 = vpop.f32.mrb[0].mxu0
      %v1469 = vpop.f32.mrb[0].mxu0
      %v1470 = vadd.f32 %v1373, %v1469
      %v1471 = vpop.f32.mrb[0].mxu0
      %1472 = vmatprep.mubr.bf16.mxu0 0
      %1473 = vmatmul.mubr.bf16.gmra.mrb[0].mxu0 %v1054
      %v1474 = vpop.f32.mrb[0].mxu0
      %v1475 = vadd.f32 %v1378, %v1474
      %v1476 = vpop.f32.mrb[0].mxu0
      %v1477 = vpop.f32.mrb[0].mxu0
      %v1478 = vadd.f32 %v1381, %v1477
      %v1479 = vpop.f32.mrb[0].mxu0
      %1480 = vmatprep.mubr.bf16.mxu0 0
      %1481 = vmatmul.mubr.bf16.gmra.mrb[0].mxu0 %v1078
      %v1482 = vpop.f32.mrb[0].mxu0
      %v1483 = vadd.f32 %v1386, %v1482
      %v1484 = vpop.f32.mrb[0].mxu0
      %v1485 = vpop.f32.mrb[0].mxu0
      %v1486 = vadd.f32 %v1389, %v1485
      %v1487 = vpop.f32.mrb[0].mxu0
      %1488 = vmatprep.mubr.bf16.mxu0 0
      %1489 = vmatmul.mubr.bf16.gmra.mrb[0].mxu0 %v1102
      %v1490 = vpop.f32.mrb[0].mxu0
      %v1491 = vadd.f32 %v1394, %v1490
      %v1492 = vpop.f32.mrb[0].mxu0
      %v1493 = vpop.f32.mrb[0].mxu0
      %v1494 = vadd.f32 %v1397, %v1493
      %v1495 = vpop.f32.mrb[0].mxu0
      %1496 = vmatprep.mubr.bf16.mxu0 0
      %1497 = vmatmul.mubr.bf16.gmra.mrb[0].mxu0 %v1126
      %v1498 = vpop.f32.mrb[0].mxu0
      %v1499 = vadd.f32 %v1402, %v1498
      %v1500 = vpop.f32.mrb[0].mxu0
      %v1501 = vpop.f32.mrb[0].mxu0
      %v1502 = vadd.f32 %v1405, %v1501
      %v1503 = vpop.f32.mrb[0].mxu0
      %1504 = vmatprep.mubr.bf16.mxu0 0
      %1505 = vmatmul.mubr.bf16.gmra.mrb[0].mxu0 %v1150
      %v1506 = vpop.f32.mrb[0].mxu0
      %v1507 = vadd.f32 %v1410, %v1506
      %v1508 = vpop.f32.mrb[0].mxu0
      %v1509 = vpop.f32.mrb[0].mxu0
      %v1510 = vadd.f32 %v1413, %v1509
      %v1511 = vpop.f32.mrb[0].mxu0
      %1512 = vdwg.mxu0
      %v1514 = vshrl.u32 %v695, 16
      %v1516 = vrot.slane %v1514, 7
      %v1517 = vshll.u32 %v696, 16
      %v1519 = vor.u32 %v950, %v1517
      %v1520 = vsel %vm715, %v1516, %v1519
      %v1522 = vshrl.u32 %v741, 16
      %v1524 = vrot.slane %v1522, 7
      %v1525 = vshll.u32 %v749, 16
      %v1527 = vor.u32 %v962, %v1525
      %v1528 = vsel %vm715, %v1524, %v1527
      %v1530 = vshrl.u32 %v829, 16
      %v1532 = vrot.slane %v1530, 7
      %v1533 = vshll.u32 %v831, 16
      %v1535 = vor.u32 %v974, %v1533
      %v1536 = vsel %vm715, %v1532, %v1535
      %v1588 = vunpack.c.l.b16 %v850
      %v1589 = vunpack.c.l.b16 %v851
      %v1590 = vunpack.c.l.b16 %v852
      %v1591 = vunpack.c.l.b16 %v853
      %v1592 = vunpack.c.l.b16 %v854
      %v1593 = vunpack.c.l.b16 %v855
      %v1594 = vunpack.c.l.b16 %v856
      %v1595 = vunpack.c.l.b16 %v857
      %v1596 = vunpack.c.l.b16 %v858
      %v1597 = vunpack.c.l.b16 %v859
      %v1598 = vunpack.c.l.b16 %v860
      %v1599 = vunpack.c.l.b16 %v861
      %v1600 = vunpack.c.l.b16 %v862
      %v1601 = vunpack.c.l.b16 %v863
      %v1602 = vunpack.c.l.b16 %v864
      %v1603 = vunpack.c.l.b16 %v865
      %v1604 = vunpack.c.l.b16 %v866
      %v1605 = vunpack.c.l.b16 %v867
      %v1606 = vunpack.c.l.b16 %v868
      %v1607 = vunpack.c.l.b16 %v869
      %v1608 = vunpack.c.l.b16 %v870
      %v1609 = vunpack.c.l.b16 %v871
      %v1610 = vunpack.c.l.b16 %v872
      %v1611 = vunpack.c.l.b16 %v873
      %v1612 = vunpack.c.l.b16 %v874
      %v1613 = vunpack.c.l.b16 %v875
      %v1614 = vunpack.c.l.b16 %v876
      %v1615 = vunpack.c.l.b16 %v877
      %v1616 = vunpack.c.l.b16 %v878
      %v1617 = vunpack.c.l.b16 %v879
      %v1618 = vunpack.c.l.b16 %v880
      %v1619 = vunpack.c.l.b16 %v881
      %v1620 = vunpack.c.l.b16 %v882
      %v1621 = vunpack.c.l.b16 %v883
      %v1622 = vunpack.c.l.b16 %v884
      %v1623 = vunpack.c.l.b16 %v885
      %v1624 = vunpack.c.l.b16 %v886
      %v1625 = vunpack.c.l.b16 %v887
      %v1626 = vunpack.c.l.b16 %v888
      %v1627 = vunpack.c.l.b16 %v889
      %v1628 = vunpack.c.l.b16 %v890
      %v1629 = vunpack.c.l.b16 %v891
      %v1630 = vunpack.c.l.b16 %v892
      %v1631 = vunpack.c.l.b16 %v893
      %v1632 = vunpack.c.l.b16 %v894
      %v1633 = vunpack.c.l.b16 %v895
      %v1634 = vunpack.c.l.b16 %v896
      %v1635 = vunpack.c.l.b16 %v897
      %v1636 = vpack.c.b16 %v1589, %v1588
      %v1637 = vpack.c.b16 %v1591, %v1590
      %v1638 = vpack.c.b16 %v1593, %v1592
      %v1639 = vpack.c.b16 %v1595, %v1594
      %v1640 = vpack.c.b16 %v1597, %v1596
      %v1641 = vpack.c.b16 %v1599, %v1598
      %v1642 = vpack.c.b16 %v1601, %v1600
      %v1643 = vpack.c.b16 %v1603, %v1602
      %v1644 = vpack.c.b16 %v1605, %v1604
      %v1645 = vpack.c.b16 %v1607, %v1606
      %v1646 = vpack.c.b16 %v1609, %v1608
      %v1647 = vpack.c.b16 %v1611, %v1610
      %v1648 = vpack.c.b16 %v1613, %v1612
      %v1649 = vpack.c.b16 %v1615, %v1614
      %v1650 = vpack.c.b16 %v1617, %v1616
      %v1651 = vpack.c.b16 %v1619, %v1618
      %v1652 = vpack.c.b16 %v1621, %v1620
      %v1653 = vpack.c.b16 %v1623, %v1622
      %v1654 = vpack.c.b16 %v1625, %v1624
      %v1655 = vpack.c.b16 %v1627, %v1626
      %v1656 = vpack.c.b16 %v1629, %v1628
      %v1657 = vpack.c.b16 %v1631, %v1630
      %v1658 = vpack.c.b16 %v1633, %v1632
      %v1659 = vpack.c.b16 %v1635, %v1634
      %1684 = vmatprep.subr.bf16.mxu0 0
      %1685 = vmatpush1.bf16.msra.mxu0 %v1636
      %1686 = vmatprep.subr.bf16.mxu0 0
      %1687 = vmatpush1.bf16.msra.mxu0 %v1637
      %1688 = vmatprep.subr.bf16.mxu0 0
      %1689 = vmatpush1.bf16.msra.mxu0 %v1638
      %1690 = vmatprep.subr.bf16.mxu0 0
      %1691 = vmatpush1.bf16.msra.mxu0 %v1639
      %1692 = vmatprep.subr.bf16.mxu0 0
      %1693 = vmatpush1.bf16.msra.mxu0 %v1640
      %1694 = vmatprep.subr.bf16.mxu0 0
      %1695 = vmatpush1.bf16.msra.mxu0 %v1641
      %1696 = vmatprep.subr.bf16.mxu0 0
      %1697 = vmatpush1.bf16.msra.mxu0 %v1642
      %1698 = vmatprep.subr.bf16.mxu0 0
      %1699 = vmatpush1.bf16.msra.mxu0 %v1643
      %1700 = vmatprep.subr.bf16.mxu0 0
      %1701 = vmatpush1.bf16.msra.mxu0 %v1644
      %1702 = vmatprep.subr.bf16.mxu0 0
      %1703 = vmatpush1.bf16.msra.mxu0 %v1645
      %1704 = vmatprep.subr.bf16.mxu0 0
      %1705 = vmatpush1.bf16.msra.mxu0 %v1646
      %1706 = vmatprep.subr.bf16.mxu0 0
      %1707 = vmatpush1.bf16.msra.mxu0 %v1647
      %1708 = vmatprep.subr.bf16.mxu0 0
      %1709 = vmatpush1.bf16.msra.mxu0 %v1648
      %1710 = vmatprep.subr.bf16.mxu0 0
      %1711 = vmatpush1.bf16.msra.mxu0 %v1649
      %1712 = vmatprep.subr.bf16.mxu0 0
      %1713 = vmatpush1.bf16.msra.mxu0 %v1650
      %1714 = vmatprep.subr.bf16.mxu0 0
      %1715 = vmatpush1.bf16.msra.mxu0 %v1651
      %1716 = vmatprep.mubr.bf16.mxu0 %v1528
      %1717 = vmatmul.mubr.bf16.gmra.mrb[0].mxu0 %v1520
      %v1718 = vpop.f32.mrb[0].mxu0
      %v1719 = vadd.f32 %v1451, %v1718
      %v1720 = vpop.f32.mrb[0].mxu0
      %v1721 = vpop.f32.mrb[0].mxu0
      %v1722 = vadd.f32 %v1454, %v1721
      %v1723 = vpop.f32.mrb[0].mxu0
      %1724 = vmatprep.mubr.bf16.mxu0 %v970
      %1725 = vmatmul.mubr.bf16.gmra.mrb[0].mxu0 %v958
      %v1726 = vpop.f32.mrb[0].mxu0
      %v1727 = vadd.f32 %v1459, %v1726
      %v1728 = vpop.f32.mrb[0].mxu0
      %v1729 = vpop.f32.mrb[0].mxu0
      %v1730 = vadd.f32 %v1462, %v1729
      %v1731 = vpop.f32.mrb[0].mxu0
      %1732 = vmatprep.mubr.bf16.mxu0 %v998
      %1733 = vmatmul.mubr.bf16.gmra.mrb[0].mxu0 %v990
      %v1734 = vpop.f32.mrb[0].mxu0
      %v1735 = vadd.f32 %v1467, %v1734
      %v1736 = vpop.f32.mrb[0].mxu0
      %v1737 = vpop.f32.mrb[0].mxu0
      %v1738 = vadd.f32 %v1470, %v1737
      %v1739 = vpop.f32.mrb[0].mxu0
      %1740 = vmatprep.mubr.bf16.mxu0 %v1022
      %1741 = vmatmul.mubr.bf16.gmra.mrb[0].mxu0 %v1014
      %v1742 = vpop.f32.mrb[0].mxu0
      %v1743 = vadd.f32 %v1475, %v1742
      %v1744 = vpop.f32.mrb[0].mxu0
      %v1745 = vpop.f32.mrb[0].mxu0
      %v1746 = vadd.f32 %v1478, %v1745
      %v1747 = vpop.f32.mrb[0].mxu0
      %1748 = vmatprep.mubr.bf16.mxu0 %v1046
      %1749 = vmatmul.mubr.bf16.gmra.mrb[0].mxu0 %v1038
      %v1750 = vpop.f32.mrb[0].mxu0
      %v1751 = vadd.f32 %v1483, %v1750
      %v1752 = vpop.f32.mrb[0].mxu0
      %v1753 = vpop.f32.mrb[0].mxu0
      %v1754 = vadd.f32 %v1486, %v1753
      %v1755 = vpop.f32.mrb[0].mxu0
      %1756 = vmatprep.mubr.bf16.mxu0 %v1070
      %1757 = vmatmul.mubr.bf16.gmra.mrb[0].mxu0 %v1062
      %v1758 = vpop.f32.mrb[0].mxu0
      %v1759 = vadd.f32 %v1491, %v1758
      %v1760 = vpop.f32.mrb[0].mxu0
      %v1761 = vpop.f32.mrb[0].mxu0
      %v1762 = vadd.f32 %v1494, %v1761
      %v1763 = vpop.f32.mrb[0].mxu0
      %1764 = vmatprep.mubr.bf16.mxu0 %v1094
      %1765 = vmatmul.mubr.bf16.gmra.mrb[0].mxu0 %v1086
      %v1766 = vpop.f32.mrb[0].mxu0
      %v1767 = vadd.f32 %v1499, %v1766
      %v1768 = vpop.f32.mrb[0].mxu0
      %v1769 = vpop.f32.mrb[0].mxu0
      %v1770 = vadd.f32 %v1502, %v1769
      %v1771 = vpop.f32.mrb[0].mxu0
      %1772 = vmatprep.mubr.bf16.mxu0 %v1118
      %1773 = vmatmul.mubr.bf16.gmra.mrb[0].mxu0 %v1110
      %v1774 = vpop.f32.mrb[0].mxu0
      %v1775 = vadd.f32 %v1507, %v1774
      %v1776 = vpop.f32.mrb[0].mxu0
      %v1777 = vpop.f32.mrb[0].mxu0
      %v1778 = vadd.f32 %v1510, %v1777
      %v1779 = vpop.f32.mrb[0].mxu0
      %1780 = vdwg.mxu0
      %1781 = vmatprep.subr.bf16.mxu0 0
      %1782 = vmatpush1.bf16.msra.mxu0 %v1652
      %1783 = vmatprep.subr.bf16.mxu0 0
      %1784 = vmatpush1.bf16.msra.mxu0 %v1653
      %1785 = vmatprep.subr.bf16.mxu0 0
      %1786 = vmatpush1.bf16.msra.mxu0 %v1654
      %1787 = vmatprep.subr.bf16.mxu0 0
      %1788 = vmatpush1.bf16.msra.mxu0 %v1655
      %1789 = vmatprep.subr.bf16.mxu0 0
      %1790 = vmatpush1.bf16.msra.mxu0 %v1656
      %1791 = vmatprep.subr.bf16.mxu0 0
      %1792 = vmatpush1.bf16.msra.mxu0 %v1657
      %1793 = vmatprep.subr.bf16.mxu0 0
      %1794 = vmatpush1.bf16.msra.mxu0 %v1658
      %1795 = vmatprep.subr.bf16.mxu0 0
      %1796 = vmatpush1.bf16.msra.mxu0 %v1659
      %1797 = vmatprep.subr.bf16.mxu0 0
      %1798 = vmatpush1.bf16.msra.mxu0 0
      %1799 = vmatprep.subr.bf16.mxu0 0
      %1800 = vmatpush1.bf16.msra.mxu0 0
      %1801 = vmatprep.subr.bf16.mxu0 0
      %1802 = vmatpush1.bf16.msra.mxu0 0
      %1803 = vmatprep.subr.bf16.mxu0 0
      %1804 = vmatpush1.bf16.msra.mxu0 0
      %1805 = vmatprep.subr.bf16.mxu0 0
      %1806 = vmatpush1.bf16.msra.mxu0 0
      %1807 = vmatprep.subr.bf16.mxu0 0
      %1808 = vmatpush1.bf16.msra.mxu0 0
      %1809 = vmatprep.subr.bf16.mxu0 0
      %1810 = vmatpush1.bf16.msra.mxu0 0
      %1811 = vmatprep.subr.bf16.mxu0 0
      %1812 = vmatpush1.bf16.msra.mxu0 0
      %1813 = vmatprep.mubr.bf16.mxu0 0
      %1814 = vmatmul.mubr.bf16.gmra.mrb[0].mxu0 %v1536
      %v1815 = vpop.f32.mrb[0].mxu0
      %v1816 = vadd.f32 %v1719, %v1815
      %v1817 = vpop.f32.mrb[0].mxu0
      %v1818 = vpop.f32.mrb[0].mxu0
      %v1819 = vadd.f32 %v1722, %v1818
      %v1820 = vpop.f32.mrb[0].mxu0
      %1821 = vmatprep.mubr.bf16.mxu0 0
      %1822 = vmatmul.mubr.bf16.gmra.mrb[0].mxu0 %v982
      %v1823 = vpop.f32.mrb[0].mxu0
      %v1824 = vadd.f32 %v1727, %v1823
      %v1825 = vpop.f32.mrb[0].mxu0
      %v1826 = vpop.f32.mrb[0].mxu0
      %v1827 = vadd.f32 %v1730, %v1826
      %v1828 = vpop.f32.mrb[0].mxu0
      %1829 = vmatprep.mubr.bf16.mxu0 0
      %1830 = vmatmul.mubr.bf16.gmra.mrb[0].mxu0 %v1006
      %v1831 = vpop.f32.mrb[0].mxu0
      %v1832 = vadd.f32 %v1735, %v1831
      %v1833 = vpop.f32.mrb[0].mxu0
      %v1834 = vpop.f32.mrb[0].mxu0
      %v1835 = vadd.f32 %v1738, %v1834
      %v1836 = vpop.f32.mrb[0].mxu0
      %1837 = vmatprep.mubr.bf16.mxu0 0
      %1838 = vmatmul.mubr.bf16.gmra.mrb[0].mxu0 %v1030
      %v1839 = vpop.f32.mrb[0].mxu0
      %v1840 = vadd.f32 %v1743, %v1839
      %v1841 = vpop.f32.mrb[0].mxu0
      %v1842 = vpop.f32.mrb[0].mxu0
      %v1843 = vadd.f32 %v1746, %v1842
      %v1844 = vpop.f32.mrb[0].mxu0
      %1845 = vmatprep.mubr.bf16.mxu0 0
      %1846 = vmatmul.mubr.bf16.gmra.mrb[0].mxu0 %v1054
      %v1847 = vpop.f32.mrb[0].mxu0
      %v1848 = vadd.f32 %v1751, %v1847
      %v1849 = vpop.f32.mrb[0].mxu0
      %v1850 = vpop.f32.mrb[0].mxu0
      %v1851 = vadd.f32 %v1754, %v1850
      %v1852 = vpop.f32.mrb[0].mxu0
      %1853 = vmatprep.mubr.bf16.mxu0 0
      %1854 = vmatmul.mubr.bf16.gmra.mrb[0].mxu0 %v1078
      %v1855 = vpop.f32.mrb[0].mxu0
      %v1856 = vadd.f32 %v1759, %v1855
      %v1857 = vpop.f32.mrb[0].mxu0
      %v1858 = vpop.f32.mrb[0].mxu0
      %v1859 = vadd.f32 %v1762, %v1858
      %v1860 = vpop.f32.mrb[0].mxu0
      %1861 = vmatprep.mubr.bf16.mxu0 0
      %1862 = vmatmul.mubr.bf16.gmra.mrb[0].mxu0 %v1102
      %v1863 = vpop.f32.mrb[0].mxu0
      %v1864 = vadd.f32 %v1767, %v1863
      %v1865 = vpop.f32.mrb[0].mxu0
      %v1866 = vpop.f32.mrb[0].mxu0
      %v1867 = vadd.f32 %v1770, %v1866
      %v1868 = vpop.f32.mrb[0].mxu0
      %1869 = vmatprep.mubr.bf16.mxu0 0
      %1870 = vmatmul.mubr.bf16.gmra.mrb[0].mxu0 %v1126
      %v1871 = vpop.f32.mrb[0].mxu0
      %v1872 = vadd.f32 %v1775, %v1871
      %v1873 = vpop.f32.mrb[0].mxu0
      %v1874 = vpop.f32.mrb[0].mxu0
      %v1875 = vadd.f32 %v1778, %v1874
      %v1876 = vpop.f32.mrb[0].mxu0
      %1877 = vdwg.mxu0
      %s1878 = scalar_lea.vmem %s3, 384
      %v1879 = vld [vmem:[%s1878] sm:$0xf]
      %v1880 = vld [vmem:[%s1878 + $0x4] sm:$0xf]
      %v1881 = vld [vmem:[%s1878 + $0x8] sm:$0xf]
      %v1882 = vld [vmem:[%s1878 + $0xc] sm:$0xf]
      %v1883 = vld [vmem:[%s1878 + $0x10] sm:$0xf]
      %v1884 = vld [vmem:[%s1878 + $0x14] sm:$0xf]
      %v1885 = vld [vmem:[%s1878 + $0x18] sm:$0xf]
      %v1886 = vld [vmem:[%s1878 + $0x1c] sm:$0xf]
      %v1887 = vld [vmem:[%s1878 + $0x20] sm:$0xf]
      %v1888 = vld [vmem:[%s1878 + $0x24] sm:$0xf]
      %v1889 = vld [vmem:[%s1878 + $0x28] sm:$0xf]
      %v1890 = vld [vmem:[%s1878 + $0x2c] sm:$0xf]
      %v1891 = vld [vmem:[%s1878 + $0x30] sm:$0xf]
      %v1892 = vld [vmem:[%s1878 + $0x34] sm:$0xf]
      %v1893 = vld [vmem:[%s1878 + $0x38] sm:$0xf]
      %v1894 = vld [vmem:[%s1878 + $0x3c] sm:$0xf]
      %v1895 = vld [vmem:[%s1878 + $0x40] sm:$0xf]
      %v1896 = vld [vmem:[%s1878 + $0x44] sm:$0xf]
      %v1897 = vld [vmem:[%s1878 + $0x48] sm:$0xf]
      %v1898 = vld [vmem:[%s1878 + $0x4c] sm:$0xf]
      %v1899 = vld [vmem:[%s1878 + $0x50] sm:$0xf]
      %v1900 = vld [vmem:[%s1878 + $0x54] sm:$0xf]
      %v1901 = vld [vmem:[%s1878 + $0x58] sm:$0xf]
      %v1902 = vld [vmem:[%s1878 + $0x5c] sm:$0xf]
      %v1903 = vld [vmem:[%s1878 + $0x60] sm:$0xf]
      %v1904 = vld [vmem:[%s1878 + $0x64] sm:$0xf]
      %v1905 = vld [vmem:[%s1878 + $0x68] sm:$0xf]
      %v1906 = vld [vmem:[%s1878 + $0x6c] sm:$0xf]
      %v1907 = vld [vmem:[%s1878 + $0x70] sm:$0xf]
      %v1908 = vld [vmem:[%s1878 + $0x74] sm:$0xf]
      %v1909 = vld [vmem:[%s1878 + $0x78] sm:$0xf]
      %v1910 = vld [vmem:[%s1878 + $0x7c] sm:$0xf]
      %v1911 = vld [vmem:[%s1878 + $0x80] sm:$0xf]
      %v1912 = vld [vmem:[%s1878 + $0x84] sm:$0xf]
      %v1913 = vld [vmem:[%s1878 + $0x88] sm:$0xf]
      %v1914 = vld [vmem:[%s1878 + $0x8c] sm:$0xf]
      %v1915 = vld [vmem:[%s1878 + $0x90] sm:$0xf]
      %v1916 = vld [vmem:[%s1878 + $0x94] sm:$0xf]
      %v1917 = vld [vmem:[%s1878 + $0x98] sm:$0xf]
      %v1918 = vld [vmem:[%s1878 + $0x9c] sm:$0xf]
      %v1919 = vld [vmem:[%s1878 + $0xa0] sm:$0xf]
      %v1920 = vld [vmem:[%s1878 + $0xa4] sm:$0xf]
      %v1921 = vld [vmem:[%s1878 + $0xa8] sm:$0xf]
      %v1922 = vld [vmem:[%s1878 + $0xac] sm:$0xf]
      %v1923 = vld [vmem:[%s1878 + $0xb0] sm:$0xf]
      %v1924 = vld [vmem:[%s1878 + $0xb4] sm:$0xf]
      %v1925 = vld [vmem:[%s1878 + $0xb8] sm:$0xf]
      %v1926 = vld [vmem:[%s1878 + $0xbc] sm:$0xf]
      %v1928 = vshrl.u32 %v705, 16
      %v1930 = vrot.slane %v1928, 7
      %v1931 = vshll.u32 %v705, 16
      %v1933 = vor.u32 %v1930, %v1931
      %v1934 = vsel %vm715, %v1130, %v1933
      %v1936 = vshrl.u32 %v816, 16
      %v1938 = vrot.slane %v1936, 7
      %v1939 = vshll.u32 %v816, 16
      %v1941 = vor.u32 %v1938, %v1939
      %v1942 = vsel %vm715, %v1138, %v1941
      %v1944 = vshrl.u32 %v849, 16
      %v1946 = vrot.slane %v1944, 7
      %v1947 = vshll.u32 %v849, 16
      %v1949 = vor.u32 %v1946, %v1947
      %v1950 = vsel %vm715, %v1146, %v1949
      %v2002 = vunpack.c.l.b16 %v1879
      %v2003 = vunpack.c.l.b16 %v1880
      %v2004 = vunpack.c.l.b16 %v1881
      %v2005 = vunpack.c.l.b16 %v1882
      %v2006 = vunpack.c.l.b16 %v1883
      %v2007 = vunpack.c.l.b16 %v1884
      %v2008 = vunpack.c.l.b16 %v1885
      %v2009 = vunpack.c.l.b16 %v1886
      %v2010 = vunpack.c.l.b16 %v1887
      %v2011 = vunpack.c.l.b16 %v1888
      %v2012 = vunpack.c.l.b16 %v1889
      %v2013 = vunpack.c.l.b16 %v1890
      %v2014 = vunpack.c.l.b16 %v1891
      %v2015 = vunpack.c.l.b16 %v1892
      %v2016 = vunpack.c.l.b16 %v1893
      %v2017 = vunpack.c.l.b16 %v1894
      %v2018 = vunpack.c.l.b16 %v1895
      %v2019 = vunpack.c.l.b16 %v1896
      %v2020 = vunpack.c.l.b16 %v1897
      %v2021 = vunpack.c.l.b16 %v1898
      %v2022 = vunpack.c.l.b16 %v1899
      %v2023 = vunpack.c.l.b16 %v1900
      %v2024 = vunpack.c.l.b16 %v1901
      %v2025 = vunpack.c.l.b16 %v1902
      %v2026 = vunpack.c.l.b16 %v1903
      %v2027 = vunpack.c.l.b16 %v1904
      %v2028 = vunpack.c.l.b16 %v1905
      %v2029 = vunpack.c.l.b16 %v1906
      %v2030 = vunpack.c.l.b16 %v1907
      %v2031 = vunpack.c.l.b16 %v1908
      %v2032 = vunpack.c.l.b16 %v1909
      %v2033 = vunpack.c.l.b16 %v1910
      %v2034 = vunpack.c.l.b16 %v1911
      %v2035 = vunpack.c.l.b16 %v1912
      %v2036 = vunpack.c.l.b16 %v1913
      %v2037 = vunpack.c.l.b16 %v1914
      %v2038 = vunpack.c.l.b16 %v1915
      %v2039 = vunpack.c.l.b16 %v1916
      %v2040 = vunpack.c.l.b16 %v1917
      %v2041 = vunpack.c.l.b16 %v1918
      %v2042 = vunpack.c.l.b16 %v1919
      %v2043 = vunpack.c.l.b16 %v1920
      %v2044 = vunpack.c.l.b16 %v1921
      %v2045 = vunpack.c.l.b16 %v1922
      %v2046 = vunpack.c.l.b16 %v1923
      %v2047 = vunpack.c.l.b16 %v1924
      %v2048 = vunpack.c.l.b16 %v1925
      %v2049 = vunpack.c.l.b16 %v1926
      %v2050 = vpack.c.b16 %v2003, %v2002
      %v2051 = vpack.c.b16 %v2005, %v2004
      %v2052 = vpack.c.b16 %v2007, %v2006
      %v2053 = vpack.c.b16 %v2009, %v2008
      %v2054 = vpack.c.b16 %v2011, %v2010
      %v2055 = vpack.c.b16 %v2013, %v2012
      %v2056 = vpack.c.b16 %v2015, %v2014
      %v2057 = vpack.c.b16 %v2017, %v2016
      %v2058 = vpack.c.b16 %v2019, %v2018
      %v2059 = vpack.c.b16 %v2021, %v2020
      %v2060 = vpack.c.b16 %v2023, %v2022
      %v2061 = vpack.c.b16 %v2025, %v2024
      %v2062 = vpack.c.b16 %v2027, %v2026
      %v2063 = vpack.c.b16 %v2029, %v2028
      %v2064 = vpack.c.b16 %v2031, %v2030
      %v2065 = vpack.c.b16 %v2033, %v2032
      %v2066 = vpack.c.b16 %v2035, %v2034
      %v2067 = vpack.c.b16 %v2037, %v2036
      %v2068 = vpack.c.b16 %v2039, %v2038
      %v2069 = vpack.c.b16 %v2041, %v2040
      %v2070 = vpack.c.b16 %v2043, %v2042
      %v2071 = vpack.c.b16 %v2045, %v2044
      %v2072 = vpack.c.b16 %v2047, %v2046
      %v2073 = vpack.c.b16 %v2049, %v2048
      %2098 = vmatprep.subr.bf16.mxu0 0
      %2099 = vmatpush1.bf16.msra.mxu0 %v2050
      %2100 = vmatprep.subr.bf16.mxu0 0
      %2101 = vmatpush1.bf16.msra.mxu0 %v2051
      %2102 = vmatprep.subr.bf16.mxu0 0
      %2103 = vmatpush1.bf16.msra.mxu0 %v2052
      %2104 = vmatprep.subr.bf16.mxu0 0
      %2105 = vmatpush1.bf16.msra.mxu0 %v2053
      %2106 = vmatprep.subr.bf16.mxu0 0
      %2107 = vmatpush1.bf16.msra.mxu0 %v2054
      %2108 = vmatprep.subr.bf16.mxu0 0
      %2109 = vmatpush1.bf16.msra.mxu0 %v2055
      %2110 = vmatprep.subr.bf16.mxu0 0
      %2111 = vmatpush1.bf16.msra.mxu0 %v2056
      %2112 = vmatprep.subr.bf16.mxu0 0
      %2113 = vmatpush1.bf16.msra.mxu0 %v2057
      %2114 = vmatprep.subr.bf16.mxu0 0
      %2115 = vmatpush1.bf16.msra.mxu0 %v2058
      %2116 = vmatprep.subr.bf16.mxu0 0
      %2117 = vmatpush1.bf16.msra.mxu0 %v2059
      %2118 = vmatprep.subr.bf16.mxu0 0
      %2119 = vmatpush1.bf16.msra.mxu0 %v2060
      %2120 = vmatprep.subr.bf16.mxu0 0
      %2121 = vmatpush1.bf16.msra.mxu0 %v2061
      %2122 = vmatprep.subr.bf16.mxu0 0
      %2123 = vmatpush1.bf16.msra.mxu0 %v2062
      %2124 = vmatprep.subr.bf16.mxu0 0
      %2125 = vmatpush1.bf16.msra.mxu0 %v2063
      %2126 = vmatprep.subr.bf16.mxu0 0
      %2127 = vmatpush1.bf16.msra.mxu0 %v2064
      %2128 = vmatprep.subr.bf16.mxu0 0
      %2129 = vmatpush1.bf16.msra.mxu0 %v2065
      %2130 = vmatprep.mubr.bf16.mxu0 %v998
      %2131 = vmatmul.mubr.bf16.gmra.mrb[0].mxu0 %v990
      %v2132 = vpop.f32.mrb[0].mxu0
      %v2133 = vadd.f32 0.0, %v2132
      %v2134 = vpop.f32.mrb[0].mxu0
      %v2135 = vpop.f32.mrb[0].mxu0
      %v2136 = vadd.f32 0.0, %v2135
      %v2137 = vpop.f32.mrb[0].mxu0
      %2138 = vmatprep.mubr.bf16.mxu0 %v1022
      %2139 = vmatmul.mubr.bf16.gmra.mrb[0].mxu0 %v1014
      %v2140 = vpop.f32.mrb[0].mxu0
      %v2141 = vadd.f32 0.0, %v2140
      %v2142 = vpop.f32.mrb[0].mxu0
      %v2143 = vpop.f32.mrb[0].mxu0
      %v2144 = vadd.f32 0.0, %v2143
      %v2145 = vpop.f32.mrb[0].mxu0
      %2146 = vmatprep.mubr.bf16.mxu0 %v1046
      %2147 = vmatmul.mubr.bf16.gmra.mrb[0].mxu0 %v1038
      %v2148 = vpop.f32.mrb[0].mxu0
      %v2149 = vadd.f32 0.0, %v2148
      %v2150 = vpop.f32.mrb[0].mxu0
      %v2151 = vpop.f32.mrb[0].mxu0
      %v2152 = vadd.f32 0.0, %v2151
      %v2153 = vpop.f32.mrb[0].mxu0
      %2154 = vmatprep.mubr.bf16.mxu0 %v1070
      %2155 = vmatmul.mubr.bf16.gmra.mrb[0].mxu0 %v1062
      %v2156 = vpop.f32.mrb[0].mxu0
      %v2157 = vadd.f32 0.0, %v2156
      %v2158 = vpop.f32.mrb[0].mxu0
      %v2159 = vpop.f32.mrb[0].mxu0
      %v2160 = vadd.f32 0.0, %v2159
      %v2161 = vpop.f32.mrb[0].mxu0
      %2162 = vmatprep.mubr.bf16.mxu0 %v1094
      %2163 = vmatmul.mubr.bf16.gmra.mrb[0].mxu0 %v1086
      %v2164 = vpop.f32.mrb[0].mxu0
      %v2165 = vadd.f32 0.0, %v2164
      %v2166 = vpop.f32.mrb[0].mxu0
      %v2167 = vpop.f32.mrb[0].mxu0
      %v2168 = vadd.f32 0.0, %v2167
      %v2169 = vpop.f32.mrb[0].mxu0
      %2170 = vmatprep.mubr.bf16.mxu0 %v1118
      %2171 = vmatmul.mubr.bf16.gmra.mrb[0].mxu0 %v1110
      %v2172 = vpop.f32.mrb[0].mxu0
      %v2173 = vadd.f32 0.0, %v2172
      %v2174 = vpop.f32.mrb[0].mxu0
      %v2175 = vpop.f32.mrb[0].mxu0
      %v2176 = vadd.f32 0.0, %v2175
      %v2177 = vpop.f32.mrb[0].mxu0
      %2178 = vmatprep.mubr.bf16.mxu0 %v1142
      %2179 = vmatmul.mubr.bf16.gmra.mrb[0].mxu0 %v1134
      %v2180 = vpop.f32.mrb[0].mxu0
      %v2181 = vadd.f32 0.0, %v2180
      %v2182 = vpop.f32.mrb[0].mxu0
      %v2183 = vpop.f32.mrb[0].mxu0
      %v2184 = vadd.f32 0.0, %v2183
      %v2185 = vpop.f32.mrb[0].mxu0
      %2186 = vmatprep.mubr.bf16.mxu0 %v1942
      %2187 = vmatmul.mubr.bf16.gmra.mrb[0].mxu0 %v1934
      %v2188 = vpop.f32.mrb[0].mxu0
      %v2189 = vadd.f32 0.0, %v2188
      %v2190 = vpop.f32.mrb[0].mxu0
      %v2191 = vpop.f32.mrb[0].mxu0
      %v2192 = vadd.f32 0.0, %v2191
      %v2193 = vpop.f32.mrb[0].mxu0
      %2194 = vdwg.mxu0
      %2195 = vmatprep.subr.bf16.mxu0 0
      %2196 = vmatpush1.bf16.msra.mxu0 %v2066
      %2197 = vmatprep.subr.bf16.mxu0 0
      %2198 = vmatpush1.bf16.msra.mxu0 %v2067
      %2199 = vmatprep.subr.bf16.mxu0 0
      %2200 = vmatpush1.bf16.msra.mxu0 %v2068
      %2201 = vmatprep.subr.bf16.mxu0 0
      %2202 = vmatpush1.bf16.msra.mxu0 %v2069
      %2203 = vmatprep.subr.bf16.mxu0 0
      %2204 = vmatpush1.bf16.msra.mxu0 %v2070
      %2205 = vmatprep.subr.bf16.mxu0 0
      %2206 = vmatpush1.bf16.msra.mxu0 %v2071
      %2207 = vmatprep.subr.bf16.mxu0 0
      %2208 = vmatpush1.bf16.msra.mxu0 %v2072
      %2209 = vmatprep.subr.bf16.mxu0 0
      %2210 = vmatpush1.bf16.msra.mxu0 %v2073
      %2211 = vmatprep.subr.bf16.mxu0 0
      %2212 = vmatpush1.bf16.msra.mxu0 0
      %2213 = vmatprep.subr.bf16.mxu0 0
      %2214 = vmatpush1.bf16.msra.mxu0 0
      %2215 = vmatprep.subr.bf16.mxu0 0
      %2216 = vmatpush1.bf16.msra.mxu0 0
      %2217 = vmatprep.subr.bf16.mxu0 0
      %2218 = vmatpush1.bf16.msra.mxu0 0
      %2219 = vmatprep.subr.bf16.mxu0 0
      %2220 = vmatpush1.bf16.msra.mxu0 0
      %2221 = vmatprep.subr.bf16.mxu0 0
      %2222 = vmatpush1.bf16.msra.mxu0 0
      %2223 = vmatprep.subr.bf16.mxu0 0
      %2224 = vmatpush1.bf16.msra.mxu0 0
      %2225 = vmatprep.subr.bf16.mxu0 0
      %2226 = vmatpush1.bf16.msra.mxu0 0
      %2227 = vmatprep.mubr.bf16.mxu0 0
      %2228 = vmatmul.mubr.bf16.gmra.mrb[0].mxu0 %v1006
      %v2229 = vpop.f32.mrb[0].mxu0
      %v2230 = vadd.f32 %v2133, %v2229
      %v2231 = vpop.f32.mrb[0].mxu0
      %v2232 = vpop.f32.mrb[0].mxu0
      %v2233 = vadd.f32 %v2136, %v2232
      %v2234 = vpop.f32.mrb[0].mxu0
      %2235 = vmatprep.mubr.bf16.mxu0 0
      %2236 = vmatmul.mubr.bf16.gmra.mrb[0].mxu0 %v1030
      %v2237 = vpop.f32.mrb[0].mxu0
      %v2238 = vadd.f32 %v2141, %v2237
      %v2239 = vpop.f32.mrb[0].mxu0
      %v2240 = vpop.f32.mrb[0].mxu0
      %v2241 = vadd.f32 %v2144, %v2240
      %v2242 = vpop.f32.mrb[0].mxu0
      %2243 = vmatprep.mubr.bf16.mxu0 0
      %2244 = vmatmul.mubr.bf16.gmra.mrb[0].mxu0 %v1054
      %v2245 = vpop.f32.mrb[0].mxu0
      %v2246 = vadd.f32 %v2149, %v2245
      %v2247 = vpop.f32.mrb[0].mxu0
      %v2248 = vpop.f32.mrb[0].mxu0
      %v2249 = vadd.f32 %v2152, %v2248
      %v2250 = vpop.f32.mrb[0].mxu0
      %2251 = vmatprep.mubr.bf16.mxu0 0
      %2252 = vmatmul.mubr.bf16.gmra.mrb[0].mxu0 %v1078
      %v2253 = vpop.f32.mrb[0].mxu0
      %v2254 = vadd.f32 %v2157, %v2253
      %v2255 = vpop.f32.mrb[0].mxu0
      %v2256 = vpop.f32.mrb[0].mxu0
      %v2257 = vadd.f32 %v2160, %v2256
      %v2258 = vpop.f32.mrb[0].mxu0
      %2259 = vmatprep.mubr.bf16.mxu0 0
      %2260 = vmatmul.mubr.bf16.gmra.mrb[0].mxu0 %v1102
      %v2261 = vpop.f32.mrb[0].mxu0
      %v2262 = vadd.f32 %v2165, %v2261
      %v2263 = vpop.f32.mrb[0].mxu0
      %v2264 = vpop.f32.mrb[0].mxu0
      %v2265 = vadd.f32 %v2168, %v2264
      %v2266 = vpop.f32.mrb[0].mxu0
      %2267 = vmatprep.mubr.bf16.mxu0 0
      %2268 = vmatmul.mubr.bf16.gmra.mrb[0].mxu0 %v1126
      %v2269 = vpop.f32.mrb[0].mxu0
      %v2270 = vadd.f32 %v2173, %v2269
      %v2271 = vpop.f32.mrb[0].mxu0
      %v2272 = vpop.f32.mrb[0].mxu0
      %v2273 = vadd.f32 %v2176, %v2272
      %v2274 = vpop.f32.mrb[0].mxu0
      %2275 = vmatprep.mubr.bf16.mxu0 0
      %2276 = vmatmul.mubr.bf16.gmra.mrb[0].mxu0 %v1150
      %v2277 = vpop.f32.mrb[0].mxu0
      %v2278 = vadd.f32 %v2181, %v2277
      %v2279 = vpop.f32.mrb[0].mxu0
      %v2280 = vpop.f32.mrb[0].mxu0
      %v2281 = vadd.f32 %v2184, %v2280
      %v2282 = vpop.f32.mrb[0].mxu0
      %2283 = vmatprep.mubr.bf16.mxu0 0
      %2284 = vmatmul.mubr.bf16.gmra.mrb[0].mxu0 %v1950
      %v2285 = vpop.f32.mrb[0].mxu0
      %v2286 = vadd.f32 %v2189, %v2285
      %v2287 = vpop.f32.mrb[0].mxu0
      %v2288 = vpop.f32.mrb[0].mxu0
      %v2289 = vadd.f32 %v2192, %v2288
      %v2290 = vpop.f32.mrb[0].mxu0
      %2291 = vdwg.mxu0
      %v2292 = vadd.f32 %v1816, %v2230
      %v2293 = vadd.f32 %v1819, %v2233
      %v2294 = vadd.f32 %v1824, %v2238
      %v2295 = vadd.f32 %v1827, %v2241
      %v2296 = vadd.f32 %v1832, %v2246
      %v2297 = vadd.f32 %v1835, %v2249
      %v2298 = vadd.f32 %v1840, %v2254
      %v2299 = vadd.f32 %v1843, %v2257
      %v2300 = vadd.f32 %v1848, %v2262
      %v2301 = vadd.f32 %v1851, %v2265
      %v2302 = vadd.f32 %v1856, %v2270
      %v2303 = vadd.f32 %v1859, %v2273
      %v2304 = vadd.f32 %v1864, %v2278
      %v2305 = vadd.f32 %v1867, %v2281
      %v2306 = vadd.f32 %v1872, %v2286
      %v2307 = vadd.f32 %v1875, %v2289
      %v2308 = vpack.c.bf16 %v2293, %v2292
      %v2309 = vpack.c.bf16 %v2295, %v2294
      %v2310 = vpack.c.bf16 %v2297, %v2296
      %v2311 = vpack.c.bf16 %v2299, %v2298
      %v2312 = vpack.c.bf16 %v2301, %v2300
      %v2313 = vpack.c.bf16 %v2303, %v2302
      %v2314 = vpack.c.bf16 %v2305, %v2304
      %v2315 = vpack.c.bf16 %v2307, %v2306
      %v2324 = vunpack.c.l.b16 %v2308
      %v2325 = vunpack.c.h.b16 %v2308
      %v2326 = vunpack.c.l.b16 %v2309
      %v2327 = vunpack.c.h.b16 %v2309
      %v2328 = vunpack.c.l.b16 %v2310
      %v2329 = vunpack.c.h.b16 %v2310
      %v2330 = vunpack.c.l.b16 %v2311
      %v2331 = vunpack.c.h.b16 %v2311
      %v2332 = vunpack.c.l.b16 %v2312
      %v2333 = vunpack.c.h.b16 %v2312
      %v2334 = vunpack.c.l.b16 %v2313
      %v2335 = vunpack.c.h.b16 %v2313
      %v2336 = vunpack.c.l.b16 %v2314
      %v2337 = vunpack.c.h.b16 %v2314
      %v2338 = vunpack.c.l.b16 %v2315
      %v2339 = vunpack.c.h.b16 %v2315
      %v2340 = vpack.c.b16 %v2324, %v2324
      %v2341 = vpack.c.b16 %v2325, %v2325
      %v2342 = vpack.c.b16 %v2326, %v2326
      %v2343 = vpack.c.b16 %v2327, %v2327
      %v2344 = vpack.c.b16 %v2328, %v2328
      %v2345 = vpack.c.b16 %v2329, %v2329
      %v2346 = vpack.c.b16 %v2330, %v2330
      %v2347 = vpack.c.b16 %v2331, %v2331
      %v2348 = vpack.c.b16 %v2332, %v2332
      %v2349 = vpack.c.b16 %v2333, %v2333
      %v2350 = vpack.c.b16 %v2334, %v2334
      %v2351 = vpack.c.b16 %v2335, %v2335
      %v2352 = vpack.c.b16 %v2336, %v2336
      %v2353 = vpack.c.b16 %v2337, %v2337
      %v2354 = vpack.c.b16 %v2338, %v2338
      %v2355 = vpack.c.b16 %v2339, %v2339
      %2372 = vst [vmem:[%s215] sm:$0xf] %v2340
      %2373 = vst [vmem:[%s215 + $0x4] sm:$0xf] %v2341
      %2374 = vst [vmem:[%s215 + $0x8] sm:$0xf] %v2342
      %2375 = vst [vmem:[%s215 + $0xc] sm:$0xf] %v2343
      %2376 = vst [vmem:[%s215 + $0x10] sm:$0xf] %v2344
      %2377 = vst [vmem:[%s215 + $0x14] sm:$0xf] %v2345
      %2378 = vst [vmem:[%s215 + $0x18] sm:$0xf] %v2346
      %2379 = vst [vmem:[%s215 + $0x1c] sm:$0xf] %v2347
      %2380 = vst [vmem:[%s215 + $0x20] sm:$0xf] %v2348
      %2381 = vst [vmem:[%s215 + $0x24] sm:$0xf] %v2349
      %2382 = vst [vmem:[%s215 + $0x28] sm:$0xf] %v2350
      %2383 = vst [vmem:[%s215 + $0x2c] sm:$0xf] %v2351
      %2384 = vst [vmem:[%s215 + $0x30] sm:$0xf] %v2352
      %2385 = vst [vmem:[%s215 + $0x34] sm:$0xf] %v2353
      %2386 = vst [vmem:[%s215 + $0x38] sm:$0xf] %v2354
      %2387 = vst [vmem:[%s215 + $0x3c] sm:$0xf] %v2355
      %v2388 = vadd.f32 %v2292, %v2293
      %v2389 = vadd.f32 %v2388, %v2294
      %v2390 = vadd.f32 %v2389, %v2295
      %v2391 = vadd.f32 %v2390, %v2296
      %v2392 = vadd.f32 %v2391, %v2297
      %v2393 = vadd.f32 %v2392, %v2298
      %v2394 = vadd.f32 %v2393, %v2299
      %v2395 = vadd.f32 %v2394, %v2300
      %v2396 = vadd.f32 %v2395, %v2301
      %v2397 = vadd.f32 %v2396, %v2302
      %v2398 = vadd.f32 %v2397, %v2303
      %v2399 = vadd.f32 %v2398, %v2304
      %v2400 = vadd.f32 %v2399, %v2305
      %v2401 = vadd.f32 %v2400, %v2306
      %v2402 = vadd.f32 %v2401, %v2307
      %v2403 = vrot.slane %v2402, 4
      %v2404 = vadd.f32 %v2402, %v2403
      %v2405 = vrot.slane %v2404, 2
      %v2406 = vadd.f32 %v2404, %v2405
      %v2407 = vrot.slane %v2406, 1
      %v2408 = vadd.f32 %v2406, %v2407
      %2409 = vst [vmem:[%s224] sm:$0x1] %v2408
      %v2410 = vmul.f32 %v2292, %v2292
      %v2411 = vmul.f32 %v2293, %v2293
      %v2412 = vmul.f32 %v2294, %v2294
      %v2413 = vmul.f32 %v2295, %v2295
      %v2414 = vmul.f32 %v2296, %v2296
      %v2415 = vmul.f32 %v2297, %v2297
      %v2416 = vmul.f32 %v2298, %v2298
      %v2417 = vmul.f32 %v2299, %v2299
      %v2418 = vmul.f32 %v2300, %v2300
      %v2419 = vmul.f32 %v2301, %v2301
      %v2420 = vmul.f32 %v2302, %v2302
      %v2421 = vmul.f32 %v2303, %v2303
      %v2422 = vmul.f32 %v2304, %v2304
      %v2423 = vmul.f32 %v2305, %v2305
      %v2424 = vmul.f32 %v2306, %v2306
      %v2425 = vmul.f32 %v2307, %v2307
      %v2426 = vadd.f32 %v2410, %v2411
      %v2427 = vadd.f32 %v2426, %v2412
      %v2428 = vadd.f32 %v2427, %v2413
      %v2429 = vadd.f32 %v2428, %v2414
      %v2430 = vadd.f32 %v2429, %v2415
      %v2431 = vadd.f32 %v2430, %v2416
      %v2432 = vadd.f32 %v2431, %v2417
      %v2433 = vadd.f32 %v2432, %v2418
      %v2434 = vadd.f32 %v2433, %v2419
      %v2435 = vadd.f32 %v2434, %v2420
      %v2436 = vadd.f32 %v2435, %v2421
      %v2437 = vadd.f32 %v2436, %v2422
      %v2438 = vadd.f32 %v2437, %v2423
      %v2439 = vadd.f32 %v2438, %v2424
      %v2440 = vadd.f32 %v2439, %v2425
      %v2441 = vrot.slane %v2440, 4
      %v2442 = vadd.f32 %v2440, %v2441
      %v2443 = vrot.slane %v2442, 2
      %v2444 = vadd.f32 %v2442, %v2443
      %v2445 = vrot.slane %v2444, 1
      %v2446 = vadd.f32 %v2444, %v2445
      %2447 = vst [vmem:[%s224 + $0x1] sm:$0x1] %v2446
      %s2448 = smul.u32 8, %s22
      %p2449 = scmp.lt.s32.totalorder %s21, 1
      %s2450 = scalar_select %p2449, %s21, 1
      %p2451 = scmp.lt.s32.totalorder %s2448, 15
      %s2452 = scalar_select %p2451, %s2448, 15
      %s2453 = smul.addr %s2452, 2
      %s2454 = smul.addr %s2450, 32
      %s2455 = sadd.s32 %s2453, %s2454
      %s2456 = smul.addr %s2455, 4
      %s2457 = scalar_lea.vmem %s4, %s2456
      %p2458 = scmp.lt.s32.totalorder %s21, 1
      %s2459 = scalar_select %p2458, %s21, 1
      %p2460 = scmp.lt.s32.totalorder %s22, 1
      %s2461 = scalar_select %p2460, %s22, 1
      %s2462 = smul.addr %s2459, 2
      %s2463 = sadd.s32 %s2461, %s2462
      %s2464 = smul.addr %s2463, 8
      %s2465 = scalar_lea.vmem %s5, %s2464
      // Predicated region
      $region277: #{unet_conv_block_2d.3} parent=31 // pred_check
        %p2466 = pneg %p112
      $region278: #{unet_conv_block_2d.3} parent=31 // pred_check_branch
        %2468 = sbr.rel (%p2466) target = $region280
      $region279: #{unet_conv_block_2d.3} parent=31 // pred_region
        %s2469 = smul.u32 8, %s22
      $region280: #{unet_conv_block_2d.3} parent=31 // pred_fallthru
        _
      // Predicated region
      $region281: #{unet_conv_block_2d.3} parent=31 // pred_check
        %p2470 = pneg %p140
      $region282: #{unet_conv_block_2d.3} parent=31 // pred_check_branch
        %2472 = sbr.rel (%p2470) target = $region284
      $region283: #{unet_conv_block_2d.3} parent=31 // pred_region
        _
      $region284: #{unet_conv_block_2d.3} parent=31 // pred_fallthru
        _
    $region32: #{unet_conv_block_2d.3} parent=5 // pred_fallthru
      _
    %p2473 = scmp.le.s32.totalorder 2, %s12
    // Predicated region
    $region285: #{unet_conv_block_2d.3} parent=5 // pred_check
      %p2474 = pneg %p2473
    $region286: #{unet_conv_block_2d.3} parent=5 // pred_check_branch
      %2476 = sbr.rel (%p2474) target = $region288
    $region287: #{unet_conv_block_2d.3} parent=5 // pred_region
      %s2477 = ssub.s32 %s12, 2
      // Predicated region
      $region289: #{unet_conv_block_2d.3} parent=287 // pred_check
        %p2478 = pneg %p118
      $region290: #{unet_conv_block_2d.3} parent=287 // pred_check_branch
        %2480 = sbr.rel (%p2478) target = $region292
      $region291: #{unet_conv_block_2d.3} parent=287 // pred_region
        %s2481 = smul.u32 8, %s24
        %p2482 = scmp.lt.s32.totalorder %s23, 1
        %s2483 = scalar_select %p2482, %s23, 1
        %p2484 = scmp.lt.s32.totalorder %s2481, 15
        %s2485 = scalar_select %p2484, %s2481, 15
        %s2486 = smul.addr %s2485, 2
        %s2487 = smul.addr %s2483, 32
        %s2488 = sadd.s32 %s2486, %s2487
        %s2489 = smul.addr %s2488, 4
        %s2490 = scalar_lea.vmem %s4, %s2489
      $region292: #{unet_conv_block_2d.3} parent=287 // pred_fallthru
        _
      // Predicated region
      $region293: #{unet_conv_block_2d.3} parent=287 // pred_check
        %p2491 = pneg %p146
      $region294: #{unet_conv_block_2d.3} parent=287 // pred_check_branch
        %2493 = sbr.rel (%p2491) target = $region296
      $region295: #{unet_conv_block_2d.3} parent=287 // pred_region
        %p2494 = scmp.lt.s32.totalorder %s23, 1
        %s2495 = scalar_select %p2494, %s23, 1
        %p2496 = scmp.lt.s32.totalorder %s24, 1
        %s2497 = scalar_select %p2496, %s24, 1
        %s2498 = smul.addr %s2495, 2
        %s2499 = sadd.s32 %s2497, %s2498
        %s2500 = smul.addr %s2499, 8
        %s2501 = scalar_lea.vmem %s5, %s2500
      $region296: #{unet_conv_block_2d.3} parent=287 // pred_fallthru
        _
    $region288: #{unet_conv_block_2d.3} parent=5 // pred_fallthru
      _
  $region6: #{unet_conv_block_2d.3} parent=0 // loop_footer
    %s16 = sadd.s32 1, %s12
  $region7: #{unet_conv_block_2d.3} parent=0 // loop_footer_branch
    %11 = sbr.rel target = $region3
  $region8: #{unet_conv_block_2d.3} parent=0 // loop_exit
    _
  %2502 = vsyncmov [#allocation3]
  %s2503 = vpop.sfrf %2502
  %p2504 = scmp.eq.s32.totalorder %s2503, 0
  %p2505 = pneg %p2504
  %2507 = shalt.err (%p2505)
  %s2508 = scalar_lea.sflag [#allocation3], 1
  %2509 = vsyncmov %s2508
  %s2510 = vpop.sfrf %2509
  %p2511 = scmp.eq.s32.totalorder %s2510, 0
  %p2512 = pneg %p2511
  %2514 = shalt.err (%p2512)
  %s2515 = scalar_lea.sflag [#allocation3], 2
  %2516 = vsyncmov %s2515
  %s2517 = vpop.sfrf %2516
  %p2518 = scmp.eq.s32.totalorder %s2517, 0
  %p2519 = pneg %p2518
  %2521 = shalt.err (%p2519)
  %s2522 = scalar_lea.sflag [#allocation3], 3
  %2523 = vsyncmov %s2522
  %s2524 = vpop.sfrf %2523
  %p2525 = scmp.eq.s32.totalorder %s2524, 0
  %p2526 = pneg %p2525
  %2528 = shalt.err (%p2526)
  %s2529 = scalar_lea.sflag [#allocation3], 4
  %2530 = vsyncmov %s2529
  %s2531 = vpop.sfrf %2530
  %p2532 = scmp.eq.s32.totalorder %s2531, 0
  %p2533 = pneg %p2532
  %2535 = shalt.err (%p2533)
  %s2536 = scalar_lea.sflag [#allocation3], 5
  %2537 = vsyncmov %s2536
  %s2538 = vpop.sfrf %2537
  %p2539 = scmp.eq.s32.totalorder %s2538, 0
  %p2540 = pneg %p2539
  %2542 = shalt.err (%p2540)

// kernel: unet_conv_block_2d.4
$region0: #{unet_conv_block_2d.4}
  #allocation0 [shape = 'u32[]', space=smem, size = 0x4, offset = 0x4, fixed_abs, tag = 'smem constant byte address 0x4 - core index']
  #allocation1 [shape = 'u32[144,128]{1,0:T(1,128)}', space=vmem, size = 0x12000, scoped, tag = 'internal scratch']
  #allocation2 [shape = 'bf16[2,12,16,128]{3,2,1,0:T(16,128)(2,1)}', space=vmem, size = 0x18000, scoped, tag = 'scratch operand']
  #allocation3 [shape = 's32[6]{0}', space=sflag, size = 0x18, scoped, tag = 'scratch operand']
  #allocation4 [shape = 's32[]', space=sflag, size = 0x4, offset = 0, fixed_abs, tag = 'sflag constant byte address 0x0 - dummy sync flag']
  #allocation5 [shape = 's32[]', space=sflag, size = 0x4, offset = 0, fixed_abs, tag = 'sflag constant byte address 0x0 - dummy sync flag']
  #allocation6 [shape = 's32[]', space=sflag, size = 0x4, offset = 0, fixed_abs, tag = 'sflag constant byte address 0x0 - dummy sync flag']
  #allocation7 [shape = 's32[]', space=sflag, size = 0x4, offset = 0, fixed_abs, tag = 'sflag constant byte address 0x0 - dummy sync flag']
  #allocation8 [shape = 's32[]', space=sflag, size = 0x4, offset = 0, fixed_abs, tag = 'sflag constant byte address 0x0 - dummy sync flag']
  #allocation9 [shape = 's32[]', space=sflag, size = 0x4, offset = 0, fixed_abs, tag = 'sflag constant byte address 0x0 - dummy sync flag']
  %s0 = inlined_call_operand.vmem [shape: f32[1,128], index: 0, kind: input, shape index: {}]
  %s1 = inlined_call_operand.vmem [shape: f32[1,128], index: 1, kind: input, shape index: {}]
  %s2 = inlined_call_operand.vmem [shape: bf16[2,16,16,128], index: 2, kind: input, shape index: {}]
  %s3 = inlined_call_operand.vmem [shape: bf16[3,384,128], index: 3, kind: input, shape index: {}]
  %s4 = inlined_call_operand.vmem [shape: bf16[2,16,16,128], index: 4, kind: output, shape index: {0}]
  %s5 = inlined_call_operand.vmem [shape: f32[2,2,8,128], index: 5, kind: output, shape index: {1}]
  %6 = xla_tuple %s4, %s5
  %s7 = sld [smem:[#allocation0]]
  $region297: #{unet_conv_block_2d.4} parent=0
    _
  %s9 = ssub.s32 1, %s7
  %s10 = scalar_select 0, %s9, %s7
  loop: start=0, step=1, limit=6
  $region2: #{unet_conv_block_2d.4} parent=0 // loop_pre_header
    _
  $region3: #{unet_conv_block_2d.4} parent=0 // loop_header
    %s12 = sphi 0, %s16
    %p13 = scmp.ge.s32.totalorder %s12, 6
    %s19 = sphi 0, %s31
    %s20 = sphi 0, %s27
    %s21 = sphi 0, %s19
    %s22 = sphi 0, %s20
    %s23 = sphi 0, %s21
    %s24 = sphi 0, %s22
    %s32 = sphi 0, %s32
    %s34 = sphi 0, %s32
    %s35 = sphi 0, %s34
    %s49 = sphi 0, %s35
    %s53 = sphi 0, %s53
    %s55 = sphi 0, %s53
    %s56 = sphi 0, %s55
    %s70 = sphi 0, %s56
    %s74 = sphi 0, %s74
    %s76 = sphi 0, %s74
    %s77 = sphi 0, %s76
    %s91 = sphi 0, %s77
    %s99 = sphi 0, %s101
    %s102 = sphi 0, %s99
    %s103 = sphi 0, %s102
    %s119 = sphi 0, %s103
    %s127 = sphi 0, %s129
    %s130 = sphi 0, %s127
    %s131 = sphi 0, %s130
    %s147 = sphi 0, %s131
  $region4: #{unet_conv_block_2d.4} parent=0 // loop_header_branch
    %15 = sbr.rel (%p13) target = $region8
  $region5: #{unet_conv_block_2d.4} parent=0 // loop_body
    %s17 = ssub.s32 %s12, 1
    %s18 = ssub.s32 %s12, 2
    %s25 = sadd.s32 1, %s20
    %p26 = scmp.ge.s32.totalorder %s25, 2
    %s27 = scalar_select %p26, 0, %s25
    %s28 = sadd.s32 1, %s19
    %s29 = scalar_select %p26, %s28, %s19
    %p30 = scmp.ge.s32.totalorder %s29, 2
    %s31 = scalar_select %p30, 0, %s29
    %s33 = sadd.s32 %s32, 1
    %p36 = scmp.eq.s32.totalorder %s12, 3
    %p37 = scmp.ne.s32.totalorder %s32, %s34
    %p38 = scmp.eq.s32.totalorder %s12, 0
    %p39 = por %p37, %p38
    %p40 = scmp.ne.s32.totalorder %s32, %s34
    %p41 = scmp.eq.s32.totalorder %s17, 3
    %p42 = por %p40, %p41
    %p43 = scmp.ne.s32.totalorder %s34, %s35
    %p44 = scmp.eq.s32.totalorder %s17, 0
    %p45 = por %p43, %p44
    %p46 = scmp.ne.s32.totalorder %s34, %s35
    %p47 = scmp.eq.s32.totalorder %s18, 3
    %p48 = por %p46, %p47
    %p50 = scmp.ne.s32.totalorder %s35, %s49
    %p51 = scmp.eq.s32.totalorder %s18, 0
    %p52 = por %p50, %p51
    %s54 = sadd.s32 %s53, 1
    %p57 = scmp.eq.s32.totalorder %s12, 3
    %p58 = scmp.ne.s32.totalorder %s53, %s55
    %p59 = scmp.eq.s32.totalorder %s12, 0
    %p60 = por %p58, %p59
    %p61 = scmp.ne.s32.totalorder %s53, %s55
    %p62 = scmp.eq.s32.totalorder %s17, 3
    %p63 = por %p61, %p62
    %p64 = scmp.ne.s32.totalorder %s55, %s56
    %p65 = scmp.eq.s32.totalorder %s17, 0
    %p66 = por %p64, %p65
    %p67 = scmp.ne.s32.totalorder %s55, %s56
    %p68 = scmp.eq.s32.totalorder %s18, 3
    %p69 = por %p67, %p68
    %p71 = scmp.ne.s32.totalorder %s56, %s70
    %p72 = scmp.eq.s32.totalorder %s18, 0
    %p73 = por %p71, %p72
    %s75 = sadd.s32 %s74, 1
    %p78 = scmp.eq.s32.totalorder %s12, 3
    %p79 = scmp.ne.s32.totalorder %s74, %s76
    %p80 = scmp.eq.s32.totalorder %s12, 0
    %p81 = por %p79, %p80
    %p82 = scmp.ne.s32.totalorder %s74, %s76
    %p83 = scmp.eq.s32.totalorder %s17, 3
    %p84 = por %p82, %p83
    %p85 = scmp.ne.s32.totalorder %s76, %s77
    %p86 = scmp.eq.s32.totalorder %s17, 0
    %p87 = por %p85, %p86
    %p88 = scmp.ne.s32.totalorder %s76, %s77
    %p89 = scmp.eq.s32.totalorder %s18, 3
    %p90 = por %p88, %p89
    %p92 = scmp.ne.s32.totalorder %s77, %s91
    %p93 = scmp.eq.s32.totalorder %s18, 0
    %p94 = por %p92, %p93
    %s95 = ssub.s32 %s19, %s31
    %s96 = ssub.s32 %s20, %s27
    %s97 = sor.u32 %s95, %s96
    %p98 = scmp.eq.s32.totalorder %s97, 0
    %s100 = sadd.s32 %s99, 1
    %s101 = scalar_select %p98, %s99, %s100
    %p104 = pneg %p98
    %p105 = scmp.eq.s32.totalorder %s12, 3
    %p106 = por %p104, %p105
    %p107 = scmp.ne.s32.totalorder %s99, %s102
    %p108 = scmp.eq.s32.totalorder %s12, 0
    %p109 = por %p107, %p108
    %p110 = scmp.ne.s32.totalorder %s99, %s102
    %p111 = scmp.eq.s32.totalorder %s17, 3
    %p112 = por %p110, %p111
    %p113 = scmp.ne.s32.totalorder %s102, %s103
    %p114 = scmp.eq.s32.totalorder %s17, 0
    %p115 = por %p113, %p114
    %p116 = scmp.ne.s32.totalorder %s102, %s103
    %p117 = scmp.eq.s32.totalorder %s18, 3
    %p118 = por %p116, %p117
    %p120 = scmp.ne.s32.totalorder %s103, %s119
    %p121 = scmp.eq.s32.totalorder %s18, 0
    %p122 = por %p120, %p121
    %s123 = ssub.s32 %s19, %s31
    %s124 = ssub.s32 %s20, %s27
    %s125 = sor.u32 %s123, %s124
    %p126 = scmp.eq.s32.totalorder %s125, 0
    %s128 = sadd.s32 %s127, 1
    %s129 = scalar_select %p126, %s127, %s128
    %p132 = pneg %p126
    %p133 = scmp.eq.s32.totalorder %s12, 3
    %p134 = por %p132, %p133
    %p135 = scmp.ne.s32.totalorder %s127, %s130
    %p136 = scmp.eq.s32.totalorder %s12, 0
    %p137 = por %p135, %p136
    %p138 = scmp.ne.s32.totalorder %s127, %s130
    %p139 = scmp.eq.s32.totalorder %s17, 3
    %p140 = por %p138, %p139
    %p141 = scmp.ne.s32.totalorder %s130, %s131
    %p142 = scmp.eq.s32.totalorder %s17, 0
    %p143 = por %p141, %p142
    %p144 = scmp.ne.s32.totalorder %s130, %s131
    %p145 = scmp.eq.s32.totalorder %s18, 3
    %p146 = por %p144, %p145
    %p148 = scmp.ne.s32.totalorder %s131, %s147
    %p149 = scmp.eq.s32.totalorder %s18, 0
    %p150 = por %p148, %p149
    %p151 = scmp.le.s32.totalorder 1, %s12
    %p152 = scmp.lt.s32.totalorder %s12, 5
    %p153 = pnand %p151, %p152
    %p154 = pneg %p153
    // Predicated region
    $region9: #{unet_conv_block_2d.4} parent=5 // pred_check
      _
    $region10: #{unet_conv_block_2d.4} parent=5 // pred_check_branch
      %156 = sbr.rel (%p153) target = $region12
    $region11: #{unet_conv_block_2d.4} parent=5 // pred_region
      %s157 = ssub.s32 %s12, 1
      // Predicated region
      $region13: #{unet_conv_block_2d.4} parent=11 // pred_check
        %p158 = pneg %p45
      $region14: #{unet_conv_block_2d.4} parent=11 // pred_check_branch
        %160 = sbr.rel (%p158) target = $region16
      $region15: #{unet_conv_block_2d.4} parent=11 // pred_region
        _
      $region16: #{unet_conv_block_2d.4} parent=11 // pred_fallthru
        _
      // Predicated region
      $region17: #{unet_conv_block_2d.4} parent=11 // pred_check
        %p161 = pneg %p66
      $region18: #{unet_conv_block_2d.4} parent=11 // pred_check_branch
        %163 = sbr.rel (%p161) target = $region20
      $region19: #{unet_conv_block_2d.4} parent=11 // pred_region
        _
      $region20: #{unet_conv_block_2d.4} parent=11 // pred_fallthru
        _
      // Predicated region
      $region21: #{unet_conv_block_2d.4} parent=11 // pred_check
        %p164 = pneg %p87
      $region22: #{unet_conv_block_2d.4} parent=11 // pred_check_branch
        %166 = sbr.rel (%p164) target = $region24
      $region23: #{unet_conv_block_2d.4} parent=11 // pred_region
        _
      $region24: #{unet_conv_block_2d.4} parent=11 // pred_fallthru
        _
    $region12: #{unet_conv_block_2d.4} parent=5 // pred_fallthru
      _
    %p167 = scmp.lt.s32.totalorder %s12, 4
    // Predicated region
    $region25: #{unet_conv_block_2d.4} parent=5 // pred_check
      %p168 = pneg %p167
    $region26: #{unet_conv_block_2d.4} parent=5 // pred_check_branch
      %170 = sbr.rel (%p168) target = $region28
    $region27: #{unet_conv_block_2d.4} parent=5 // pred_region
      _
    $region28: #{unet_conv_block_2d.4} parent=5 // pred_fallthru
      _
    %p171 = scmp.le.s32.totalorder 1, %s12
    %p172 = scmp.lt.s32.totalorder %s12, 5
    %p173 = pnand %p171, %p172
    %p174 = pneg %p173
    // Predicated region
    $region29: #{unet_conv_block_2d.4} parent=5 // pred_check
      _
    $region30: #{unet_conv_block_2d.4} parent=5 // pred_check_branch
      %176 = sbr.rel (%p173) target = $region32
    $region31: #{unet_conv_block_2d.4} parent=5 // pred_region
      %s177 = ssub.s32 %s12, 1
      %p178 = pneg %p45
      %p179 = pneg %p42
      %p180 = pneg %p66
      %p181 = pneg %p63
      %p182 = pneg %p87
      %p183 = pneg %p84
      %p184 = pneg %p115
      %p185 = pneg %p112
      %s186 = smul.u32 8, %s22
      %p187 = scmp.lt.s32.totalorder %s21, 1
      %s188 = scalar_select %p187, %s21, 1
      %p189 = scmp.lt.s32.totalorder %s186, 15
      %s190 = scalar_select %p189, %s186, 15
      %s191 = smul.addr %s190, 2
      %s192 = smul.addr %s188, 32
      %s193 = sadd.s32 %s191, %s192
      %s194 = smul.addr %s193, 4
      %s195 = scalar_lea.vmem %s4, %s194
      %p196 = pneg %p143
      %p197 = pneg %p140
      %p198 = scmp.lt.s32.totalorder %s21, 1
      %s199 = scalar_select %p198, %s21, 1
      %p200 = scmp.lt.s32.totalorder %s22, 1
      %s201 = scalar_select %p200, %s22, 1
      %s202 = smul.addr %s199, 2
      %s203 = sadd.s32 %s201, %s202
      %s204 = smul.addr %s203, 8
      %s205 = scalar_lea.vmem %s5, %s204
      %s206 = smul.u32 8, %s22
      %p207 = scmp.lt.s32.totalorder %s21, 1
      %s208 = scalar_select %p207, %s21, 1
      %p209 = scmp.lt.s32.totalorder %s206, 15
      %s210 = scalar_select %p209, %s206, 15
      %s211 = smul.addr %s210, 2
      %s212 = smul.addr %s208, 32
      %s213 = sadd.s32 %s211, %s212
      %s214 = smul.addr %s213, 4
      %s215 = scalar_lea.vmem %s4, %s214
      %s216 = smul.u32 8, %s22
      %p217 = scmp.lt.s32.totalorder %s21, 1
      %s218 = scalar_select %p217, %s21, 1
      %p219 = scmp.lt.s32.totalorder %s22, 1
      %s220 = scalar_select %p219, %s22, 1
      %s221 = smul.addr %s218, 2
      %s222 = sadd.s32 %s220, %s221
      %s223 = smul.addr %s222, 8
      %s224 = scalar_lea.vmem %s5, %s223
      %p228 = scmp.lt.s32.totalorder %s22, 0
      %s229 = ssub.s32 0, %s22
      %s230 = scalar_select %p228, %s229, %s22
      %s231 = sand.u32 %s230, 1
      %s232 = ssub.s32 0, %s231
      %s233 = scalar_select %p228, %s232, %s231
      %p234 = scmp.ne.s32.totalorder %s233, 0
      %p235 = scmp.lt.s32.totalorder %s233, 0
      %p236 = pnand %p235, %p234
      %p237 = pneg %p236
      %s238 = sadd.s32 %s233, 2
      %s239 = scalar_select %p237, %s238, %s233
      %s240 = ssub.s32 1, %s239
      %p241 = scmp.eq.s32.totalorder %s22, 0
      // Predicated region
      $region33: #{unet_conv_block_2d.4} parent=31 // pred_check
        %p242 = pneg %p241
      $region34: #{unet_conv_block_2d.4} parent=31 // pred_check_branch
        %244 = sbr.rel (%p242) target = $region36
      $region35: #{unet_conv_block_2d.4} parent=31 // pred_region
        %s245 = smul.u32 %s22, 8
        %s246 = smul.u32 %s245, 2
        %s247 = smul.u32 %s21, 32
        %s248 = sadd.s32 %s246, %s247
        %s249 = smul.addr %s248, 4
        %s250 = scalar_lea.vmem %s2, %s249
        %s251 = smul.u32 %s239, 12
        %s252 = sadd.s32 2, %s251
        %s253 = smul.addr %s252, 8
        %s254 = scalar_lea.vmem [#allocation2], %s253
        %s255 = smul.u32 %s239, 3
        %s256 = scalar_lea.sflag [#allocation3], %s255
        %p258 = scmp.lt.u32.totalorder 64, 8
        %p259 = pneg %p258
        // Predicated region
        $region37: #{unet_conv_block_2d.4} parent=35 // pred_check
          _
        $region38: #{unet_conv_block_2d.4} parent=35 // pred_check_branch
          %261 = sbr.rel (%p258) target = $region40
        $region39: #{unet_conv_block_2d.4} parent=35 // pred_region
          %s276 = sand.u32 64, 7
          %p277 = scmp.eq.s32.totalorder %s276, 0
          // Predicated region
          $region52: #{unet_conv_block_2d.4} parent=39 // pred_check
            %p278 = pneg %p277
          $region53: #{unet_conv_block_2d.4} parent=39 // pred_check_branch
            %280 = sbr.rel (%p278) target = $region55
          $region54: #{unet_conv_block_2d.4} parent=39 // pred_region
            loop: start=0, step=1, limit=1
            $region56: #{unet_conv_block_2d.4} parent=54 // loop_pre_header
              _
            $region57: #{unet_conv_block_2d.4} parent=54 // loop_header
              %s282 = sphi 0, %s286
              %p283 = scmp.ge.s32.totalorder %s282, 1
              %s287 = sphi %s250, %s250
              %s288 = sphi %s254, %s254
            $region58: #{unet_conv_block_2d.4} parent=54 // loop_header_branch
              %285 = sbr.rel (%p283) target = $region62
            $region59: #{unet_conv_block_2d.4} parent=54 // loop_body
              %v289 = vld [vmem:[%s287] sm:$0xff]
              %290 = vst [vmem:[%s288] sm:$0xff] %v289
              %v291 = vld [vmem:[%s287 + $0x8] sm:$0xff]
              %292 = vst [vmem:[%s288 + $0x8] sm:$0xff] %v291
              %v293 = vld [vmem:[%s287 + $0x10] sm:$0xff]
              %294 = vst [vmem:[%s288 + $0x10] sm:$0xff] %v293
              %v295 = vld [vmem:[%s287 + $0x18] sm:$0xff]
              %296 = vst [vmem:[%s288 + $0x18] sm:$0xff] %v295
              %v297 = vld [vmem:[%s287 + $0x20] sm:$0xff]
              %298 = vst [vmem:[%s288 + $0x20] sm:$0xff] %v297
              %v299 = vld [vmem:[%s287 + $0x28] sm:$0xff]
              %300 = vst [vmem:[%s288 + $0x28] sm:$0xff] %v299
              %v301 = vld [vmem:[%s287 + $0x30] sm:$0xff]
              %302 = vst [vmem:[%s288 + $0x30] sm:$0xff] %v301
              %v303 = vld [vmem:[%s287 + $0x38] sm:$0xff]
              %304 = vst [vmem:[%s288 + $0x38] sm:$0xff] %v303
            $region60: #{unet_conv_block_2d.4} parent=54 // loop_footer
              %s286 = sadd.s32 1, %s282
            $region61: #{unet_conv_block_2d.4} parent=54 // loop_footer_branch
              %281 = sbr.rel target = $region57
            $region62: #{unet_conv_block_2d.4} parent=54 // loop_exit
              _
          $region55: #{unet_conv_block_2d.4} parent=39 // pred_fallthru
            _
          %p305 = pneg %p277
          // Predicated region
          $region63: #{unet_conv_block_2d.4} parent=39 // pred_check
            _
          $region64: #{unet_conv_block_2d.4} parent=39 // pred_check_branch
            %307 = sbr.rel (%p277) target = $region66
          $region65: #{unet_conv_block_2d.4} parent=39 // pred_region
            %s308 = sand.u32 64, 7
          $region66: #{unet_conv_block_2d.4} parent=39 // pred_fallthru
            _
        $region40: #{unet_conv_block_2d.4} parent=35 // pred_fallthru
          _
        // Predicated region
        $region41: #{unet_conv_block_2d.4} parent=35 // pred_check
          %p262 = pneg %p258
        $region42: #{unet_conv_block_2d.4} parent=35 // pred_check_branch
          %264 = sbr.rel (%p262) target = $region44
        $region43: #{unet_conv_block_2d.4} parent=35 // pred_region
          %s265 = sshllo.u32 0, 64
          loop: start=0, step=1, limit=1
          $region45: #{unet_conv_block_2d.4} parent=43 // loop_pre_header
            _
          $region46: #{unet_conv_block_2d.4} parent=43 // loop_header
            %s267 = sphi 0, %s271
            %p268 = scmp.ge.s32.totalorder %s267, 1
            %s272 = sphi %s250, %s250
            %s273 = sphi %s254, %s254
          $region47: #{unet_conv_block_2d.4} parent=43 // loop_header_branch
            %270 = sbr.rel (%p268) target = $region51
          $region48: #{unet_conv_block_2d.4} parent=43 // loop_body
            %v274 = vld [vmem:[%s272] sm:%s265]
            %275 = vst [vmem:[%s273] sm:%s265] %v274
          $region49: #{unet_conv_block_2d.4} parent=43 // loop_footer
            %s271 = sadd.s32 1, %s267
          $region50: #{unet_conv_block_2d.4} parent=43 // loop_footer_branch
            %266 = sbr.rel target = $region46
          $region51: #{unet_conv_block_2d.4} parent=43 // loop_exit
            _
        $region44: #{unet_conv_block_2d.4} parent=35 // pred_fallthru
          _
        // Predicated region
        $region67: #{unet_conv_block_2d.4} parent=35 // pred_check
          _
        $region68: #{unet_conv_block_2d.4} parent=35 // pred_check_branch
          %311 = sbr.rel (0) target = $region70
        $region69: #{unet_conv_block_2d.4} parent=35 // pred_region
          %312 = vsyncadd %s256, 1024
        $region70: #{unet_conv_block_2d.4} parent=35 // pred_fallthru
          _
        %p313 = scmp.gt.s32.totalorder %s22, 0
        // Predicated region
        $region71: #{unet_conv_block_2d.4} parent=35 // pred_check
          %p314 = pneg %p313
        $region72: #{unet_conv_block_2d.4} parent=35 // pred_check_branch
          %316 = sbr.rel (%p314) target = $region74
        $region73: #{unet_conv_block_2d.4} parent=35 // pred_region
          %s317 = ssub.s32 %s245, 1
          %s318 = smul.u32 %s317, 2
          %s319 = sadd.s32 %s318, %s247
          %s320 = smul.addr %s319, 4
          %s321 = scalar_lea.vmem %s2, %s320
          %s322 = sadd.s32 1, %s251
          %s323 = smul.addr %s322, 8
          %s324 = scalar_lea.vmem [#allocation2], %s323
          %s325 = sadd.s32 1, %s255
          %s326 = scalar_lea.sflag [#allocation3], %s325
          %p328 = scmp.lt.u32.totalorder 8, 8
          %p329 = pneg %p328
          // Predicated region
          $region75: #{unet_conv_block_2d.4} parent=73 // pred_check
            _
          $region76: #{unet_conv_block_2d.4} parent=73 // pred_check_branch
            %331 = sbr.rel (%p328) target = $region78
          $region77: #{unet_conv_block_2d.4} parent=73 // pred_region
            %s346 = sand.u32 8, 7
            %p347 = scmp.eq.s32.totalorder %s346, 0
            // Predicated region
            $region90: #{unet_conv_block_2d.4} parent=77 // pred_check
              %p348 = pneg %p347
            $region91: #{unet_conv_block_2d.4} parent=77 // pred_check_branch
              %350 = sbr.rel (%p348) target = $region93
            $region92: #{unet_conv_block_2d.4} parent=77 // pred_region
              loop: start=0, step=1, limit=1
              $region94: #{unet_conv_block_2d.4} parent=92 // loop_pre_header
                _
              $region95: #{unet_conv_block_2d.4} parent=92 // loop_header
                %s352 = sphi 0, %s356
                %p353 = scmp.ge.s32.totalorder %s352, 1
                %s357 = sphi %s321, %s321
                %s358 = sphi %s324, %s324
              $region96: #{unet_conv_block_2d.4} parent=92 // loop_header_branch
                %355 = sbr.rel (%p353) target = $region100
              $region97: #{unet_conv_block_2d.4} parent=92 // loop_body
                %v359 = vld [vmem:[%s357] sm:$0xff]
                %360 = vst [vmem:[%s358] sm:$0xff] %v359
              $region98: #{unet_conv_block_2d.4} parent=92 // loop_footer
                %s356 = sadd.s32 1, %s352
              $region99: #{unet_conv_block_2d.4} parent=92 // loop_footer_branch
                %351 = sbr.rel target = $region95
              $region100: #{unet_conv_block_2d.4} parent=92 // loop_exit
                _
            $region93: #{unet_conv_block_2d.4} parent=77 // pred_fallthru
              _
            %p361 = pneg %p347
            // Predicated region
            $region101: #{unet_conv_block_2d.4} parent=77 // pred_check
              _
            $region102: #{unet_conv_block_2d.4} parent=77 // pred_check_branch
              %363 = sbr.rel (%p347) target = $region104
            $region103: #{unet_conv_block_2d.4} parent=77 // pred_region
              %s364 = sand.u32 8, 7
            $region104: #{unet_conv_block_2d.4} parent=77 // pred_fallthru
              _
          $region78: #{unet_conv_block_2d.4} parent=73 // pred_fallthru
            _
          // Predicated region
          $region79: #{unet_conv_block_2d.4} parent=73 // pred_check
            %p332 = pneg %p328
          $region80: #{unet_conv_block_2d.4} parent=73 // pred_check_branch
            %334 = sbr.rel (%p332) target = $region82
          $region81: #{unet_conv_block_2d.4} parent=73 // pred_region
            %s335 = sshllo.u32 0, 8
            loop: start=0, step=1, limit=1
            $region83: #{unet_conv_block_2d.4} parent=81 // loop_pre_header
              _
            $region84: #{unet_conv_block_2d.4} parent=81 // loop_header
              %s337 = sphi 0, %s341
              %p338 = scmp.ge.s32.totalorder %s337, 1
              %s342 = sphi %s321, %s321
              %s343 = sphi %s324, %s324
            $region85: #{unet_conv_block_2d.4} parent=81 // loop_header_branch
              %340 = sbr.rel (%p338) target = $region89
            $region86: #{unet_conv_block_2d.4} parent=81 // loop_body
              %v344 = vld [vmem:[%s342] sm:%s335]
              %345 = vst [vmem:[%s343] sm:%s335] %v344
            $region87: #{unet_conv_block_2d.4} parent=81 // loop_footer
              %s341 = sadd.s32 1, %s337
            $region88: #{unet_conv_block_2d.4} parent=81 // loop_footer_branch
              %336 = sbr.rel target = $region84
            $region89: #{unet_conv_block_2d.4} parent=81 // loop_exit
              _
          $region82: #{unet_conv_block_2d.4} parent=73 // pred_fallthru
            _
          // Predicated region
          $region105: #{unet_conv_block_2d.4} parent=73 // pred_check
            _
          $region106: #{unet_conv_block_2d.4} parent=73 // pred_check_branch
            %367 = sbr.rel (0) target = $region108
          $region107: #{unet_conv_block_2d.4} parent=73 // pred_region
            %368 = vsyncadd %s326, 128
          $region108: #{unet_conv_block_2d.4} parent=73 // pred_fallthru
            _
        $region74: #{unet_conv_block_2d.4} parent=35 // pred_fallthru
          _
        %p369 = scmp.lt.s32.totalorder %s22, 1
        // Predicated region
        $region109: #{unet_conv_block_2d.4} parent=35 // pred_check
          %p370 = pneg %p369
        $region110: #{unet_conv_block_2d.4} parent=35 // pred_check_branch
          %372 = sbr.rel (%p370) target = $region112
        $region111: #{unet_conv_block_2d.4} parent=35 // pred_region
          %s373 = sadd.s32 %s245, 8
          %s374 = smul.u32 %s373, 2
          %s375 = sadd.s32 %s374, %s247
          %s376 = smul.addr %s375, 4
          %s377 = scalar_lea.vmem %s2, %s376
          %s378 = sadd.s32 10, %s251
          %s379 = smul.addr %s378, 8
          %s380 = scalar_lea.vmem [#allocation2], %s379
          %s381 = sadd.s32 2, %s255
          %s382 = scalar_lea.sflag [#allocation3], %s381
          %p384 = scmp.lt.u32.totalorder 8, 8
          %p385 = pneg %p384
          // Predicated region
          $region113: #{unet_conv_block_2d.4} parent=111 // pred_check
            _
          $region114: #{unet_conv_block_2d.4} parent=111 // pred_check_branch
            %387 = sbr.rel (%p384) target = $region116
          $region115: #{unet_conv_block_2d.4} parent=111 // pred_region
            %s402 = sand.u32 8, 7
            %p403 = scmp.eq.s32.totalorder %s402, 0
            // Predicated region
            $region128: #{unet_conv_block_2d.4} parent=115 // pred_check
              %p404 = pneg %p403
            $region129: #{unet_conv_block_2d.4} parent=115 // pred_check_branch
              %406 = sbr.rel (%p404) target = $region131
            $region130: #{unet_conv_block_2d.4} parent=115 // pred_region
              loop: start=0, step=1, limit=1
              $region132: #{unet_conv_block_2d.4} parent=130 // loop_pre_header
                _
              $region133: #{unet_conv_block_2d.4} parent=130 // loop_header
                %s408 = sphi 0, %s412
                %p409 = scmp.ge.s32.totalorder %s408, 1
                %s413 = sphi %s377, %s377
                %s414 = sphi %s380, %s380
              $region134: #{unet_conv_block_2d.4} parent=130 // loop_header_branch
                %411 = sbr.rel (%p409) target = $region138
              $region135: #{unet_conv_block_2d.4} parent=130 // loop_body
                %v415 = vld [vmem:[%s413] sm:$0xff]
                %416 = vst [vmem:[%s414] sm:$0xff] %v415
              $region136: #{unet_conv_block_2d.4} parent=130 // loop_footer
                %s412 = sadd.s32 1, %s408
              $region137: #{unet_conv_block_2d.4} parent=130 // loop_footer_branch
                %407 = sbr.rel target = $region133
              $region138: #{unet_conv_block_2d.4} parent=130 // loop_exit
                _
            $region131: #{unet_conv_block_2d.4} parent=115 // pred_fallthru
              _
            %p417 = pneg %p403
            // Predicated region
            $region139: #{unet_conv_block_2d.4} parent=115 // pred_check
              _
            $region140: #{unet_conv_block_2d.4} parent=115 // pred_check_branch
              %419 = sbr.rel (%p403) target = $region142
            $region141: #{unet_conv_block_2d.4} parent=115 // pred_region
              %s420 = sand.u32 8, 7
            $region142: #{unet_conv_block_2d.4} parent=115 // pred_fallthru
              _
          $region116: #{unet_conv_block_2d.4} parent=111 // pred_fallthru
            _
          // Predicated region
          $region117: #{unet_conv_block_2d.4} parent=111 // pred_check
            %p388 = pneg %p384
          $region118: #{unet_conv_block_2d.4} parent=111 // pred_check_branch
            %390 = sbr.rel (%p388) target = $region120
          $region119: #{unet_conv_block_2d.4} parent=111 // pred_region
            %s391 = sshllo.u32 0, 8
            loop: start=0, step=1, limit=1
            $region121: #{unet_conv_block_2d.4} parent=119 // loop_pre_header
              _
            $region122: #{unet_conv_block_2d.4} parent=119 // loop_header
              %s393 = sphi 0, %s397
              %p394 = scmp.ge.s32.totalorder %s393, 1
              %s398 = sphi %s377, %s377
              %s399 = sphi %s380, %s380
            $region123: #{unet_conv_block_2d.4} parent=119 // loop_header_branch
              %396 = sbr.rel (%p394) target = $region127
            $region124: #{unet_conv_block_2d.4} parent=119 // loop_body
              %v400 = vld [vmem:[%s398] sm:%s391]
              %401 = vst [vmem:[%s399] sm:%s391] %v400
            $region125: #{unet_conv_block_2d.4} parent=119 // loop_footer
              %s397 = sadd.s32 1, %s393
            $region126: #{unet_conv_block_2d.4} parent=119 // loop_footer_branch
              %392 = sbr.rel target = $region122
            $region127: #{unet_conv_block_2d.4} parent=119 // loop_exit
              _
          $region120: #{unet_conv_block_2d.4} parent=111 // pred_fallthru
            _
          // Predicated region
          $region143: #{unet_conv_block_2d.4} parent=111 // pred_check
            _
          $region144: #{unet_conv_block_2d.4} parent=111 // pred_check_branch
            %423 = sbr.rel (0) target = $region146
          $region145: #{unet_conv_block_2d.4} parent=111 // pred_region
            %424 = vsyncadd %s382, 128
          $region146: #{unet_conv_block_2d.4} parent=111 // pred_fallthru
            _
        $region112: #{unet_conv_block_2d.4} parent=35 // pred_fallthru
          _
      $region36: #{unet_conv_block_2d.4} parent=31 // pred_fallthru
        _
      %s425 = sadd.s32 %s22, 1
      %p426 = scmp.lt.s32.totalorder %s425, 2
      // Predicated region
      $region147: #{unet_conv_block_2d.4} parent=31 // pred_check
        %p427 = pneg %p426
      $region148: #{unet_conv_block_2d.4} parent=31 // pred_check_branch
        %429 = sbr.rel (%p427) target = $region150
      $region149: #{unet_conv_block_2d.4} parent=31 // pred_region
        %s430 = smul.u32 %s425, 8
        %s431 = smul.u32 %s430, 2
        %s432 = smul.u32 %s21, 32
        %s433 = sadd.s32 %s431, %s432
        %s434 = smul.addr %s433, 4
        %s435 = scalar_lea.vmem %s2, %s434
        %s436 = smul.u32 %s240, 12
        %s437 = sadd.s32 2, %s436
        %s438 = smul.addr %s437, 8
        %s439 = scalar_lea.vmem [#allocation2], %s438
        %s440 = smul.u32 %s240, 3
        %s441 = scalar_lea.sflag [#allocation3], %s440
        %p443 = scmp.lt.u32.totalorder 64, 8
        %p444 = pneg %p443
        // Predicated region
        $region151: #{unet_conv_block_2d.4} parent=149 // pred_check
          _
        $region152: #{unet_conv_block_2d.4} parent=149 // pred_check_branch
          %446 = sbr.rel (%p443) target = $region154
        $region153: #{unet_conv_block_2d.4} parent=149 // pred_region
          %s461 = sand.u32 64, 7
          %p462 = scmp.eq.s32.totalorder %s461, 0
          // Predicated region
          $region166: #{unet_conv_block_2d.4} parent=153 // pred_check
            %p463 = pneg %p462
          $region167: #{unet_conv_block_2d.4} parent=153 // pred_check_branch
            %465 = sbr.rel (%p463) target = $region169
          $region168: #{unet_conv_block_2d.4} parent=153 // pred_region
            loop: start=0, step=1, limit=1
            $region170: #{unet_conv_block_2d.4} parent=168 // loop_pre_header
              _
            $region171: #{unet_conv_block_2d.4} parent=168 // loop_header
              %s467 = sphi 0, %s471
              %p468 = scmp.ge.s32.totalorder %s467, 1
              %s472 = sphi %s435, %s435
              %s473 = sphi %s439, %s439
            $region172: #{unet_conv_block_2d.4} parent=168 // loop_header_branch
              %470 = sbr.rel (%p468) target = $region176
            $region173: #{unet_conv_block_2d.4} parent=168 // loop_body
              %v474 = vld [vmem:[%s472] sm:$0xff]
              %475 = vst [vmem:[%s473] sm:$0xff] %v474
              %v476 = vld [vmem:[%s472 + $0x8] sm:$0xff]
              %477 = vst [vmem:[%s473 + $0x8] sm:$0xff] %v476
              %v478 = vld [vmem:[%s472 + $0x10] sm:$0xff]
              %479 = vst [vmem:[%s473 + $0x10] sm:$0xff] %v478
              %v480 = vld [vmem:[%s472 + $0x18] sm:$0xff]
              %481 = vst [vmem:[%s473 + $0x18] sm:$0xff] %v480
              %v482 = vld [vmem:[%s472 + $0x20] sm:$0xff]
              %483 = vst [vmem:[%s473 + $0x20] sm:$0xff] %v482
              %v484 = vld [vmem:[%s472 + $0x28] sm:$0xff]
              %485 = vst [vmem:[%s473 + $0x28] sm:$0xff] %v484
              %v486 = vld [vmem:[%s472 + $0x30] sm:$0xff]
              %487 = vst [vmem:[%s473 + $0x30] sm:$0xff] %v486
              %v488 = vld [vmem:[%s472 + $0x38] sm:$0xff]
              %489 = vst [vmem:[%s473 + $0x38] sm:$0xff] %v488
            $region174: #{unet_conv_block_2d.4} parent=168 // loop_footer
              %s471 = sadd.s32 1, %s467
            $region175: #{unet_conv_block_2d.4} parent=168 // loop_footer_branch
              %466 = sbr.rel target = $region171
            $region176: #{unet_conv_block_2d.4} parent=168 // loop_exit
              _
          $region169: #{unet_conv_block_2d.4} parent=153 // pred_fallthru
            _
          %p490 = pneg %p462
          // Predicated region
          $region177: #{unet_conv_block_2d.4} parent=153 // pred_check
            _
          $region178: #{unet_conv_block_2d.4} parent=153 // pred_check_branch
            %492 = sbr.rel (%p462) target = $region180
          $region179: #{unet_conv_block_2d.4} parent=153 // pred_region
            %s493 = sand.u32 64, 7
          $region180: #{unet_conv_block_2d.4} parent=153 // pred_fallthru
            _
        $region154: #{unet_conv_block_2d.4} parent=149 // pred_fallthru
          _
        // Predicated region
        $region155: #{unet_conv_block_2d.4} parent=149 // pred_check
          %p447 = pneg %p443
        $region156: #{unet_conv_block_2d.4} parent=149 // pred_check_branch
          %449 = sbr.rel (%p447) target = $region158
        $region157: #{unet_conv_block_2d.4} parent=149 // pred_region
          %s450 = sshllo.u32 0, 64
          loop: start=0, step=1, limit=1
          $region159: #{unet_conv_block_2d.4} parent=157 // loop_pre_header
            _
          $region160: #{unet_conv_block_2d.4} parent=157 // loop_header
            %s452 = sphi 0, %s456
            %p453 = scmp.ge.s32.totalorder %s452, 1
            %s457 = sphi %s435, %s435
            %s458 = sphi %s439, %s439
          $region161: #{unet_conv_block_2d.4} parent=157 // loop_header_branch
            %455 = sbr.rel (%p453) target = $region165
          $region162: #{unet_conv_block_2d.4} parent=157 // loop_body
            %v459 = vld [vmem:[%s457] sm:%s450]
            %460 = vst [vmem:[%s458] sm:%s450] %v459
          $region163: #{unet_conv_block_2d.4} parent=157 // loop_footer
            %s456 = sadd.s32 1, %s452
          $region164: #{unet_conv_block_2d.4} parent=157 // loop_footer_branch
            %451 = sbr.rel target = $region160
          $region165: #{unet_conv_block_2d.4} parent=157 // loop_exit
            _
        $region158: #{unet_conv_block_2d.4} parent=149 // pred_fallthru
          _
        // Predicated region
        $region181: #{unet_conv_block_2d.4} parent=149 // pred_check
          _
        $region182: #{unet_conv_block_2d.4} parent=149 // pred_check_branch
          %496 = sbr.rel (0) target = $region184
        $region183: #{unet_conv_block_2d.4} parent=149 // pred_region
          %497 = vsyncadd %s441, 1024
        $region184: #{unet_conv_block_2d.4} parent=149 // pred_fallthru
          _
        %p498 = scmp.gt.s32.totalorder %s425, 0
        // Predicated region
        $region185: #{unet_conv_block_2d.4} parent=149 // pred_check
          %p499 = pneg %p498
        $region186: #{unet_conv_block_2d.4} parent=149 // pred_check_branch
          %501 = sbr.rel (%p499) target = $region188
        $region187: #{unet_conv_block_2d.4} parent=149 // pred_region
          %s502 = ssub.s32 %s430, 1
          %s503 = smul.u32 %s502, 2
          %s504 = sadd.s32 %s503, %s432
          %s505 = smul.addr %s504, 4
          %s506 = scalar_lea.vmem %s2, %s505
          %s507 = sadd.s32 1, %s436
          %s508 = smul.addr %s507, 8
          %s509 = scalar_lea.vmem [#allocation2], %s508
          %s510 = sadd.s32 1, %s440
          %s511 = scalar_lea.sflag [#allocation3], %s510
          %p513 = scmp.lt.u32.totalorder 8, 8
          %p514 = pneg %p513
          // Predicated region
          $region189: #{unet_conv_block_2d.4} parent=187 // pred_check
            _
          $region190: #{unet_conv_block_2d.4} parent=187 // pred_check_branch
            %516 = sbr.rel (%p513) target = $region192
          $region191: #{unet_conv_block_2d.4} parent=187 // pred_region
            %s531 = sand.u32 8, 7
            %p532 = scmp.eq.s32.totalorder %s531, 0
            // Predicated region
            $region204: #{unet_conv_block_2d.4} parent=191 // pred_check
              %p533 = pneg %p532
            $region205: #{unet_conv_block_2d.4} parent=191 // pred_check_branch
              %535 = sbr.rel (%p533) target = $region207
            $region206: #{unet_conv_block_2d.4} parent=191 // pred_region
              loop: start=0, step=1, limit=1
              $region208: #{unet_conv_block_2d.4} parent=206 // loop_pre_header
                _
              $region209: #{unet_conv_block_2d.4} parent=206 // loop_header
                %s537 = sphi 0, %s541
                %p538 = scmp.ge.s32.totalorder %s537, 1
                %s542 = sphi %s506, %s506
                %s543 = sphi %s509, %s509
              $region210: #{unet_conv_block_2d.4} parent=206 // loop_header_branch
                %540 = sbr.rel (%p538) target = $region214
              $region211: #{unet_conv_block_2d.4} parent=206 // loop_body
                %v544 = vld [vmem:[%s542] sm:$0xff]
                %545 = vst [vmem:[%s543] sm:$0xff] %v544
              $region212: #{unet_conv_block_2d.4} parent=206 // loop_footer
                %s541 = sadd.s32 1, %s537
              $region213: #{unet_conv_block_2d.4} parent=206 // loop_footer_branch
                %536 = sbr.rel target = $region209
              $region214: #{unet_conv_block_2d.4} parent=206 // loop_exit
                _
            $region207: #{unet_conv_block_2d.4} parent=191 // pred_fallthru
              _
            %p546 = pneg %p532
            // Predicated region
            $region215: #{unet_conv_block_2d.4} parent=191 // pred_check
              _
            $region216: #{unet_conv_block_2d.4} parent=191 // pred_check_branch
              %548 = sbr.rel (%p532) target = $region218
            $region217: #{unet_conv_block_2d.4} parent=191 // pred_region
              %s549 = sand.u32 8, 7
            $region218: #{unet_conv_block_2d.4} parent=191 // pred_fallthru
              _
          $region192: #{unet_conv_block_2d.4} parent=187 // pred_fallthru
            _
          // Predicated region
          $region193: #{unet_conv_block_2d.4} parent=187 // pred_check
            %p517 = pneg %p513
          $region194: #{unet_conv_block_2d.4} parent=187 // pred_check_branch
            %519 = sbr.rel (%p517) target = $region196
          $region195: #{unet_conv_block_2d.4} parent=187 // pred_region
            %s520 = sshllo.u32 0, 8
            loop: start=0, step=1, limit=1
            $region197: #{unet_conv_block_2d.4} parent=195 // loop_pre_header
              _
            $region198: #{unet_conv_block_2d.4} parent=195 // loop_header
              %s522 = sphi 0, %s526
              %p523 = scmp.ge.s32.totalorder %s522, 1
              %s527 = sphi %s506, %s506
              %s528 = sphi %s509, %s509
            $region199: #{unet_conv_block_2d.4} parent=195 // loop_header_branch
              %525 = sbr.rel (%p523) target = $region203
            $region200: #{unet_conv_block_2d.4} parent=195 // loop_body
              %v529 = vld [vmem:[%s527] sm:%s520]
              %530 = vst [vmem:[%s528] sm:%s520] %v529
            $region201: #{unet_conv_block_2d.4} parent=195 // loop_footer
              %s526 = sadd.s32 1, %s522
            $region202: #{unet_conv_block_2d.4} parent=195 // loop_footer_branch
              %521 = sbr.rel target = $region198
            $region203: #{unet_conv_block_2d.4} parent=195 // loop_exit
              _
          $region196: #{unet_conv_block_2d.4} parent=187 // pred_fallthru
            _
          // Predicated region
          $region219: #{unet_conv_block_2d.4} parent=187 // pred_check
            _
          $region220: #{unet_conv_block_2d.4} parent=187 // pred_check_branch
            %552 = sbr.rel (0) target = $region222
          $region221: #{unet_conv_block_2d.4} parent=187 // pred_region
            %553 = vsyncadd %s511, 128
          $region222: #{unet_conv_block_2d.4} parent=187 // pred_fallthru
            _
        $region188: #{unet_conv_block_2d.4} parent=149 // pred_fallthru
          _
        %p554 = scmp.lt.s32.totalorder %s425, 1
        // Predicated region
        $region223: #{unet_conv_block_2d.4} parent=149 // pred_check
          %p555 = pneg %p554
        $region224: #{unet_conv_block_2d.4} parent=149 // pred_check_branch
          %557 = sbr.rel (%p555) target = $region226
        $region225: #{unet_conv_block_2d.4} parent=149 // pred_region
          %s558 = sadd.s32 %s430, 8
          %s559 = smul.u32 %s558, 2
          %s560 = sadd.s32 %s559, %s432
          %s561 = smul.addr %s560, 4
          %s562 = scalar_lea.vmem %s2, %s561
          %s563 = sadd.s32 10, %s436
          %s564 = smul.addr %s563, 8
          %s565 = scalar_lea.vmem [#allocation2], %s564
          %s566 = sadd.s32 2, %s440
          %s567 = scalar_lea.sflag [#allocation3], %s566
          %p569 = scmp.lt.u32.totalorder 8, 8
          %p570 = pneg %p569
          // Predicated region
          $region227: #{unet_conv_block_2d.4} parent=225 // pred_check
            _
          $region228: #{unet_conv_block_2d.4} parent=225 // pred_check_branch
            %572 = sbr.rel (%p569) target = $region230
          $region229: #{unet_conv_block_2d.4} parent=225 // pred_region
            %s587 = sand.u32 8, 7
            %p588 = scmp.eq.s32.totalorder %s587, 0
            // Predicated region
            $region242: #{unet_conv_block_2d.4} parent=229 // pred_check
              %p589 = pneg %p588
            $region243: #{unet_conv_block_2d.4} parent=229 // pred_check_branch
              %591 = sbr.rel (%p589) target = $region245
            $region244: #{unet_conv_block_2d.4} parent=229 // pred_region
              loop: start=0, step=1, limit=1
              $region246: #{unet_conv_block_2d.4} parent=244 // loop_pre_header
                _
              $region247: #{unet_conv_block_2d.4} parent=244 // loop_header
                %s593 = sphi 0, %s597
                %p594 = scmp.ge.s32.totalorder %s593, 1
                %s598 = sphi %s562, %s562
                %s599 = sphi %s565, %s565
              $region248: #{unet_conv_block_2d.4} parent=244 // loop_header_branch
                %596 = sbr.rel (%p594) target = $region252
              $region249: #{unet_conv_block_2d.4} parent=244 // loop_body
                %v600 = vld [vmem:[%s598] sm:$0xff]
                %601 = vst [vmem:[%s599] sm:$0xff] %v600
              $region250: #{unet_conv_block_2d.4} parent=244 // loop_footer
                %s597 = sadd.s32 1, %s593
              $region251: #{unet_conv_block_2d.4} parent=244 // loop_footer_branch
                %592 = sbr.rel target = $region247
              $region252: #{unet_conv_block_2d.4} parent=244 // loop_exit
                _
            $region245: #{unet_conv_block_2d.4} parent=229 // pred_fallthru
              _
            %p602 = pneg %p588
            // Predicated region
            $region253: #{unet_conv_block_2d.4} parent=229 // pred_check
              _
            $region254: #{unet_conv_block_2d.4} parent=229 // pred_check_branch
              %604 = sbr.rel (%p588) target = $region256
            $region255: #{unet_conv_block_2d.4} parent=229 // pred_region
              %s605 = sand.u32 8, 7
            $region256: #{unet_conv_block_2d.4} parent=229 // pred_fallthru
              _
          $region230: #{unet_conv_block_2d.4} parent=225 // pred_fallthru
            _
          // Predicated region
          $region231: #{unet_conv_block_2d.4} parent=225 // pred_check
            %p573 = pneg %p569
          $region232: #{unet_conv_block_2d.4} parent=225 // pred_check_branch
            %575 = sbr.rel (%p573) target = $region234
          $region233: #{unet_conv_block_2d.4} parent=225 // pred_region
            %s576 = sshllo.u32 0, 8
            loop: start=0, step=1, limit=1
            $region235: #{unet_conv_block_2d.4} parent=233 // loop_pre_header
              _
            $region236: #{unet_conv_block_2d.4} parent=233 // loop_header
              %s578 = sphi 0, %s582
              %p579 = scmp.ge.s32.totalorder %s578, 1
              %s583 = sphi %s562, %s562
              %s584 = sphi %s565, %s565
            $region237: #{unet_conv_block_2d.4} parent=233 // loop_header_branch
              %581 = sbr.rel (%p579) target = $region241
            $region238: #{unet_conv_block_2d.4} parent=233 // loop_body
              %v585 = vld [vmem:[%s583] sm:%s576]
              %586 = vst [vmem:[%s584] sm:%s576] %v585
            $region239: #{unet_conv_block_2d.4} parent=233 // loop_footer
              %s582 = sadd.s32 1, %s578
            $region240: #{unet_conv_block_2d.4} parent=233 // loop_footer_branch
              %577 = sbr.rel target = $region236
            $region241: #{unet_conv_block_2d.4} parent=233 // loop_exit
              _
          $region234: #{unet_conv_block_2d.4} parent=225 // pred_fallthru
            _
          // Predicated region
          $region257: #{unet_conv_block_2d.4} parent=225 // pred_check
            _
          $region258: #{unet_conv_block_2d.4} parent=225 // pred_check_branch
            %608 = sbr.rel (0) target = $region260
          $region259: #{unet_conv_block_2d.4} parent=225 // pred_region
            %609 = vsyncadd %s567, 128
          $region260: #{unet_conv_block_2d.4} parent=225 // pred_fallthru
            _
        $region226: #{unet_conv_block_2d.4} parent=149 // pred_fallthru
          _
      $region150: #{unet_conv_block_2d.4} parent=31 // pred_fallthru
        _
      %s610 = smul.u32 %s239, 3
      %s611 = scalar_lea.sflag [#allocation3], %s610
      %s612 = smul.u32 4, 8
      %s613 = smul.u32 %s612, 2
      %s614 = smul.u32 %s613, 1
      %s615 = sshll.u32 %s614, 4
      %616 = dma.done %s611, %s615
      %p617 = scmp.gt.s32.totalorder %s22, 0
      // Predicated region
      $region261: #{unet_conv_block_2d.4} parent=31 // pred_check
        %p618 = pneg %p617
      $region262: #{unet_conv_block_2d.4} parent=31 // pred_check_branch
        %620 = sbr.rel (%p618) target = $region264
      $region263: #{unet_conv_block_2d.4} parent=31 // pred_region
        %s621 = sadd.s32 1, %s610
        %s622 = scalar_lea.sflag [#allocation3], %s621
        %s623 = smul.u32 4, 1
        %s624 = smul.u32 %s623, 2
        %s625 = smul.u32 %s624, 1
        %s626 = sshll.u32 %s625, 4
        %627 = dma.done %s622, %s626
      $region264: #{unet_conv_block_2d.4} parent=31 // pred_fallthru
        _
      %p628 = scmp.lt.s32.totalorder %s22, 1
      // Predicated region
      $region265: #{unet_conv_block_2d.4} parent=31 // pred_check
        %p629 = pneg %p628
      $region266: #{unet_conv_block_2d.4} parent=31 // pred_check_branch
        %631 = sbr.rel (%p629) target = $region268
      $region267: #{unet_conv_block_2d.4} parent=31 // pred_region
        %s632 = sadd.s32 2, %s610
        %s633 = scalar_lea.sflag [#allocation3], %s632
        %s634 = smul.u32 4, 1
        %s635 = smul.u32 %s634, 2
        %s636 = smul.u32 %s635, 1
        %s637 = sshll.u32 %s636, 4
        %638 = dma.done %s633, %s637
      $region268: #{unet_conv_block_2d.4} parent=31 // pred_fallthru
        _
      %v639 = vld [vmem:[%s0] sm:$0x1]
      %v640 = vld [vmem:[%s1] sm:$0x1]
      %s641 = smul.u32 %s239, 12
      %s642 = smul.addr %s641, 8
      %s643 = scalar_lea.vmem [#allocation2], %s642
      %v644 = vld [vmem:[%s643] sm:$0xff]
      %v645 = vld [vmem:[%s643 + $0x8] sm:$0xff]
      %v646 = vld [vmem:[%s643 + $0x10] sm:$0xff]
      %v647 = vld [vmem:[%s643 + $0x18] sm:$0xff]
      %v648 = vld [vmem:[%s643 + $0x20] sm:$0xff]
      %v649 = vld [vmem:[%s643 + $0x28] sm:$0xff]
      %v650 = vld [vmem:[%s643 + $0x30] sm:$0xff]
      %v651 = vld [vmem:[%s643 + $0x38] sm:$0xff]
      %v652 = vld [vmem:[%s643 + $0x40] sm:$0xff]
      %v653 = vld [vmem:[%s643 + $0x48] sm:$0xff]
      %v654 = vld [vmem:[%s643 + $0x50] sm:$0xff]
      %v655 = vld [vmem:[%s643 + $0x58] sm:$0xff]
      %v656 = vunpack.c.l.bf16 %v644
      %v657 = vunpack.c.h.bf16 %v644
      %v658 = vunpack.c.l.bf16 %v645
      %v659 = vunpack.c.h.bf16 %v645
      %v660 = vunpack.c.l.bf16 %v646
      %v661 = vunpack.c.h.bf16 %v646
      %v662 = vunpack.c.l.bf16 %v647
      %v663 = vunpack.c.h.bf16 %v647
      %v664 = vunpack.c.l.bf16 %v648
      %v665 = vunpack.c.h.bf16 %v648
      %v666 = vunpack.c.l.bf16 %v649
      %v667 = vunpack.c.h.bf16 %v649
      %v668 = vunpack.c.l.bf16 %v650
      %v669 = vunpack.c.h.bf16 %v650
      %v670 = vunpack.c.l.bf16 %v651
      %v671 = vunpack.c.h.bf16 %v651
      %v672 = vunpack.c.l.bf16 %v652
      %v673 = vunpack.c.h.bf16 %v652
      %v674 = vunpack.c.l.bf16 %v653
      %v675 = vunpack.c.h.bf16 %v653
      %v676 = vunpack.c.l.bf16 %v654
      %v677 = vunpack.c.h.bf16 %v654
      %v678 = vunpack.c.l.bf16 %v655
      %v679 = vunpack.c.h.bf16 %v655
      %v681 = vlaneseq
      %v682 = vshrl.u32 %v681, 7
      %v683 = vsub.s32 0, %v682
      %v684 = vrot.slane %v639, %v683
      %v686 = vmul.f32 %v656, %v684
      %v687 = vmul.f32 %v657, %v684
      %v688 = vmul.f32 %v658, %v684
      %v689 = vmul.f32 %v659, %v684
      %v690 = vmul.f32 %v660, %v684
      %v691 = vmul.f32 %v661, %v684
      %v692 = vmul.f32 %v662, %v684
      %v693 = vmul.f32 %v663, %v684
      %v694 = vmul.f32 %v664, %v684
      %v695 = vmul.f32 %v665, %v684
      %v696 = vmul.f32 %v666, %v684
      %v697 = vmul.f32 %v667, %v684
      %v698 = vmul.f32 %v668, %v684
      %v699 = vmul.f32 %v669, %v684
      %v700 = vmul.f32 %v670, %v684
      %v701 = vmul.f32 %v671, %v684
      %v702 = vmul.f32 %v672, %v684
      %v703 = vmul.f32 %v673, %v684
      %v704 = vmul.f32 %v674, %v684
      %v705 = vmul.f32 %v675, %v684
      %v706 = vmul.f32 %v676, %v684
      %v707 = vmul.f32 %v677, %v684
      %v708 = vmul.f32 %v678, %v684
      %v709 = vmul.f32 %v679, %v684
      %v711 = vlaneseq
      %v712 = vshrl.u32 %v711, 7
      %v713 = vsub.s32 0, %v712
      %v714 = vrot.slane %v640, %v713
      %v716 = vadd.f32 %v686, %v714
      %v717 = vadd.f32 %v687, %v714
      %v718 = vadd.f32 %v688, %v714
      %v719 = vadd.f32 %v689, %v714
      %v720 = vadd.f32 %v690, %v714
      %v721 = vadd.f32 %v691, %v714
      %v722 = vadd.f32 %v692, %v714
      %v723 = vadd.f32 %v693, %v714
      %v724 = vadd.f32 %v694, %v714
      %v725 = vadd.f32 %v695, %v714
      %v726 = vadd.f32 %v696, %v714
      %v727 = vadd.f32 %v697, %v714
      %v728 = vadd.f32 %v698, %v714
      %v729 = vadd.f32 %v699, %v714
      %v730 = vadd.f32 %v700, %v714
      %v731 = vadd.f32 %v701, %v714
      %v732 = vadd.f32 %v702, %v714
      %v733 = vadd.f32 %v703, %v714
      %v734 = vadd.f32 %v704, %v714
      %v735 = vadd.f32 %v705, %v714
      %v736 = vadd.f32 %v706, %v714
      %v737 = vadd.f32 %v707, %v714
      %v738 = vadd.f32 %v708, %v714
      %v739 = vadd.f32 %v709, %v714
      %v740 = vmax.f32 %v716, 0.0
      %v741 = vmax.f32 %v717, 0.0
      %v742 = vmax.f32 %v718, 0.0
      %v743 = vmax.f32 %v719, 0.0
      %v744 = vmax.f32 %v720, 0.0
      %v745 = vmax.f32 %v721, 0.0
      %v746 = vmax.f32 %v722, 0.0
      %v747 = vmax.f32 %v723, 0.0
      %v748 = vmax.f32 %v724, 0.0
      %v749 = vmax.f32 %v725, 0.0
      %v750 = vmax.f32 %v726, 0.0
      %v751 = vmax.f32 %v727, 0.0
      %v752 = vmax.f32 %v728, 0.0
      %v753 = vmax.f32 %v729, 0.0
      %v754 = vmax.f32 %v730, 0.0
      %v755 = vmax.f32 %v731, 0.0
      %v756 = vmax.f32 %v732, 0.0
      %v757 = vmax.f32 %v733, 0.0
      %v758 = vmax.f32 %v734, 0.0
      %v759 = vmax.f32 %v735, 0.0
      %v760 = vmax.f32 %v736, 0.0
      %v761 = vmax.f32 %v737, 0.0
      %v762 = vmax.f32 %v738, 0.0
      %v763 = vmax.f32 %v739, 0.0
      %v764 = vpack.c.bf16 %v741, %v740
      %v765 = vpack.c.bf16 %v743, %v742
      %v766 = vpack.c.bf16 %v745, %v744
      %v767 = vpack.c.bf16 %v747, %v746
      %v768 = vpack.c.bf16 %v749, %v748
      %v769 = vpack.c.bf16 %v751, %v750
      %v770 = vpack.c.bf16 %v753, %v752
      %v771 = vpack.c.bf16 %v755, %v754
      %v772 = vpack.c.bf16 %v757, %v756
      %v773 = vpack.c.bf16 %v759, %v758
      %v774 = vpack.c.bf16 %v761, %v760
      %v775 = vpack.c.bf16 %v763, %v762
      %776 = vst [vmem:[%s643] sm:$0xff] %v764
      %777 = vst [vmem:[%s643 + $0x8] sm:$0xff] %v765
      %778 = vst [vmem:[%s643 + $0x10] sm:$0xff] %v766
      %779 = vst [vmem:[%s643 + $0x18] sm:$0xff] %v767
      %780 = vst [vmem:[%s643 + $0x20] sm:$0xff] %v768
      %781 = vst [vmem:[%s643 + $0x28] sm:$0xff] %v769
      %782 = vst [vmem:[%s643 + $0x30] sm:$0xff] %v770
      %783 = vst [vmem:[%s643 + $0x38] sm:$0xff] %v771
      %784 = vst [vmem:[%s643 + $0x40] sm:$0xff] %v772
      %785 = vst [vmem:[%s643 + $0x48] sm:$0xff] %v773
      %786 = vst [vmem:[%s643 + $0x50] sm:$0xff] %v774
      %787 = vst [vmem:[%s643 + $0x58] sm:$0xff] %v775
      // Predicated region
      $region269: #{unet_conv_block_2d.4} parent=31 // pred_check
        %p788 = pneg %p241
      $region270: #{unet_conv_block_2d.4} parent=31 // pred_check_branch
        %790 = sbr.rel (%p788) target = $region272
      $region271: #{unet_conv_block_2d.4} parent=31 // pred_region
        %s791 = sadd.s32 1, %s641
        %s792 = smul.addr %s791, 8
        %s793 = scalar_lea.vmem [#allocation2], %s792
        %794 = vst [vmem:[%s793] sm:$0xff] 0
      $region272: #{unet_conv_block_2d.4} parent=31 // pred_fallthru
        _
      %p795 = scmp.eq.s32.totalorder %s22, 1
      // Predicated region
      $region273: #{unet_conv_block_2d.4} parent=31 // pred_check
        %p796 = pneg %p795
      $region274: #{unet_conv_block_2d.4} parent=31 // pred_check_branch
        %798 = sbr.rel (%p796) target = $region276
      $region275: #{unet_conv_block_2d.4} parent=31 // pred_region
        %s799 = sadd.s32 10, %s641
        %s800 = smul.addr %s799, 8
        %s801 = scalar_lea.vmem [#allocation2], %s800
        %802 = vst [vmem:[%s801] sm:$0xff] 0
      $region276: #{unet_conv_block_2d.4} parent=31 // pred_fallthru
        _
      %v803 = vld [vmem:[%s643] sm:$0xff]
      %v804 = vld [vmem:[%s643 + $0x8] sm:$0xff]
      %v805 = vld [vmem:[%s643 + $0x10] sm:$0xff]
      %v806 = vld [vmem:[%s643 + $0x18] sm:$0xff]
      %v807 = vld [vmem:[%s643 + $0x20] sm:$0xff]
      %v808 = vld [vmem:[%s643 + $0x28] sm:$0xff]
      %v809 = vld [vmem:[%s643 + $0x30] sm:$0xff]
      %v810 = vld [vmem:[%s643 + $0x38] sm:$0xff]
      %v811 = vld [vmem:[%s643 + $0x40] sm:$0xff]
      %v812 = vld [vmem:[%s643 + $0x48] sm:$0xff]
      %v813 = vld [vmem:[%s643 + $0x50] sm:$0xff]
      %v814 = vld [vmem:[%s643 + $0x58] sm:$0xff]
      %v815 = vlaneseq
      %v816 = vshrl.u32 %v815, 7
      %v817 = vadd.s32 %v816, 8
      %vm818 = vcmp.eq.s32.totalorder %v816, 0
      %vm819 = vcmp.eq.s32.totalorder %v817, 0
      %vm820 = vmpackc.low %vm818, %vm818
      %vm821 = vmpackc.low %vm819, %vm819
      %v822 = vsel %vm820, 65537, 0
      %v823 = vsel %vm821, 65537, 0
      %v824 = vunpack.c.l.b16 %v822
      %v825 = vunpack.c.l.b16 %v823
      %v826 = vpack.c.b16 %v825, %v824
      %vm827 = vsmask.f32 7424
      %v829 = vshll.u32 %v826, 16
      %v831 = vrot.slane %v829, 1
      %v832 = vshrl.u32 %v826, 16
      %v834 = vor.u32 %v832, %v831
      %v835 = vsel %vm827, %v834, %v831
      %vm836 = vcmp.ne.s16.totalorder %v831, 0
      %vm837 = vcmp.ne.s16.totalorder %v835, 0
      %vm838 = vcmp.ne.s16.totalorder %v834, 0
      %v839 = vsel %vm836, 0, %v803
      %v840 = vsel %vm837, 0, %v804
      %v841 = vsel %vm837, 0, %v805
      %v842 = vsel %vm837, 0, %v806
      %v843 = vsel %vm837, 0, %v807
      %v844 = vsel %vm837, 0, %v808
      %v845 = vsel %vm837, 0, %v809
      %v846 = vsel %vm837, 0, %v810
      %v847 = vsel %vm837, 0, %v811
      %v848 = vsel %vm837, 0, %v812
      %v849 = vsel %vm838, 0, %v813
      %vm850 = vcmp.eq.s32.totalorder %v816, 15
      %vm851 = vcmp.eq.s32.totalorder %v817, 15
      %vm852 = vmpackc.low %vm850, %vm850
      %vm853 = vmpackc.low %vm851, %vm851
      %v854 = vsel %vm852, 65537, 0
      %v855 = vsel %vm853, 65537, 0
      %v856 = vunpack.c.l.b16 %v854
      %v857 = vunpack.c.l.b16 %v855
      %v858 = vpack.c.b16 %v857, %v856
      %vm859 = vsmask.f32 256
      %v861 = vshrl.u32 %v858, 16
      %v863 = vrot.slane %v861, 7
      %v864 = vshll.u32 %v858, 16
      %v866 = vor.u32 %v863, %v864
      %v867 = vsel %vm859, %v863, %v866
      %vm868 = vcmp.ne.s16.totalorder %v866, 0
      %vm869 = vcmp.ne.s16.totalorder %v867, 0
      %vm870 = vcmp.ne.s16.totalorder %v863, 0
      %v871 = vsel %vm868, 0, %v804
      %v872 = vsel %vm869, 0, %v805
      %v873 = vsel %vm869, 0, %v806
      %v874 = vsel %vm869, 0, %v807
      %v875 = vsel %vm869, 0, %v808
      %v876 = vsel %vm869, 0, %v809
      %v877 = vsel %vm869, 0, %v810
      %v878 = vsel %vm869, 0, %v811
      %v879 = vsel %vm869, 0, %v812
      %v880 = vsel %vm869, 0, %v813
      %v881 = vsel %vm870, 0, %v814
      %v883 = vshll.u32 %v804, 16
      %v885 = vrot.slane %v883, 1
      %v886 = vshrl.u32 %v804, 16
      %v888 = vor.u32 %v886, %v885
      %v890 = vshll.u32 %v805, 16
      %v892 = vrot.slane %v890, 1
      %v893 = vsel %vm827, %v888, %v892
      %v894 = vshrl.u32 %v805, 16
      %v896 = vor.u32 %v894, %v892
      %v898 = vshll.u32 %v806, 16
      %v900 = vrot.slane %v898, 1
      %v901 = vsel %vm827, %v896, %v900
      %v902 = vshrl.u32 %v806, 16
      %v904 = vor.u32 %v902, %v900
      %v906 = vshll.u32 %v807, 16
      %v908 = vrot.slane %v906, 1
      %v909 = vsel %vm827, %v904, %v908
      %v910 = vshrl.u32 %v807, 16
      %v912 = vor.u32 %v910, %v908
      %v914 = vshll.u32 %v808, 16
      %v916 = vrot.slane %v914, 1
      %v917 = vsel %vm827, %v912, %v916
      %v918 = vshrl.u32 %v808, 16
      %v920 = vor.u32 %v918, %v916
      %v922 = vshll.u32 %v809, 16
      %v924 = vrot.slane %v922, 1
      %v925 = vsel %vm827, %v920, %v924
      %v926 = vshrl.u32 %v809, 16
      %v928 = vor.u32 %v926, %v924
      %v930 = vshll.u32 %v810, 16
      %v932 = vrot.slane %v930, 1
      %v933 = vsel %vm827, %v928, %v932
      %v934 = vshrl.u32 %v810, 16
      %v936 = vor.u32 %v934, %v932
      %v938 = vshll.u32 %v811, 16
      %v940 = vrot.slane %v938, 1
      %v941 = vsel %vm827, %v936, %v940
      %v942 = vshrl.u32 %v811, 16
      %v944 = vor.u32 %v942, %v940
      %v946 = vshll.u32 %v812, 16
      %v948 = vrot.slane %v946, 1
      %v949 = vsel %vm827, %v944, %v948
      %v950 = vshrl.u32 %v812, 16
      %v952 = vor.u32 %v950, %v948
      %v954 = vshll.u32 %v813, 16
      %v956 = vrot.slane %v954, 1
      %v957 = vsel %vm827, %v952, %v956
      %v958 = vshrl.u32 %v813, 16
      %v960 = vor.u32 %v958, %v956
      %vm972 = vcmask 1046528
      %v973 = vrot.slane %v871, 1
      %v974 = vrot.slane %v872, 1
      %v975 = vsel %vm972, %v973, %v974
      %v976 = vrot.slane %v873, 1
      %v977 = vsel %vm972, %v974, %v976
      %v978 = vrot.slane %v874, 1
      %v979 = vsel %vm972, %v976, %v978
      %v980 = vrot.slane %v875, 1
      %v981 = vsel %vm972, %v978, %v980
      %v982 = vrot.slane %v876, 1
      %v983 = vsel %vm972, %v980, %v982
      %v984 = vrot.slane %v877, 1
      %v985 = vsel %vm972, %v982, %v984
      %v986 = vrot.slane %v878, 1
      %v987 = vsel %vm972, %v984, %v986
      %v988 = vrot.slane %v879, 1
      %v989 = vsel %vm972, %v986, %v988
      %v990 = vrot.slane %v880, 1
      %v991 = vsel %vm972, %v988, %v990
      %v992 = vrot.slane %v881, 1
      %v993 = vsel %vm972, %v990, %v992
      %v994 = vld [vmem:[%s3] sm:$0xf]
      %v995 = vld [vmem:[%s3 + $0x4] sm:$0xf]
      %v996 = vld [vmem:[%s3 + $0x8] sm:$0xf]
      %v997 = vld [vmem:[%s3 + $0xc] sm:$0xf]
      %v998 = vld [vmem:[%s3 + $0x10] sm:$0xf]
      %v999 = vld [vmem:[%s3 + $0x14] sm:$0xf]
      %v1000 = vld [vmem:[%s3 + $0x18] sm:$0xf]
      %v1001 = vld [vmem:[%s3 + $0x1c] sm:$0xf]
      %v1002 = vld [vmem:[%s3 + $0x20] sm:$0xf]
      %v1003 = vld [vmem:[%s3 + $0x24] sm:$0xf]
      %v1004 = vld [vmem:[%s3 + $0x28] sm:$0xf]
      %v1005 = vld [vmem:[%s3 + $0x2c] sm:$0xf]
      %v1006 = vld [vmem:[%s3 + $0x30] sm:$0xf]
      %v1007 = vld [vmem:[%s3 + $0x34] sm:$0xf]
      %v1008 = vld [vmem:[%s3 + $0x38] sm:$0xf]
      %v1009 = vld [vmem:[%s3 + $0x3c] sm:$0xf]
      %v1010 = vld [vmem:[%s3 + $0x40] sm:$0xf]
      %v1011 = vld [vmem:[%s3 + $0x44] sm:$0xf]
      %v1012 = vld [vmem:[%s3 + $0x48] sm:$0xf]
      %v1013 = vld [vmem:[%s3 + $0x4c] sm:$0xf]
      %v1014 = vld [vmem:[%s3 + $0x50] sm:$0xf]
      %v1015 = vld [vmem:[%s3 + $0x54] sm:$0xf]
      %v1016 = vld [vmem:[%s3 + $0x58] sm:$0xf]
      %v1017 = vld [vmem:[%s3 + $0x5c] sm:$0xf]
      %v1018 = vld [vmem:[%s3 + $0x60] sm:$0xf]
      %v1019 = vld [vmem:[%s3 + $0x64] sm:$0xf]
      %v1020 = vld [vmem:[%s3 + $0x68] sm:$0xf]
      %v1021 = vld [vmem:[%s3 + $0x6c] sm:$0xf]
      %v1022 = vld [vmem:[%s3 + $0x70] sm:$0xf]
      %v1023 = vld [vmem:[%s3 + $0x74] sm:$0xf]
      %v1024 = vld [vmem:[%s3 + $0x78] sm:$0xf]
      %v1025 = vld [vmem:[%s3 + $0x7c] sm:$0xf]
      %v1026 = vld [vmem:[%s3 + $0x80] sm:$0xf]
      %v1027 = vld [vmem:[%s3 + $0x84] sm:$0xf]
      %v1028 = vld [vmem:[%s3 + $0x88] sm:$0xf]
      %v1029 = vld [vmem:[%s3 + $0x8c] sm:$0xf]
      %v1030 = vld [vmem:[%s3 + $0x90] sm:$0xf]
      %v1031 = vld [vmem:[%s3 + $0x94] sm:$0xf]
      %v1032 = vld [vmem:[%s3 + $0x98] sm:$0xf]
      %v1033 = vld [vmem:[%s3 + $0x9c] sm:$0xf]
      %v1034 = vld [vmem:[%s3 + $0xa0] sm:$0xf]
      %v1035 = vld [vmem:[%s3 + $0xa4] sm:$0xf]
      %v1036 = vld [vmem:[%s3 + $0xa8] sm:$0xf]
      %v1037 = vld [vmem:[%s3 + $0xac] sm:$0xf]
      %v1038 = vld [vmem:[%s3 + $0xb0] sm:$0xf]
      %v1039 = vld [vmem:[%s3 + $0xb4] sm:$0xf]
      %v1040 = vld [vmem:[%s3 + $0xb8] sm:$0xf]
      %v1041 = vld [vmem:[%s3 + $0xbc] sm:$0xf]
      %s1042 = scalar_lea.vmem %s3, 192
      %v1043 = vld [vmem:[%s1042] sm:$0xf]
      %v1044 = vld [vmem:[%s1042 + $0x4] sm:$0xf]
      %v1045 = vld [vmem:[%s1042 + $0x8] sm:$0xf]
      %v1046 = vld [vmem:[%s1042 + $0xc] sm:$0xf]
      %v1047 = vld [vmem:[%s1042 + $0x10] sm:$0xf]
      %v1048 = vld [vmem:[%s1042 + $0x14] sm:$0xf]
      %v1049 = vld [vmem:[%s1042 + $0x18] sm:$0xf]
      %v1050 = vld [vmem:[%s1042 + $0x1c] sm:$0xf]
      %v1051 = vld [vmem:[%s1042 + $0x20] sm:$0xf]
      %v1052 = vld [vmem:[%s1042 + $0x24] sm:$0xf]
      %v1053 = vld [vmem:[%s1042 + $0x28] sm:$0xf]
      %v1054 = vld [vmem:[%s1042 + $0x2c] sm:$0xf]
      %v1055 = vld [vmem:[%s1042 + $0x30] sm:$0xf]
      %v1056 = vld [vmem:[%s1042 + $0x34] sm:$0xf]
      %v1057 = vld [vmem:[%s1042 + $0x38] sm:$0xf]
      %v1058 = vld [vmem:[%s1042 + $0x3c] sm:$0xf]
      %v1059 = vld [vmem:[%s1042 + $0x40] sm:$0xf]
      %v1060 = vld [vmem:[%s1042 + $0x44] sm:$0xf]
      %v1061 = vld [vmem:[%s1042 + $0x48] sm:$0xf]
      %v1062 = vld [vmem:[%s1042 + $0x4c] sm:$0xf]
      %v1063 = vld [vmem:[%s1042 + $0x50] sm:$0xf]
      %v1064 = vld [vmem:[%s1042 + $0x54] sm:$0xf]
      %v1065 = vld [vmem:[%s1042 + $0x58] sm:$0xf]
      %v1066 = vld [vmem:[%s1042 + $0x5c] sm:$0xf]
      %v1067 = vld [vmem:[%s1042 + $0x60] sm:$0xf]
      %v1068 = vld [vmem:[%s1042 + $0x64] sm:$0xf]
      %v1069 = vld [vmem:[%s1042 + $0x68] sm:$0xf]
      %v1070 = vld [vmem:[%s1042 + $0x6c] sm:$0xf]
      %v1071 = vld [vmem:[%s1042 + $0x70] sm:$0xf]
      %v1072 = vld [vmem:[%s1042 + $0x74] sm:$0xf]
      %v1073 = vld [vmem:[%s1042 + $0x78] sm:$0xf]
      %v1074 = vld [vmem:[%s1042 + $0x7c] sm:$0xf]
      %v1075 = vld [vmem:[%s1042 + $0x80] sm:$0xf]
      %v1076 = vld [vmem:[%s1042 + $0x84] sm:$0xf]
      %v1077 = vld [vmem:[%s1042 + $0x88] sm:$0xf]
      %v1078 = vld [vmem:[%s1042 + $0x8c] sm:$0xf]
      %v1079 = vld [vmem:[%s1042 + $0x90] sm:$0xf]
      %v1080 = vld [vmem:[%s1042 + $0x94] sm:$0xf]
      %v1081 = vld [vmem:[%s1042 + $0x98] sm:$0xf]
      %v1082 = vld [vmem:[%s1042 + $0x9c] sm:$0xf]
      %v1083 = vld [vmem:[%s1042 + $0xa0] sm:$0xf]
      %v1084 = vld [vmem:[%s1042 + $0xa4] sm:$0xf]
      %v1085 = vld [vmem:[%s1042 + $0xa8] sm:$0xf]
      %v1086 = vld [vmem:[%s1042 + $0xac] sm:$0xf]
      %v1087 = vld [vmem:[%s1042 + $0xb0] sm:$0xf]
      %v1088 = vld [vmem:[%s1042 + $0xb4] sm:$0xf]
      %v1089 = vld [vmem:[%s1042 + $0xb8] sm:$0xf]
      %v1090 = vld [vmem:[%s1042 + $0xbc] sm:$0xf]
      %v1092 = vshrl.u32 %v840, 16
      %v1094 = vrot.slane %v1092, 7
      %v1096 = vshrl.u32 %v841, 16
      %v1098 = vrot.slane %v1096, 7
      %v1099 = vshll.u32 %v841, 16
      %v1101 = vor.u32 %v1098, %v1099
      %v1102 = vsel %vm859, %v1094, %v1101
      %v1104 = vshrl.u32 %v893, 16
      %v1106 = vrot.slane %v1104, 7
      %v1108 = vshrl.u32 %v901, 16
      %v1110 = vrot.slane %v1108, 7
      %v1111 = vshll.u32 %v901, 16
      %v1113 = vor.u32 %v1110, %v1111
      %v1114 = vsel %vm859, %v1106, %v1113
      %v1116 = vshrl.u32 %v975, 16
      %v1118 = vrot.slane %v1116, 7
      %v1120 = vshrl.u32 %v977, 16
      %v1122 = vrot.slane %v1120, 7
      %v1123 = vshll.u32 %v977, 16
      %v1125 = vor.u32 %v1122, %v1123
      %v1126 = vsel %vm859, %v1118, %v1125
      %v1128 = vshrl.u32 %v842, 16
      %v1130 = vrot.slane %v1128, 7
      %v1131 = vshll.u32 %v842, 16
      %v1133 = vor.u32 %v1130, %v1131
      %v1134 = vsel %vm859, %v1098, %v1133
      %v1136 = vshrl.u32 %v909, 16
      %v1138 = vrot.slane %v1136, 7
      %v1139 = vshll.u32 %v909, 16
      %v1141 = vor.u32 %v1138, %v1139
      %v1142 = vsel %vm859, %v1110, %v1141
      %v1144 = vshrl.u32 %v979, 16
      %v1146 = vrot.slane %v1144, 7
      %v1147 = vshll.u32 %v979, 16
      %v1149 = vor.u32 %v1146, %v1147
      %v1150 = vsel %vm859, %v1122, %v1149
      %v1152 = vshrl.u32 %v843, 16
      %v1154 = vrot.slane %v1152, 7
      %v1155 = vshll.u32 %v843, 16
      %v1157 = vor.u32 %v1154, %v1155
      %v1158 = vsel %vm859, %v1130, %v1157
      %v1160 = vshrl.u32 %v917, 16
      %v1162 = vrot.slane %v1160, 7
      %v1163 = vshll.u32 %v917, 16
      %v1165 = vor.u32 %v1162, %v1163
      %v1166 = vsel %vm859, %v1138, %v1165
      %v1168 = vshrl.u32 %v981, 16
      %v1170 = vrot.slane %v1168, 7
      %v1171 = vshll.u32 %v981, 16
      %v1173 = vor.u32 %v1170, %v1171
      %v1174 = vsel %vm859, %v1146, %v1173
      %v1176 = vshrl.u32 %v844, 16
      %v1178 = vrot.slane %v1176, 7
      %v1179 = vshll.u32 %v844, 16
      %v1181 = vor.u32 %v1178, %v1179
      %v1182 = vsel %vm859, %v1154, %v1181
      %v1184 = vshrl.u32 %v925, 16
      %v1186 = vrot.slane %v1184, 7
      %v1187 = vshll.u32 %v925, 16
      %v1189 = vor.u32 %v1186, %v1187
      %v1190 = vsel %vm859, %v1162, %v1189
      %v1192 = vshrl.u32 %v983, 16
      %v1194 = vrot.slane %v1192, 7
      %v1195 = vshll.u32 %v983, 16
      %v1197 = vor.u32 %v1194, %v1195
      %v1198 = vsel %vm859, %v1170, %v1197
      %v1200 = vshrl.u32 %v845, 16
      %v1202 = vrot.slane %v1200, 7
      %v1203 = vshll.u32 %v845, 16
      %v1205 = vor.u32 %v1202, %v1203
      %v1206 = vsel %vm859, %v1178, %v1205
      %v1208 = vshrl.u32 %v933, 16
      %v1210 = vrot.slane %v1208, 7
      %v1211 = vshll.u32 %v933, 16
      %v1213 = vor.u32 %v1210, %v1211
      %v1214 = vsel %vm859, %v1186, %v1213
      %v1216 = vshrl.u32 %v985, 16
      %v1218 = vrot.slane %v1216, 7
      %v1219 = vshll.u32 %v985, 16
      %v1221 = vor.u32 %v1218, %v1219
      %v1222 = vsel %vm859, %v1194, %v1221
      %v1224 = vshrl.u32 %v846, 16
      %v1226 = vrot.slane %v1224, 7
      %v1227 = vshll.u32 %v846, 16
      %v1229 = vor.u32 %v1226, %v1227
      %v1230 = vsel %vm859, %v1202, %v1229
      %v1232 = vshrl.u32 %v941, 16
      %v1234 = vrot.slane %v1232, 7
      %v1235 = vshll.u32 %v941, 16
      %v1237 = vor.u32 %v1234, %v1235
      %v1238 = vsel %vm859, %v1210, %v1237
      %v1240 = vshrl.u32 %v987, 16
      %v1242 = vrot.slane %v1240, 7
      %v1243 = vshll.u32 %v987, 16
      %v1245 = vor.u32 %v1242, %v1243
      %v1246 = vsel %vm859, %v1218, %v1245
      %v1248 = vshrl.u32 %v847, 16
      %v1250 = vrot.slane %v1248, 7
      %v1251 = vshll.u32 %v847, 16
      %v1253 = vor.u32 %v1250, %v1251
      %v1254 = vsel %vm859, %v1226, %v1253
      %v1256 = vshrl.u32 %v949, 16
      %v1258 = vrot.slane %v1256, 7
      %v1259 = vshll.u32 %v949, 16
      %v1261 = vor.u32 %v1258, %v1259
      %v1262 = vsel %vm859, %v1234, %v1261
      %v1264 = vshrl.u32 %v989, 16
      %v1266 = vrot.slane %v1264, 7
      %v1267 = vshll.u32 %v989, 16
      %v1269 = vor.u32 %v1266, %v1267
      %v1270 = vsel %vm859, %v1242, %v1269
      %v1272 = vshrl.u32 %v848, 16
      %v1274 = vrot.slane %v1272, 7
      %v1275 = vshll.u32 %v848, 16
      %v1277 = vor.u32 %v1274, %v1275
      %v1278 = vsel %vm859, %v1250, %v1277
      %v1280 = vshrl.u32 %v957, 16
      %v1282 = vrot.slane %v1280, 7
      %v1283 = vshll.u32 %v957, 16
      %v1285 = vor.u32 %v1282, %v1283
      %v1286 = vsel %vm859, %v1258, %v1285
      %v1288 = vshrl.u32 %v991, 16
      %v1290 = vrot.slane %v1288, 7
      %v1291 = vshll.u32 %v991, 16
      %v1293 = vor.u32 %v1290, %v1291
      %v1294 = vsel %vm859, %v1266, %v1293
      %v1367 = vunpack.c.l.b16 %v1043
      %v1368 = vunpack.c.l.b16 %v1044
      %v1369 = vunpack.c.l.b16 %v1045
      %v1370 = vunpack.c.l.b16 %v1046
      %v1371 = vunpack.c.l.b16 %v1047
      %v1372 = vunpack.c.l.b16 %v1048
      %v1373 = vunpack.c.l.b16 %v1049
      %v1374 = vunpack.c.l.b16 %v1050
      %v1375 = vunpack.c.l.b16 %v1051
      %v1376 = vunpack.c.l.b16 %v1052
      %v1377 = vunpack.c.l.b16 %v1053
      %v1378 = vunpack.c.l.b16 %v1054
      %v1379 = vunpack.c.l.b16 %v1055
      %v1380 = vunpack.c.l.b16 %v1056
      %v1381 = vunpack.c.l.b16 %v1057
      %v1382 = vunpack.c.l.b16 %v1058
      %v1383 = vunpack.c.l.b16 %v1059
      %v1384 = vunpack.c.l.b16 %v1060
      %v1385 = vunpack.c.l.b16 %v1061
      %v1386 = vunpack.c.l.b16 %v1062
      %v1387 = vunpack.c.l.b16 %v1063
      %v1388 = vunpack.c.l.b16 %v1064
      %v1389 = vunpack.c.l.b16 %v1065
      %v1390 = vunpack.c.l.b16 %v1066
      %v1391 = vunpack.c.l.b16 %v1067
      %v1392 = vunpack.c.l.b16 %v1068
      %v1393 = vunpack.c.l.b16 %v1069
      %v1394 = vunpack.c.l.b16 %v1070
      %v1395 = vunpack.c.l.b16 %v1071
      %v1396 = vunpack.c.l.b16 %v1072
      %v1397 = vunpack.c.l.b16 %v1073
      %v1398 = vunpack.c.l.b16 %v1074
      %v1399 = vunpack.c.l.b16 %v1075
      %v1400 = vunpack.c.l.b16 %v1076
      %v1401 = vunpack.c.l.b16 %v1077
      %v1402 = vunpack.c.l.b16 %v1078
      %v1403 = vunpack.c.l.b16 %v1079
      %v1404 = vunpack.c.l.b16 %v1080
      %v1405 = vunpack.c.l.b16 %v1081
      %v1406 = vunpack.c.l.b16 %v1082
      %v1407 = vunpack.c.l.b16 %v1083
      %v1408 = vunpack.c.l.b16 %v1084
      %v1409 = vunpack.c.l.b16 %v1085
      %v1410 = vunpack.c.l.b16 %v1086
      %v1411 = vunpack.c.l.b16 %v1087
      %v1412 = vunpack.c.l.b16 %v1088
      %v1413 = vunpack.c.l.b16 %v1089
      %v1414 = vunpack.c.l.b16 %v1090
      %v1415 = vpack.c.b16 %v1368, %v1367
      %v1416 = vpack.c.b16 %v1370, %v1369
      %v1417 = vpack.c.b16 %v1372, %v1371
      %v1418 = vpack.c.b16 %v1374, %v1373
      %v1419 = vpack.c.b16 %v1376, %v1375
      %v1420 = vpack.c.b16 %v1378, %v1377
      %v1421 = vpack.c.b16 %v1380, %v1379
      %v1422 = vpack.c.b16 %v1382, %v1381
      %v1423 = vpack.c.b16 %v1384, %v1383
      %v1424 = vpack.c.b16 %v1386, %v1385
      %v1425 = vpack.c.b16 %v1388, %v1387
      %v1426 = vpack.c.b16 %v1390, %v1389
      %v1427 = vpack.c.b16 %v1392, %v1391
      %v1428 = vpack.c.b16 %v1394, %v1393
      %v1429 = vpack.c.b16 %v1396, %v1395
      %v1430 = vpack.c.b16 %v1398, %v1397
      %v1431 = vpack.c.b16 %v1400, %v1399
      %v1432 = vpack.c.b16 %v1402, %v1401
      %v1433 = vpack.c.b16 %v1404, %v1403
      %v1434 = vpack.c.b16 %v1406, %v1405
      %v1435 = vpack.c.b16 %v1408, %v1407
      %v1436 = vpack.c.b16 %v1410, %v1409
      %v1437 = vpack.c.b16 %v1412, %v1411
      %v1438 = vpack.c.b16 %v1414, %v1413
      %1463 = vmatprep.subr.bf16.mxu0 0
      %1464 = vmatpush1.bf16.msra.mxu0 %v1415
      %1465 = vmatprep.subr.bf16.mxu0 0
      %1466 = vmatpush1.bf16.msra.mxu0 %v1416
      %1467 = vmatprep.subr.bf16.mxu0 0
      %1468 = vmatpush1.bf16.msra.mxu0 %v1417
      %1469 = vmatprep.subr.bf16.mxu0 0
      %1470 = vmatpush1.bf16.msra.mxu0 %v1418
      %1471 = vmatprep.subr.bf16.mxu0 0
      %1472 = vmatpush1.bf16.msra.mxu0 %v1419
      %1473 = vmatprep.subr.bf16.mxu0 0
      %1474 = vmatpush1.bf16.msra.mxu0 %v1420
      %1475 = vmatprep.subr.bf16.mxu0 0
      %1476 = vmatpush1.bf16.msra.mxu0 %v1421
      %1477 = vmatprep.subr.bf16.mxu0 0
      %1478 = vmatpush1.bf16.msra.mxu0 %v1422
      %1479 = vmatprep.subr.bf16.mxu0 0
      %1480 = vmatpush1.bf16.msra.mxu0 %v1423
      %1481 = vmatprep.subr.bf16.mxu0 0
      %1482 = vmatpush1.bf16.msra.mxu0 %v1424
      %1483 = vmatprep.subr.bf16.mxu0 0
      %1484 = vmatpush1.bf16.msra.mxu0 %v1425
      %1485 = vmatprep.subr.bf16.mxu0 0
      %1486 = vmatpush1.bf16.msra.mxu0 %v1426
      %1487 = vmatprep.subr.bf16.mxu0 0
      %1488 = vmatpush1.bf16.msra.mxu0 %v1427
      %1489 = vmatprep.subr.bf16.mxu0 0
      %1490 = vmatpush1.bf16.msra.mxu0 %v1428
      %1491 = vmatprep.subr.bf16.mxu0 0
      %1492 = vmatpush1.bf16.msra.mxu0 %v1429
      %1493 = vmatprep.subr.bf16.mxu0 0
      %1494 = vmatpush1.bf16.msra.mxu0 %v1430
      %1495 = vmatprep.mubr.bf16.mxu0 %v1114
      %1496 = vmatmul.mubr.bf16.gmra.mrb[0].mxu0 %v1102
      %v1497 = vpop.f32.mrb[0].mxu0
      %v1498 = vadd.f32 0.0, %v1497
      %v1499 = vpop.f32.mrb[0].mxu0
      %v1500 = vpop.f32.mrb[0].mxu0
      %v1501 = vadd.f32 0.0, %v1500
      %v1502 = vpop.f32.mrb[0].mxu0
      %1503 = vmatprep.mubr.bf16.mxu0 %v1142
      %1504 = vmatmul.mubr.bf16.gmra.mrb[0].mxu0 %v1134
      %v1505 = vpop.f32.mrb[0].mxu0
      %v1506 = vadd.f32 0.0, %v1505
      %v1507 = vpop.f32.mrb[0].mxu0
      %v1508 = vpop.f32.mrb[0].mxu0
      %v1509 = vadd.f32 0.0, %v1508
      %v1510 = vpop.f32.mrb[0].mxu0
      %1511 = vmatprep.mubr.bf16.mxu0 %v1166
      %1512 = vmatmul.mubr.bf16.gmra.mrb[0].mxu0 %v1158
      %v1513 = vpop.f32.mrb[0].mxu0
      %v1514 = vadd.f32 0.0, %v1513
      %v1515 = vpop.f32.mrb[0].mxu0
      %v1516 = vpop.f32.mrb[0].mxu0
      %v1517 = vadd.f32 0.0, %v1516
      %v1518 = vpop.f32.mrb[0].mxu0
      %1519 = vmatprep.mubr.bf16.mxu0 %v1190
      %1520 = vmatmul.mubr.bf16.gmra.mrb[0].mxu0 %v1182
      %v1521 = vpop.f32.mrb[0].mxu0
      %v1522 = vadd.f32 0.0, %v1521
      %v1523 = vpop.f32.mrb[0].mxu0
      %v1524 = vpop.f32.mrb[0].mxu0
      %v1525 = vadd.f32 0.0, %v1524
      %v1526 = vpop.f32.mrb[0].mxu0
      %1527 = vmatprep.mubr.bf16.mxu0 %v1214
      %1528 = vmatmul.mubr.bf16.gmra.mrb[0].mxu0 %v1206
      %v1529 = vpop.f32.mrb[0].mxu0
      %v1530 = vadd.f32 0.0, %v1529
      %v1531 = vpop.f32.mrb[0].mxu0
      %v1532 = vpop.f32.mrb[0].mxu0
      %v1533 = vadd.f32 0.0, %v1532
      %v1534 = vpop.f32.mrb[0].mxu0
      %1535 = vmatprep.mubr.bf16.mxu0 %v1238
      %1536 = vmatmul.mubr.bf16.gmra.mrb[0].mxu0 %v1230
      %v1537 = vpop.f32.mrb[0].mxu0
      %v1538 = vadd.f32 0.0, %v1537
      %v1539 = vpop.f32.mrb[0].mxu0
      %v1540 = vpop.f32.mrb[0].mxu0
      %v1541 = vadd.f32 0.0, %v1540
      %v1542 = vpop.f32.mrb[0].mxu0
      %1543 = vmatprep.mubr.bf16.mxu0 %v1262
      %1544 = vmatmul.mubr.bf16.gmra.mrb[0].mxu0 %v1254
      %v1545 = vpop.f32.mrb[0].mxu0
      %v1546 = vadd.f32 0.0, %v1545
      %v1547 = vpop.f32.mrb[0].mxu0
      %v1548 = vpop.f32.mrb[0].mxu0
      %v1549 = vadd.f32 0.0, %v1548
      %v1550 = vpop.f32.mrb[0].mxu0
      %1551 = vmatprep.mubr.bf16.mxu0 %v1286
      %1552 = vmatmul.mubr.bf16.gmra.mrb[0].mxu0 %v1278
      %v1553 = vpop.f32.mrb[0].mxu0
      %v1554 = vadd.f32 0.0, %v1553
      %v1555 = vpop.f32.mrb[0].mxu0
      %v1556 = vpop.f32.mrb[0].mxu0
      %v1557 = vadd.f32 0.0, %v1556
      %v1558 = vpop.f32.mrb[0].mxu0
      %1559 = vdwg.mxu0
      %1560 = vmatprep.subr.bf16.mxu0 0
      %1561 = vmatpush1.bf16.msra.mxu0 %v1431
      %1562 = vmatprep.subr.bf16.mxu0 0
      %1563 = vmatpush1.bf16.msra.mxu0 %v1432
      %1564 = vmatprep.subr.bf16.mxu0 0
      %1565 = vmatpush1.bf16.msra.mxu0 %v1433
      %1566 = vmatprep.subr.bf16.mxu0 0
      %1567 = vmatpush1.bf16.msra.mxu0 %v1434
      %1568 = vmatprep.subr.bf16.mxu0 0
      %1569 = vmatpush1.bf16.msra.mxu0 %v1435
      %1570 = vmatprep.subr.bf16.mxu0 0
      %1571 = vmatpush1.bf16.msra.mxu0 %v1436
      %1572 = vmatprep.subr.bf16.mxu0 0
      %1573 = vmatpush1.bf16.msra.mxu0 %v1437
      %1574 = vmatprep.subr.bf16.mxu0 0
      %1575 = vmatpush1.bf16.msra.mxu0 %v1438
      %1576 = vmatprep.subr.bf16.mxu0 0
      %1577 = vmatpush1.bf16.msra.mxu0 0
      %1578 = vmatprep.subr.bf16.mxu0 0
      %1579 = vmatpush1.bf16.msra.mxu0 0
      %1580 = vmatprep.subr.bf16.mxu0 0
      %1581 = vmatpush1.bf16.msra.mxu0 0
      %1582 = vmatprep.subr.bf16.mxu0 0
      %1583 = vmatpush1.bf16.msra.mxu0 0
      %1584 = vmatprep.subr.bf16.mxu0 0
      %1585 = vmatpush1.bf16.msra.mxu0 0
      %1586 = vmatprep.subr.bf16.mxu0 0
      %1587 = vmatpush1.bf16.msra.mxu0 0
      %1588 = vmatprep.subr.bf16.mxu0 0
      %1589 = vmatpush1.bf16.msra.mxu0 0
      %1590 = vmatprep.subr.bf16.mxu0 0
      %1591 = vmatpush1.bf16.msra.mxu0 0
      %1592 = vmatprep.mubr.bf16.mxu0 0
      %1593 = vmatmul.mubr.bf16.gmra.mrb[0].mxu0 %v1126
      %v1594 = vpop.f32.mrb[0].mxu0
      %v1595 = vadd.f32 %v1498, %v1594
      %v1596 = vpop.f32.mrb[0].mxu0
      %v1597 = vpop.f32.mrb[0].mxu0
      %v1598 = vadd.f32 %v1501, %v1597
      %v1599 = vpop.f32.mrb[0].mxu0
      %1600 = vmatprep.mubr.bf16.mxu0 0
      %1601 = vmatmul.mubr.bf16.gmra.mrb[0].mxu0 %v1150
      %v1602 = vpop.f32.mrb[0].mxu0
      %v1603 = vadd.f32 %v1506, %v1602
      %v1604 = vpop.f32.mrb[0].mxu0
      %v1605 = vpop.f32.mrb[0].mxu0
      %v1606 = vadd.f32 %v1509, %v1605
      %v1607 = vpop.f32.mrb[0].mxu0
      %1608 = vmatprep.mubr.bf16.mxu0 0
      %1609 = vmatmul.mubr.bf16.gmra.mrb[0].mxu0 %v1174
      %v1610 = vpop.f32.mrb[0].mxu0
      %v1611 = vadd.f32 %v1514, %v1610
      %v1612 = vpop.f32.mrb[0].mxu0
      %v1613 = vpop.f32.mrb[0].mxu0
      %v1614 = vadd.f32 %v1517, %v1613
      %v1615 = vpop.f32.mrb[0].mxu0
      %1616 = vmatprep.mubr.bf16.mxu0 0
      %1617 = vmatmul.mubr.bf16.gmra.mrb[0].mxu0 %v1198
      %v1618 = vpop.f32.mrb[0].mxu0
      %v1619 = vadd.f32 %v1522, %v1618
      %v1620 = vpop.f32.mrb[0].mxu0
      %v1621 = vpop.f32.mrb[0].mxu0
      %v1622 = vadd.f32 %v1525, %v1621
      %v1623 = vpop.f32.mrb[0].mxu0
      %1624 = vmatprep.mubr.bf16.mxu0 0
      %1625 = vmatmul.mubr.bf16.gmra.mrb[0].mxu0 %v1222
      %v1626 = vpop.f32.mrb[0].mxu0
      %v1627 = vadd.f32 %v1530, %v1626
      %v1628 = vpop.f32.mrb[0].mxu0
      %v1629 = vpop.f32.mrb[0].mxu0
      %v1630 = vadd.f32 %v1533, %v1629
      %v1631 = vpop.f32.mrb[0].mxu0
      %1632 = vmatprep.mubr.bf16.mxu0 0
      %1633 = vmatmul.mubr.bf16.gmra.mrb[0].mxu0 %v1246
      %v1634 = vpop.f32.mrb[0].mxu0
      %v1635 = vadd.f32 %v1538, %v1634
      %v1636 = vpop.f32.mrb[0].mxu0
      %v1637 = vpop.f32.mrb[0].mxu0
      %v1638 = vadd.f32 %v1541, %v1637
      %v1639 = vpop.f32.mrb[0].mxu0
      %1640 = vmatprep.mubr.bf16.mxu0 0
      %1641 = vmatmul.mubr.bf16.gmra.mrb[0].mxu0 %v1270
      %v1642 = vpop.f32.mrb[0].mxu0
      %v1643 = vadd.f32 %v1546, %v1642
      %v1644 = vpop.f32.mrb[0].mxu0
      %v1645 = vpop.f32.mrb[0].mxu0
      %v1646 = vadd.f32 %v1549, %v1645
      %v1647 = vpop.f32.mrb[0].mxu0
      %1648 = vmatprep.mubr.bf16.mxu0 0
      %1649 = vmatmul.mubr.bf16.gmra.mrb[0].mxu0 %v1294
      %v1650 = vpop.f32.mrb[0].mxu0
      %v1651 = vadd.f32 %v1554, %v1650
      %v1652 = vpop.f32.mrb[0].mxu0
      %v1653 = vpop.f32.mrb[0].mxu0
      %v1654 = vadd.f32 %v1557, %v1653
      %v1655 = vpop.f32.mrb[0].mxu0
      %1656 = vdwg.mxu0
      %v1658 = vshrl.u32 %v839, 16
      %v1660 = vrot.slane %v1658, 7
      %v1661 = vshll.u32 %v840, 16
      %v1663 = vor.u32 %v1094, %v1661
      %v1664 = vsel %vm859, %v1660, %v1663
      %v1666 = vshrl.u32 %v885, 16
      %v1668 = vrot.slane %v1666, 7
      %v1669 = vshll.u32 %v893, 16
      %v1671 = vor.u32 %v1106, %v1669
      %v1672 = vsel %vm859, %v1668, %v1671
      %v1674 = vshrl.u32 %v973, 16
      %v1676 = vrot.slane %v1674, 7
      %v1677 = vshll.u32 %v975, 16
      %v1679 = vor.u32 %v1118, %v1677
      %v1680 = vsel %vm859, %v1676, %v1679
      %v1732 = vunpack.c.l.b16 %v994
      %v1733 = vunpack.c.l.b16 %v995
      %v1734 = vunpack.c.l.b16 %v996
      %v1735 = vunpack.c.l.b16 %v997
      %v1736 = vunpack.c.l.b16 %v998
      %v1737 = vunpack.c.l.b16 %v999
      %v1738 = vunpack.c.l.b16 %v1000
      %v1739 = vunpack.c.l.b16 %v1001
      %v1740 = vunpack.c.l.b16 %v1002
      %v1741 = vunpack.c.l.b16 %v1003
      %v1742 = vunpack.c.l.b16 %v1004
      %v1743 = vunpack.c.l.b16 %v1005
      %v1744 = vunpack.c.l.b16 %v1006
      %v1745 = vunpack.c.l.b16 %v1007
      %v1746 = vunpack.c.l.b16 %v1008
      %v1747 = vunpack.c.l.b16 %v1009
      %v1748 = vunpack.c.l.b16 %v1010
      %v1749 = vunpack.c.l.b16 %v1011
      %v1750 = vunpack.c.l.b16 %v1012
      %v1751 = vunpack.c.l.b16 %v1013
      %v1752 = vunpack.c.l.b16 %v1014
      %v1753 = vunpack.c.l.b16 %v1015
      %v1754 = vunpack.c.l.b16 %v1016
      %v1755 = vunpack.c.l.b16 %v1017
      %v1756 = vunpack.c.l.b16 %v1018
      %v1757 = vunpack.c.l.b16 %v1019
      %v1758 = vunpack.c.l.b16 %v1020
      %v1759 = vunpack.c.l.b16 %v1021
      %v1760 = vunpack.c.l.b16 %v1022
      %v1761 = vunpack.c.l.b16 %v1023
      %v1762 = vunpack.c.l.b16 %v1024
      %v1763 = vunpack.c.l.b16 %v1025
      %v1764 = vunpack.c.l.b16 %v1026
      %v1765 = vunpack.c.l.b16 %v1027
      %v1766 = vunpack.c.l.b16 %v1028
      %v1767 = vunpack.c.l.b16 %v1029
      %v1768 = vunpack.c.l.b16 %v1030
      %v1769 = vunpack.c.l.b16 %v1031
      %v1770 = vunpack.c.l.b16 %v1032
      %v1771 = vunpack.c.l.b16 %v1033
      %v1772 = vunpack.c.l.b16 %v1034
      %v1773 = vunpack.c.l.b16 %v1035
      %v1774 = vunpack.c.l.b16 %v1036
      %v1775 = vunpack.c.l.b16 %v1037
      %v1776 = vunpack.c.l.b16 %v1038
      %v1777 = vunpack.c.l.b16 %v1039
      %v1778 = vunpack.c.l.b16 %v1040
      %v1779 = vunpack.c.l.b16 %v1041
      %v1780 = vpack.c.b16 %v1733, %v1732
      %v1781 = vpack.c.b16 %v1735, %v1734
      %v1782 = vpack.c.b16 %v1737, %v1736
      %v1783 = vpack.c.b16 %v1739, %v1738
      %v1784 = vpack.c.b16 %v1741, %v1740
      %v1785 = vpack.c.b16 %v1743, %v1742
      %v1786 = vpack.c.b16 %v1745, %v1744
      %v1787 = vpack.c.b16 %v1747, %v1746
      %v1788 = vpack.c.b16 %v1749, %v1748
      %v1789 = vpack.c.b16 %v1751, %v1750
      %v1790 = vpack.c.b16 %v1753, %v1752
      %v1791 = vpack.c.b16 %v1755, %v1754
      %v1792 = vpack.c.b16 %v1757, %v1756
      %v1793 = vpack.c.b16 %v1759, %v1758
      %v1794 = vpack.c.b16 %v1761, %v1760
      %v1795 = vpack.c.b16 %v1763, %v1762
      %v1796 = vpack.c.b16 %v1765, %v1764
      %v1797 = vpack.c.b16 %v1767, %v1766
      %v1798 = vpack.c.b16 %v1769, %v1768
      %v1799 = vpack.c.b16 %v1771, %v1770
      %v1800 = vpack.c.b16 %v1773, %v1772
      %v1801 = vpack.c.b16 %v1775, %v1774
      %v1802 = vpack.c.b16 %v1777, %v1776
      %v1803 = vpack.c.b16 %v1779, %v1778
      %1828 = vmatprep.subr.bf16.mxu0 0
      %1829 = vmatpush1.bf16.msra.mxu0 %v1780
      %1830 = vmatprep.subr.bf16.mxu0 0
      %1831 = vmatpush1.bf16.msra.mxu0 %v1781
      %1832 = vmatprep.subr.bf16.mxu0 0
      %1833 = vmatpush1.bf16.msra.mxu0 %v1782
      %1834 = vmatprep.subr.bf16.mxu0 0
      %1835 = vmatpush1.bf16.msra.mxu0 %v1783
      %1836 = vmatprep.subr.bf16.mxu0 0
      %1837 = vmatpush1.bf16.msra.mxu0 %v1784
      %1838 = vmatprep.subr.bf16.mxu0 0
      %1839 = vmatpush1.bf16.msra.mxu0 %v1785
      %1840 = vmatprep.subr.bf16.mxu0 0
      %1841 = vmatpush1.bf16.msra.mxu0 %v1786
      %1842 = vmatprep.subr.bf16.mxu0 0
      %1843 = vmatpush1.bf16.msra.mxu0 %v1787
      %1844 = vmatprep.subr.bf16.mxu0 0
      %1845 = vmatpush1.bf16.msra.mxu0 %v1788
      %1846 = vmatprep.subr.bf16.mxu0 0
      %1847 = vmatpush1.bf16.msra.mxu0 %v1789
      %1848 = vmatprep.subr.bf16.mxu0 0
      %1849 = vmatpush1.bf16.msra.mxu0 %v1790
      %1850 = vmatprep.subr.bf16.mxu0 0
      %1851 = vmatpush1.bf16.msra.mxu0 %v1791
      %1852 = vmatprep.subr.bf16.mxu0 0
      %1853 = vmatpush1.bf16.msra.mxu0 %v1792
      %1854 = vmatprep.subr.bf16.mxu0 0
      %1855 = vmatpush1.bf16.msra.mxu0 %v1793
      %1856 = vmatprep.subr.bf16.mxu0 0
      %1857 = vmatpush1.bf16.msra.mxu0 %v1794
      %1858 = vmatprep.subr.bf16.mxu0 0
      %1859 = vmatpush1.bf16.msra.mxu0 %v1795
      %1860 = vmatprep.mubr.bf16.mxu0 %v1672
      %1861 = vmatmul.mubr.bf16.gmra.mrb[0].mxu0 %v1664
      %v1862 = vpop.f32.mrb[0].mxu0
      %v1863 = vadd.f32 %v1595, %v1862
      %v1864 = vpop.f32.mrb[0].mxu0
      %v1865 = vpop.f32.mrb[0].mxu0
      %v1866 = vadd.f32 %v1598, %v1865
      %v1867 = vpop.f32.mrb[0].mxu0
      %1868 = vmatprep.mubr.bf16.mxu0 %v1114
      %1869 = vmatmul.mubr.bf16.gmra.mrb[0].mxu0 %v1102
      %v1870 = vpop.f32.mrb[0].mxu0
      %v1871 = vadd.f32 %v1603, %v1870
      %v1872 = vpop.f32.mrb[0].mxu0
      %v1873 = vpop.f32.mrb[0].mxu0
      %v1874 = vadd.f32 %v1606, %v1873
      %v1875 = vpop.f32.mrb[0].mxu0
      %1876 = vmatprep.mubr.bf16.mxu0 %v1142
      %1877 = vmatmul.mubr.bf16.gmra.mrb[0].mxu0 %v1134
      %v1878 = vpop.f32.mrb[0].mxu0
      %v1879 = vadd.f32 %v1611, %v1878
      %v1880 = vpop.f32.mrb[0].mxu0
      %v1881 = vpop.f32.mrb[0].mxu0
      %v1882 = vadd.f32 %v1614, %v1881
      %v1883 = vpop.f32.mrb[0].mxu0
      %1884 = vmatprep.mubr.bf16.mxu0 %v1166
      %1885 = vmatmul.mubr.bf16.gmra.mrb[0].mxu0 %v1158
      %v1886 = vpop.f32.mrb[0].mxu0
      %v1887 = vadd.f32 %v1619, %v1886
      %v1888 = vpop.f32.mrb[0].mxu0
      %v1889 = vpop.f32.mrb[0].mxu0
      %v1890 = vadd.f32 %v1622, %v1889
      %v1891 = vpop.f32.mrb[0].mxu0
      %1892 = vmatprep.mubr.bf16.mxu0 %v1190
      %1893 = vmatmul.mubr.bf16.gmra.mrb[0].mxu0 %v1182
      %v1894 = vpop.f32.mrb[0].mxu0
      %v1895 = vadd.f32 %v1627, %v1894
      %v1896 = vpop.f32.mrb[0].mxu0
      %v1897 = vpop.f32.mrb[0].mxu0
      %v1898 = vadd.f32 %v1630, %v1897
      %v1899 = vpop.f32.mrb[0].mxu0
      %1900 = vmatprep.mubr.bf16.mxu0 %v1214
      %1901 = vmatmul.mubr.bf16.gmra.mrb[0].mxu0 %v1206
      %v1902 = vpop.f32.mrb[0].mxu0
      %v1903 = vadd.f32 %v1635, %v1902
      %v1904 = vpop.f32.mrb[0].mxu0
      %v1905 = vpop.f32.mrb[0].mxu0
      %v1906 = vadd.f32 %v1638, %v1905
      %v1907 = vpop.f32.mrb[0].mxu0
      %1908 = vmatprep.mubr.bf16.mxu0 %v1238
      %1909 = vmatmul.mubr.bf16.gmra.mrb[0].mxu0 %v1230
      %v1910 = vpop.f32.mrb[0].mxu0
      %v1911 = vadd.f32 %v1643, %v1910
      %v1912 = vpop.f32.mrb[0].mxu0
      %v1913 = vpop.f32.mrb[0].mxu0
      %v1914 = vadd.f32 %v1646, %v1913
      %v1915 = vpop.f32.mrb[0].mxu0
      %1916 = vmatprep.mubr.bf16.mxu0 %v1262
      %1917 = vmatmul.mubr.bf16.gmra.mrb[0].mxu0 %v1254
      %v1918 = vpop.f32.mrb[0].mxu0
      %v1919 = vadd.f32 %v1651, %v1918
      %v1920 = vpop.f32.mrb[0].mxu0
      %v1921 = vpop.f32.mrb[0].mxu0
      %v1922 = vadd.f32 %v1654, %v1921
      %v1923 = vpop.f32.mrb[0].mxu0
      %1924 = vdwg.mxu0
      %1925 = vmatprep.subr.bf16.mxu0 0
      %1926 = vmatpush1.bf16.msra.mxu0 %v1796
      %1927 = vmatprep.subr.bf16.mxu0 0
      %1928 = vmatpush1.bf16.msra.mxu0 %v1797
      %1929 = vmatprep.subr.bf16.mxu0 0
      %1930 = vmatpush1.bf16.msra.mxu0 %v1798
      %1931 = vmatprep.subr.bf16.mxu0 0
      %1932 = vmatpush1.bf16.msra.mxu0 %v1799
      %1933 = vmatprep.subr.bf16.mxu0 0
      %1934 = vmatpush1.bf16.msra.mxu0 %v1800
      %1935 = vmatprep.subr.bf16.mxu0 0
      %1936 = vmatpush1.bf16.msra.mxu0 %v1801
      %1937 = vmatprep.subr.bf16.mxu0 0
      %1938 = vmatpush1.bf16.msra.mxu0 %v1802
      %1939 = vmatprep.subr.bf16.mxu0 0
      %1940 = vmatpush1.bf16.msra.mxu0 %v1803
      %1941 = vmatprep.subr.bf16.mxu0 0
      %1942 = vmatpush1.bf16.msra.mxu0 0
      %1943 = vmatprep.subr.bf16.mxu0 0
      %1944 = vmatpush1.bf16.msra.mxu0 0
      %1945 = vmatprep.subr.bf16.mxu0 0
      %1946 = vmatpush1.bf16.msra.mxu0 0
      %1947 = vmatprep.subr.bf16.mxu0 0
      %1948 = vmatpush1.bf16.msra.mxu0 0
      %1949 = vmatprep.subr.bf16.mxu0 0
      %1950 = vmatpush1.bf16.msra.mxu0 0
      %1951 = vmatprep.subr.bf16.mxu0 0
      %1952 = vmatpush1.bf16.msra.mxu0 0
      %1953 = vmatprep.subr.bf16.mxu0 0
      %1954 = vmatpush1.bf16.msra.mxu0 0
      %1955 = vmatprep.subr.bf16.mxu0 0
      %1956 = vmatpush1.bf16.msra.mxu0 0
      %1957 = vmatprep.mubr.bf16.mxu0 0
      %1958 = vmatmul.mubr.bf16.gmra.mrb[0].mxu0 %v1680
      %v1959 = vpop.f32.mrb[0].mxu0
      %v1960 = vadd.f32 %v1863, %v1959
      %v1961 = vpop.f32.mrb[0].mxu0
      %v1962 = vpop.f32.mrb[0].mxu0
      %v1963 = vadd.f32 %v1866, %v1962
      %v1964 = vpop.f32.mrb[0].mxu0
      %1965 = vmatprep.mubr.bf16.mxu0 0
      %1966 = vmatmul.mubr.bf16.gmra.mrb[0].mxu0 %v1126
      %v1967 = vpop.f32.mrb[0].mxu0
      %v1968 = vadd.f32 %v1871, %v1967
      %v1969 = vpop.f32.mrb[0].mxu0
      %v1970 = vpop.f32.mrb[0].mxu0
      %v1971 = vadd.f32 %v1874, %v1970
      %v1972 = vpop.f32.mrb[0].mxu0
      %1973 = vmatprep.mubr.bf16.mxu0 0
      %1974 = vmatmul.mubr.bf16.gmra.mrb[0].mxu0 %v1150
      %v1975 = vpop.f32.mrb[0].mxu0
      %v1976 = vadd.f32 %v1879, %v1975
      %v1977 = vpop.f32.mrb[0].mxu0
      %v1978 = vpop.f32.mrb[0].mxu0
      %v1979 = vadd.f32 %v1882, %v1978
      %v1980 = vpop.f32.mrb[0].mxu0
      %1981 = vmatprep.mubr.bf16.mxu0 0
      %1982 = vmatmul.mubr.bf16.gmra.mrb[0].mxu0 %v1174
      %v1983 = vpop.f32.mrb[0].mxu0
      %v1984 = vadd.f32 %v1887, %v1983
      %v1985 = vpop.f32.mrb[0].mxu0
      %v1986 = vpop.f32.mrb[0].mxu0
      %v1987 = vadd.f32 %v1890, %v1986
      %v1988 = vpop.f32.mrb[0].mxu0
      %1989 = vmatprep.mubr.bf16.mxu0 0
      %1990 = vmatmul.mubr.bf16.gmra.mrb[0].mxu0 %v1198
      %v1991 = vpop.f32.mrb[0].mxu0
      %v1992 = vadd.f32 %v1895, %v1991
      %v1993 = vpop.f32.mrb[0].mxu0
      %v1994 = vpop.f32.mrb[0].mxu0
      %v1995 = vadd.f32 %v1898, %v1994
      %v1996 = vpop.f32.mrb[0].mxu0
      %1997 = vmatprep.mubr.bf16.mxu0 0
      %1998 = vmatmul.mubr.bf16.gmra.mrb[0].mxu0 %v1222
      %v1999 = vpop.f32.mrb[0].mxu0
      %v2000 = vadd.f32 %v1903, %v1999
      %v2001 = vpop.f32.mrb[0].mxu0
      %v2002 = vpop.f32.mrb[0].mxu0
      %v2003 = vadd.f32 %v1906, %v2002
      %v2004 = vpop.f32.mrb[0].mxu0
      %2005 = vmatprep.mubr.bf16.mxu0 0
      %2006 = vmatmul.mubr.bf16.gmra.mrb[0].mxu0 %v1246
      %v2007 = vpop.f32.mrb[0].mxu0
      %v2008 = vadd.f32 %v1911, %v2007
      %v2009 = vpop.f32.mrb[0].mxu0
      %v2010 = vpop.f32.mrb[0].mxu0
      %v2011 = vadd.f32 %v1914, %v2010
      %v2012 = vpop.f32.mrb[0].mxu0
      %2013 = vmatprep.mubr.bf16.mxu0 0
      %2014 = vmatmul.mubr.bf16.gmra.mrb[0].mxu0 %v1270
      %v2015 = vpop.f32.mrb[0].mxu0
      %v2016 = vadd.f32 %v1919, %v2015
      %v2017 = vpop.f32.mrb[0].mxu0
      %v2018 = vpop.f32.mrb[0].mxu0
      %v2019 = vadd.f32 %v1922, %v2018
      %v2020 = vpop.f32.mrb[0].mxu0
      %2021 = vdwg.mxu0
      %s2022 = scalar_lea.vmem %s3, 384
      %v2023 = vld [vmem:[%s2022] sm:$0xf]
      %v2024 = vld [vmem:[%s2022 + $0x4] sm:$0xf]
      %v2025 = vld [vmem:[%s2022 + $0x8] sm:$0xf]
      %v2026 = vld [vmem:[%s2022 + $0xc] sm:$0xf]
      %v2027 = vld [vmem:[%s2022 + $0x10] sm:$0xf]
      %v2028 = vld [vmem:[%s2022 + $0x14] sm:$0xf]
      %v2029 = vld [vmem:[%s2022 + $0x18] sm:$0xf]
      %v2030 = vld [vmem:[%s2022 + $0x1c] sm:$0xf]
      %v2031 = vld [vmem:[%s2022 + $0x20] sm:$0xf]
      %v2032 = vld [vmem:[%s2022 + $0x24] sm:$0xf]
      %v2033 = vld [vmem:[%s2022 + $0x28] sm:$0xf]
      %v2034 = vld [vmem:[%s2022 + $0x2c] sm:$0xf]
      %v2035 = vld [vmem:[%s2022 + $0x30] sm:$0xf]
      %v2036 = vld [vmem:[%s2022 + $0x34] sm:$0xf]
      %v2037 = vld [vmem:[%s2022 + $0x38] sm:$0xf]
      %v2038 = vld [vmem:[%s2022 + $0x3c] sm:$0xf]
      %v2039 = vld [vmem:[%s2022 + $0x40] sm:$0xf]
      %v2040 = vld [vmem:[%s2022 + $0x44] sm:$0xf]
      %v2041 = vld [vmem:[%s2022 + $0x48] sm:$0xf]
      %v2042 = vld [vmem:[%s2022 + $0x4c] sm:$0xf]
      %v2043 = vld [vmem:[%s2022 + $0x50] sm:$0xf]
      %v2044 = vld [vmem:[%s2022 + $0x54] sm:$0xf]
      %v2045 = vld [vmem:[%s2022 + $0x58] sm:$0xf]
      %v2046 = vld [vmem:[%s2022 + $0x5c] sm:$0xf]
      %v2047 = vld [vmem:[%s2022 + $0x60] sm:$0xf]
      %v2048 = vld [vmem:[%s2022 + $0x64] sm:$0xf]
      %v2049 = vld [vmem:[%s2022 + $0x68] sm:$0xf]
      %v2050 = vld [vmem:[%s2022 + $0x6c] sm:$0xf]
      %v2051 = vld [vmem:[%s2022 + $0x70] sm:$0xf]
      %v2052 = vld [vmem:[%s2022 + $0x74] sm:$0xf]
      %v2053 = vld [vmem:[%s2022 + $0x78] sm:$0xf]
      %v2054 = vld [vmem:[%s2022 + $0x7c] sm:$0xf]
      %v2055 = vld [vmem:[%s2022 + $0x80] sm:$0xf]
      %v2056 = vld [vmem:[%s2022 + $0x84] sm:$0xf]
      %v2057 = vld [vmem:[%s2022 + $0x88] sm:$0xf]
      %v2058 = vld [vmem:[%s2022 + $0x8c] sm:$0xf]
      %v2059 = vld [vmem:[%s2022 + $0x90] sm:$0xf]
      %v2060 = vld [vmem:[%s2022 + $0x94] sm:$0xf]
      %v2061 = vld [vmem:[%s2022 + $0x98] sm:$0xf]
      %v2062 = vld [vmem:[%s2022 + $0x9c] sm:$0xf]
      %v2063 = vld [vmem:[%s2022 + $0xa0] sm:$0xf]
      %v2064 = vld [vmem:[%s2022 + $0xa4] sm:$0xf]
      %v2065 = vld [vmem:[%s2022 + $0xa8] sm:$0xf]
      %v2066 = vld [vmem:[%s2022 + $0xac] sm:$0xf]
      %v2067 = vld [vmem:[%s2022 + $0xb0] sm:$0xf]
      %v2068 = vld [vmem:[%s2022 + $0xb4] sm:$0xf]
      %v2069 = vld [vmem:[%s2022 + $0xb8] sm:$0xf]
      %v2070 = vld [vmem:[%s2022 + $0xbc] sm:$0xf]
      %v2072 = vshrl.u32 %v849, 16
      %v2074 = vrot.slane %v2072, 7
      %v2075 = vshll.u32 %v849, 16
      %v2077 = vor.u32 %v2074, %v2075
      %v2078 = vsel %vm859, %v1274, %v2077
      %v2080 = vshrl.u32 %v960, 16
      %v2082 = vrot.slane %v2080, 7
      %v2083 = vshll.u32 %v960, 16
      %v2085 = vor.u32 %v2082, %v2083
      %v2086 = vsel %vm859, %v1282, %v2085
      %v2088 = vshrl.u32 %v993, 16
      %v2090 = vrot.slane %v2088, 7
      %v2091 = vshll.u32 %v993, 16
      %v2093 = vor.u32 %v2090, %v2091
      %v2094 = vsel %vm859, %v1290, %v2093
      %v2146 = vunpack.c.l.b16 %v2023
      %v2147 = vunpack.c.l.b16 %v2024
      %v2148 = vunpack.c.l.b16 %v2025
      %v2149 = vunpack.c.l.b16 %v2026
      %v2150 = vunpack.c.l.b16 %v2027
      %v2151 = vunpack.c.l.b16 %v2028
      %v2152 = vunpack.c.l.b16 %v2029
      %v2153 = vunpack.c.l.b16 %v2030
      %v2154 = vunpack.c.l.b16 %v2031
      %v2155 = vunpack.c.l.b16 %v2032
      %v2156 = vunpack.c.l.b16 %v2033
      %v2157 = vunpack.c.l.b16 %v2034
      %v2158 = vunpack.c.l.b16 %v2035
      %v2159 = vunpack.c.l.b16 %v2036
      %v2160 = vunpack.c.l.b16 %v2037
      %v2161 = vunpack.c.l.b16 %v2038
      %v2162 = vunpack.c.l.b16 %v2039
      %v2163 = vunpack.c.l.b16 %v2040
      %v2164 = vunpack.c.l.b16 %v2041
      %v2165 = vunpack.c.l.b16 %v2042
      %v2166 = vunpack.c.l.b16 %v2043
      %v2167 = vunpack.c.l.b16 %v2044
      %v2168 = vunpack.c.l.b16 %v2045
      %v2169 = vunpack.c.l.b16 %v2046
      %v2170 = vunpack.c.l.b16 %v2047
      %v2171 = vunpack.c.l.b16 %v2048
      %v2172 = vunpack.c.l.b16 %v2049
      %v2173 = vunpack.c.l.b16 %v2050
      %v2174 = vunpack.c.l.b16 %v2051
      %v2175 = vunpack.c.l.b16 %v2052
      %v2176 = vunpack.c.l.b16 %v2053
      %v2177 = vunpack.c.l.b16 %v2054
      %v2178 = vunpack.c.l.b16 %v2055
      %v2179 = vunpack.c.l.b16 %v2056
      %v2180 = vunpack.c.l.b16 %v2057
      %v2181 = vunpack.c.l.b16 %v2058
      %v2182 = vunpack.c.l.b16 %v2059
      %v2183 = vunpack.c.l.b16 %v2060
      %v2184 = vunpack.c.l.b16 %v2061
      %v2185 = vunpack.c.l.b16 %v2062
      %v2186 = vunpack.c.l.b16 %v2063
      %v2187 = vunpack.c.l.b16 %v2064
      %v2188 = vunpack.c.l.b16 %v2065
      %v2189 = vunpack.c.l.b16 %v2066
      %v2190 = vunpack.c.l.b16 %v2067
      %v2191 = vunpack.c.l.b16 %v2068
      %v2192 = vunpack.c.l.b16 %v2069
      %v2193 = vunpack.c.l.b16 %v2070
      %v2194 = vpack.c.b16 %v2147, %v2146
      %v2195 = vpack.c.b16 %v2149, %v2148
      %v2196 = vpack.c.b16 %v2151, %v2150
      %v2197 = vpack.c.b16 %v2153, %v2152
      %v2198 = vpack.c.b16 %v2155, %v2154
      %v2199 = vpack.c.b16 %v2157, %v2156
      %v2200 = vpack.c.b16 %v2159, %v2158
      %v2201 = vpack.c.b16 %v2161, %v2160
      %v2202 = vpack.c.b16 %v2163, %v2162
      %v2203 = vpack.c.b16 %v2165, %v2164
      %v2204 = vpack.c.b16 %v2167, %v2166
      %v2205 = vpack.c.b16 %v2169, %v2168
      %v2206 = vpack.c.b16 %v2171, %v2170
      %v2207 = vpack.c.b16 %v2173, %v2172
      %v2208 = vpack.c.b16 %v2175, %v2174
      %v2209 = vpack.c.b16 %v2177, %v2176
      %v2210 = vpack.c.b16 %v2179, %v2178
      %v2211 = vpack.c.b16 %v2181, %v2180
      %v2212 = vpack.c.b16 %v2183, %v2182
      %v2213 = vpack.c.b16 %v2185, %v2184
      %v2214 = vpack.c.b16 %v2187, %v2186
      %v2215 = vpack.c.b16 %v2189, %v2188
      %v2216 = vpack.c.b16 %v2191, %v2190
      %v2217 = vpack.c.b16 %v2193, %v2192
      %2242 = vmatprep.subr.bf16.mxu0 0
      %2243 = vmatpush1.bf16.msra.mxu0 %v2194
      %2244 = vmatprep.subr.bf16.mxu0 0
      %2245 = vmatpush1.bf16.msra.mxu0 %v2195
      %2246 = vmatprep.subr.bf16.mxu0 0
      %2247 = vmatpush1.bf16.msra.mxu0 %v2196
      %2248 = vmatprep.subr.bf16.mxu0 0
      %2249 = vmatpush1.bf16.msra.mxu0 %v2197
      %2250 = vmatprep.subr.bf16.mxu0 0
      %2251 = vmatpush1.bf16.msra.mxu0 %v2198
      %2252 = vmatprep.subr.bf16.mxu0 0
      %2253 = vmatpush1.bf16.msra.mxu0 %v2199
      %2254 = vmatprep.subr.bf16.mxu0 0
      %2255 = vmatpush1.bf16.msra.mxu0 %v2200
      %2256 = vmatprep.subr.bf16.mxu0 0
      %2257 = vmatpush1.bf16.msra.mxu0 %v2201
      %2258 = vmatprep.subr.bf16.mxu0 0
      %2259 = vmatpush1.bf16.msra.mxu0 %v2202
      %2260 = vmatprep.subr.bf16.mxu0 0
      %2261 = vmatpush1.bf16.msra.mxu0 %v2203
      %2262 = vmatprep.subr.bf16.mxu0 0
      %2263 = vmatpush1.bf16.msra.mxu0 %v2204
      %2264 = vmatprep.subr.bf16.mxu0 0
      %2265 = vmatpush1.bf16.msra.mxu0 %v2205
      %2266 = vmatprep.subr.bf16.mxu0 0
      %2267 = vmatpush1.bf16.msra.mxu0 %v2206
      %2268 = vmatprep.subr.bf16.mxu0 0
      %2269 = vmatpush1.bf16.msra.mxu0 %v2207
      %2270 = vmatprep.subr.bf16.mxu0 0
      %2271 = vmatpush1.bf16.msra.mxu0 %v2208
      %2272 = vmatprep.subr.bf16.mxu0 0
      %2273 = vmatpush1.bf16.msra.mxu0 %v2209
      %2274 = vmatprep.mubr.bf16.mxu0 %v1142
      %2275 = vmatmul.mubr.bf16.gmra.mrb[0].mxu0 %v1134
      %v2276 = vpop.f32.mrb[0].mxu0
      %v2277 = vadd.f32 0.0, %v2276
      %v2278 = vpop.f32.mrb[0].mxu0
      %v2279 = vpop.f32.mrb[0].mxu0
      %v2280 = vadd.f32 0.0, %v2279
      %v2281 = vpop.f32.mrb[0].mxu0
      %2282 = vmatprep.mubr.bf16.mxu0 %v1166
      %2283 = vmatmul.mubr.bf16.gmra.mrb[0].mxu0 %v1158
      %v2284 = vpop.f32.mrb[0].mxu0
      %v2285 = vadd.f32 0.0, %v2284
      %v2286 = vpop.f32.mrb[0].mxu0
      %v2287 = vpop.f32.mrb[0].mxu0
      %v2288 = vadd.f32 0.0, %v2287
      %v2289 = vpop.f32.mrb[0].mxu0
      %2290 = vmatprep.mubr.bf16.mxu0 %v1190
      %2291 = vmatmul.mubr.bf16.gmra.mrb[0].mxu0 %v1182
      %v2292 = vpop.f32.mrb[0].mxu0
      %v2293 = vadd.f32 0.0, %v2292
      %v2294 = vpop.f32.mrb[0].mxu0
      %v2295 = vpop.f32.mrb[0].mxu0
      %v2296 = vadd.f32 0.0, %v2295
      %v2297 = vpop.f32.mrb[0].mxu0
      %2298 = vmatprep.mubr.bf16.mxu0 %v1214
      %2299 = vmatmul.mubr.bf16.gmra.mrb[0].mxu0 %v1206
      %v2300 = vpop.f32.mrb[0].mxu0
      %v2301 = vadd.f32 0.0, %v2300
      %v2302 = vpop.f32.mrb[0].mxu0
      %v2303 = vpop.f32.mrb[0].mxu0
      %v2304 = vadd.f32 0.0, %v2303
      %v2305 = vpop.f32.mrb[0].mxu0
      %2306 = vmatprep.mubr.bf16.mxu0 %v1238
      %2307 = vmatmul.mubr.bf16.gmra.mrb[0].mxu0 %v1230
      %v2308 = vpop.f32.mrb[0].mxu0
      %v2309 = vadd.f32 0.0, %v2308
      %v2310 = vpop.f32.mrb[0].mxu0
      %v2311 = vpop.f32.mrb[0].mxu0
      %v2312 = vadd.f32 0.0, %v2311
      %v2313 = vpop.f32.mrb[0].mxu0
      %2314 = vmatprep.mubr.bf16.mxu0 %v1262
      %2315 = vmatmul.mubr.bf16.gmra.mrb[0].mxu0 %v1254
      %v2316 = vpop.f32.mrb[0].mxu0
      %v2317 = vadd.f32 0.0, %v2316
      %v2318 = vpop.f32.mrb[0].mxu0
      %v2319 = vpop.f32.mrb[0].mxu0
      %v2320 = vadd.f32 0.0, %v2319
      %v2321 = vpop.f32.mrb[0].mxu0
      %2322 = vmatprep.mubr.bf16.mxu0 %v1286
      %2323 = vmatmul.mubr.bf16.gmra.mrb[0].mxu0 %v1278
      %v2324 = vpop.f32.mrb[0].mxu0
      %v2325 = vadd.f32 0.0, %v2324
      %v2326 = vpop.f32.mrb[0].mxu0
      %v2327 = vpop.f32.mrb[0].mxu0
      %v2328 = vadd.f32 0.0, %v2327
      %v2329 = vpop.f32.mrb[0].mxu0
      %2330 = vmatprep.mubr.bf16.mxu0 %v2086
      %2331 = vmatmul.mubr.bf16.gmra.mrb[0].mxu0 %v2078
      %v2332 = vpop.f32.mrb[0].mxu0
      %v2333 = vadd.f32 0.0, %v2332
      %v2334 = vpop.f32.mrb[0].mxu0
      %v2335 = vpop.f32.mrb[0].mxu0
      %v2336 = vadd.f32 0.0, %v2335
      %v2337 = vpop.f32.mrb[0].mxu0
      %2338 = vdwg.mxu0
      %2339 = vmatprep.subr.bf16.mxu0 0
      %2340 = vmatpush1.bf16.msra.mxu0 %v2210
      %2341 = vmatprep.subr.bf16.mxu0 0
      %2342 = vmatpush1.bf16.msra.mxu0 %v2211
      %2343 = vmatprep.subr.bf16.mxu0 0
      %2344 = vmatpush1.bf16.msra.mxu0 %v2212
      %2345 = vmatprep.subr.bf16.mxu0 0
      %2346 = vmatpush1.bf16.msra.mxu0 %v2213
      %2347 = vmatprep.subr.bf16.mxu0 0
      %2348 = vmatpush1.bf16.msra.mxu0 %v2214
      %2349 = vmatprep.subr.bf16.mxu0 0
      %2350 = vmatpush1.bf16.msra.mxu0 %v2215
      %2351 = vmatprep.subr.bf16.mxu0 0
      %2352 = vmatpush1.bf16.msra.mxu0 %v2216
      %2353 = vmatprep.subr.bf16.mxu0 0
      %2354 = vmatpush1.bf16.msra.mxu0 %v2217
      %2355 = vmatprep.subr.bf16.mxu0 0
      %2356 = vmatpush1.bf16.msra.mxu0 0
      %2357 = vmatprep.subr.bf16.mxu0 0
      %2358 = vmatpush1.bf16.msra.mxu0 0
      %2359 = vmatprep.subr.bf16.mxu0 0
      %2360 = vmatpush1.bf16.msra.mxu0 0
      %2361 = vmatprep.subr.bf16.mxu0 0
      %2362 = vmatpush1.bf16.msra.mxu0 0
      %2363 = vmatprep.subr.bf16.mxu0 0
      %2364 = vmatpush1.bf16.msra.mxu0 0
      %2365 = vmatprep.subr.bf16.mxu0 0
      %2366 = vmatpush1.bf16.msra.mxu0 0
      %2367 = vmatprep.subr.bf16.mxu0 0
      %2368 = vmatpush1.bf16.msra.mxu0 0
      %2369 = vmatprep.subr.bf16.mxu0 0
      %2370 = vmatpush1.bf16.msra.mxu0 0
      %2371 = vmatprep.mubr.bf16.mxu0 0
      %2372 = vmatmul.mubr.bf16.gmra.mrb[0].mxu0 %v1150
      %v2373 = vpop.f32.mrb[0].mxu0
      %v2374 = vadd.f32 %v2277, %v2373
      %v2375 = vpop.f32.mrb[0].mxu0
      %v2376 = vpop.f32.mrb[0].mxu0
      %v2377 = vadd.f32 %v2280, %v2376
      %v2378 = vpop.f32.mrb[0].mxu0
      %2379 = vmatprep.mubr.bf16.mxu0 0
      %2380 = vmatmul.mubr.bf16.gmra.mrb[0].mxu0 %v1174
      %v2381 = vpop.f32.mrb[0].mxu0
      %v2382 = vadd.f32 %v2285, %v2381
      %v2383 = vpop.f32.mrb[0].mxu0
      %v2384 = vpop.f32.mrb[0].mxu0
      %v2385 = vadd.f32 %v2288, %v2384
      %v2386 = vpop.f32.mrb[0].mxu0
      %2387 = vmatprep.mubr.bf16.mxu0 0
      %2388 = vmatmul.mubr.bf16.gmra.mrb[0].mxu0 %v1198
      %v2389 = vpop.f32.mrb[0].mxu0
      %v2390 = vadd.f32 %v2293, %v2389
      %v2391 = vpop.f32.mrb[0].mxu0
      %v2392 = vpop.f32.mrb[0].mxu0
      %v2393 = vadd.f32 %v2296, %v2392
      %v2394 = vpop.f32.mrb[0].mxu0
      %2395 = vmatprep.mubr.bf16.mxu0 0
      %2396 = vmatmul.mubr.bf16.gmra.mrb[0].mxu0 %v1222
      %v2397 = vpop.f32.mrb[0].mxu0
      %v2398 = vadd.f32 %v2301, %v2397
      %v2399 = vpop.f32.mrb[0].mxu0
      %v2400 = vpop.f32.mrb[0].mxu0
      %v2401 = vadd.f32 %v2304, %v2400
      %v2402 = vpop.f32.mrb[0].mxu0
      %2403 = vmatprep.mubr.bf16.mxu0 0
      %2404 = vmatmul.mubr.bf16.gmra.mrb[0].mxu0 %v1246
      %v2405 = vpop.f32.mrb[0].mxu0
      %v2406 = vadd.f32 %v2309, %v2405
      %v2407 = vpop.f32.mrb[0].mxu0
      %v2408 = vpop.f32.mrb[0].mxu0
      %v2409 = vadd.f32 %v2312, %v2408
      %v2410 = vpop.f32.mrb[0].mxu0
      %2411 = vmatprep.mubr.bf16.mxu0 0
      %2412 = vmatmul.mubr.bf16.gmra.mrb[0].mxu0 %v1270
      %v2413 = vpop.f32.mrb[0].mxu0
      %v2414 = vadd.f32 %v2317, %v2413
      %v2415 = vpop.f32.mrb[0].mxu0
      %v2416 = vpop.f32.mrb[0].mxu0
      %v2417 = vadd.f32 %v2320, %v2416
      %v2418 = vpop.f32.mrb[0].mxu0
      %2419 = vmatprep.mubr.bf16.mxu0 0
      %2420 = vmatmul.mubr.bf16.gmra.mrb[0].mxu0 %v1294
      %v2421 = vpop.f32.mrb[0].mxu0
      %v2422 = vadd.f32 %v2325, %v2421
      %v2423 = vpop.f32.mrb[0].mxu0
      %v2424 = vpop.f32.mrb[0].mxu0
      %v2425 = vadd.f32 %v2328, %v2424
      %v2426 = vpop.f32.mrb[0].mxu0
      %2427 = vmatprep.mubr.bf16.mxu0 0
      %2428 = vmatmul.mubr.bf16.gmra.mrb[0].mxu0 %v2094
      %v2429 = vpop.f32.mrb[0].mxu0
      %v2430 = vadd.f32 %v2333, %v2429
      %v2431 = vpop.f32.mrb[0].mxu0
      %v2432 = vpop.f32.mrb[0].mxu0
      %v2433 = vadd.f32 %v2336, %v2432
      %v2434 = vpop.f32.mrb[0].mxu0
      %2435 = vdwg.mxu0
      %v2436 = vadd.f32 %v1960, %v2374
      %v2437 = vadd.f32 %v1963, %v2377
      %v2438 = vadd.f32 %v1968, %v2382
      %v2439 = vadd.f32 %v1971, %v2385
      %v2440 = vadd.f32 %v1976, %v2390
      %v2441 = vadd.f32 %v1979, %v2393
      %v2442 = vadd.f32 %v1984, %v2398
      %v2443 = vadd.f32 %v1987, %v2401
      %v2444 = vadd.f32 %v1992, %v2406
      %v2445 = vadd.f32 %v1995, %v2409
      %v2446 = vadd.f32 %v2000, %v2414
      %v2447 = vadd.f32 %v2003, %v2417
      %v2448 = vadd.f32 %v2008, %v2422
      %v2449 = vadd.f32 %v2011, %v2425
      %v2450 = vadd.f32 %v2016, %v2430
      %v2451 = vadd.f32 %v2019, %v2433
      %v2452 = vpack.c.bf16 %v2437, %v2436
      %v2453 = vpack.c.bf16 %v2439, %v2438
      %v2454 = vpack.c.bf16 %v2441, %v2440
      %v2455 = vpack.c.bf16 %v2443, %v2442
      %v2456 = vpack.c.bf16 %v2445, %v2444
      %v2457 = vpack.c.bf16 %v2447, %v2446
      %v2458 = vpack.c.bf16 %v2449, %v2448
      %v2459 = vpack.c.bf16 %v2451, %v2450
      %v2468 = vunpack.c.l.b16 %v2452
      %v2469 = vunpack.c.h.b16 %v2452
      %v2470 = vunpack.c.l.b16 %v2453
      %v2471 = vunpack.c.h.b16 %v2453
      %v2472 = vunpack.c.l.b16 %v2454
      %v2473 = vunpack.c.h.b16 %v2454
      %v2474 = vunpack.c.l.b16 %v2455
      %v2475 = vunpack.c.h.b16 %v2455
      %v2476 = vunpack.c.l.b16 %v2456
      %v2477 = vunpack.c.h.b16 %v2456
      %v2478 = vunpack.c.l.b16 %v2457
      %v2479 = vunpack.c.h.b16 %v2457
      %v2480 = vunpack.c.l.b16 %v2458
      %v2481 = vunpack.c.h.b16 %v2458
      %v2482 = vunpack.c.l.b16 %v2459
      %v2483 = vunpack.c.h.b16 %v2459
      %v2484 = vpack.c.b16 %v2468, %v2468
      %v2485 = vpack.c.b16 %v2469, %v2469
      %v2486 = vpack.c.b16 %v2470, %v2470
      %v2487 = vpack.c.b16 %v2471, %v2471
      %v2488 = vpack.c.b16 %v2472, %v2472
      %v2489 = vpack.c.b16 %v2473, %v2473
      %v2490 = vpack.c.b16 %v2474, %v2474
      %v2491 = vpack.c.b16 %v2475, %v2475
      %v2492 = vpack.c.b16 %v2476, %v2476
      %v2493 = vpack.c.b16 %v2477, %v2477
      %v2494 = vpack.c.b16 %v2478, %v2478
      %v2495 = vpack.c.b16 %v2479, %v2479
      %v2496 = vpack.c.b16 %v2480, %v2480
      %v2497 = vpack.c.b16 %v2481, %v2481
      %v2498 = vpack.c.b16 %v2482, %v2482
      %v2499 = vpack.c.b16 %v2483, %v2483
      %2516 = vst [vmem:[%s215] sm:$0xf] %v2484
      %2517 = vst [vmem:[%s215 + $0x4] sm:$0xf] %v2485
      %2518 = vst [vmem:[%s215 + $0x8] sm:$0xf] %v2486
      %2519 = vst [vmem:[%s215 + $0xc] sm:$0xf] %v2487
      %2520 = vst [vmem:[%s215 + $0x10] sm:$0xf] %v2488
      %2521 = vst [vmem:[%s215 + $0x14] sm:$0xf] %v2489
      %2522 = vst [vmem:[%s215 + $0x18] sm:$0xf] %v2490
      %2523 = vst [vmem:[%s215 + $0x1c] sm:$0xf] %v2491
      %2524 = vst [vmem:[%s215 + $0x20] sm:$0xf] %v2492
      %2525 = vst [vmem:[%s215 + $0x24] sm:$0xf] %v2493
      %2526 = vst [vmem:[%s215 + $0x28] sm:$0xf] %v2494
      %2527 = vst [vmem:[%s215 + $0x2c] sm:$0xf] %v2495
      %2528 = vst [vmem:[%s215 + $0x30] sm:$0xf] %v2496
      %2529 = vst [vmem:[%s215 + $0x34] sm:$0xf] %v2497
      %2530 = vst [vmem:[%s215 + $0x38] sm:$0xf] %v2498
      %2531 = vst [vmem:[%s215 + $0x3c] sm:$0xf] %v2499
      %v2532 = vadd.f32 %v2436, %v2437
      %v2533 = vadd.f32 %v2532, %v2438
      %v2534 = vadd.f32 %v2533, %v2439
      %v2535 = vadd.f32 %v2534, %v2440
      %v2536 = vadd.f32 %v2535, %v2441
      %v2537 = vadd.f32 %v2536, %v2442
      %v2538 = vadd.f32 %v2537, %v2443
      %v2539 = vadd.f32 %v2538, %v2444
      %v2540 = vadd.f32 %v2539, %v2445
      %v2541 = vadd.f32 %v2540, %v2446
      %v2542 = vadd.f32 %v2541, %v2447
      %v2543 = vadd.f32 %v2542, %v2448
      %v2544 = vadd.f32 %v2543, %v2449
      %v2545 = vadd.f32 %v2544, %v2450
      %v2546 = vadd.f32 %v2545, %v2451
      %v2547 = vrot.slane %v2546, 4
      %v2548 = vadd.f32 %v2546, %v2547
      %v2549 = vrot.slane %v2548, 2
      %v2550 = vadd.f32 %v2548, %v2549
      %v2551 = vrot.slane %v2550, 1
      %v2552 = vadd.f32 %v2550, %v2551
      %2553 = vst [vmem:[%s224] sm:$0x1] %v2552
      %v2554 = vmul.f32 %v2436, %v2436
      %v2555 = vmul.f32 %v2437, %v2437
      %v2556 = vmul.f32 %v2438, %v2438
      %v2557 = vmul.f32 %v2439, %v2439
      %v2558 = vmul.f32 %v2440, %v2440
      %v2559 = vmul.f32 %v2441, %v2441
      %v2560 = vmul.f32 %v2442, %v2442
      %v2561 = vmul.f32 %v2443, %v2443
      %v2562 = vmul.f32 %v2444, %v2444
      %v2563 = vmul.f32 %v2445, %v2445
      %v2564 = vmul.f32 %v2446, %v2446
      %v2565 = vmul.f32 %v2447, %v2447
      %v2566 = vmul.f32 %v2448, %v2448
      %v2567 = vmul.f32 %v2449, %v2449
      %v2568 = vmul.f32 %v2450, %v2450
      %v2569 = vmul.f32 %v2451, %v2451
      %v2570 = vadd.f32 %v2554, %v2555
      %v2571 = vadd.f32 %v2570, %v2556
      %v2572 = vadd.f32 %v2571, %v2557
      %v2573 = vadd.f32 %v2572, %v2558
      %v2574 = vadd.f32 %v2573, %v2559
      %v2575 = vadd.f32 %v2574, %v2560
      %v2576 = vadd.f32 %v2575, %v2561
      %v2577 = vadd.f32 %v2576, %v2562
      %v2578 = vadd.f32 %v2577, %v2563
      %v2579 = vadd.f32 %v2578, %v2564
      %v2580 = vadd.f32 %v2579, %v2565
      %v2581 = vadd.f32 %v2580, %v2566
      %v2582 = vadd.f32 %v2581, %v2567
      %v2583 = vadd.f32 %v2582, %v2568
      %v2584 = vadd.f32 %v2583, %v2569
      %v2585 = vrot.slane %v2584, 4
      %v2586 = vadd.f32 %v2584, %v2585
      %v2587 = vrot.slane %v2586, 2
      %v2588 = vadd.f32 %v2586, %v2587
      %v2589 = vrot.slane %v2588, 1
      %v2590 = vadd.f32 %v2588, %v2589
      %2591 = vst [vmem:[%s224 + $0x1] sm:$0x1] %v2590
      %s2592 = smul.u32 8, %s22
      %p2593 = scmp.lt.s32.totalorder %s21, 1
      %s2594 = scalar_select %p2593, %s21, 1
      %p2595 = scmp.lt.s32.totalorder %s2592, 15
      %s2596 = scalar_select %p2595, %s2592, 15
      %s2597 = smul.addr %s2596, 2
      %s2598 = smul.addr %s2594, 32
      %s2599 = sadd.s32 %s2597, %s2598
      %s2600 = smul.addr %s2599, 4
      %s2601 = scalar_lea.vmem %s4, %s2600
      %p2602 = scmp.lt.s32.totalorder %s21, 1
      %s2603 = scalar_select %p2602, %s21, 1
      %p2604 = scmp.lt.s32.totalorder %s22, 1
      %s2605 = scalar_select %p2604, %s22, 1
      %s2606 = smul.addr %s2603, 2
      %s2607 = sadd.s32 %s2605, %s2606
      %s2608 = smul.addr %s2607, 8
      %s2609 = scalar_lea.vmem %s5, %s2608
      // Predicated region
      $region277: #{unet_conv_block_2d.4} parent=31 // pred_check
        %p2610 = pneg %p112
      $region278: #{unet_conv_block_2d.4} parent=31 // pred_check_branch
        %2612 = sbr.rel (%p2610) target = $region280
      $region279: #{unet_conv_block_2d.4} parent=31 // pred_region
        %s2613 = smul.u32 8, %s22
      $region280: #{unet_conv_block_2d.4} parent=31 // pred_fallthru
        _
      // Predicated region
      $region281: #{unet_conv_block_2d.4} parent=31 // pred_check
        %p2614 = pneg %p140
      $region282: #{unet_conv_block_2d.4} parent=31 // pred_check_branch
        %2616 = sbr.rel (%p2614) target = $region284
      $region283: #{unet_conv_block_2d.4} parent=31 // pred_region
        _
      $region284: #{unet_conv_block_2d.4} parent=31 // pred_fallthru
        _
    $region32: #{unet_conv_block_2d.4} parent=5 // pred_fallthru
      _
    %p2617 = scmp.le.s32.totalorder 2, %s12
    // Predicated region
    $region285: #{unet_conv_block_2d.4} parent=5 // pred_check
      %p2618 = pneg %p2617
    $region286: #{unet_conv_block_2d.4} parent=5 // pred_check_branch
      %2620 = sbr.rel (%p2618) target = $region288
    $region287: #{unet_conv_block_2d.4} parent=5 // pred_region
      %s2621 = ssub.s32 %s12, 2
      // Predicated region
      $region289: #{unet_conv_block_2d.4} parent=287 // pred_check
        %p2622 = pneg %p118
      $region290: #{unet_conv_block_2d.4} parent=287 // pred_check_branch
        %2624 = sbr.rel (%p2622) target = $region292
      $region291: #{unet_conv_block_2d.4} parent=287 // pred_region
        %s2625 = smul.u32 8, %s24
        %p2626 = scmp.lt.s32.totalorder %s23, 1
        %s2627 = scalar_select %p2626, %s23, 1
        %p2628 = scmp.lt.s32.totalorder %s2625, 15
        %s2629 = scalar_select %p2628, %s2625, 15
        %s2630 = smul.addr %s2629, 2
        %s2631 = smul.addr %s2627, 32
        %s2632 = sadd.s32 %s2630, %s2631
        %s2633 = smul.addr %s2632, 4
        %s2634 = scalar_lea.vmem %s4, %s2633
      $region292: #{unet_conv_block_2d.4} parent=287 // pred_fallthru
        _
      // Predicated region
      $region293: #{unet_conv_block_2d.4} parent=287 // pred_check
        %p2635 = pneg %p146
      $region294: #{unet_conv_block_2d.4} parent=287 // pred_check_branch
        %2637 = sbr.rel (%p2635) target = $region296
      $region295: #{unet_conv_block_2d.4} parent=287 // pred_region
        %p2638 = scmp.lt.s32.totalorder %s23, 1
        %s2639 = scalar_select %p2638, %s23, 1
        %p2640 = scmp.lt.s32.totalorder %s24, 1
        %s2641 = scalar_select %p2640, %s24, 1
        %s2642 = smul.addr %s2639, 2
        %s2643 = sadd.s32 %s2641, %s2642
        %s2644 = smul.addr %s2643, 8
        %s2645 = scalar_lea.vmem %s5, %s2644
      $region296: #{unet_conv_block_2d.4} parent=287 // pred_fallthru
        _
    $region288: #{unet_conv_block_2d.4} parent=5 // pred_fallthru
      _
  $region6: #{unet_conv_block_2d.4} parent=0 // loop_footer
    %s16 = sadd.s32 1, %s12
  $region7: #{unet_conv_block_2d.4} parent=0 // loop_footer_branch
    %11 = sbr.rel target = $region3
  $region8: #{unet_conv_block_2d.4} parent=0 // loop_exit
    _
  %2646 = vsyncmov [#allocation3]
  %s2647 = vpop.sfrf %2646
  %p2648 = scmp.eq.s32.totalorder %s2647, 0
  %p2649 = pneg %p2648
  %2651 = shalt.err (%p2649)
  %s2652 = scalar_lea.sflag [#allocation3], 1
  %2653 = vsyncmov %s2652
  %s2654 = vpop.sfrf %2653
  %p2655 = scmp.eq.s32.totalorder %s2654, 0
  %p2656 = pneg %p2655
  %2658 = shalt.err (%p2656)
  %s2659 = scalar_lea.sflag [#allocation3], 2
  %2660 = vsyncmov %s2659
  %s2661 = vpop.sfrf %2660
  %p2662 = scmp.eq.s32.totalorder %s2661, 0
  %p2663 = pneg %p2662
  %2665 = shalt.err (%p2663)
  %s2666 = scalar_lea.sflag [#allocation3], 3
  %2667 = vsyncmov %s2666
  %s2668 = vpop.sfrf %2667
  %p2669 = scmp.eq.s32.totalorder %s2668, 0
  %p2670 = pneg %p2669
  %2672 = shalt.err (%p2670)
  %s2673 = scalar_lea.sflag [#allocation3], 4
  %2674 = vsyncmov %s2673
  %s2675 = vpop.sfrf %2674
  %p2676 = scmp.eq.s32.totalorder %s2675, 0
  %p2677 = pneg %p2676
  %2679 = shalt.err (%p2677)
  %s2680 = scalar_lea.sflag [#allocation3], 5
  %2681 = vsyncmov %s2680
  %s2682 = vpop.sfrf %2681
  %p2683 = scmp.eq.s32.totalorder %s2682, 0
  %p2684 = pneg %p2683
  %2686 = shalt.err (%p2684)

</llo_original>
